<compile_context>
chip_gen: v6e
topology: v6e:2x2x1
jax: 0.10.0
libtpu: 0.0.40
codegen_flags: <defaults>
</compile_context>

<pallas_src>
import numpy as np
import jax
import jax.numpy as jnp
from jax.experimental import pallas as pl
from jax.experimental.pallas import tpu as pltpu

NUM_CLASSES = 10     # true fc2 output width
OUT_PAD = 128        # lane-dense padded output width
FC1_PAD = 512        # fc1 output padded 500 -> 512 (lane aligned)


# ----------------------------------------------------------------------------
# Fused Pallas kernel: 4 chained (matmul + bias [+ relu]) layers, all in VMEM.
# ----------------------------------------------------------------------------
def _fused_cnn_kernel(x_ref, w1_ref, b1_ref, w2_ref, b2_ref,
                      w3_ref, b3_ref, w4_ref, b4_ref, o_ref):
    def dense(h, w_ref, b_ref, relu):
        # bf16 MXU inputs, f32 accumulation.
        acc = jnp.dot(h.astype(w_ref.dtype), w_ref[...],
                      preferred_element_type=jnp.float32)
        acc = acc + b_ref[...]                 # (1, D) broadcast over rows
        return jnp.maximum(acc, 0.0) if relu else acc

    h = dense(x_ref[...], w1_ref, b1_ref, relu=True)    # conv1 + relu
    h = dense(h,          w2_ref, b2_ref, relu=True)    # conv2 + relu
    h = dense(h,          w3_ref, b3_ref, relu=True)    # fc1   + relu
    h = dense(h,          w4_ref, b4_ref, relu=False)   # fc2 (padded to 128)
    o_ref[...] = h.astype(o_ref.dtype)


@jax.jit
def cnn_forward(x, fused_params):
    """x: (N, 1, 12, 12) NCHW float32 -> (N, 10) float32 logits."""
    n = x.shape[0]
    x2d = x.reshape(n, -1)                     # NCHW flatten; contiguous, free
    m, k = x2d.shape

    # Row-block only when the batch is big enough to matter; the "parallel"
    # axis then shards across v7x's two TensorCores.
    bm = 128 if (m > 128 and m % 128 == 0) else m
    grid = (m // bm,)

    in_specs = [pl.BlockSpec((bm, k), lambda i: (i, 0))]
    in_specs += [pl.BlockSpec(p.shape, lambda i: (0, 0)) for p in fused_params]

    out_pad = pl.pallas_call(
        _fused_cnn_kernel,
        out_shape=jax.ShapeDtypeStruct((m, OUT_PAD), jnp.float32),
        grid=grid,
        in_specs=in_specs,
        out_specs=pl.BlockSpec((bm, OUT_PAD), lambda i: (i, 0)),
        compiler_params=pltpu.CompilerParams(
            dimension_semantics=("parallel",)),
    )(x2d, *fused_params)
    return out_pad[:, :NUM_CLASSES]


# ----------------------------------------------------------------------------
# One-time (init-time) weight layout transforms — NOT in the hot path.
# ----------------------------------------------------------------------------
def _conv_to_matrix(w, in_h, in_w):
    """Valid, stride-1 Conv2d weight (OC, C, KH, KW) -> dense (C*H*W, OC*OH*OW)
    matrix acting on NCHW-flattened activations."""
    w = np.asarray(w, dtype=np.float32)
    oc, c, kh, kw = w.shape
    oh, ow = in_h - kh + 1, in_w - kw + 1
    mat = np.zeros((c * in_h * in_w, oc * oh * ow), dtype=np.float32)
    occ, ohh, oww, cc, ii, jj = np.meshgrid(
        np.arange(oc), np.arange(oh), np.arange(ow),
        np.arange(c), np.arange(kh), np.arange(kw), indexing="ij")
    rows = cc * (in_h * in_w) + (ohh + ii) * in_w + (oww + jj)
    cols = occ * (oh * ow) + ohh * ow + oww
    mat[rows.ravel(), cols.ravel()] = w[occ, cc, ii, jj].ravel()
    return mat


def _pad2d(a, rows, cols):
    out = np.zeros((rows, cols), dtype=a.dtype)
    out[: a.shape[0], : a.shape[1]] = a
    return out


def _pad1d(a, n):
    out = np.zeros((n,), dtype=a.dtype)
    out[: a.shape[0]] = a
    return out


def build_fused_params(params, weight_dtype=jnp.bfloat16):
    """Precompute the fused-kernel weight layouts once: conv weights expanded
    to Toeplitz matrices, fc weights transposed and zero-padded to lane/tile-
    aligned shapes, biases broadcast to the flattened NCHW layout.
    Weights are cast to `weight_dtype`; biases stay f32."""
    w1, b1, w2, b2, wf1, bf1, wf2, bf2 = [np.asarray(p, np.float32)
                                          for p in params]
    mats = (
        _conv_to_matrix(w1, 12, 12),                       # (144, 1280)
        _conv_to_matrix(w2, 8, 8),                         # (1280, 1024)
        _pad2d(wf1.T, 1024, FC1_PAD),                      # (1024, 512)
        _pad2d(wf2.T, FC1_PAD, OUT_PAD),                   # (512, 128)
    )
    biases = (
        np.repeat(b1, 8 * 8),            # per output position, NCHW order
        np.repeat(b2, 4 * 4),
        _pad1d(bf1, FC1_PAD),
        _pad1d(bf2, OUT_PAD),
    )
    fused = []
    for mat, b in zip(mats, biases):
        fused.append(jnp.asarray(mat, dtype=weight_dtype))
        fused.append(jnp.asarray(b.reshape(1, -1), dtype=jnp.float32))
    return tuple(fused)


# ----------------------------------------------------------------------------
# Pure-JAX references for correctness checking.
# ----------------------------------------------------------------------------
def reference_forward(x, params):
    """Exact PyTorch CNNModel semantics in f32 (highest-precision matmuls)."""
    w1, b1, w2, b2, wf1, bf1, wf2, bf2 = params
    dn = ("NCHW", "OIHW", "NCHW")
    hi = jax.lax.Precision.HIGHEST
    y = jax.lax.conv_general_dilated(x, w1, (1, 1), "VALID",
                                     dimension_numbers=dn, precision=hi)
    y = jnp.maximum(y + b1[None, :, None, None], 0.0)
    y = jax.lax.conv_general_dilated(y, w2, (1, 1), "VALID",
                                     dimension_numbers=dn, precision=hi)
    y = jnp.maximum(y + b2[None, :, None, None], 0.0)
    y = y.reshape(y.shape[0], -1)
    y = jnp.maximum(jnp.dot(y, wf1.T, precision=hi) + bf1, 0.0)
    return jnp.dot(y, wf2.T, precision=hi) + bf2


def reference_forward_fused(x, fused_params):
    """Pure-JAX mirror of the kernel math (same dtypes / casts / f32 accum)."""
    h = x.reshape(x.shape[0], -1)
    for idx in range(4):
        w, b = fused_params[2 * idx], fused_params[2 * idx + 1]
        acc = jnp.dot(h.astype(w.dtype), w,
                      preferred_element_type=jnp.float32) + b
        h = jnp.maximum(acc, 0.0) if idx < 3 else acc
    return h[:, :NUM_CLASSES]


def init_params(key):
    """Deterministic init mimicking PyTorch's default U(-1/sqrt(fan_in), ...)."""
    ks = jax.random.split(key, 8)

    def u(k, shape, fan_in):
        bound = 1.0 / jnp.sqrt(fan_in)
        return jax.random.uniform(k, shape, jnp.float32, -bound, bound)

    w1 = u(ks[0], (20, 1, 5, 5), 1 * 5 * 5)
    b1 = u(ks[1], (20,), 1 * 5 * 5)
    w2 = u(ks[2], (64, 20, 5, 5), 20 * 5 * 5)
    b2 = u(ks[3], (64,), 20 * 5 * 5)
    wf1 = u(ks[4], (500, 1024), 1024)
    bf1 = u(ks[5], (500,), 1024)
    wf2 = u(ks[6], (10, 500), 500)
    bf2 = u(ks[7], (10,), 500)
    return (w1, b1, w2, b2, wf1, bf1, wf2, bf2)


if __name__ == "__main__":
    key = jax.random.PRNGKey(0)
    kp, kx = jax.random.split(key)
    params = init_params(kp)

    # Two 5x5 valid convs must leave 4x4 spatial for fc1 (64*4*4) => H = W = 12.
    x = jax.random.normal(kx, (2, 1, 12, 12), dtype=jnp.float32)

    fused = build_fused_params(params, weight_dtype=jnp.bfloat16)

    out = jax.block_until_ready(cnn_forward(x, fused))
    assert out.shape == (2, NUM_CLASSES), out.shape

    # (1) Tight check of the Pallas kernel against a pure-JAX mirror of the
    #     exact same math (bf16 MXU inputs, f32 accumulation).
    ref_fused = reference_forward_fused(x, fused)
    err_kernel = float(jnp.max(jnp.abs(out - ref_fused)))
    assert jnp.allclose(out, ref_fused, atol=5e-3, rtol=5e-3), (
        f"kernel vs fused reference mismatch: max abs err {err_kernel}")

    # (2) Check against the exact f32 module semantics; tolerance sized for
    #     bf16 matmul inputs (K <= 1280) with f32 accumulation.
    ref = reference_forward(x, params)
    err_model = float(jnp.max(jnp.abs(out - ref)))
    assert jnp.allclose(out, ref, atol=5e-2, rtol=5e-2), (
        f"kernel vs f32 model reference mismatch: max abs err {err_model}")

    print("KERNEL_OK")
</pallas_src>

<mosaic_0001>
module attributes {stable_mosaic.version = 11 : i64} {
  func.func @_fused_cnn_kernel(%arg0: i32, %arg1: memref<2x144xf32, #tpu.memory_space<vmem>>, %arg2: memref<144x1280xbf16, #tpu.memory_space<vmem>>, %arg3: memref<1x1280xf32, #tpu.memory_space<vmem>>, %arg4: memref<1280x1024xbf16, #tpu.memory_space<vmem>>, %arg5: memref<1x1024xf32, #tpu.memory_space<vmem>>, %arg6: memref<1024x512xbf16, #tpu.memory_space<vmem>>, %arg7: memref<1x512xf32, #tpu.memory_space<vmem>>, %arg8: memref<512x128xbf16, #tpu.memory_space<vmem>>, %arg9: memref<1x128xf32, #tpu.memory_space<vmem>>, %arg10: memref<2x128xf32, #tpu.memory_space<vmem>>) attributes {dimension_semantics = [#tpu.dimension_semantics<parallel>], iteration_bounds = array<i64: 1>, scalar_prefetch = 0 : i64, scratch_operands = 0 : i64, tpu.core_type = #tpu.core_type<tc>, window_params = [{transform_indices = @transform_0, window_bounds = array<i64: 2, 144>}, {pipeline_mode = #tpu.pipeline_mode<synchronous>, transform_indices = @transform_1, window_bounds = array<i64: 144, 1280>}, {pipeline_mode = #tpu.pipeline_mode<synchronous>, transform_indices = @transform_2, window_bounds = array<i64: 1, 1280>}, {pipeline_mode = #tpu.pipeline_mode<synchronous>, transform_indices = @transform_3, window_bounds = array<i64: 1280, 1024>}, {pipeline_mode = #tpu.pipeline_mode<synchronous>, transform_indices = @transform_4, window_bounds = array<i64: 1, 1024>}, {pipeline_mode = #tpu.pipeline_mode<synchronous>, transform_indices = @transform_5, window_bounds = array<i64: 1024, 512>}, {pipeline_mode = #tpu.pipeline_mode<synchronous>, transform_indices = @transform_6, window_bounds = array<i64: 1, 512>}, {pipeline_mode = #tpu.pipeline_mode<synchronous>, transform_indices = @transform_7, window_bounds = array<i64: 512, 128>}, {pipeline_mode = #tpu.pipeline_mode<synchronous>, transform_indices = @transform_8, window_bounds = array<i64: 1, 128>}, {transform_indices = @transform_9, window_bounds = array<i64: 2, 128>}]} {
    %c0 = arith.constant 0 : index
    %c0_0 = arith.constant 0 : index
    %0 = vector.load %arg1[%c0, %c0_0] : memref<2x144xf32, #tpu.memory_space<vmem>>, vector<2x144xf32>
    %1 = arith.truncf %0 : vector<2x144xf32> to vector<2x144xbf16>
    %c0_1 = arith.constant 0 : index
    %c0_2 = arith.constant 0 : index
    %2 = vector.load %arg2[%c0_1, %c0_2] : memref<144x1280xbf16, #tpu.memory_space<vmem>>, vector<144x1280xbf16>
    %cst = arith.constant dense<0.000000e+00> : vector<2x1280xf32>
    %3 = tpu.matmul %1, %2, %cst {dimension_numbers = #tpu.dot_dimension_numbers<[1], [0], [0], [1], [0, 0, 1, 1], [], []>} : vector<2x144xbf16>, vector<144x1280xbf16>, vector<2x1280xf32> -> vector<2x1280xf32>
    %c0_3 = arith.constant 0 : index
    %c0_4 = arith.constant 0 : index
    %4 = vector.load %arg3[%c0_3, %c0_4] : memref<1x1280xf32, #tpu.memory_space<vmem>>, vector<1x1280xf32>
    %5 = vector.broadcast %4 : vector<1x1280xf32> to vector<2x1280xf32>
    %6 = arith.addf %3, %5 : vector<2x1280xf32>
    %cst_5 = arith.constant 0.000000e+00 : f32
    %7 = vector.broadcast %cst_5 : f32 to vector<2x1280xf32>
    %8 = arith.maximumf %6, %7 : vector<2x1280xf32>
    %9 = arith.truncf %8 : vector<2x1280xf32> to vector<2x1280xbf16>
    %c0_6 = arith.constant 0 : index
    %c0_7 = arith.constant 0 : index
    %10 = vector.load %arg4[%c0_6, %c0_7] : memref<1280x1024xbf16, #tpu.memory_space<vmem>>, vector<1280x1024xbf16>
    %cst_8 = arith.constant dense<0.000000e+00> : vector<2x1024xf32>
    %11 = tpu.matmul %9, %10, %cst_8 {dimension_numbers = #tpu.dot_dimension_numbers<[1], [0], [0], [1], [0, 0, 1, 1], [], []>} : vector<2x1280xbf16>, vector<1280x1024xbf16>, vector<2x1024xf32> -> vector<2x1024xf32>
    %c0_9 = arith.constant 0 : index
    %c0_10 = arith.constant 0 : index
    %12 = vector.load %arg5[%c0_9, %c0_10] : memref<1x1024xf32, #tpu.memory_space<vmem>>, vector<1x1024xf32>
    %13 = vector.broadcast %12 : vector<1x1024xf32> to vector<2x1024xf32>
    %14 = arith.addf %11, %13 : vector<2x1024xf32>
    %cst_11 = arith.constant 0.000000e+00 : f32
    %15 = vector.broadcast %cst_11 : f32 to vector<2x1024xf32>
    %16 = arith.maximumf %14, %15 : vector<2x1024xf32>
    %17 = arith.truncf %16 : vector<2x1024xf32> to vector<2x1024xbf16>
    %c0_12 = arith.constant 0 : index
    %c0_13 = arith.constant 0 : index
    %18 = vector.load %arg6[%c0_12, %c0_13] : memref<1024x512xbf16, #tpu.memory_space<vmem>>, vector<1024x512xbf16>
    %cst_14 = arith.constant dense<0.000000e+00> : vector<2x512xf32>
    %19 = tpu.matmul %17, %18, %cst_14 {dimension_numbers = #tpu.dot_dimension_numbers<[1], [0], [0], [1], [0, 0, 1, 1], [], []>} : vector<2x1024xbf16>, vector<1024x512xbf16>, vector<2x512xf32> -> vector<2x512xf32>
    %c0_15 = arith.constant 0 : index
    %c0_16 = arith.constant 0 : index
    %20 = vector.load %arg7[%c0_15, %c0_16] : memref<1x512xf32, #tpu.memory_space<vmem>>, vector<1x512xf32>
    %21 = vector.broadcast %20 : vector<1x512xf32> to vector<2x512xf32>
    %22 = arith.addf %19, %21 : vector<2x512xf32>
    %cst_17 = arith.constant 0.000000e+00 : f32
    %23 = vector.broadcast %cst_17 : f32 to vector<2x512xf32>
    %24 = arith.maximumf %22, %23 : vector<2x512xf32>
    %25 = arith.truncf %24 : vector<2x512xf32> to vector<2x512xbf16>
    %c0_18 = arith.constant 0 : index
    %c0_19 = arith.constant 0 : index
    %26 = vector.load %arg8[%c0_18, %c0_19] : memref<512x128xbf16, #tpu.memory_space<vmem>>, vector<512x128xbf16>
    %cst_20 = arith.constant dense<0.000000e+00> : vector<2x128xf32>
    %27 = tpu.matmul %25, %26, %cst_20 {dimension_numbers = #tpu.dot_dimension_numbers<[1], [0], [0], [1], [0, 0, 1, 1], [], []>} : vector<2x512xbf16>, vector<512x128xbf16>, vector<2x128xf32> -> vector<2x128xf32>
    %c0_21 = arith.constant 0 : index
    %c0_22 = arith.constant 0 : index
    %28 = vector.load %arg9[%c0_21, %c0_22] : memref<1x128xf32, #tpu.memory_space<vmem>>, vector<1x128xf32>
    %29 = vector.broadcast %28 : vector<1x128xf32> to vector<2x128xf32>
    %30 = arith.addf %27, %29 : vector<2x128xf32>
    %c0_23 = arith.constant 0 : index
    %c0_24 = arith.constant 0 : index
    %31 = vector.load %arg10[%c0_23, %c0_24] : memref<2x128xf32, #tpu.memory_space<vmem>>, vector<2x128xf32>
    tpu.vector_store %arg10[%c0_23, %c0_24], %30 {strides = array<i32>} : memref<2x128xf32, #tpu.memory_space<vmem>>, vector<2x128xf32>,
    return
  }
  func.func @transform_0(%arg0: i32) -> (i32, i32) {
    %c0_i32 = arith.constant 0 : i32
    %c0_i32_0 = arith.constant 0 : i32
    return %arg0, %c0_i32 : i32, i32
  }
  func.func @transform_1(%arg0: i32) -> (i32, i32) {
    %c0_i32 = arith.constant 0 : i32
    %c0_i32_0 = arith.constant 0 : i32
    %c0_i32_1 = arith.constant 0 : i32
    return %c0_i32, %c0_i32_0 : i32, i32
  }
  func.func @transform_2(%arg0: i32) -> (i32, i32) {
    %c0_i32 = arith.constant 0 : i32
    %c0_i32_0 = arith.constant 0 : i32
    %c0_i32_1 = arith.constant 0 : i32
    return %c0_i32, %c0_i32_0 : i32, i32
  }
  func.func @transform_3(%arg0: i32) -> (i32, i32) {
    %c0_i32 = arith.constant 0 : i32
    %c0_i32_0 = arith.constant 0 : i32
    %c0_i32_1 = arith.constant 0 : i32
    return %c0_i32, %c0_i32_0 : i32, i32
  }
  func.func @transform_4(%arg0: i32) -> (i32, i32) {
    %c0_i32 = arith.constant 0 : i32
    %c0_i32_0 = arith.constant 0 : i32
    %c0_i32_1 = arith.constant 0 : i32
    return %c0_i32, %c0_i32_0 : i32, i32
  }
  func.func @transform_5(%arg0: i32) -> (i32, i32) {
    %c0_i32 = arith.constant 0 : i32
    %c0_i32_0 = arith.constant 0 : i32
    %c0_i32_1 = arith.constant 0 : i32
    return %c0_i32, %c0_i32_0 : i32, i32
  }
  func.func @transform_6(%arg0: i32) -> (i32, i32) {
    %c0_i32 = arith.constant 0 : i32
    %c0_i32_0 = arith.constant 0 : i32
    %c0_i32_1 = arith.constant 0 : i32
    return %c0_i32, %c0_i32_0 : i32, i32
  }
  func.func @transform_7(%arg0: i32) -> (i32, i32) {
    %c0_i32 = arith.constant 0 : i32
    %c0_i32_0 = arith.constant 0 : i32
    %c0_i32_1 = arith.constant 0 : i32
    return %c0_i32, %c0_i32_0 : i32, i32
  }
  func.func @transform_8(%arg0: i32) -> (i32, i32) {
    %c0_i32 = arith.constant 0 : i32
    %c0_i32_0 = arith.constant 0 : i32
    %c0_i32_1 = arith.constant 0 : i32
    return %c0_i32, %c0_i32_0 : i32, i32
  }
  func.func @transform_9(%arg0: i32) -> (i32, i32) {
    %c0_i32 = arith.constant 0 : i32
    %c0_i32_0 = arith.constant 0 : i32
    return %arg0, %c0_i32 : i32, i32
  }
}

</mosaic_0001>

<llo_original>
// kernel: cnn_forward.1
$region0: #{cnn_forward.1}
  #allocation0 [shape = 'u32[]', space=smem, size = 0x4, offset = 0x4, fixed_abs, tag = 'smem constant byte address 0x4 - core index']
  #allocation1 [shape = 'u32[144,128]{1,0:T(1,128)}', space=vmem, size = 0x12000, scoped, tag = 'internal scratch']
  %s0 = inlined_call_operand.vmem [shape: f32[2,144], index: 0, kind: input, shape index: {}]
  %s1 = inlined_call_operand.hbm [shape: bf16[144,1280], index: 1, kind: input, shape index: {}]
  %s2 = inlined_call_operand.hbm [shape: f32[1,1280], index: 2, kind: input, shape index: {}]
  %s3 = inlined_call_operand.hbm [shape: bf16[1280,1024], index: 3, kind: input, shape index: {}]
  %s4 = inlined_call_operand.hbm [shape: f32[1,1024], index: 4, kind: input, shape index: {}]
  %s5 = inlined_call_operand.hbm [shape: bf16[1024,512], index: 5, kind: input, shape index: {}]
  %s6 = inlined_call_operand.hbm [shape: f32[1,512], index: 6, kind: input, shape index: {}]
  %s7 = inlined_call_operand.hbm [shape: bf16[512,128], index: 7, kind: input, shape index: {}]
  %s8 = inlined_call_operand.hbm [shape: f32[1,128], index: 8, kind: input, shape index: {}]
  %s9 = inlined_call_operand.hbm [shape: f32[2,128], index: 9, kind: output, shape index: {}]
  %s10 = sld [smem:[#allocation0]]
  $region78: #{cnn_forward.1} parent=0
    _
  %s12 = ssub.s32 1, %s10
  %s13 = scalar_select 0, %s12, %s10
  $region1: #{cnn_forward.1} parent=0
    #allocation2 [shape = 'u8[368640]{0}', space=vmem, size = 0x5a000, scoped, tag = 'input window, operand 1, single buffered']
    #allocation3 [shape = 's32[1]{0}', space=sflag, size = 0x4, scoped, tag = 'scoped memory for cnn_forward.1']
    #allocation4 [shape = 's32[1]{0}', space=sflag, size = 0x4, scoped, tag = 'scoped memory for cnn_forward.1']
    #allocation5 [shape = 'u8[5120]{0}', space=vmem, size = 0x1400, scoped, tag = 'input window, operand 2, single buffered']
    #allocation6 [shape = 's32[1]{0}', space=sflag, size = 0x4, scoped, tag = 'scoped memory for cnn_forward.1']
    #allocation7 [shape = 'u8[2621440]{0}', space=vmem, size = 0x280000, scoped, tag = 'input window, operand 3, single buffered']
    #allocation8 [shape = 'u8[4096]{0}', space=vmem, size = 0x1000, scoped, tag = 'input window, operand 4, single buffered']
    #allocation9 [shape = 's32[1]{0}', space=sflag, size = 0x4, scoped, tag = 'scoped memory for cnn_forward.1']
    #allocation10 [shape = 'u8[1048576]{0}', space=vmem, size = 0x100000, scoped, tag = 'input window, operand 5, single buffered']
    #allocation11 [shape = 'u8[2048]{0}', space=vmem, size = 0x800, scoped, tag = 'input window, operand 6, single buffered']
    #allocation12 [shape = 's32[1]{0}', space=sflag, size = 0x4, scoped, tag = 'scoped memory for cnn_forward.1']
    #allocation13 [shape = 'u8[131072]{0}', space=vmem, size = 0x20000, scoped, tag = 'input window, operand 7, single buffered']
    #allocation14 [shape = 'u8[512]{0}', space=vmem, size = 0x400, scoped, tag = 'input window, operand 8, single buffered']
    #allocation15 [shape = 's32[1]{0}', space=sflag, size = 0x4, scoped, tag = 'scoped memory for cnn_forward.1']
    #allocation16 [shape = 'u8[1024]{0}', space=vmem, size = 0x400, scoped, tag = 'output window, operand 0, single buffered']
    %14 = vsyncpa [#allocation3], 0
    %15 = vsyncpa [#allocation6], 0
    %16 = vsyncpa [#allocation9], 0
    %17 = vsyncpa [#allocation12], 0
    %18 = vsyncpa [#allocation15], 0
    %19 = vsyncpa [#allocation4], 0
    // Predicated region
    $region2: #{cnn_forward.1} parent=1 // pred_check
      _
    $region3: #{cnn_forward.1} parent=1 // pred_check_branch
      %21 = sbr.rel (0) target = $region5
    $region4: #{cnn_forward.1} parent=1 // pred_region
      _
    $region5: #{cnn_forward.1} parent=1 // pred_fallthru
      _
    // Predicated region
    $region6: #{cnn_forward.1} parent=1 // pred_check
      _
    $region7: #{cnn_forward.1} parent=1 // pred_check_branch
      %23 = sbr.rel (0) target = $region9
    $region8: #{cnn_forward.1} parent=1 // pred_region
      %s25 = ssub.s32 11520, 11520
      %26 = vsyncadd [#allocation3], %s25
      %s27 = sshll.u32 [#allocation2], 4
      %s28 = int_to_ptr.vmem [resolvable:$true] %s27
      %33 = dma.hbm_to_vmem [thread:$0]  %s1, 11520, %s28, [#allocation3], 640, 640, 40
    $region9: #{cnn_forward.1} parent=1 // pred_fallthru
      _
    // Predicated region
    $region10: #{cnn_forward.1} parent=1 // pred_check
      _
    $region11: #{cnn_forward.1} parent=1 // pred_check_branch
      %35 = sbr.rel (0) target = $region13
    $region12: #{cnn_forward.1} parent=1 // pred_region
      %s37 = ssub.s32 160, 160
      %38 = vsyncadd [#allocation6], %s37
      %s40 = sshll.u32 [#allocation5], 4
      %s41 = int_to_ptr.vmem [resolvable:$true] %s40
      %43 = dma.hbm_to_vmem [thread:$0]  %s2, 160, %s41, [#allocation6]
    $region13: #{cnn_forward.1} parent=1 // pred_fallthru
      _
    // Predicated region
    $region14: #{cnn_forward.1} parent=1 // pred_check
      _
    $region15: #{cnn_forward.1} parent=1 // pred_check_branch
      %45 = sbr.rel (0) target = $region17
    $region16: #{cnn_forward.1} parent=1 // pred_region
      %s47 = ssub.s32 81920, 81920
      %48 = vsyncadd [#allocation6], %s47
      %s49 = sshll.u32 [#allocation7], 4
      %s50 = int_to_ptr.vmem [resolvable:$true] %s49
      %55 = dma.hbm_to_vmem [thread:$0]  %s3, 81920, %s50, [#allocation6], 512, 512, 32
    $region17: #{cnn_forward.1} parent=1 // pred_fallthru
      _
    // Predicated region
    $region18: #{cnn_forward.1} parent=1 // pred_check
      _
    $region19: #{cnn_forward.1} parent=1 // pred_check_branch
      %57 = sbr.rel (0) target = $region21
    $region20: #{cnn_forward.1} parent=1 // pred_region
      %s59 = ssub.s32 128, 128
      %60 = vsyncadd [#allocation9], %s59
      %s62 = sshll.u32 [#allocation8], 4
      %s63 = int_to_ptr.vmem [resolvable:$true] %s62
      %65 = dma.hbm_to_vmem [thread:$0]  %s4, 128, %s63, [#allocation9]
    $region21: #{cnn_forward.1} parent=1 // pred_fallthru
      _
    // Predicated region
    $region22: #{cnn_forward.1} parent=1 // pred_check
      _
    $region23: #{cnn_forward.1} parent=1 // pred_check_branch
      %67 = sbr.rel (0) target = $region25
    $region24: #{cnn_forward.1} parent=1 // pred_region
      %s69 = ssub.s32 32768, 32768
      %70 = vsyncadd [#allocation9], %s69
      %s71 = sshll.u32 [#allocation10], 4
      %s72 = int_to_ptr.vmem [resolvable:$true] %s71
      %77 = dma.hbm_to_vmem [thread:$0]  %s5, 32768, %s72, [#allocation9], 256, 256, 16
    $region25: #{cnn_forward.1} parent=1 // pred_fallthru
      _
    // Predicated region
    $region26: #{cnn_forward.1} parent=1 // pred_check
      _
    $region27: #{cnn_forward.1} parent=1 // pred_check_branch
      %79 = sbr.rel (0) target = $region29
    $region28: #{cnn_forward.1} parent=1 // pred_region
      %s81 = ssub.s32 64, 64
      %82 = vsyncadd [#allocation12], %s81
      %s84 = sshll.u32 [#allocation11], 4
      %s85 = int_to_ptr.vmem [resolvable:$true] %s84
      %87 = dma.hbm_to_vmem [thread:$0]  %s6, 64, %s85, [#allocation12]
    $region29: #{cnn_forward.1} parent=1 // pred_fallthru
      _
    // Predicated region
    $region30: #{cnn_forward.1} parent=1 // pred_check
      _
    $region31: #{cnn_forward.1} parent=1 // pred_check_branch
      %89 = sbr.rel (0) target = $region33
    $region32: #{cnn_forward.1} parent=1 // pred_region
      %s91 = ssub.s32 4096, 4096
      %92 = vsyncadd [#allocation12], %s91
      %s93 = sshll.u32 [#allocation13], 4
      %s94 = int_to_ptr.vmem [resolvable:$true] %s93
      %99 = dma.hbm_to_vmem [thread:$0]  %s7, 4096, %s94, [#allocation12], 64, 64, 4
    $region33: #{cnn_forward.1} parent=1 // pred_fallthru
      _
    // Predicated region
    $region34: #{cnn_forward.1} parent=1 // pred_check
      _
    $region35: #{cnn_forward.1} parent=1 // pred_check_branch
      %101 = sbr.rel (0) target = $region37
    $region36: #{cnn_forward.1} parent=1 // pred_region
      %s103 = ssub.s32 16, 16
      %104 = vsyncadd [#allocation15], %s103
      %s106 = sshll.u32 [#allocation14], 4
      %s107 = int_to_ptr.vmem [resolvable:$true] %s106
      %109 = dma.hbm_to_vmem [thread:$0]  %s8, 16, %s107, [#allocation15]
    $region37: #{cnn_forward.1} parent=1 // pred_fallthru
      _
    // Predicated region
    $region38: #{cnn_forward.1} parent=1 // pred_check
      _
    $region39: #{cnn_forward.1} parent=1 // pred_check_branch
      %111 = sbr.rel (0) target = $region41
    $region40: #{cnn_forward.1} parent=1 // pred_region
      %112 = dma.done [#allocation3], 11520
    $region41: #{cnn_forward.1} parent=1 // pred_fallthru
      _
    // Predicated region
    $region42: #{cnn_forward.1} parent=1 // pred_check
      _
    $region43: #{cnn_forward.1} parent=1 // pred_check_branch
      %114 = sbr.rel (0) target = $region45
    $region44: #{cnn_forward.1} parent=1 // pred_region
      %115 = dma.done [#allocation6], 160
    $region45: #{cnn_forward.1} parent=1 // pred_fallthru
      _
    // Predicated region
    $region46: #{cnn_forward.1} parent=1 // pred_check
      _
    $region47: #{cnn_forward.1} parent=1 // pred_check_branch
      %117 = sbr.rel (0) target = $region49
    $region48: #{cnn_forward.1} parent=1 // pred_region
      %118 = dma.done [#allocation6], 81920
    $region49: #{cnn_forward.1} parent=1 // pred_fallthru
      _
    // Predicated region
    $region50: #{cnn_forward.1} parent=1 // pred_check
      _
    $region51: #{cnn_forward.1} parent=1 // pred_check_branch
      %120 = sbr.rel (0) target = $region53
    $region52: #{cnn_forward.1} parent=1 // pred_region
      %121 = dma.done [#allocation9], 128
    $region53: #{cnn_forward.1} parent=1 // pred_fallthru
      _
    // Predicated region
    $region54: #{cnn_forward.1} parent=1 // pred_check
      _
    $region55: #{cnn_forward.1} parent=1 // pred_check_branch
      %123 = sbr.rel (0) target = $region57
    $region56: #{cnn_forward.1} parent=1 // pred_region
      %124 = dma.done [#allocation9], 32768
    $region57: #{cnn_forward.1} parent=1 // pred_fallthru
      _
    // Predicated region
    $region58: #{cnn_forward.1} parent=1 // pred_check
      _
    $region59: #{cnn_forward.1} parent=1 // pred_check_branch
      %126 = sbr.rel (0) target = $region61
    $region60: #{cnn_forward.1} parent=1 // pred_region
      %127 = dma.done [#allocation12], 64
    $region61: #{cnn_forward.1} parent=1 // pred_fallthru
      _
    // Predicated region
    $region62: #{cnn_forward.1} parent=1 // pred_check
      _
    $region63: #{cnn_forward.1} parent=1 // pred_check_branch
      %129 = sbr.rel (0) target = $region65
    $region64: #{cnn_forward.1} parent=1 // pred_region
      %130 = dma.done [#allocation12], 4096
    $region65: #{cnn_forward.1} parent=1 // pred_fallthru
      _
    // Predicated region
    $region66: #{cnn_forward.1} parent=1 // pred_check
      _
    $region67: #{cnn_forward.1} parent=1 // pred_check_branch
      %132 = sbr.rel (0) target = $region69
    $region68: #{cnn_forward.1} parent=1 // pred_region
      %133 = dma.done [#allocation15], 16
    $region69: #{cnn_forward.1} parent=1 // pred_fallthru
      _
    %v135 = vld [vmem:[%s0] sm:$0xf]
    %v138 = vunpack.c.l.s4 1983009808
    %v139 = vunpack.c.0.s8 %v138
    %v140 = vlaneseq
    %v141 = vshrl.u32 %v140, 7
    %v142 = vsub.s32 %v139, %v141
    %v143 = vrot.slane %v135, %v142
    %v144 = vcombine.high %v143, %v143
    %v147 = vpack.c.bf16 %v143, %v143
    %v148 = vpack.c.bf16 %v144, %v144
    %v149 = vld [vmem:[#allocation2] sm:$0xff]
    %v150 = vld [vmem:[#allocation2 + $0x8] sm:$0xff]
    %v151 = vld [vmem:[#allocation2 + $0x10] sm:$0xff]
    %v152 = vld [vmem:[#allocation2 + $0x18] sm:$0xff]
    %v153 = vld [vmem:[#allocation2 + $0x20] sm:$0xff]
    %v154 = vld [vmem:[#allocation2 + $0x28] sm:$0xff]
    %v155 = vld [vmem:[#allocation2 + $0x30] sm:$0xff]
    %v156 = vld [vmem:[#allocation2 + $0x38] sm:$0xff]
    %v157 = vld [vmem:[#allocation2 + $0x40] sm:$0xff]
    %v158 = vld [vmem:[#allocation2 + $0x48] sm:$0xff]
    %v159 = vld [vmem:[#allocation2 + $0x50] sm:$0xff]
    %v160 = vld [vmem:[#allocation2 + $0x58] sm:$0xff]
    %v161 = vld [vmem:[#allocation2 + $0x60] sm:$0xff]
    %v162 = vld [vmem:[#allocation2 + $0x68] sm:$0xff]
    %v163 = vld [vmem:[#allocation2 + $0x70] sm:$0xff]
    %v164 = vld [vmem:[#allocation2 + $0x78] sm:$0xff]
    %v165 = vld [vmem:[#allocation2 + $0x80] sm:$0xff]
    %v166 = vld [vmem:[#allocation2 + $0x88] sm:$0xff]
    %v167 = vld [vmem:[#allocation2 + $0x90] sm:$0xff]
    %v168 = vld [vmem:[#allocation2 + $0x98] sm:$0xff]
    %v169 = vld [vmem:[#allocation2 + $0xa0] sm:$0xff]
    %v170 = vld [vmem:[#allocation2 + $0xa8] sm:$0xff]
    %v171 = vld [vmem:[#allocation2 + $0xb0] sm:$0xff]
    %v172 = vld [vmem:[#allocation2 + $0xb8] sm:$0xff]
    %v173 = vld [vmem:[#allocation2 + $0xc0] sm:$0xff]
    %v174 = vld [vmem:[#allocation2 + $0xc8] sm:$0xff]
    %v175 = vld [vmem:[#allocation2 + $0xd0] sm:$0xff]
    %v176 = vld [vmem:[#allocation2 + $0xd8] sm:$0xff]
    %v177 = vld [vmem:[#allocation2 + $0xe0] sm:$0xff]
    %v178 = vld [vmem:[#allocation2 + $0xe8] sm:$0xff]
    %v179 = vld [vmem:[#allocation2 + $0xf0] sm:$0xff]
    %v180 = vld [vmem:[#allocation2 + $0xf8] sm:$0xff]
    %v181 = vld [vmem:[#allocation2 + $0x100] sm:$0xff]
    %v182 = vld [vmem:[#allocation2 + $0x108] sm:$0xff]
    %v183 = vld [vmem:[#allocation2 + $0x110] sm:$0xff]
    %v184 = vld [vmem:[#allocation2 + $0x118] sm:$0xff]
    %v185 = vld [vmem:[#allocation2 + $0x120] sm:$0xff]
    %v186 = vld [vmem:[#allocation2 + $0x128] sm:$0xff]
    %v187 = vld [vmem:[#allocation2 + $0x130] sm:$0xff]
    %v188 = vld [vmem:[#allocation2 + $0x138] sm:$0xff]
    %v189 = vld [vmem:[#allocation2 + $0x140] sm:$0xff]
    %v190 = vld [vmem:[#allocation2 + $0x148] sm:$0xff]
    %v191 = vld [vmem:[#allocation2 + $0x150] sm:$0xff]
    %v192 = vld [vmem:[#allocation2 + $0x158] sm:$0xff]
    %v193 = vld [vmem:[#allocation2 + $0x160] sm:$0xff]
    %v194 = vld [vmem:[#allocation2 + $0x168] sm:$0xff]
    %v195 = vld [vmem:[#allocation2 + $0x170] sm:$0xff]
    %v196 = vld [vmem:[#allocation2 + $0x178] sm:$0xff]
    %v197 = vld [vmem:[#allocation2 + $0x180] sm:$0xff]
    %v198 = vld [vmem:[#allocation2 + $0x188] sm:$0xff]
    %v199 = vld [vmem:[#allocation2 + $0x190] sm:$0xff]
    %v200 = vld [vmem:[#allocation2 + $0x198] sm:$0xff]
    %v201 = vld [vmem:[#allocation2 + $0x1a0] sm:$0xff]
    %v202 = vld [vmem:[#allocation2 + $0x1a8] sm:$0xff]
    %v203 = vld [vmem:[#allocation2 + $0x1b0] sm:$0xff]
    %v204 = vld [vmem:[#allocation2 + $0x1b8] sm:$0xff]
    %v205 = vld [vmem:[#allocation2 + $0x1c0] sm:$0xff]
    %v206 = vld [vmem:[#allocation2 + $0x1c8] sm:$0xff]
    %v207 = vld [vmem:[#allocation2 + $0x1d0] sm:$0xff]
    %v208 = vld [vmem:[#allocation2 + $0x1d8] sm:$0xff]
    %v209 = vld [vmem:[#allocation2 + $0x1e0] sm:$0xff]
    %v210 = vld [vmem:[#allocation2 + $0x1e8] sm:$0xff]
    %v211 = vld [vmem:[#allocation2 + $0x1f0] sm:$0xff]
    %v212 = vld [vmem:[#allocation2 + $0x1f8] sm:$0xff]
    %v213 = vld [vmem:[#allocation2 + $0x200] sm:$0xff]
    %v214 = vld [vmem:[#allocation2 + $0x208] sm:$0xff]
    %v215 = vld [vmem:[#allocation2 + $0x210] sm:$0xff]
    %v216 = vld [vmem:[#allocation2 + $0x218] sm:$0xff]
    %v217 = vld [vmem:[#allocation2 + $0x220] sm:$0xff]
    %v218 = vld [vmem:[#allocation2 + $0x228] sm:$0xff]
    %v219 = vld [vmem:[#allocation2 + $0x230] sm:$0xff]
    %v220 = vld [vmem:[#allocation2 + $0x238] sm:$0xff]
    %v221 = vld [vmem:[#allocation2 + $0x240] sm:$0xff]
    %v222 = vld [vmem:[#allocation2 + $0x248] sm:$0xff]
    %v223 = vld [vmem:[#allocation2 + $0x250] sm:$0xff]
    %v224 = vld [vmem:[#allocation2 + $0x258] sm:$0xff]
    %v225 = vld [vmem:[#allocation2 + $0x260] sm:$0xff]
    %v226 = vld [vmem:[#allocation2 + $0x268] sm:$0xff]
    %v227 = vld [vmem:[#allocation2 + $0x270] sm:$0xff]
    %v228 = vld [vmem:[#allocation2 + $0x278] sm:$0xff]
    %v229 = vld [vmem:[#allocation2 + $0x280] sm:$0xff]
    %v230 = vld [vmem:[#allocation2 + $0x288] sm:$0xff]
    %v231 = vld [vmem:[#allocation2 + $0x290] sm:$0xff]
    %v232 = vld [vmem:[#allocation2 + $0x298] sm:$0xff]
    %v233 = vld [vmem:[#allocation2 + $0x2a0] sm:$0xff]
    %v234 = vld [vmem:[#allocation2 + $0x2a8] sm:$0xff]
    %v235 = vld [vmem:[#allocation2 + $0x2b0] sm:$0xff]
    %v236 = vld [vmem:[#allocation2 + $0x2b8] sm:$0xff]
    %v237 = vld [vmem:[#allocation2 + $0x2c0] sm:$0xff]
    %v238 = vld [vmem:[#allocation2 + $0x2c8] sm:$0xff]
    %v239 = vld [vmem:[#allocation5] sm:$0xff]
    %v240 = vld [vmem:[#allocation5 + $0x8] sm:$0x3]
    %v243 = vlaneseq
    %v244 = vshrl.u32 %v243, 7
    %v245 = vsub.s32 0, %v244
    %v246 = vrot.slane %v239, %v245
    %v247 = vlaneseq
    %v248 = vshrl.u32 %v247, 7
    %v249 = vsub.s32 1, %v248
    %v250 = vrot.slane %v239, %v249
    %v251 = vlaneseq
    %v252 = vshrl.u32 %v251, 7
    %v253 = vsub.s32 2, %v252
    %v254 = vrot.slane %v239, %v253
    %v255 = vlaneseq
    %v256 = vshrl.u32 %v255, 7
    %v257 = vsub.s32 3, %v256
    %v258 = vrot.slane %v239, %v257
    %v259 = vlaneseq
    %v260 = vshrl.u32 %v259, 7
    %v261 = vsub.s32 4, %v260
    %v262 = vrot.slane %v239, %v261
    %v263 = vlaneseq
    %v264 = vshrl.u32 %v263, 7
    %v265 = vsub.s32 5, %v264
    %v266 = vrot.slane %v239, %v265
    %v267 = vlaneseq
    %v268 = vshrl.u32 %v267, 7
    %v269 = vsub.s32 6, %v268
    %v270 = vrot.slane %v239, %v269
    %v271 = vlaneseq
    %v272 = vshrl.u32 %v271, 7
    %v273 = vsub.s32 7, %v272
    %v274 = vrot.slane %v239, %v273
    %v275 = vlaneseq
    %v276 = vshrl.u32 %v275, 7
    %v277 = vsub.s32 0, %v276
    %v278 = vrot.slane %v240, %v277
    %v279 = vlaneseq
    %v280 = vshrl.u32 %v279, 7
    %v281 = vsub.s32 1, %v280
    %v282 = vrot.slane %v240, %v281
    %v383 = vunpack.c.l.b16 %v149
    %v384 = vunpack.c.h.b16 %v149
    %v385 = vunpack.c.l.b16 %v150
    %v386 = vunpack.c.h.b16 %v150
    %v387 = vunpack.c.l.b16 %v151
    %v388 = vunpack.c.h.b16 %v151
    %v389 = vunpack.c.l.b16 %v152
    %v390 = vunpack.c.h.b16 %v152
    %v391 = vunpack.c.l.b16 %v153
    %v392 = vunpack.c.h.b16 %v153
    %v393 = vunpack.c.l.b16 %v154
    %v394 = vunpack.c.h.b16 %v154
    %v395 = vunpack.c.l.b16 %v155
    %v396 = vunpack.c.h.b16 %v155
    %v397 = vunpack.c.l.b16 %v156
    %v398 = vunpack.c.h.b16 %v156
    %v399 = vunpack.c.l.b16 %v157
    %v400 = vunpack.c.h.b16 %v157
    %v401 = vunpack.c.l.b16 %v158
    %v402 = vunpack.c.h.b16 %v158
    %v403 = vunpack.c.l.b16 %v159
    %v404 = vunpack.c.h.b16 %v159
    %v405 = vunpack.c.l.b16 %v160
    %v406 = vunpack.c.h.b16 %v160
    %v407 = vunpack.c.l.b16 %v161
    %v408 = vunpack.c.h.b16 %v161
    %v409 = vunpack.c.l.b16 %v162
    %v410 = vunpack.c.h.b16 %v162
    %v411 = vunpack.c.l.b16 %v163
    %v412 = vunpack.c.h.b16 %v163
    %v413 = vunpack.c.l.b16 %v164
    %v414 = vunpack.c.h.b16 %v164
    %v415 = vunpack.c.l.b16 %v165
    %v416 = vunpack.c.h.b16 %v165
    %v417 = vunpack.c.l.b16 %v166
    %v418 = vunpack.c.h.b16 %v166
    %v419 = vunpack.c.l.b16 %v167
    %v420 = vunpack.c.h.b16 %v167
    %v421 = vunpack.c.l.b16 %v168
    %v422 = vunpack.c.h.b16 %v168
    %v423 = vunpack.c.l.b16 %v169
    %v424 = vunpack.c.h.b16 %v169
    %v425 = vunpack.c.l.b16 %v170
    %v426 = vunpack.c.h.b16 %v170
    %v427 = vunpack.c.l.b16 %v171
    %v428 = vunpack.c.h.b16 %v171
    %v429 = vunpack.c.l.b16 %v172
    %v430 = vunpack.c.h.b16 %v172
    %v431 = vunpack.c.l.b16 %v173
    %v432 = vunpack.c.h.b16 %v173
    %v433 = vunpack.c.l.b16 %v174
    %v434 = vunpack.c.h.b16 %v174
    %v435 = vunpack.c.l.b16 %v175
    %v436 = vunpack.c.h.b16 %v175
    %v437 = vunpack.c.l.b16 %v176
    %v438 = vunpack.c.h.b16 %v176
    %v439 = vunpack.c.l.b16 %v177
    %v440 = vunpack.c.h.b16 %v177
    %v441 = vunpack.c.l.b16 %v178
    %v442 = vunpack.c.h.b16 %v178
    %v443 = vunpack.c.l.b16 %v179
    %v444 = vunpack.c.h.b16 %v179
    %v445 = vunpack.c.l.b16 %v180
    %v446 = vunpack.c.h.b16 %v180
    %v447 = vunpack.c.l.b16 %v181
    %v448 = vunpack.c.h.b16 %v181
    %v449 = vunpack.c.l.b16 %v182
    %v450 = vunpack.c.h.b16 %v182
    %v451 = vunpack.c.l.b16 %v183
    %v452 = vunpack.c.h.b16 %v183
    %v453 = vunpack.c.l.b16 %v184
    %v454 = vunpack.c.h.b16 %v184
    %v455 = vunpack.c.l.b16 %v185
    %v456 = vunpack.c.h.b16 %v185
    %v457 = vunpack.c.l.b16 %v186
    %v458 = vunpack.c.h.b16 %v186
    %v459 = vunpack.c.l.b16 %v187
    %v460 = vunpack.c.h.b16 %v187
    %v461 = vunpack.c.l.b16 %v188
    %v462 = vunpack.c.h.b16 %v188
    %v463 = vunpack.c.l.b16 %v189
    %v464 = vunpack.c.h.b16 %v189
    %v465 = vunpack.c.l.b16 %v190
    %v466 = vunpack.c.h.b16 %v190
    %v467 = vunpack.c.l.b16 %v191
    %v468 = vunpack.c.h.b16 %v191
    %v469 = vunpack.c.l.b16 %v192
    %v470 = vunpack.c.h.b16 %v192
    %v471 = vunpack.c.l.b16 %v193
    %v472 = vunpack.c.h.b16 %v193
    %v473 = vunpack.c.l.b16 %v194
    %v474 = vunpack.c.h.b16 %v194
    %v475 = vunpack.c.l.b16 %v195
    %v476 = vunpack.c.h.b16 %v195
    %v477 = vunpack.c.l.b16 %v196
    %v478 = vunpack.c.h.b16 %v196
    %v479 = vunpack.c.l.b16 %v197
    %v480 = vunpack.c.h.b16 %v197
    %v481 = vunpack.c.l.b16 %v198
    %v482 = vunpack.c.h.b16 %v198
    %v483 = vunpack.c.l.b16 %v199
    %v484 = vunpack.c.h.b16 %v199
    %v485 = vunpack.c.l.b16 %v200
    %v486 = vunpack.c.h.b16 %v200
    %v487 = vunpack.c.l.b16 %v201
    %v488 = vunpack.c.h.b16 %v201
    %v489 = vunpack.c.l.b16 %v202
    %v490 = vunpack.c.h.b16 %v202
    %v491 = vunpack.c.l.b16 %v203
    %v492 = vunpack.c.h.b16 %v203
    %v493 = vunpack.c.l.b16 %v204
    %v494 = vunpack.c.h.b16 %v204
    %v495 = vunpack.c.l.b16 %v205
    %v496 = vunpack.c.h.b16 %v205
    %v497 = vunpack.c.l.b16 %v206
    %v498 = vunpack.c.h.b16 %v206
    %v499 = vunpack.c.l.b16 %v207
    %v500 = vunpack.c.h.b16 %v207
    %v501 = vunpack.c.l.b16 %v208
    %v502 = vunpack.c.h.b16 %v208
    %v503 = vunpack.c.l.b16 %v209
    %v504 = vunpack.c.h.b16 %v209
    %v505 = vunpack.c.l.b16 %v210
    %v506 = vunpack.c.h.b16 %v210
    %v507 = vunpack.c.l.b16 %v211
    %v508 = vunpack.c.h.b16 %v211
    %v509 = vunpack.c.l.b16 %v212
    %v510 = vunpack.c.h.b16 %v212
    %v511 = vunpack.c.l.b16 %v213
    %v512 = vunpack.c.h.b16 %v213
    %v513 = vunpack.c.l.b16 %v214
    %v514 = vunpack.c.h.b16 %v214
    %v515 = vunpack.c.l.b16 %v215
    %v516 = vunpack.c.h.b16 %v215
    %v517 = vunpack.c.l.b16 %v216
    %v518 = vunpack.c.h.b16 %v216
    %v519 = vunpack.c.l.b16 %v217
    %v520 = vunpack.c.h.b16 %v217
    %v521 = vunpack.c.l.b16 %v218
    %v522 = vunpack.c.h.b16 %v218
    %v523 = vunpack.c.l.b16 %v219
    %v524 = vunpack.c.h.b16 %v219
    %v525 = vunpack.c.l.b16 %v220
    %v526 = vunpack.c.h.b16 %v220
    %v527 = vunpack.c.l.b16 %v221
    %v528 = vunpack.c.h.b16 %v221
    %v529 = vunpack.c.l.b16 %v222
    %v530 = vunpack.c.h.b16 %v222
    %v531 = vunpack.c.l.b16 %v223
    %v532 = vunpack.c.h.b16 %v223
    %v533 = vunpack.c.l.b16 %v224
    %v534 = vunpack.c.h.b16 %v224
    %v535 = vunpack.c.l.b16 %v225
    %v536 = vunpack.c.h.b16 %v225
    %v537 = vunpack.c.l.b16 %v226
    %v538 = vunpack.c.h.b16 %v226
    %v539 = vunpack.c.l.b16 %v227
    %v540 = vunpack.c.h.b16 %v227
    %v541 = vunpack.c.l.b16 %v228
    %v542 = vunpack.c.h.b16 %v228
    %v543 = vunpack.c.l.b16 %v229
    %v544 = vunpack.c.h.b16 %v229
    %v545 = vunpack.c.l.b16 %v230
    %v546 = vunpack.c.h.b16 %v230
    %v547 = vunpack.c.l.b16 %v231
    %v548 = vunpack.c.h.b16 %v231
    %v549 = vunpack.c.l.b16 %v232
    %v550 = vunpack.c.h.b16 %v232
    %v551 = vunpack.c.l.b16 %v233
    %v552 = vunpack.c.h.b16 %v233
    %v553 = vunpack.c.l.b16 %v234
    %v554 = vunpack.c.h.b16 %v234
    %v555 = vunpack.c.l.b16 %v235
    %v556 = vunpack.c.h.b16 %v235
    %v557 = vunpack.c.l.b16 %v236
    %v558 = vunpack.c.h.b16 %v236
    %v559 = vunpack.c.l.b16 %v237
    %v560 = vunpack.c.h.b16 %v237
    %v561 = vunpack.c.l.b16 %v238
    %v562 = vunpack.c.h.b16 %v238
    %v563 = vpack.c.b16 %v393, %v383
    %v564 = vpack.c.b16 %v394, %v384
    %v565 = vpack.c.b16 %v395, %v385
    %v566 = vpack.c.b16 %v396, %v386
    %v567 = vpack.c.b16 %v397, %v387
    %v568 = vpack.c.b16 %v398, %v388
    %v569 = vpack.c.b16 %v399, %v389
    %v570 = vpack.c.b16 %v400, %v390
    %v571 = vpack.c.b16 %v401, %v391
    %v572 = vpack.c.b16 %v402, %v392
    %v573 = vpack.c.b16 %v413, %v403
    %v574 = vpack.c.b16 %v414, %v404
    %v575 = vpack.c.b16 %v415, %v405
    %v576 = vpack.c.b16 %v416, %v406
    %v577 = vpack.c.b16 %v417, %v407
    %v578 = vpack.c.b16 %v418, %v408
    %v579 = vpack.c.b16 %v419, %v409
    %v580 = vpack.c.b16 %v420, %v410
    %v581 = vpack.c.b16 %v421, %v411
    %v582 = vpack.c.b16 %v422, %v412
    %v583 = vpack.c.b16 %v433, %v423
    %v584 = vpack.c.b16 %v434, %v424
    %v585 = vpack.c.b16 %v435, %v425
    %v586 = vpack.c.b16 %v436, %v426
    %v587 = vpack.c.b16 %v437, %v427
    %v588 = vpack.c.b16 %v438, %v428
    %v589 = vpack.c.b16 %v439, %v429
    %v590 = vpack.c.b16 %v440, %v430
    %v591 = vpack.c.b16 %v441, %v431
    %v592 = vpack.c.b16 %v442, %v432
    %v593 = vpack.c.b16 %v453, %v443
    %v594 = vpack.c.b16 %v454, %v444
    %v595 = vpack.c.b16 %v455, %v445
    %v596 = vpack.c.b16 %v456, %v446
    %v597 = vpack.c.b16 %v457, %v447
    %v598 = vpack.c.b16 %v458, %v448
    %v599 = vpack.c.b16 %v459, %v449
    %v600 = vpack.c.b16 %v460, %v450
    %v601 = vpack.c.b16 %v461, %v451
    %v602 = vpack.c.b16 %v462, %v452
    %v603 = vpack.c.b16 %v473, %v463
    %v604 = vpack.c.b16 %v474, %v464
    %v605 = vpack.c.b16 %v475, %v465
    %v606 = vpack.c.b16 %v476, %v466
    %v607 = vpack.c.b16 %v477, %v467
    %v608 = vpack.c.b16 %v478, %v468
    %v609 = vpack.c.b16 %v479, %v469
    %v610 = vpack.c.b16 %v480, %v470
    %v611 = vpack.c.b16 %v481, %v471
    %v612 = vpack.c.b16 %v482, %v472
    %v613 = vpack.c.b16 %v493, %v483
    %v614 = vpack.c.b16 %v494, %v484
    %v615 = vpack.c.b16 %v495, %v485
    %v616 = vpack.c.b16 %v496, %v486
    %v617 = vpack.c.b16 %v497, %v487
    %v618 = vpack.c.b16 %v498, %v488
    %v619 = vpack.c.b16 %v499, %v489
    %v620 = vpack.c.b16 %v500, %v490
    %v621 = vpack.c.b16 %v501, %v491
    %v622 = vpack.c.b16 %v502, %v492
    %v623 = vpack.c.b16 %v513, %v503
    %v624 = vpack.c.b16 %v514, %v504
    %v625 = vpack.c.b16 %v515, %v505
    %v626 = vpack.c.b16 %v516, %v506
    %v627 = vpack.c.b16 %v517, %v507
    %v628 = vpack.c.b16 %v518, %v508
    %v629 = vpack.c.b16 %v519, %v509
    %v630 = vpack.c.b16 %v520, %v510
    %v631 = vpack.c.b16 %v521, %v511
    %v632 = vpack.c.b16 %v522, %v512
    %v633 = vpack.c.b16 %v533, %v523
    %v634 = vpack.c.b16 %v534, %v524
    %v635 = vpack.c.b16 %v535, %v525
    %v636 = vpack.c.b16 %v536, %v526
    %v637 = vpack.c.b16 %v537, %v527
    %v638 = vpack.c.b16 %v538, %v528
    %v639 = vpack.c.b16 %v539, %v529
    %v640 = vpack.c.b16 %v540, %v530
    %v641 = vpack.c.b16 %v541, %v531
    %v642 = vpack.c.b16 %v542, %v532
    %v643 = vpack.c.b16 %v553, %v543
    %v644 = vpack.c.b16 %v554, %v544
    %v645 = vpack.c.b16 %v555, %v545
    %v646 = vpack.c.b16 %v556, %v546
    %v647 = vpack.c.b16 %v557, %v547
    %v648 = vpack.c.b16 %v558, %v548
    %v649 = vpack.c.b16 %v559, %v549
    %v650 = vpack.c.b16 %v560, %v550
    %v651 = vpack.c.b16 %v561, %v551
    %v652 = vpack.c.b16 %v562, %v552
    %vm743 = vcmask 130048
    %v745 = vsel %vm743, %v148, 0
    %747 = vmatprep.subr.bf16.mxu0 %v634
    %748 = vmatpush1.bf16.msra.mxu0 %v633
    %749 = vmatprep.subr.bf16.mxu0 %v624
    %750 = vmatpush1.bf16.msra.mxu0 %v623
    %751 = vmatprep.subr.bf16.mxu0 %v614
    %752 = vmatpush1.bf16.msra.mxu0 %v613
    %753 = vmatprep.subr.bf16.mxu0 %v604
    %754 = vmatpush1.bf16.msra.mxu0 %v603
    %755 = vmatprep.subr.bf16.mxu0 %v594
    %756 = vmatpush1.bf16.msra.mxu0 %v593
    %757 = vmatprep.subr.bf16.mxu0 %v584
    %758 = vmatpush1.bf16.msra.mxu0 %v583
    %759 = vmatprep.subr.bf16.mxu0 %v574
    %760 = vmatpush1.bf16.msra.mxu0 %v573
    %761 = vmatprep.subr.bf16.mxu0 %v564
    %762 = vmatpush1.bf16.msra.mxu0 %v563
    %763 = vmatprep.subr.bf16.mxu0 0
    %764 = vmatpush2.bf16.msra.mxu0 0
    %765 = vmatprep.subr.bf16.mxu0 0
    %766 = vmatpush2.bf16.msra.mxu0 0
    %767 = vmatprep.subr.bf16.mxu0 0
    %768 = vmatpush2.bf16.msra.mxu0 0
    %769 = vmatprep.subr.bf16.mxu0 0
    %770 = vmatpush2.bf16.msra.mxu0 0
    %771 = vmatprep.subr.bf16.mxu0 0
    %772 = vmatpush2.bf16.msra.mxu0 0
    %773 = vmatprep.subr.bf16.mxu0 0
    %774 = vmatpush2.bf16.msra.mxu0 0
    %775 = vmatprep.subr.bf16.mxu0 0
    %776 = vmatpush2.bf16.msra.mxu0 0
    %777 = vmatprep.subr.bf16.mxu0 %v644
    %778 = vmatpush2.bf16.msra.mxu0 %v643
    %779 = vmatprep.mubr.bf16.mxu0 %v745
    %780 = vmatmul.mubr.bf16.gmra.mxu0 %v147
    %v781 = vpop.f32.mrf.mxu0
    %v782 = vadd.f32 %v246, %v781
    %v783 = vpop.f32.mrf.mxu0
    %v784 = vadd.f32 %v250, %v783
    %v785 = vpop.f32.mrf.mxu0
    %v786 = vpop.f32.mrf.mxu0
    %787 = vdwg.mxu0
    %788 = vmatprep.subr.bf16.mxu0 %v636
    %789 = vmatpush1.bf16.msra.mxu0 %v635
    %790 = vmatprep.subr.bf16.mxu0 %v626
    %791 = vmatpush1.bf16.msra.mxu0 %v625
    %792 = vmatprep.subr.bf16.mxu0 %v616
    %793 = vmatpush1.bf16.msra.mxu0 %v615
    %794 = vmatprep.subr.bf16.mxu0 %v606
    %795 = vmatpush1.bf16.msra.mxu0 %v605
    %796 = vmatprep.subr.bf16.mxu0 %v596
    %797 = vmatpush1.bf16.msra.mxu0 %v595
    %798 = vmatprep.subr.bf16.mxu0 %v586
    %799 = vmatpush1.bf16.msra.mxu0 %v585
    %800 = vmatprep.subr.bf16.mxu0 %v576
    %801 = vmatpush1.bf16.msra.mxu0 %v575
    %802 = vmatprep.subr.bf16.mxu0 %v566
    %803 = vmatpush1.bf16.msra.mxu0 %v565
    %804 = vmatprep.subr.bf16.mxu0 0
    %805 = vmatpush2.bf16.msra.mxu0 0
    %806 = vmatprep.subr.bf16.mxu0 0
    %807 = vmatpush2.bf16.msra.mxu0 0
    %808 = vmatprep.subr.bf16.mxu0 0
    %809 = vmatpush2.bf16.msra.mxu0 0
    %810 = vmatprep.subr.bf16.mxu0 0
    %811 = vmatpush2.bf16.msra.mxu0 0
    %812 = vmatprep.subr.bf16.mxu0 0
    %813 = vmatpush2.bf16.msra.mxu0 0
    %814 = vmatprep.subr.bf16.mxu0 0
    %815 = vmatpush2.bf16.msra.mxu0 0
    %816 = vmatprep.subr.bf16.mxu0 0
    %817 = vmatpush2.bf16.msra.mxu0 0
    %818 = vmatprep.subr.bf16.mxu0 %v646
    %819 = vmatpush2.bf16.msra.mxu0 %v645
    %820 = vmatprep.mubr.bf16.mxu0 %v745
    %821 = vmatmul.mubr.bf16.gmra.mxu0 %v147
    %v822 = vpop.f32.mrf.mxu0
    %v823 = vadd.f32 %v254, %v822
    %v824 = vpop.f32.mrf.mxu0
    %v825 = vadd.f32 %v258, %v824
    %v826 = vpop.f32.mrf.mxu0
    %v827 = vpop.f32.mrf.mxu0
    %828 = vdwg.mxu0
    %829 = vmatprep.subr.bf16.mxu0 %v638
    %830 = vmatpush1.bf16.msra.mxu0 %v637
    %831 = vmatprep.subr.bf16.mxu0 %v628
    %832 = vmatpush1.bf16.msra.mxu0 %v627
    %833 = vmatprep.subr.bf16.mxu0 %v618
    %834 = vmatpush1.bf16.msra.mxu0 %v617
    %835 = vmatprep.subr.bf16.mxu0 %v608
    %836 = vmatpush1.bf16.msra.mxu0 %v607
    %837 = vmatprep.subr.bf16.mxu0 %v598
    %838 = vmatpush1.bf16.msra.mxu0 %v597
    %839 = vmatprep.subr.bf16.mxu0 %v588
    %840 = vmatpush1.bf16.msra.mxu0 %v587
    %841 = vmatprep.subr.bf16.mxu0 %v578
    %842 = vmatpush1.bf16.msra.mxu0 %v577
    %843 = vmatprep.subr.bf16.mxu0 %v568
    %844 = vmatpush1.bf16.msra.mxu0 %v567
    %845 = vmatprep.subr.bf16.mxu0 0
    %846 = vmatpush2.bf16.msra.mxu0 0
    %847 = vmatprep.subr.bf16.mxu0 0
    %848 = vmatpush2.bf16.msra.mxu0 0
    %849 = vmatprep.subr.bf16.mxu0 0
    %850 = vmatpush2.bf16.msra.mxu0 0
    %851 = vmatprep.subr.bf16.mxu0 0
    %852 = vmatpush2.bf16.msra.mxu0 0
    %853 = vmatprep.subr.bf16.mxu0 0
    %854 = vmatpush2.bf16.msra.mxu0 0
    %855 = vmatprep.subr.bf16.mxu0 0
    %856 = vmatpush2.bf16.msra.mxu0 0
    %857 = vmatprep.subr.bf16.mxu0 0
    %858 = vmatpush2.bf16.msra.mxu0 0
    %859 = vmatprep.subr.bf16.mxu0 %v648
    %860 = vmatpush2.bf16.msra.mxu0 %v647
    %861 = vmatprep.mubr.bf16.mxu0 %v745
    %862 = vmatmul.mubr.bf16.gmra.mxu0 %v147
    %v863 = vpop.f32.mrf.mxu0
    %v864 = vadd.f32 %v262, %v863
    %v865 = vpop.f32.mrf.mxu0
    %v866 = vadd.f32 %v266, %v865
    %v867 = vpop.f32.mrf.mxu0
    %v868 = vpop.f32.mrf.mxu0
    %869 = vdwg.mxu0
    %870 = vmatprep.subr.bf16.mxu0 %v640
    %871 = vmatpush1.bf16.msra.mxu0 %v639
    %872 = vmatprep.subr.bf16.mxu0 %v630
    %873 = vmatpush1.bf16.msra.mxu0 %v629
    %874 = vmatprep.subr.bf16.mxu0 %v620
    %875 = vmatpush1.bf16.msra.mxu0 %v619
    %876 = vmatprep.subr.bf16.mxu0 %v610
    %877 = vmatpush1.bf16.msra.mxu0 %v609
    %878 = vmatprep.subr.bf16.mxu0 %v600
    %879 = vmatpush1.bf16.msra.mxu0 %v599
    %880 = vmatprep.subr.bf16.mxu0 %v590
    %881 = vmatpush1.bf16.msra.mxu0 %v589
    %882 = vmatprep.subr.bf16.mxu0 %v580
    %883 = vmatpush1.bf16.msra.mxu0 %v579
    %884 = vmatprep.subr.bf16.mxu0 %v570
    %885 = vmatpush1.bf16.msra.mxu0 %v569
    %886 = vmatprep.subr.bf16.mxu0 0
    %887 = vmatpush2.bf16.msra.mxu0 0
    %888 = vmatprep.subr.bf16.mxu0 0
    %889 = vmatpush2.bf16.msra.mxu0 0
    %890 = vmatprep.subr.bf16.mxu0 0
    %891 = vmatpush2.bf16.msra.mxu0 0
    %892 = vmatprep.subr.bf16.mxu0 0
    %893 = vmatpush2.bf16.msra.mxu0 0
    %894 = vmatprep.subr.bf16.mxu0 0
    %895 = vmatpush2.bf16.msra.mxu0 0
    %896 = vmatprep.subr.bf16.mxu0 0
    %897 = vmatpush2.bf16.msra.mxu0 0
    %898 = vmatprep.subr.bf16.mxu0 0
    %899 = vmatpush2.bf16.msra.mxu0 0
    %900 = vmatprep.subr.bf16.mxu0 %v650
    %901 = vmatpush2.bf16.msra.mxu0 %v649
    %902 = vmatprep.mubr.bf16.mxu0 %v745
    %903 = vmatmul.mubr.bf16.gmra.mxu0 %v147
    %v904 = vpop.f32.mrf.mxu0
    %v905 = vadd.f32 %v270, %v904
    %v906 = vpop.f32.mrf.mxu0
    %v907 = vadd.f32 %v274, %v906
    %v908 = vpop.f32.mrf.mxu0
    %v909 = vpop.f32.mrf.mxu0
    %910 = vdwg.mxu0
    %911 = vmatprep.subr.bf16.mxu0 %v642
    %912 = vmatpush1.bf16.msra.mxu0 %v641
    %913 = vmatprep.subr.bf16.mxu0 %v632
    %914 = vmatpush1.bf16.msra.mxu0 %v631
    %915 = vmatprep.subr.bf16.mxu0 %v622
    %916 = vmatpush1.bf16.msra.mxu0 %v621
    %917 = vmatprep.subr.bf16.mxu0 %v612
    %918 = vmatpush1.bf16.msra.mxu0 %v611
    %919 = vmatprep.subr.bf16.mxu0 %v602
    %920 = vmatpush1.bf16.msra.mxu0 %v601
    %921 = vmatprep.subr.bf16.mxu0 %v592
    %922 = vmatpush1.bf16.msra.mxu0 %v591
    %923 = vmatprep.subr.bf16.mxu0 %v582
    %924 = vmatpush1.bf16.msra.mxu0 %v581
    %925 = vmatprep.subr.bf16.mxu0 %v572
    %926 = vmatpush1.bf16.msra.mxu0 %v571
    %927 = vmatprep.subr.bf16.mxu0 0
    %928 = vmatpush2.bf16.msra.mxu0 0
    %929 = vmatprep.subr.bf16.mxu0 0
    %930 = vmatpush2.bf16.msra.mxu0 0
    %931 = vmatprep.subr.bf16.mxu0 0
    %932 = vmatpush2.bf16.msra.mxu0 0
    %933 = vmatprep.subr.bf16.mxu0 0
    %934 = vmatpush2.bf16.msra.mxu0 0
    %935 = vmatprep.subr.bf16.mxu0 0
    %936 = vmatpush2.bf16.msra.mxu0 0
    %937 = vmatprep.subr.bf16.mxu0 0
    %938 = vmatpush2.bf16.msra.mxu0 0
    %939 = vmatprep.subr.bf16.mxu0 0
    %940 = vmatpush2.bf16.msra.mxu0 0
    %941 = vmatprep.subr.bf16.mxu0 %v652
    %942 = vmatpush2.bf16.msra.mxu0 %v651
    %943 = vmatprep.mubr.bf16.mxu0 %v745
    %944 = vmatmul.mubr.bf16.gmra.mxu0 %v147
    %v945 = vpop.f32.mrf.mxu0
    %v946 = vadd.f32 %v278, %v945
    %v947 = vpop.f32.mrf.mxu0
    %v948 = vadd.f32 %v282, %v947
    %v949 = vpop.f32.mrf.mxu0
    %v950 = vpop.f32.mrf.mxu0
    %951 = vdwg.mxu0
    %v952 = vmax.f32 %v782, 0.0
    %v953 = vmax.f32 %v784, 0.0
    %v954 = vmax.f32 %v823, 0.0
    %v955 = vmax.f32 %v825, 0.0
    %v956 = vmax.f32 %v864, 0.0
    %v957 = vmax.f32 %v866, 0.0
    %v958 = vmax.f32 %v905, 0.0
    %v959 = vmax.f32 %v907, 0.0
    %v960 = vmax.f32 %v946, 0.0
    %v961 = vmax.f32 %v948, 0.0
    %v962 = vpack.c.bf16 %v952, %v952
    %v963 = vpack.c.bf16 %v953, %v953
    %v964 = vpack.c.bf16 %v954, %v954
    %v965 = vpack.c.bf16 %v955, %v955
    %v966 = vpack.c.bf16 %v956, %v956
    %v967 = vpack.c.bf16 %v957, %v957
    %v968 = vpack.c.bf16 %v958, %v958
    %v969 = vpack.c.bf16 %v959, %v959
    %v970 = vpack.c.bf16 %v960, %v960
    %v971 = vpack.c.bf16 %v961, %v961
    %v972 = vld [vmem:[#allocation7] sm:$0xff]
    %v973 = vld [vmem:[#allocation7 + $0x8] sm:$0xff]
    %v974 = vld [vmem:[#allocation7 + $0x10] sm:$0xff]
    %v975 = vld [vmem:[#allocation7 + $0x18] sm:$0xff]
    %v976 = vld [vmem:[#allocation7 + $0x20] sm:$0xff]
    %v977 = vld [vmem:[#allocation7 + $0x28] sm:$0xff]
    %v978 = vld [vmem:[#allocation7 + $0x30] sm:$0xff]
    %v979 = vld [vmem:[#allocation7 + $0x38] sm:$0xff]
    %v980 = vld [vmem:[#allocation7 + $0x40] sm:$0xff]
    %v981 = vld [vmem:[#allocation7 + $0x48] sm:$0xff]
    %v982 = vld [vmem:[#allocation7 + $0x50] sm:$0xff]
    %v983 = vld [vmem:[#allocation7 + $0x58] sm:$0xff]
    %v984 = vld [vmem:[#allocation7 + $0x60] sm:$0xff]
    %v985 = vld [vmem:[#allocation7 + $0x68] sm:$0xff]
    %v986 = vld [vmem:[#allocation7 + $0x70] sm:$0xff]
    %v987 = vld [vmem:[#allocation7 + $0x78] sm:$0xff]
    %v988 = vld [vmem:[#allocation7 + $0x80] sm:$0xff]
    %v989 = vld [vmem:[#allocation7 + $0x88] sm:$0xff]
    %v990 = vld [vmem:[#allocation7 + $0x90] sm:$0xff]
    %v991 = vld [vmem:[#allocation7 + $0x98] sm:$0xff]
    %v992 = vld [vmem:[#allocation7 + $0xa0] sm:$0xff]
    %v993 = vld [vmem:[#allocation7 + $0xa8] sm:$0xff]
    %v994 = vld [vmem:[#allocation7 + $0xb0] sm:$0xff]
    %v995 = vld [vmem:[#allocation7 + $0xb8] sm:$0xff]
    %v996 = vld [vmem:[#allocation7 + $0xc0] sm:$0xff]
    %v997 = vld [vmem:[#allocation7 + $0xc8] sm:$0xff]
    %v998 = vld [vmem:[#allocation7 + $0xd0] sm:$0xff]
    %v999 = vld [vmem:[#allocation7 + $0xd8] sm:$0xff]
    %v1000 = vld [vmem:[#allocation7 + $0xe0] sm:$0xff]
    %v1001 = vld [vmem:[#allocation7 + $0xe8] sm:$0xff]
    %v1002 = vld [vmem:[#allocation7 + $0xf0] sm:$0xff]
    %v1003 = vld [vmem:[#allocation7 + $0xf8] sm:$0xff]
    %v1004 = vld [vmem:[#allocation7 + $0x100] sm:$0xff]
    %v1005 = vld [vmem:[#allocation7 + $0x108] sm:$0xff]
    %v1006 = vld [vmem:[#allocation7 + $0x110] sm:$0xff]
    %v1007 = vld [vmem:[#allocation7 + $0x118] sm:$0xff]
    %v1008 = vld [vmem:[#allocation7 + $0x120] sm:$0xff]
    %v1009 = vld [vmem:[#allocation7 + $0x128] sm:$0xff]
    %v1010 = vld [vmem:[#allocation7 + $0x130] sm:$0xff]
    %v1011 = vld [vmem:[#allocation7 + $0x138] sm:$0xff]
    %v1012 = vld [vmem:[#allocation7 + $0x140] sm:$0xff]
    %v1013 = vld [vmem:[#allocation7 + $0x148] sm:$0xff]
    %v1014 = vld [vmem:[#allocation7 + $0x150] sm:$0xff]
    %v1015 = vld [vmem:[#allocation7 + $0x158] sm:$0xff]
    %v1016 = vld [vmem:[#allocation7 + $0x160] sm:$0xff]
    %v1017 = vld [vmem:[#allocation7 + $0x168] sm:$0xff]
    %v1018 = vld [vmem:[#allocation7 + $0x170] sm:$0xff]
    %v1019 = vld [vmem:[#allocation7 + $0x178] sm:$0xff]
    %v1020 = vld [vmem:[#allocation7 + $0x180] sm:$0xff]
    %v1021 = vld [vmem:[#allocation7 + $0x188] sm:$0xff]
    %v1022 = vld [vmem:[#allocation7 + $0x190] sm:$0xff]
    %v1023 = vld [vmem:[#allocation7 + $0x198] sm:$0xff]
    %v1024 = vld [vmem:[#allocation7 + $0x1a0] sm:$0xff]
    %v1025 = vld [vmem:[#allocation7 + $0x1a8] sm:$0xff]
    %v1026 = vld [vmem:[#allocation7 + $0x1b0] sm:$0xff]
    %v1027 = vld [vmem:[#allocation7 + $0x1b8] sm:$0xff]
    %v1028 = vld [vmem:[#allocation7 + $0x1c0] sm:$0xff]
    %v1029 = vld [vmem:[#allocation7 + $0x1c8] sm:$0xff]
    %v1030 = vld [vmem:[#allocation7 + $0x1d0] sm:$0xff]
    %v1031 = vld [vmem:[#allocation7 + $0x1d8] sm:$0xff]
    %v1032 = vld [vmem:[#allocation7 + $0x1e0] sm:$0xff]
    %v1033 = vld [vmem:[#allocation7 + $0x1e8] sm:$0xff]
    %v1034 = vld [vmem:[#allocation7 + $0x1f0] sm:$0xff]
    %v1035 = vld [vmem:[#allocation7 + $0x1f8] sm:$0xff]
    %v1036 = vld [vmem:[#allocation7 + $0x200] sm:$0xff]
    %v1037 = vld [vmem:[#allocation7 + $0x208] sm:$0xff]
    %v1038 = vld [vmem:[#allocation7 + $0x210] sm:$0xff]
    %v1039 = vld [vmem:[#allocation7 + $0x218] sm:$0xff]
    %v1040 = vld [vmem:[#allocation7 + $0x220] sm:$0xff]
    %v1041 = vld [vmem:[#allocation7 + $0x228] sm:$0xff]
    %v1042 = vld [vmem:[#allocation7 + $0x230] sm:$0xff]
    %v1043 = vld [vmem:[#allocation7 + $0x238] sm:$0xff]
    %v1044 = vld [vmem:[#allocation7 + $0x240] sm:$0xff]
    %v1045 = vld [vmem:[#allocation7 + $0x248] sm:$0xff]
    %v1046 = vld [vmem:[#allocation7 + $0x250] sm:$0xff]
    %v1047 = vld [vmem:[#allocation7 + $0x258] sm:$0xff]
    %v1048 = vld [vmem:[#allocation7 + $0x260] sm:$0xff]
    %v1049 = vld [vmem:[#allocation7 + $0x268] sm:$0xff]
    %v1050 = vld [vmem:[#allocation7 + $0x270] sm:$0xff]
    %v1051 = vld [vmem:[#allocation7 + $0x278] sm:$0xff]
    %v1052 = vld [vmem:[#allocation7 + $0x280] sm:$0xff]
    %v1053 = vld [vmem:[#allocation7 + $0x288] sm:$0xff]
    %v1054 = vld [vmem:[#allocation7 + $0x290] sm:$0xff]
    %v1055 = vld [vmem:[#allocation7 + $0x298] sm:$0xff]
    %v1056 = vld [vmem:[#allocation7 + $0x2a0] sm:$0xff]
    %v1057 = vld [vmem:[#allocation7 + $0x2a8] sm:$0xff]
    %v1058 = vld [vmem:[#allocation7 + $0x2b0] sm:$0xff]
    %v1059 = vld [vmem:[#allocation7 + $0x2b8] sm:$0xff]
    %v1060 = vld [vmem:[#allocation7 + $0x2c0] sm:$0xff]
    %v1061 = vld [vmem:[#allocation7 + $0x2c8] sm:$0xff]
    %v1062 = vld [vmem:[#allocation7 + $0x2d0] sm:$0xff]
    %v1063 = vld [vmem:[#allocation7 + $0x2d8] sm:$0xff]
    %v1064 = vld [vmem:[#allocation7 + $0x2e0] sm:$0xff]
    %v1065 = vld [vmem:[#allocation7 + $0x2e8] sm:$0xff]
    %v1066 = vld [vmem:[#allocation7 + $0x2f0] sm:$0xff]
    %v1067 = vld [vmem:[#allocation7 + $0x2f8] sm:$0xff]
    %v1068 = vld [vmem:[#allocation7 + $0x300] sm:$0xff]
    %v1069 = vld [vmem:[#allocation7 + $0x308] sm:$0xff]
    %v1070 = vld [vmem:[#allocation7 + $0x310] sm:$0xff]
    %v1071 = vld [vmem:[#allocation7 + $0x318] sm:$0xff]
    %v1072 = vld [vmem:[#allocation7 + $0x320] sm:$0xff]
    %v1073 = vld [vmem:[#allocation7 + $0x328] sm:$0xff]
    %v1074 = vld [vmem:[#allocation7 + $0x330] sm:$0xff]
    %v1075 = vld [vmem:[#allocation7 + $0x338] sm:$0xff]
    %v1076 = vld [vmem:[#allocation7 + $0x340] sm:$0xff]
    %v1077 = vld [vmem:[#allocation7 + $0x348] sm:$0xff]
    %v1078 = vld [vmem:[#allocation7 + $0x350] sm:$0xff]
    %v1079 = vld [vmem:[#allocation7 + $0x358] sm:$0xff]
    %v1080 = vld [vmem:[#allocation7 + $0x360] sm:$0xff]
    %v1081 = vld [vmem:[#allocation7 + $0x368] sm:$0xff]
    %v1082 = vld [vmem:[#allocation7 + $0x370] sm:$0xff]
    %v1083 = vld [vmem:[#allocation7 + $0x378] sm:$0xff]
    %v1084 = vld [vmem:[#allocation7 + $0x380] sm:$0xff]
    %v1085 = vld [vmem:[#allocation7 + $0x388] sm:$0xff]
    %v1086 = vld [vmem:[#allocation7 + $0x390] sm:$0xff]
    %v1087 = vld [vmem:[#allocation7 + $0x398] sm:$0xff]
    %v1088 = vld [vmem:[#allocation7 + $0x3a0] sm:$0xff]
    %v1089 = vld [vmem:[#allocation7 + $0x3a8] sm:$0xff]
    %v1090 = vld [vmem:[#allocation7 + $0x3b0] sm:$0xff]
    %v1091 = vld [vmem:[#allocation7 + $0x3b8] sm:$0xff]
    %v1092 = vld [vmem:[#allocation7 + $0x3c0] sm:$0xff]
    %v1093 = vld [vmem:[#allocation7 + $0x3c8] sm:$0xff]
    %v1094 = vld [vmem:[#allocation7 + $0x3d0] sm:$0xff]
    %v1095 = vld [vmem:[#allocation7 + $0x3d8] sm:$0xff]
    %v1096 = vld [vmem:[#allocation7 + $0x3e0] sm:$0xff]
    %v1097 = vld [vmem:[#allocation7 + $0x3e8] sm:$0xff]
    %v1098 = vld [vmem:[#allocation7 + $0x3f0] sm:$0xff]
    %v1099 = vld [vmem:[#allocation7 + $0x3f8] sm:$0xff]
    %v1100 = vld [vmem:[#allocation7 + $0x400] sm:$0xff]
    %v1101 = vld [vmem:[#allocation7 + $0x408] sm:$0xff]
    %v1102 = vld [vmem:[#allocation7 + $0x410] sm:$0xff]
    %v1103 = vld [vmem:[#allocation7 + $0x418] sm:$0xff]
    %v1104 = vld [vmem:[#allocation7 + $0x420] sm:$0xff]
    %v1105 = vld [vmem:[#allocation7 + $0x428] sm:$0xff]
    %v1106 = vld [vmem:[#allocation7 + $0x430] sm:$0xff]
    %v1107 = vld [vmem:[#allocation7 + $0x438] sm:$0xff]
    %v1108 = vld [vmem:[#allocation7 + $0x440] sm:$0xff]
    %v1109 = vld [vmem:[#allocation7 + $0x448] sm:$0xff]
    %v1110 = vld [vmem:[#allocation7 + $0x450] sm:$0xff]
    %v1111 = vld [vmem:[#allocation7 + $0x458] sm:$0xff]
    %v1112 = vld [vmem:[#allocation7 + $0x460] sm:$0xff]
    %v1113 = vld [vmem:[#allocation7 + $0x468] sm:$0xff]
    %v1114 = vld [vmem:[#allocation7 + $0x470] sm:$0xff]
    %v1115 = vld [vmem:[#allocation7 + $0x478] sm:$0xff]
    %v1116 = vld [vmem:[#allocation7 + $0x480] sm:$0xff]
    %v1117 = vld [vmem:[#allocation7 + $0x488] sm:$0xff]
    %v1118 = vld [vmem:[#allocation7 + $0x490] sm:$0xff]
    %v1119 = vld [vmem:[#allocation7 + $0x498] sm:$0xff]
    %v1120 = vld [vmem:[#allocation7 + $0x4a0] sm:$0xff]
    %v1121 = vld [vmem:[#allocation7 + $0x4a8] sm:$0xff]
    %v1122 = vld [vmem:[#allocation7 + $0x4b0] sm:$0xff]
    %v1123 = vld [vmem:[#allocation7 + $0x4b8] sm:$0xff]
    %v1124 = vld [vmem:[#allocation7 + $0x4c0] sm:$0xff]
    %v1125 = vld [vmem:[#allocation7 + $0x4c8] sm:$0xff]
    %v1126 = vld [vmem:[#allocation7 + $0x4d0] sm:$0xff]
    %v1127 = vld [vmem:[#allocation7 + $0x4d8] sm:$0xff]
    %v1128 = vld [vmem:[#allocation7 + $0x4e0] sm:$0xff]
    %v1129 = vld [vmem:[#allocation7 + $0x4e8] sm:$0xff]
    %v1130 = vld [vmem:[#allocation7 + $0x4f0] sm:$0xff]
    %v1131 = vld [vmem:[#allocation7 + $0x4f8] sm:$0xff]
    %v1132 = vld [vmem:[#allocation7 + $0x500] sm:$0xff]
    %v1133 = vld [vmem:[#allocation7 + $0x508] sm:$0xff]
    %v1134 = vld [vmem:[#allocation7 + $0x510] sm:$0xff]
    %v1135 = vld [vmem:[#allocation7 + $0x518] sm:$0xff]
    %v1136 = vld [vmem:[#allocation7 + $0x520] sm:$0xff]
    %v1137 = vld [vmem:[#allocation7 + $0x528] sm:$0xff]
    %v1138 = vld [vmem:[#allocation7 + $0x530] sm:$0xff]
    %v1139 = vld [vmem:[#allocation7 + $0x538] sm:$0xff]
    %v1140 = vld [vmem:[#allocation7 + $0x540] sm:$0xff]
    %v1141 = vld [vmem:[#allocation7 + $0x548] sm:$0xff]
    %v1142 = vld [vmem:[#allocation7 + $0x550] sm:$0xff]
    %v1143 = vld [vmem:[#allocation7 + $0x558] sm:$0xff]
    %v1144 = vld [vmem:[#allocation7 + $0x560] sm:$0xff]
    %v1145 = vld [vmem:[#allocation7 + $0x568] sm:$0xff]
    %v1146 = vld [vmem:[#allocation7 + $0x570] sm:$0xff]
    %v1147 = vld [vmem:[#allocation7 + $0x578] sm:$0xff]
    %v1148 = vld [vmem:[#allocation7 + $0x580] sm:$0xff]
    %v1149 = vld [vmem:[#allocation7 + $0x588] sm:$0xff]
    %v1150 = vld [vmem:[#allocation7 + $0x590] sm:$0xff]
    %v1151 = vld [vmem:[#allocation7 + $0x598] sm:$0xff]
    %v1152 = vld [vmem:[#allocation7 + $0x5a0] sm:$0xff]
    %v1153 = vld [vmem:[#allocation7 + $0x5a8] sm:$0xff]
    %v1154 = vld [vmem:[#allocation7 + $0x5b0] sm:$0xff]
    %v1155 = vld [vmem:[#allocation7 + $0x5b8] sm:$0xff]
    %v1156 = vld [vmem:[#allocation7 + $0x5c0] sm:$0xff]
    %v1157 = vld [vmem:[#allocation7 + $0x5c8] sm:$0xff]
    %v1158 = vld [vmem:[#allocation7 + $0x5d0] sm:$0xff]
    %v1159 = vld [vmem:[#allocation7 + $0x5d8] sm:$0xff]
    %v1160 = vld [vmem:[#allocation7 + $0x5e0] sm:$0xff]
    %v1161 = vld [vmem:[#allocation7 + $0x5e8] sm:$0xff]
    %v1162 = vld [vmem:[#allocation7 + $0x5f0] sm:$0xff]
    %v1163 = vld [vmem:[#allocation7 + $0x5f8] sm:$0xff]
    %v1164 = vld [vmem:[#allocation7 + $0x600] sm:$0xff]
    %v1165 = vld [vmem:[#allocation7 + $0x608] sm:$0xff]
    %v1166 = vld [vmem:[#allocation7 + $0x610] sm:$0xff]
    %v1167 = vld [vmem:[#allocation7 + $0x618] sm:$0xff]
    %v1168 = vld [vmem:[#allocation7 + $0x620] sm:$0xff]
    %v1169 = vld [vmem:[#allocation7 + $0x628] sm:$0xff]
    %v1170 = vld [vmem:[#allocation7 + $0x630] sm:$0xff]
    %v1171 = vld [vmem:[#allocation7 + $0x638] sm:$0xff]
    %v1172 = vld [vmem:[#allocation7 + $0x640] sm:$0xff]
    %v1173 = vld [vmem:[#allocation7 + $0x648] sm:$0xff]
    %v1174 = vld [vmem:[#allocation7 + $0x650] sm:$0xff]
    %v1175 = vld [vmem:[#allocation7 + $0x658] sm:$0xff]
    %v1176 = vld [vmem:[#allocation7 + $0x660] sm:$0xff]
    %v1177 = vld [vmem:[#allocation7 + $0x668] sm:$0xff]
    %v1178 = vld [vmem:[#allocation7 + $0x670] sm:$0xff]
    %v1179 = vld [vmem:[#allocation7 + $0x678] sm:$0xff]
    %v1180 = vld [vmem:[#allocation7 + $0x680] sm:$0xff]
    %v1181 = vld [vmem:[#allocation7 + $0x688] sm:$0xff]
    %v1182 = vld [vmem:[#allocation7 + $0x690] sm:$0xff]
    %v1183 = vld [vmem:[#allocation7 + $0x698] sm:$0xff]
    %v1184 = vld [vmem:[#allocation7 + $0x6a0] sm:$0xff]
    %v1185 = vld [vmem:[#allocation7 + $0x6a8] sm:$0xff]
    %v1186 = vld [vmem:[#allocation7 + $0x6b0] sm:$0xff]
    %v1187 = vld [vmem:[#allocation7 + $0x6b8] sm:$0xff]
    %v1188 = vld [vmem:[#allocation7 + $0x6c0] sm:$0xff]
    %v1189 = vld [vmem:[#allocation7 + $0x6c8] sm:$0xff]
    %v1190 = vld [vmem:[#allocation7 + $0x6d0] sm:$0xff]
    %v1191 = vld [vmem:[#allocation7 + $0x6d8] sm:$0xff]
    %v1192 = vld [vmem:[#allocation7 + $0x6e0] sm:$0xff]
    %v1193 = vld [vmem:[#allocation7 + $0x6e8] sm:$0xff]
    %v1194 = vld [vmem:[#allocation7 + $0x6f0] sm:$0xff]
    %v1195 = vld [vmem:[#allocation7 + $0x6f8] sm:$0xff]
    %v1196 = vld [vmem:[#allocation7 + $0x700] sm:$0xff]
    %v1197 = vld [vmem:[#allocation7 + $0x708] sm:$0xff]
    %v1198 = vld [vmem:[#allocation7 + $0x710] sm:$0xff]
    %v1199 = vld [vmem:[#allocation7 + $0x718] sm:$0xff]
    %v1200 = vld [vmem:[#allocation7 + $0x720] sm:$0xff]
    %v1201 = vld [vmem:[#allocation7 + $0x728] sm:$0xff]
    %v1202 = vld [vmem:[#allocation7 + $0x730] sm:$0xff]
    %v1203 = vld [vmem:[#allocation7 + $0x738] sm:$0xff]
    %v1204 = vld [vmem:[#allocation7 + $0x740] sm:$0xff]
    %v1205 = vld [vmem:[#allocation7 + $0x748] sm:$0xff]
    %v1206 = vld [vmem:[#allocation7 + $0x750] sm:$0xff]
    %v1207 = vld [vmem:[#allocation7 + $0x758] sm:$0xff]
    %v1208 = vld [vmem:[#allocation7 + $0x760] sm:$0xff]
    %v1209 = vld [vmem:[#allocation7 + $0x768] sm:$0xff]
    %v1210 = vld [vmem:[#allocation7 + $0x770] sm:$0xff]
    %v1211 = vld [vmem:[#allocation7 + $0x778] sm:$0xff]
    %v1212 = vld [vmem:[#allocation7 + $0x780] sm:$0xff]
    %v1213 = vld [vmem:[#allocation7 + $0x788] sm:$0xff]
    %v1214 = vld [vmem:[#allocation7 + $0x790] sm:$0xff]
    %v1215 = vld [vmem:[#allocation7 + $0x798] sm:$0xff]
    %v1216 = vld [vmem:[#allocation7 + $0x7a0] sm:$0xff]
    %v1217 = vld [vmem:[#allocation7 + $0x7a8] sm:$0xff]
    %v1218 = vld [vmem:[#allocation7 + $0x7b0] sm:$0xff]
    %v1219 = vld [vmem:[#allocation7 + $0x7b8] sm:$0xff]
    %v1220 = vld [vmem:[#allocation7 + $0x7c0] sm:$0xff]
    %v1221 = vld [vmem:[#allocation7 + $0x7c8] sm:$0xff]
    %v1222 = vld [vmem:[#allocation7 + $0x7d0] sm:$0xff]
    %v1223 = vld [vmem:[#allocation7 + $0x7d8] sm:$0xff]
    %v1224 = vld [vmem:[#allocation7 + $0x7e0] sm:$0xff]
    %v1225 = vld [vmem:[#allocation7 + $0x7e8] sm:$0xff]
    %v1226 = vld [vmem:[#allocation7 + $0x7f0] sm:$0xff]
    %v1227 = vld [vmem:[#allocation7 + $0x7f8] sm:$0xff]
    %v1228 = vld [vmem:[#allocation7 + $0x800] sm:$0xff]
    %v1229 = vld [vmem:[#allocation7 + $0x808] sm:$0xff]
    %v1230 = vld [vmem:[#allocation7 + $0x810] sm:$0xff]
    %v1231 = vld [vmem:[#allocation7 + $0x818] sm:$0xff]
    %v1232 = vld [vmem:[#allocation7 + $0x820] sm:$0xff]
    %v1233 = vld [vmem:[#allocation7 + $0x828] sm:$0xff]
    %v1234 = vld [vmem:[#allocation7 + $0x830] sm:$0xff]
    %v1235 = vld [vmem:[#allocation7 + $0x838] sm:$0xff]
    %v1236 = vld [vmem:[#allocation7 + $0x840] sm:$0xff]
    %v1237 = vld [vmem:[#allocation7 + $0x848] sm:$0xff]
    %v1238 = vld [vmem:[#allocation7 + $0x850] sm:$0xff]
    %v1239 = vld [vmem:[#allocation7 + $0x858] sm:$0xff]
    %v1240 = vld [vmem:[#allocation7 + $0x860] sm:$0xff]
    %v1241 = vld [vmem:[#allocation7 + $0x868] sm:$0xff]
    %v1242 = vld [vmem:[#allocation7 + $0x870] sm:$0xff]
    %v1243 = vld [vmem:[#allocation7 + $0x878] sm:$0xff]
    %v1244 = vld [vmem:[#allocation7 + $0x880] sm:$0xff]
    %v1245 = vld [vmem:[#allocation7 + $0x888] sm:$0xff]
    %v1246 = vld [vmem:[#allocation7 + $0x890] sm:$0xff]
    %v1247 = vld [vmem:[#allocation7 + $0x898] sm:$0xff]
    %v1248 = vld [vmem:[#allocation7 + $0x8a0] sm:$0xff]
    %v1249 = vld [vmem:[#allocation7 + $0x8a8] sm:$0xff]
    %v1250 = vld [vmem:[#allocation7 + $0x8b0] sm:$0xff]
    %v1251 = vld [vmem:[#allocation7 + $0x8b8] sm:$0xff]
    %v1252 = vld [vmem:[#allocation7 + $0x8c0] sm:$0xff]
    %v1253 = vld [vmem:[#allocation7 + $0x8c8] sm:$0xff]
    %v1254 = vld [vmem:[#allocation7 + $0x8d0] sm:$0xff]
    %v1255 = vld [vmem:[#allocation7 + $0x8d8] sm:$0xff]
    %v1256 = vld [vmem:[#allocation7 + $0x8e0] sm:$0xff]
    %v1257 = vld [vmem:[#allocation7 + $0x8e8] sm:$0xff]
    %v1258 = vld [vmem:[#allocation7 + $0x8f0] sm:$0xff]
    %v1259 = vld [vmem:[#allocation7 + $0x8f8] sm:$0xff]
    %v1260 = vld [vmem:[#allocation7 + $0x900] sm:$0xff]
    %v1261 = vld [vmem:[#allocation7 + $0x908] sm:$0xff]
    %v1262 = vld [vmem:[#allocation7 + $0x910] sm:$0xff]
    %v1263 = vld [vmem:[#allocation7 + $0x918] sm:$0xff]
    %v1264 = vld [vmem:[#allocation7 + $0x920] sm:$0xff]
    %v1265 = vld [vmem:[#allocation7 + $0x928] sm:$0xff]
    %v1266 = vld [vmem:[#allocation7 + $0x930] sm:$0xff]
    %v1267 = vld [vmem:[#allocation7 + $0x938] sm:$0xff]
    %v1268 = vld [vmem:[#allocation7 + $0x940] sm:$0xff]
    %v1269 = vld [vmem:[#allocation7 + $0x948] sm:$0xff]
    %v1270 = vld [vmem:[#allocation7 + $0x950] sm:$0xff]
    %v1271 = vld [vmem:[#allocation7 + $0x958] sm:$0xff]
    %v1272 = vld [vmem:[#allocation7 + $0x960] sm:$0xff]
    %v1273 = vld [vmem:[#allocation7 + $0x968] sm:$0xff]
    %v1274 = vld [vmem:[#allocation7 + $0x970] sm:$0xff]
    %v1275 = vld [vmem:[#allocation7 + $0x978] sm:$0xff]
    %v1276 = vld [vmem:[#allocation7 + $0x980] sm:$0xff]
    %v1277 = vld [vmem:[#allocation7 + $0x988] sm:$0xff]
    %v1278 = vld [vmem:[#allocation7 + $0x990] sm:$0xff]
    %v1279 = vld [vmem:[#allocation7 + $0x998] sm:$0xff]
    %v1280 = vld [vmem:[#allocation7 + $0x9a0] sm:$0xff]
    %v1281 = vld [vmem:[#allocation7 + $0x9a8] sm:$0xff]
    %v1282 = vld [vmem:[#allocation7 + $0x9b0] sm:$0xff]
    %v1283 = vld [vmem:[#allocation7 + $0x9b8] sm:$0xff]
    %v1284 = vld [vmem:[#allocation7 + $0x9c0] sm:$0xff]
    %v1285 = vld [vmem:[#allocation7 + $0x9c8] sm:$0xff]
    %v1286 = vld [vmem:[#allocation7 + $0x9d0] sm:$0xff]
    %v1287 = vld [vmem:[#allocation7 + $0x9d8] sm:$0xff]
    %v1288 = vld [vmem:[#allocation7 + $0x9e0] sm:$0xff]
    %v1289 = vld [vmem:[#allocation7 + $0x9e8] sm:$0xff]
    %v1290 = vld [vmem:[#allocation7 + $0x9f0] sm:$0xff]
    %v1291 = vld [vmem:[#allocation7 + $0x9f8] sm:$0xff]
    %v1292 = vld [vmem:[#allocation7 + $0xa00] sm:$0xff]
    %v1293 = vld [vmem:[#allocation7 + $0xa08] sm:$0xff]
    %v1294 = vld [vmem:[#allocation7 + $0xa10] sm:$0xff]
    %v1295 = vld [vmem:[#allocation7 + $0xa18] sm:$0xff]
    %v1296 = vld [vmem:[#allocation7 + $0xa20] sm:$0xff]
    %v1297 = vld [vmem:[#allocation7 + $0xa28] sm:$0xff]
    %v1298 = vld [vmem:[#allocation7 + $0xa30] sm:$0xff]
    %v1299 = vld [vmem:[#allocation7 + $0xa38] sm:$0xff]
    %v1300 = vld [vmem:[#allocation7 + $0xa40] sm:$0xff]
    %v1301 = vld [vmem:[#allocation7 + $0xa48] sm:$0xff]
    %v1302 = vld [vmem:[#allocation7 + $0xa50] sm:$0xff]
    %v1303 = vld [vmem:[#allocation7 + $0xa58] sm:$0xff]
    %v1304 = vld [vmem:[#allocation7 + $0xa60] sm:$0xff]
    %v1305 = vld [vmem:[#allocation7 + $0xa68] sm:$0xff]
    %v1306 = vld [vmem:[#allocation7 + $0xa70] sm:$0xff]
    %v1307 = vld [vmem:[#allocation7 + $0xa78] sm:$0xff]
    %v1308 = vld [vmem:[#allocation7 + $0xa80] sm:$0xff]
    %v1309 = vld [vmem:[#allocation7 + $0xa88] sm:$0xff]
    %v1310 = vld [vmem:[#allocation7 + $0xa90] sm:$0xff]
    %v1311 = vld [vmem:[#allocation7 + $0xa98] sm:$0xff]
    %v1312 = vld [vmem:[#allocation7 + $0xaa0] sm:$0xff]
    %v1313 = vld [vmem:[#allocation7 + $0xaa8] sm:$0xff]
    %v1314 = vld [vmem:[#allocation7 + $0xab0] sm:$0xff]
    %v1315 = vld [vmem:[#allocation7 + $0xab8] sm:$0xff]
    %v1316 = vld [vmem:[#allocation7 + $0xac0] sm:$0xff]
    %v1317 = vld [vmem:[#allocation7 + $0xac8] sm:$0xff]
    %v1318 = vld [vmem:[#allocation7 + $0xad0] sm:$0xff]
    %v1319 = vld [vmem:[#allocation7 + $0xad8] sm:$0xff]
    %v1320 = vld [vmem:[#allocation7 + $0xae0] sm:$0xff]
    %v1321 = vld [vmem:[#allocation7 + $0xae8] sm:$0xff]
    %v1322 = vld [vmem:[#allocation7 + $0xaf0] sm:$0xff]
    %v1323 = vld [vmem:[#allocation7 + $0xaf8] sm:$0xff]
    %v1324 = vld [vmem:[#allocation7 + $0xb00] sm:$0xff]
    %v1325 = vld [vmem:[#allocation7 + $0xb08] sm:$0xff]
    %v1326 = vld [vmem:[#allocation7 + $0xb10] sm:$0xff]
    %v1327 = vld [vmem:[#allocation7 + $0xb18] sm:$0xff]
    %v1328 = vld [vmem:[#allocation7 + $0xb20] sm:$0xff]
    %v1329 = vld [vmem:[#allocation7 + $0xb28] sm:$0xff]
    %v1330 = vld [vmem:[#allocation7 + $0xb30] sm:$0xff]
    %v1331 = vld [vmem:[#allocation7 + $0xb38] sm:$0xff]
    %v1332 = vld [vmem:[#allocation7 + $0xb40] sm:$0xff]
    %v1333 = vld [vmem:[#allocation7 + $0xb48] sm:$0xff]
    %v1334 = vld [vmem:[#allocation7 + $0xb50] sm:$0xff]
    %v1335 = vld [vmem:[#allocation7 + $0xb58] sm:$0xff]
    %v1336 = vld [vmem:[#allocation7 + $0xb60] sm:$0xff]
    %v1337 = vld [vmem:[#allocation7 + $0xb68] sm:$0xff]
    %v1338 = vld [vmem:[#allocation7 + $0xb70] sm:$0xff]
    %v1339 = vld [vmem:[#allocation7 + $0xb78] sm:$0xff]
    %v1340 = vld [vmem:[#allocation7 + $0xb80] sm:$0xff]
    %v1341 = vld [vmem:[#allocation7 + $0xb88] sm:$0xff]
    %v1342 = vld [vmem:[#allocation7 + $0xb90] sm:$0xff]
    %v1343 = vld [vmem:[#allocation7 + $0xb98] sm:$0xff]
    %v1344 = vld [vmem:[#allocation7 + $0xba0] sm:$0xff]
    %v1345 = vld [vmem:[#allocation7 + $0xba8] sm:$0xff]
    %v1346 = vld [vmem:[#allocation7 + $0xbb0] sm:$0xff]
    %v1347 = vld [vmem:[#allocation7 + $0xbb8] sm:$0xff]
    %v1348 = vld [vmem:[#allocation7 + $0xbc0] sm:$0xff]
    %v1349 = vld [vmem:[#allocation7 + $0xbc8] sm:$0xff]
    %v1350 = vld [vmem:[#allocation7 + $0xbd0] sm:$0xff]
    %v1351 = vld [vmem:[#allocation7 + $0xbd8] sm:$0xff]
    %v1352 = vld [vmem:[#allocation7 + $0xbe0] sm:$0xff]
    %v1353 = vld [vmem:[#allocation7 + $0xbe8] sm:$0xff]
    %v1354 = vld [vmem:[#allocation7 + $0xbf0] sm:$0xff]
    %v1355 = vld [vmem:[#allocation7 + $0xbf8] sm:$0xff]
    %v1356 = vld [vmem:[#allocation7 + $0xc00] sm:$0xff]
    %v1357 = vld [vmem:[#allocation7 + $0xc08] sm:$0xff]
    %v1358 = vld [vmem:[#allocation7 + $0xc10] sm:$0xff]
    %v1359 = vld [vmem:[#allocation7 + $0xc18] sm:$0xff]
    %v1360 = vld [vmem:[#allocation7 + $0xc20] sm:$0xff]
    %v1361 = vld [vmem:[#allocation7 + $0xc28] sm:$0xff]
    %v1362 = vld [vmem:[#allocation7 + $0xc30] sm:$0xff]
    %v1363 = vld [vmem:[#allocation7 + $0xc38] sm:$0xff]
    %v1364 = vld [vmem:[#allocation7 + $0xc40] sm:$0xff]
    %v1365 = vld [vmem:[#allocation7 + $0xc48] sm:$0xff]
    %v1366 = vld [vmem:[#allocation7 + $0xc50] sm:$0xff]
    %v1367 = vld [vmem:[#allocation7 + $0xc58] sm:$0xff]
    %v1368 = vld [vmem:[#allocation7 + $0xc60] sm:$0xff]
    %v1369 = vld [vmem:[#allocation7 + $0xc68] sm:$0xff]
    %v1370 = vld [vmem:[#allocation7 + $0xc70] sm:$0xff]
    %v1371 = vld [vmem:[#allocation7 + $0xc78] sm:$0xff]
    %v1372 = vld [vmem:[#allocation7 + $0xc80] sm:$0xff]
    %v1373 = vld [vmem:[#allocation7 + $0xc88] sm:$0xff]
    %v1374 = vld [vmem:[#allocation7 + $0xc90] sm:$0xff]
    %v1375 = vld [vmem:[#allocation7 + $0xc98] sm:$0xff]
    %v1376 = vld [vmem:[#allocation7 + $0xca0] sm:$0xff]
    %v1377 = vld [vmem:[#allocation7 + $0xca8] sm:$0xff]
    %v1378 = vld [vmem:[#allocation7 + $0xcb0] sm:$0xff]
    %v1379 = vld [vmem:[#allocation7 + $0xcb8] sm:$0xff]
    %v1380 = vld [vmem:[#allocation7 + $0xcc0] sm:$0xff]
    %v1381 = vld [vmem:[#allocation7 + $0xcc8] sm:$0xff]
    %v1382 = vld [vmem:[#allocation7 + $0xcd0] sm:$0xff]
    %v1383 = vld [vmem:[#allocation7 + $0xcd8] sm:$0xff]
    %v1384 = vld [vmem:[#allocation7 + $0xce0] sm:$0xff]
    %v1385 = vld [vmem:[#allocation7 + $0xce8] sm:$0xff]
    %v1386 = vld [vmem:[#allocation7 + $0xcf0] sm:$0xff]
    %v1387 = vld [vmem:[#allocation7 + $0xcf8] sm:$0xff]
    %v1388 = vld [vmem:[#allocation7 + $0xd00] sm:$0xff]
    %v1389 = vld [vmem:[#allocation7 + $0xd08] sm:$0xff]
    %v1390 = vld [vmem:[#allocation7 + $0xd10] sm:$0xff]
    %v1391 = vld [vmem:[#allocation7 + $0xd18] sm:$0xff]
    %v1392 = vld [vmem:[#allocation7 + $0xd20] sm:$0xff]
    %v1393 = vld [vmem:[#allocation7 + $0xd28] sm:$0xff]
    %v1394 = vld [vmem:[#allocation7 + $0xd30] sm:$0xff]
    %v1395 = vld [vmem:[#allocation7 + $0xd38] sm:$0xff]
    %v1396 = vld [vmem:[#allocation7 + $0xd40] sm:$0xff]
    %v1397 = vld [vmem:[#allocation7 + $0xd48] sm:$0xff]
    %v1398 = vld [vmem:[#allocation7 + $0xd50] sm:$0xff]
    %v1399 = vld [vmem:[#allocation7 + $0xd58] sm:$0xff]
    %v1400 = vld [vmem:[#allocation7 + $0xd60] sm:$0xff]
    %v1401 = vld [vmem:[#allocation7 + $0xd68] sm:$0xff]
    %v1402 = vld [vmem:[#allocation7 + $0xd70] sm:$0xff]
    %v1403 = vld [vmem:[#allocation7 + $0xd78] sm:$0xff]
    %v1404 = vld [vmem:[#allocation7 + $0xd80] sm:$0xff]
    %v1405 = vld [vmem:[#allocation7 + $0xd88] sm:$0xff]
    %v1406 = vld [vmem:[#allocation7 + $0xd90] sm:$0xff]
    %v1407 = vld [vmem:[#allocation7 + $0xd98] sm:$0xff]
    %v1408 = vld [vmem:[#allocation7 + $0xda0] sm:$0xff]
    %v1409 = vld [vmem:[#allocation7 + $0xda8] sm:$0xff]
    %v1410 = vld [vmem:[#allocation7 + $0xdb0] sm:$0xff]
    %v1411 = vld [vmem:[#allocation7 + $0xdb8] sm:$0xff]
    %v1412 = vld [vmem:[#allocation7 + $0xdc0] sm:$0xff]
    %v1413 = vld [vmem:[#allocation7 + $0xdc8] sm:$0xff]
    %v1414 = vld [vmem:[#allocation7 + $0xdd0] sm:$0xff]
    %v1415 = vld [vmem:[#allocation7 + $0xdd8] sm:$0xff]
    %v1416 = vld [vmem:[#allocation7 + $0xde0] sm:$0xff]
    %v1417 = vld [vmem:[#allocation7 + $0xde8] sm:$0xff]
    %v1418 = vld [vmem:[#allocation7 + $0xdf0] sm:$0xff]
    %v1419 = vld [vmem:[#allocation7 + $0xdf8] sm:$0xff]
    %v1420 = vld [vmem:[#allocation7 + $0xe00] sm:$0xff]
    %v1421 = vld [vmem:[#allocation7 + $0xe08] sm:$0xff]
    %v1422 = vld [vmem:[#allocation7 + $0xe10] sm:$0xff]
    %v1423 = vld [vmem:[#allocation7 + $0xe18] sm:$0xff]
    %v1424 = vld [vmem:[#allocation7 + $0xe20] sm:$0xff]
    %v1425 = vld [vmem:[#allocation7 + $0xe28] sm:$0xff]
    %v1426 = vld [vmem:[#allocation7 + $0xe30] sm:$0xff]
    %v1427 = vld [vmem:[#allocation7 + $0xe38] sm:$0xff]
    %v1428 = vld [vmem:[#allocation7 + $0xe40] sm:$0xff]
    %v1429 = vld [vmem:[#allocation7 + $0xe48] sm:$0xff]
    %v1430 = vld [vmem:[#allocation7 + $0xe50] sm:$0xff]
    %v1431 = vld [vmem:[#allocation7 + $0xe58] sm:$0xff]
    %v1432 = vld [vmem:[#allocation7 + $0xe60] sm:$0xff]
    %v1433 = vld [vmem:[#allocation7 + $0xe68] sm:$0xff]
    %v1434 = vld [vmem:[#allocation7 + $0xe70] sm:$0xff]
    %v1435 = vld [vmem:[#allocation7 + $0xe78] sm:$0xff]
    %v1436 = vld [vmem:[#allocation7 + $0xe80] sm:$0xff]
    %v1437 = vld [vmem:[#allocation7 + $0xe88] sm:$0xff]
    %v1438 = vld [vmem:[#allocation7 + $0xe90] sm:$0xff]
    %v1439 = vld [vmem:[#allocation7 + $0xe98] sm:$0xff]
    %v1440 = vld [vmem:[#allocation7 + $0xea0] sm:$0xff]
    %v1441 = vld [vmem:[#allocation7 + $0xea8] sm:$0xff]
    %v1442 = vld [vmem:[#allocation7 + $0xeb0] sm:$0xff]
    %v1443 = vld [vmem:[#allocation7 + $0xeb8] sm:$0xff]
    %v1444 = vld [vmem:[#allocation7 + $0xec0] sm:$0xff]
    %v1445 = vld [vmem:[#allocation7 + $0xec8] sm:$0xff]
    %v1446 = vld [vmem:[#allocation7 + $0xed0] sm:$0xff]
    %v1447 = vld [vmem:[#allocation7 + $0xed8] sm:$0xff]
    %v1448 = vld [vmem:[#allocation7 + $0xee0] sm:$0xff]
    %v1449 = vld [vmem:[#allocation7 + $0xee8] sm:$0xff]
    %v1450 = vld [vmem:[#allocation7 + $0xef0] sm:$0xff]
    %v1451 = vld [vmem:[#allocation7 + $0xef8] sm:$0xff]
    %v1452 = vld [vmem:[#allocation7 + $0xf00] sm:$0xff]
    %v1453 = vld [vmem:[#allocation7 + $0xf08] sm:$0xff]
    %v1454 = vld [vmem:[#allocation7 + $0xf10] sm:$0xff]
    %v1455 = vld [vmem:[#allocation7 + $0xf18] sm:$0xff]
    %v1456 = vld [vmem:[#allocation7 + $0xf20] sm:$0xff]
    %v1457 = vld [vmem:[#allocation7 + $0xf28] sm:$0xff]
    %v1458 = vld [vmem:[#allocation7 + $0xf30] sm:$0xff]
    %v1459 = vld [vmem:[#allocation7 + $0xf38] sm:$0xff]
    %v1460 = vld [vmem:[#allocation7 + $0xf40] sm:$0xff]
    %v1461 = vld [vmem:[#allocation7 + $0xf48] sm:$0xff]
    %v1462 = vld [vmem:[#allocation7 + $0xf50] sm:$0xff]
    %v1463 = vld [vmem:[#allocation7 + $0xf58] sm:$0xff]
    %v1464 = vld [vmem:[#allocation7 + $0xf60] sm:$0xff]
    %v1465 = vld [vmem:[#allocation7 + $0xf68] sm:$0xff]
    %v1466 = vld [vmem:[#allocation7 + $0xf70] sm:$0xff]
    %v1467 = vld [vmem:[#allocation7 + $0xf78] sm:$0xff]
    %v1468 = vld [vmem:[#allocation7 + $0xf80] sm:$0xff]
    %v1469 = vld [vmem:[#allocation7 + $0xf88] sm:$0xff]
    %v1470 = vld [vmem:[#allocation7 + $0xf90] sm:$0xff]
    %v1471 = vld [vmem:[#allocation7 + $0xf98] sm:$0xff]
    %v1472 = vld [vmem:[#allocation7 + $0xfa0] sm:$0xff]
    %v1473 = vld [vmem:[#allocation7 + $0xfa8] sm:$0xff]
    %v1474 = vld [vmem:[#allocation7 + $0xfb0] sm:$0xff]
    %v1475 = vld [vmem:[#allocation7 + $0xfb8] sm:$0xff]
    %v1476 = vld [vmem:[#allocation7 + $0xfc0] sm:$0xff]
    %v1477 = vld [vmem:[#allocation7 + $0xfc8] sm:$0xff]
    %v1478 = vld [vmem:[#allocation7 + $0xfd0] sm:$0xff]
    %v1479 = vld [vmem:[#allocation7 + $0xfd8] sm:$0xff]
    %v1480 = vld [vmem:[#allocation7 + $0xfe0] sm:$0xff]
    %v1481 = vld [vmem:[#allocation7 + $0xfe8] sm:$0xff]
    %v1482 = vld [vmem:[#allocation7 + $0xff0] sm:$0xff]
    %v1483 = vld [vmem:[#allocation7 + $0xff8] sm:$0xff]
    %v1484 = vld [vmem:[#allocation7 + $0x1000] sm:$0xff]
    %v1485 = vld [vmem:[#allocation7 + $0x1008] sm:$0xff]
    %v1486 = vld [vmem:[#allocation7 + $0x1010] sm:$0xff]
    %v1487 = vld [vmem:[#allocation7 + $0x1018] sm:$0xff]
    %v1488 = vld [vmem:[#allocation7 + $0x1020] sm:$0xff]
    %v1489 = vld [vmem:[#allocation7 + $0x1028] sm:$0xff]
    %v1490 = vld [vmem:[#allocation7 + $0x1030] sm:$0xff]
    %v1491 = vld [vmem:[#allocation7 + $0x1038] sm:$0xff]
    %v1492 = vld [vmem:[#allocation7 + $0x1040] sm:$0xff]
    %v1493 = vld [vmem:[#allocation7 + $0x1048] sm:$0xff]
    %v1494 = vld [vmem:[#allocation7 + $0x1050] sm:$0xff]
    %v1495 = vld [vmem:[#allocation7 + $0x1058] sm:$0xff]
    %v1496 = vld [vmem:[#allocation7 + $0x1060] sm:$0xff]
    %v1497 = vld [vmem:[#allocation7 + $0x1068] sm:$0xff]
    %v1498 = vld [vmem:[#allocation7 + $0x1070] sm:$0xff]
    %v1499 = vld [vmem:[#allocation7 + $0x1078] sm:$0xff]
    %v1500 = vld [vmem:[#allocation7 + $0x1080] sm:$0xff]
    %v1501 = vld [vmem:[#allocation7 + $0x1088] sm:$0xff]
    %v1502 = vld [vmem:[#allocation7 + $0x1090] sm:$0xff]
    %v1503 = vld [vmem:[#allocation7 + $0x1098] sm:$0xff]
    %v1504 = vld [vmem:[#allocation7 + $0x10a0] sm:$0xff]
    %v1505 = vld [vmem:[#allocation7 + $0x10a8] sm:$0xff]
    %v1506 = vld [vmem:[#allocation7 + $0x10b0] sm:$0xff]
    %v1507 = vld [vmem:[#allocation7 + $0x10b8] sm:$0xff]
    %v1508 = vld [vmem:[#allocation7 + $0x10c0] sm:$0xff]
    %v1509 = vld [vmem:[#allocation7 + $0x10c8] sm:$0xff]
    %v1510 = vld [vmem:[#allocation7 + $0x10d0] sm:$0xff]
    %v1511 = vld [vmem:[#allocation7 + $0x10d8] sm:$0xff]
    %v1512 = vld [vmem:[#allocation7 + $0x10e0] sm:$0xff]
    %v1513 = vld [vmem:[#allocation7 + $0x10e8] sm:$0xff]
    %v1514 = vld [vmem:[#allocation7 + $0x10f0] sm:$0xff]
    %v1515 = vld [vmem:[#allocation7 + $0x10f8] sm:$0xff]
    %v1516 = vld [vmem:[#allocation7 + $0x1100] sm:$0xff]
    %v1517 = vld [vmem:[#allocation7 + $0x1108] sm:$0xff]
    %v1518 = vld [vmem:[#allocation7 + $0x1110] sm:$0xff]
    %v1519 = vld [vmem:[#allocation7 + $0x1118] sm:$0xff]
    %v1520 = vld [vmem:[#allocation7 + $0x1120] sm:$0xff]
    %v1521 = vld [vmem:[#allocation7 + $0x1128] sm:$0xff]
    %v1522 = vld [vmem:[#allocation7 + $0x1130] sm:$0xff]
    %v1523 = vld [vmem:[#allocation7 + $0x1138] sm:$0xff]
    %v1524 = vld [vmem:[#allocation7 + $0x1140] sm:$0xff]
    %v1525 = vld [vmem:[#allocation7 + $0x1148] sm:$0xff]
    %v1526 = vld [vmem:[#allocation7 + $0x1150] sm:$0xff]
    %v1527 = vld [vmem:[#allocation7 + $0x1158] sm:$0xff]
    %v1528 = vld [vmem:[#allocation7 + $0x1160] sm:$0xff]
    %v1529 = vld [vmem:[#allocation7 + $0x1168] sm:$0xff]
    %v1530 = vld [vmem:[#allocation7 + $0x1170] sm:$0xff]
    %v1531 = vld [vmem:[#allocation7 + $0x1178] sm:$0xff]
    %v1532 = vld [vmem:[#allocation7 + $0x1180] sm:$0xff]
    %v1533 = vld [vmem:[#allocation7 + $0x1188] sm:$0xff]
    %v1534 = vld [vmem:[#allocation7 + $0x1190] sm:$0xff]
    %v1535 = vld [vmem:[#allocation7 + $0x1198] sm:$0xff]
    %v1536 = vld [vmem:[#allocation7 + $0x11a0] sm:$0xff]
    %v1537 = vld [vmem:[#allocation7 + $0x11a8] sm:$0xff]
    %v1538 = vld [vmem:[#allocation7 + $0x11b0] sm:$0xff]
    %v1539 = vld [vmem:[#allocation7 + $0x11b8] sm:$0xff]
    %v1540 = vld [vmem:[#allocation7 + $0x11c0] sm:$0xff]
    %v1541 = vld [vmem:[#allocation7 + $0x11c8] sm:$0xff]
    %v1542 = vld [vmem:[#allocation7 + $0x11d0] sm:$0xff]
    %v1543 = vld [vmem:[#allocation7 + $0x11d8] sm:$0xff]
    %v1544 = vld [vmem:[#allocation7 + $0x11e0] sm:$0xff]
    %v1545 = vld [vmem:[#allocation7 + $0x11e8] sm:$0xff]
    %v1546 = vld [vmem:[#allocation7 + $0x11f0] sm:$0xff]
    %v1547 = vld [vmem:[#allocation7 + $0x11f8] sm:$0xff]
    %v1548 = vld [vmem:[#allocation7 + $0x1200] sm:$0xff]
    %v1549 = vld [vmem:[#allocation7 + $0x1208] sm:$0xff]
    %v1550 = vld [vmem:[#allocation7 + $0x1210] sm:$0xff]
    %v1551 = vld [vmem:[#allocation7 + $0x1218] sm:$0xff]
    %v1552 = vld [vmem:[#allocation7 + $0x1220] sm:$0xff]
    %v1553 = vld [vmem:[#allocation7 + $0x1228] sm:$0xff]
    %v1554 = vld [vmem:[#allocation7 + $0x1230] sm:$0xff]
    %v1555 = vld [vmem:[#allocation7 + $0x1238] sm:$0xff]
    %v1556 = vld [vmem:[#allocation7 + $0x1240] sm:$0xff]
    %v1557 = vld [vmem:[#allocation7 + $0x1248] sm:$0xff]
    %v1558 = vld [vmem:[#allocation7 + $0x1250] sm:$0xff]
    %v1559 = vld [vmem:[#allocation7 + $0x1258] sm:$0xff]
    %v1560 = vld [vmem:[#allocation7 + $0x1260] sm:$0xff]
    %v1561 = vld [vmem:[#allocation7 + $0x1268] sm:$0xff]
    %v1562 = vld [vmem:[#allocation7 + $0x1270] sm:$0xff]
    %v1563 = vld [vmem:[#allocation7 + $0x1278] sm:$0xff]
    %v1564 = vld [vmem:[#allocation7 + $0x1280] sm:$0xff]
    %v1565 = vld [vmem:[#allocation7 + $0x1288] sm:$0xff]
    %v1566 = vld [vmem:[#allocation7 + $0x1290] sm:$0xff]
    %v1567 = vld [vmem:[#allocation7 + $0x1298] sm:$0xff]
    %v1568 = vld [vmem:[#allocation7 + $0x12a0] sm:$0xff]
    %v1569 = vld [vmem:[#allocation7 + $0x12a8] sm:$0xff]
    %v1570 = vld [vmem:[#allocation7 + $0x12b0] sm:$0xff]
    %v1571 = vld [vmem:[#allocation7 + $0x12b8] sm:$0xff]
    %v1572 = vld [vmem:[#allocation7 + $0x12c0] sm:$0xff]
    %v1573 = vld [vmem:[#allocation7 + $0x12c8] sm:$0xff]
    %v1574 = vld [vmem:[#allocation7 + $0x12d0] sm:$0xff]
    %v1575 = vld [vmem:[#allocation7 + $0x12d8] sm:$0xff]
    %v1576 = vld [vmem:[#allocation7 + $0x12e0] sm:$0xff]
    %v1577 = vld [vmem:[#allocation7 + $0x12e8] sm:$0xff]
    %v1578 = vld [vmem:[#allocation7 + $0x12f0] sm:$0xff]
    %v1579 = vld [vmem:[#allocation7 + $0x12f8] sm:$0xff]
    %v1580 = vld [vmem:[#allocation7 + $0x1300] sm:$0xff]
    %v1581 = vld [vmem:[#allocation7 + $0x1308] sm:$0xff]
    %v1582 = vld [vmem:[#allocation7 + $0x1310] sm:$0xff]
    %v1583 = vld [vmem:[#allocation7 + $0x1318] sm:$0xff]
    %v1584 = vld [vmem:[#allocation7 + $0x1320] sm:$0xff]
    %v1585 = vld [vmem:[#allocation7 + $0x1328] sm:$0xff]
    %v1586 = vld [vmem:[#allocation7 + $0x1330] sm:$0xff]
    %v1587 = vld [vmem:[#allocation7 + $0x1338] sm:$0xff]
    %v1588 = vld [vmem:[#allocation7 + $0x1340] sm:$0xff]
    %v1589 = vld [vmem:[#allocation7 + $0x1348] sm:$0xff]
    %v1590 = vld [vmem:[#allocation7 + $0x1350] sm:$0xff]
    %v1591 = vld [vmem:[#allocation7 + $0x1358] sm:$0xff]
    %v1592 = vld [vmem:[#allocation7 + $0x1360] sm:$0xff]
    %v1593 = vld [vmem:[#allocation7 + $0x1368] sm:$0xff]
    %v1594 = vld [vmem:[#allocation7 + $0x1370] sm:$0xff]
    %v1595 = vld [vmem:[#allocation7 + $0x1378] sm:$0xff]
    %v1596 = vld [vmem:[#allocation7 + $0x1380] sm:$0xff]
    %v1597 = vld [vmem:[#allocation7 + $0x1388] sm:$0xff]
    %v1598 = vld [vmem:[#allocation7 + $0x1390] sm:$0xff]
    %v1599 = vld [vmem:[#allocation7 + $0x1398] sm:$0xff]
    %v1600 = vld [vmem:[#allocation7 + $0x13a0] sm:$0xff]
    %v1601 = vld [vmem:[#allocation7 + $0x13a8] sm:$0xff]
    %v1602 = vld [vmem:[#allocation7 + $0x13b0] sm:$0xff]
    %v1603 = vld [vmem:[#allocation7 + $0x13b8] sm:$0xff]
    %v1604 = vld [vmem:[#allocation7 + $0x13c0] sm:$0xff]
    %v1605 = vld [vmem:[#allocation7 + $0x13c8] sm:$0xff]
    %v1606 = vld [vmem:[#allocation7 + $0x13d0] sm:$0xff]
    %v1607 = vld [vmem:[#allocation7 + $0x13d8] sm:$0xff]
    %v1608 = vld [vmem:[#allocation7 + $0x13e0] sm:$0xff]
    %v1609 = vld [vmem:[#allocation7 + $0x13e8] sm:$0xff]
    %v1610 = vld [vmem:[#allocation7 + $0x13f0] sm:$0xff]
    %v1611 = vld [vmem:[#allocation7 + $0x13f8] sm:$0xff]
    %v1612 = vld [vmem:[#allocation8] sm:$0xff]
    %v1614 = vlaneseq
    %v1615 = vshrl.u32 %v1614, 7
    %v1616 = vsub.s32 0, %v1615
    %v1617 = vrot.slane %v1612, %v1616
    %v1618 = vlaneseq
    %v1619 = vshrl.u32 %v1618, 7
    %v1620 = vsub.s32 1, %v1619
    %v1621 = vrot.slane %v1612, %v1620
    %v1622 = vlaneseq
    %v1623 = vshrl.u32 %v1622, 7
    %v1624 = vsub.s32 2, %v1623
    %v1625 = vrot.slane %v1612, %v1624
    %v1626 = vlaneseq
    %v1627 = vshrl.u32 %v1626, 7
    %v1628 = vsub.s32 3, %v1627
    %v1629 = vrot.slane %v1612, %v1628
    %v1630 = vlaneseq
    %v1631 = vshrl.u32 %v1630, 7
    %v1632 = vsub.s32 4, %v1631
    %v1633 = vrot.slane %v1612, %v1632
    %v1634 = vlaneseq
    %v1635 = vshrl.u32 %v1634, 7
    %v1636 = vsub.s32 5, %v1635
    %v1637 = vrot.slane %v1612, %v1636
    %v1638 = vlaneseq
    %v1639 = vshrl.u32 %v1638, 7
    %v1640 = vsub.s32 6, %v1639
    %v1641 = vrot.slane %v1612, %v1640
    %v1642 = vlaneseq
    %v1643 = vshrl.u32 %v1642, 7
    %v1644 = vsub.s32 7, %v1643
    %v1645 = vrot.slane %v1612, %v1644
    %v2294 = vunpack.c.l.b16 %v972
    %v2295 = vunpack.c.h.b16 %v972
    %v2296 = vunpack.c.l.b16 %v973
    %v2297 = vunpack.c.h.b16 %v973
    %v2298 = vunpack.c.l.b16 %v974
    %v2299 = vunpack.c.h.b16 %v974
    %v2300 = vunpack.c.l.b16 %v975
    %v2301 = vunpack.c.h.b16 %v975
    %v2302 = vunpack.c.l.b16 %v976
    %v2303 = vunpack.c.h.b16 %v976
    %v2304 = vunpack.c.l.b16 %v977
    %v2305 = vunpack.c.h.b16 %v977
    %v2306 = vunpack.c.l.b16 %v978
    %v2307 = vunpack.c.h.b16 %v978
    %v2308 = vunpack.c.l.b16 %v979
    %v2309 = vunpack.c.h.b16 %v979
    %v2310 = vunpack.c.l.b16 %v980
    %v2311 = vunpack.c.h.b16 %v980
    %v2312 = vunpack.c.l.b16 %v981
    %v2313 = vunpack.c.h.b16 %v981
    %v2314 = vunpack.c.l.b16 %v982
    %v2315 = vunpack.c.h.b16 %v982
    %v2316 = vunpack.c.l.b16 %v983
    %v2317 = vunpack.c.h.b16 %v983
    %v2318 = vunpack.c.l.b16 %v984
    %v2319 = vunpack.c.h.b16 %v984
    %v2320 = vunpack.c.l.b16 %v985
    %v2321 = vunpack.c.h.b16 %v985
    %v2322 = vunpack.c.l.b16 %v986
    %v2323 = vunpack.c.h.b16 %v986
    %v2324 = vunpack.c.l.b16 %v987
    %v2325 = vunpack.c.h.b16 %v987
    %v2326 = vunpack.c.l.b16 %v988
    %v2327 = vunpack.c.h.b16 %v988
    %v2328 = vunpack.c.l.b16 %v989
    %v2329 = vunpack.c.h.b16 %v989
    %v2330 = vunpack.c.l.b16 %v990
    %v2331 = vunpack.c.h.b16 %v990
    %v2332 = vunpack.c.l.b16 %v991
    %v2333 = vunpack.c.h.b16 %v991
    %v2334 = vunpack.c.l.b16 %v992
    %v2335 = vunpack.c.h.b16 %v992
    %v2336 = vunpack.c.l.b16 %v993
    %v2337 = vunpack.c.h.b16 %v993
    %v2338 = vunpack.c.l.b16 %v994
    %v2339 = vunpack.c.h.b16 %v994
    %v2340 = vunpack.c.l.b16 %v995
    %v2341 = vunpack.c.h.b16 %v995
    %v2342 = vunpack.c.l.b16 %v996
    %v2343 = vunpack.c.h.b16 %v996
    %v2344 = vunpack.c.l.b16 %v997
    %v2345 = vunpack.c.h.b16 %v997
    %v2346 = vunpack.c.l.b16 %v998
    %v2347 = vunpack.c.h.b16 %v998
    %v2348 = vunpack.c.l.b16 %v999
    %v2349 = vunpack.c.h.b16 %v999
    %v2350 = vunpack.c.l.b16 %v1000
    %v2351 = vunpack.c.h.b16 %v1000
    %v2352 = vunpack.c.l.b16 %v1001
    %v2353 = vunpack.c.h.b16 %v1001
    %v2354 = vunpack.c.l.b16 %v1002
    %v2355 = vunpack.c.h.b16 %v1002
    %v2356 = vunpack.c.l.b16 %v1003
    %v2357 = vunpack.c.h.b16 %v1003
    %v2358 = vunpack.c.l.b16 %v1004
    %v2359 = vunpack.c.h.b16 %v1004
    %v2360 = vunpack.c.l.b16 %v1005
    %v2361 = vunpack.c.h.b16 %v1005
    %v2362 = vunpack.c.l.b16 %v1006
    %v2363 = vunpack.c.h.b16 %v1006
    %v2364 = vunpack.c.l.b16 %v1007
    %v2365 = vunpack.c.h.b16 %v1007
    %v2366 = vunpack.c.l.b16 %v1008
    %v2367 = vunpack.c.h.b16 %v1008
    %v2368 = vunpack.c.l.b16 %v1009
    %v2369 = vunpack.c.h.b16 %v1009
    %v2370 = vunpack.c.l.b16 %v1010
    %v2371 = vunpack.c.h.b16 %v1010
    %v2372 = vunpack.c.l.b16 %v1011
    %v2373 = vunpack.c.h.b16 %v1011
    %v2374 = vunpack.c.l.b16 %v1012
    %v2375 = vunpack.c.h.b16 %v1012
    %v2376 = vunpack.c.l.b16 %v1013
    %v2377 = vunpack.c.h.b16 %v1013
    %v2378 = vunpack.c.l.b16 %v1014
    %v2379 = vunpack.c.h.b16 %v1014
    %v2380 = vunpack.c.l.b16 %v1015
    %v2381 = vunpack.c.h.b16 %v1015
    %v2382 = vunpack.c.l.b16 %v1016
    %v2383 = vunpack.c.h.b16 %v1016
    %v2384 = vunpack.c.l.b16 %v1017
    %v2385 = vunpack.c.h.b16 %v1017
    %v2386 = vunpack.c.l.b16 %v1018
    %v2387 = vunpack.c.h.b16 %v1018
    %v2388 = vunpack.c.l.b16 %v1019
    %v2389 = vunpack.c.h.b16 %v1019
    %v2390 = vunpack.c.l.b16 %v1020
    %v2391 = vunpack.c.h.b16 %v1020
    %v2392 = vunpack.c.l.b16 %v1021
    %v2393 = vunpack.c.h.b16 %v1021
    %v2394 = vunpack.c.l.b16 %v1022
    %v2395 = vunpack.c.h.b16 %v1022
    %v2396 = vunpack.c.l.b16 %v1023
    %v2397 = vunpack.c.h.b16 %v1023
    %v2398 = vunpack.c.l.b16 %v1024
    %v2399 = vunpack.c.h.b16 %v1024
    %v2400 = vunpack.c.l.b16 %v1025
    %v2401 = vunpack.c.h.b16 %v1025
    %v2402 = vunpack.c.l.b16 %v1026
    %v2403 = vunpack.c.h.b16 %v1026
    %v2404 = vunpack.c.l.b16 %v1027
    %v2405 = vunpack.c.h.b16 %v1027
    %v2406 = vunpack.c.l.b16 %v1028
    %v2407 = vunpack.c.h.b16 %v1028
    %v2408 = vunpack.c.l.b16 %v1029
    %v2409 = vunpack.c.h.b16 %v1029
    %v2410 = vunpack.c.l.b16 %v1030
    %v2411 = vunpack.c.h.b16 %v1030
    %v2412 = vunpack.c.l.b16 %v1031
    %v2413 = vunpack.c.h.b16 %v1031
    %v2414 = vunpack.c.l.b16 %v1032
    %v2415 = vunpack.c.h.b16 %v1032
    %v2416 = vunpack.c.l.b16 %v1033
    %v2417 = vunpack.c.h.b16 %v1033
    %v2418 = vunpack.c.l.b16 %v1034
    %v2419 = vunpack.c.h.b16 %v1034
    %v2420 = vunpack.c.l.b16 %v1035
    %v2421 = vunpack.c.h.b16 %v1035
    %v2422 = vunpack.c.l.b16 %v1036
    %v2423 = vunpack.c.h.b16 %v1036
    %v2424 = vunpack.c.l.b16 %v1037
    %v2425 = vunpack.c.h.b16 %v1037
    %v2426 = vunpack.c.l.b16 %v1038
    %v2427 = vunpack.c.h.b16 %v1038
    %v2428 = vunpack.c.l.b16 %v1039
    %v2429 = vunpack.c.h.b16 %v1039
    %v2430 = vunpack.c.l.b16 %v1040
    %v2431 = vunpack.c.h.b16 %v1040
    %v2432 = vunpack.c.l.b16 %v1041
    %v2433 = vunpack.c.h.b16 %v1041
    %v2434 = vunpack.c.l.b16 %v1042
    %v2435 = vunpack.c.h.b16 %v1042
    %v2436 = vunpack.c.l.b16 %v1043
    %v2437 = vunpack.c.h.b16 %v1043
    %v2438 = vunpack.c.l.b16 %v1044
    %v2439 = vunpack.c.h.b16 %v1044
    %v2440 = vunpack.c.l.b16 %v1045
    %v2441 = vunpack.c.h.b16 %v1045
    %v2442 = vunpack.c.l.b16 %v1046
    %v2443 = vunpack.c.h.b16 %v1046
    %v2444 = vunpack.c.l.b16 %v1047
    %v2445 = vunpack.c.h.b16 %v1047
    %v2446 = vunpack.c.l.b16 %v1048
    %v2447 = vunpack.c.h.b16 %v1048
    %v2448 = vunpack.c.l.b16 %v1049
    %v2449 = vunpack.c.h.b16 %v1049
    %v2450 = vunpack.c.l.b16 %v1050
    %v2451 = vunpack.c.h.b16 %v1050
    %v2452 = vunpack.c.l.b16 %v1051
    %v2453 = vunpack.c.h.b16 %v1051
    %v2454 = vunpack.c.l.b16 %v1052
    %v2455 = vunpack.c.h.b16 %v1052
    %v2456 = vunpack.c.l.b16 %v1053
    %v2457 = vunpack.c.h.b16 %v1053
    %v2458 = vunpack.c.l.b16 %v1054
    %v2459 = vunpack.c.h.b16 %v1054
    %v2460 = vunpack.c.l.b16 %v1055
    %v2461 = vunpack.c.h.b16 %v1055
    %v2462 = vunpack.c.l.b16 %v1056
    %v2463 = vunpack.c.h.b16 %v1056
    %v2464 = vunpack.c.l.b16 %v1057
    %v2465 = vunpack.c.h.b16 %v1057
    %v2466 = vunpack.c.l.b16 %v1058
    %v2467 = vunpack.c.h.b16 %v1058
    %v2468 = vunpack.c.l.b16 %v1059
    %v2469 = vunpack.c.h.b16 %v1059
    %v2470 = vunpack.c.l.b16 %v1060
    %v2471 = vunpack.c.h.b16 %v1060
    %v2472 = vunpack.c.l.b16 %v1061
    %v2473 = vunpack.c.h.b16 %v1061
    %v2474 = vunpack.c.l.b16 %v1062
    %v2475 = vunpack.c.h.b16 %v1062
    %v2476 = vunpack.c.l.b16 %v1063
    %v2477 = vunpack.c.h.b16 %v1063
    %v2478 = vunpack.c.l.b16 %v1064
    %v2479 = vunpack.c.h.b16 %v1064
    %v2480 = vunpack.c.l.b16 %v1065
    %v2481 = vunpack.c.h.b16 %v1065
    %v2482 = vunpack.c.l.b16 %v1066
    %v2483 = vunpack.c.h.b16 %v1066
    %v2484 = vunpack.c.l.b16 %v1067
    %v2485 = vunpack.c.h.b16 %v1067
    %v2486 = vunpack.c.l.b16 %v1068
    %v2487 = vunpack.c.h.b16 %v1068
    %v2488 = vunpack.c.l.b16 %v1069
    %v2489 = vunpack.c.h.b16 %v1069
    %v2490 = vunpack.c.l.b16 %v1070
    %v2491 = vunpack.c.h.b16 %v1070
    %v2492 = vunpack.c.l.b16 %v1071
    %v2493 = vunpack.c.h.b16 %v1071
    %v2494 = vunpack.c.l.b16 %v1072
    %v2495 = vunpack.c.h.b16 %v1072
    %v2496 = vunpack.c.l.b16 %v1073
    %v2497 = vunpack.c.h.b16 %v1073
    %v2498 = vunpack.c.l.b16 %v1074
    %v2499 = vunpack.c.h.b16 %v1074
    %v2500 = vunpack.c.l.b16 %v1075
    %v2501 = vunpack.c.h.b16 %v1075
    %v2502 = vunpack.c.l.b16 %v1076
    %v2503 = vunpack.c.h.b16 %v1076
    %v2504 = vunpack.c.l.b16 %v1077
    %v2505 = vunpack.c.h.b16 %v1077
    %v2506 = vunpack.c.l.b16 %v1078
    %v2507 = vunpack.c.h.b16 %v1078
    %v2508 = vunpack.c.l.b16 %v1079
    %v2509 = vunpack.c.h.b16 %v1079
    %v2510 = vunpack.c.l.b16 %v1080
    %v2511 = vunpack.c.h.b16 %v1080
    %v2512 = vunpack.c.l.b16 %v1081
    %v2513 = vunpack.c.h.b16 %v1081
    %v2514 = vunpack.c.l.b16 %v1082
    %v2515 = vunpack.c.h.b16 %v1082
    %v2516 = vunpack.c.l.b16 %v1083
    %v2517 = vunpack.c.h.b16 %v1083
    %v2518 = vunpack.c.l.b16 %v1084
    %v2519 = vunpack.c.h.b16 %v1084
    %v2520 = vunpack.c.l.b16 %v1085
    %v2521 = vunpack.c.h.b16 %v1085
    %v2522 = vunpack.c.l.b16 %v1086
    %v2523 = vunpack.c.h.b16 %v1086
    %v2524 = vunpack.c.l.b16 %v1087
    %v2525 = vunpack.c.h.b16 %v1087
    %v2526 = vunpack.c.l.b16 %v1088
    %v2527 = vunpack.c.h.b16 %v1088
    %v2528 = vunpack.c.l.b16 %v1089
    %v2529 = vunpack.c.h.b16 %v1089
    %v2530 = vunpack.c.l.b16 %v1090
    %v2531 = vunpack.c.h.b16 %v1090
    %v2532 = vunpack.c.l.b16 %v1091
    %v2533 = vunpack.c.h.b16 %v1091
    %v2534 = vunpack.c.l.b16 %v1092
    %v2535 = vunpack.c.h.b16 %v1092
    %v2536 = vunpack.c.l.b16 %v1093
    %v2537 = vunpack.c.h.b16 %v1093
    %v2538 = vunpack.c.l.b16 %v1094
    %v2539 = vunpack.c.h.b16 %v1094
    %v2540 = vunpack.c.l.b16 %v1095
    %v2541 = vunpack.c.h.b16 %v1095
    %v2542 = vunpack.c.l.b16 %v1096
    %v2543 = vunpack.c.h.b16 %v1096
    %v2544 = vunpack.c.l.b16 %v1097
    %v2545 = vunpack.c.h.b16 %v1097
    %v2546 = vunpack.c.l.b16 %v1098
    %v2547 = vunpack.c.h.b16 %v1098
    %v2548 = vunpack.c.l.b16 %v1099
    %v2549 = vunpack.c.h.b16 %v1099
    %v2550 = vunpack.c.l.b16 %v1100
    %v2551 = vunpack.c.h.b16 %v1100
    %v2552 = vunpack.c.l.b16 %v1101
    %v2553 = vunpack.c.h.b16 %v1101
    %v2554 = vunpack.c.l.b16 %v1102
    %v2555 = vunpack.c.h.b16 %v1102
    %v2556 = vunpack.c.l.b16 %v1103
    %v2557 = vunpack.c.h.b16 %v1103
    %v2558 = vunpack.c.l.b16 %v1104
    %v2559 = vunpack.c.h.b16 %v1104
    %v2560 = vunpack.c.l.b16 %v1105
    %v2561 = vunpack.c.h.b16 %v1105
    %v2562 = vunpack.c.l.b16 %v1106
    %v2563 = vunpack.c.h.b16 %v1106
    %v2564 = vunpack.c.l.b16 %v1107
    %v2565 = vunpack.c.h.b16 %v1107
    %v2566 = vunpack.c.l.b16 %v1108
    %v2567 = vunpack.c.h.b16 %v1108
    %v2568 = vunpack.c.l.b16 %v1109
    %v2569 = vunpack.c.h.b16 %v1109
    %v2570 = vunpack.c.l.b16 %v1110
    %v2571 = vunpack.c.h.b16 %v1110
    %v2572 = vunpack.c.l.b16 %v1111
    %v2573 = vunpack.c.h.b16 %v1111
    %v2574 = vunpack.c.l.b16 %v1112
    %v2575 = vunpack.c.h.b16 %v1112
    %v2576 = vunpack.c.l.b16 %v1113
    %v2577 = vunpack.c.h.b16 %v1113
    %v2578 = vunpack.c.l.b16 %v1114
    %v2579 = vunpack.c.h.b16 %v1114
    %v2580 = vunpack.c.l.b16 %v1115
    %v2581 = vunpack.c.h.b16 %v1115
    %v2582 = vunpack.c.l.b16 %v1116
    %v2583 = vunpack.c.h.b16 %v1116
    %v2584 = vunpack.c.l.b16 %v1117
    %v2585 = vunpack.c.h.b16 %v1117
    %v2586 = vunpack.c.l.b16 %v1118
    %v2587 = vunpack.c.h.b16 %v1118
    %v2588 = vunpack.c.l.b16 %v1119
    %v2589 = vunpack.c.h.b16 %v1119
    %v2590 = vunpack.c.l.b16 %v1120
    %v2591 = vunpack.c.h.b16 %v1120
    %v2592 = vunpack.c.l.b16 %v1121
    %v2593 = vunpack.c.h.b16 %v1121
    %v2594 = vunpack.c.l.b16 %v1122
    %v2595 = vunpack.c.h.b16 %v1122
    %v2596 = vunpack.c.l.b16 %v1123
    %v2597 = vunpack.c.h.b16 %v1123
    %v2598 = vunpack.c.l.b16 %v1124
    %v2599 = vunpack.c.h.b16 %v1124
    %v2600 = vunpack.c.l.b16 %v1125
    %v2601 = vunpack.c.h.b16 %v1125
    %v2602 = vunpack.c.l.b16 %v1126
    %v2603 = vunpack.c.h.b16 %v1126
    %v2604 = vunpack.c.l.b16 %v1127
    %v2605 = vunpack.c.h.b16 %v1127
    %v2606 = vunpack.c.l.b16 %v1128
    %v2607 = vunpack.c.h.b16 %v1128
    %v2608 = vunpack.c.l.b16 %v1129
    %v2609 = vunpack.c.h.b16 %v1129
    %v2610 = vunpack.c.l.b16 %v1130
    %v2611 = vunpack.c.h.b16 %v1130
    %v2612 = vunpack.c.l.b16 %v1131
    %v2613 = vunpack.c.h.b16 %v1131
    %v2614 = vunpack.c.l.b16 %v1132
    %v2615 = vunpack.c.h.b16 %v1132
    %v2616 = vunpack.c.l.b16 %v1133
    %v2617 = vunpack.c.h.b16 %v1133
    %v2618 = vunpack.c.l.b16 %v1134
    %v2619 = vunpack.c.h.b16 %v1134
    %v2620 = vunpack.c.l.b16 %v1135
    %v2621 = vunpack.c.h.b16 %v1135
    %v2622 = vunpack.c.l.b16 %v1136
    %v2623 = vunpack.c.h.b16 %v1136
    %v2624 = vunpack.c.l.b16 %v1137
    %v2625 = vunpack.c.h.b16 %v1137
    %v2626 = vunpack.c.l.b16 %v1138
    %v2627 = vunpack.c.h.b16 %v1138
    %v2628 = vunpack.c.l.b16 %v1139
    %v2629 = vunpack.c.h.b16 %v1139
    %v2630 = vunpack.c.l.b16 %v1140
    %v2631 = vunpack.c.h.b16 %v1140
    %v2632 = vunpack.c.l.b16 %v1141
    %v2633 = vunpack.c.h.b16 %v1141
    %v2634 = vunpack.c.l.b16 %v1142
    %v2635 = vunpack.c.h.b16 %v1142
    %v2636 = vunpack.c.l.b16 %v1143
    %v2637 = vunpack.c.h.b16 %v1143
    %v2638 = vunpack.c.l.b16 %v1144
    %v2639 = vunpack.c.h.b16 %v1144
    %v2640 = vunpack.c.l.b16 %v1145
    %v2641 = vunpack.c.h.b16 %v1145
    %v2642 = vunpack.c.l.b16 %v1146
    %v2643 = vunpack.c.h.b16 %v1146
    %v2644 = vunpack.c.l.b16 %v1147
    %v2645 = vunpack.c.h.b16 %v1147
    %v2646 = vunpack.c.l.b16 %v1148
    %v2647 = vunpack.c.h.b16 %v1148
    %v2648 = vunpack.c.l.b16 %v1149
    %v2649 = vunpack.c.h.b16 %v1149
    %v2650 = vunpack.c.l.b16 %v1150
    %v2651 = vunpack.c.h.b16 %v1150
    %v2652 = vunpack.c.l.b16 %v1151
    %v2653 = vunpack.c.h.b16 %v1151
    %v2654 = vunpack.c.l.b16 %v1152
    %v2655 = vunpack.c.h.b16 %v1152
    %v2656 = vunpack.c.l.b16 %v1153
    %v2657 = vunpack.c.h.b16 %v1153
    %v2658 = vunpack.c.l.b16 %v1154
    %v2659 = vunpack.c.h.b16 %v1154
    %v2660 = vunpack.c.l.b16 %v1155
    %v2661 = vunpack.c.h.b16 %v1155
    %v2662 = vunpack.c.l.b16 %v1156
    %v2663 = vunpack.c.h.b16 %v1156
    %v2664 = vunpack.c.l.b16 %v1157
    %v2665 = vunpack.c.h.b16 %v1157
    %v2666 = vunpack.c.l.b16 %v1158
    %v2667 = vunpack.c.h.b16 %v1158
    %v2668 = vunpack.c.l.b16 %v1159
    %v2669 = vunpack.c.h.b16 %v1159
    %v2670 = vunpack.c.l.b16 %v1160
    %v2671 = vunpack.c.h.b16 %v1160
    %v2672 = vunpack.c.l.b16 %v1161
    %v2673 = vunpack.c.h.b16 %v1161
    %v2674 = vunpack.c.l.b16 %v1162
    %v2675 = vunpack.c.h.b16 %v1162
    %v2676 = vunpack.c.l.b16 %v1163
    %v2677 = vunpack.c.h.b16 %v1163
    %v2678 = vunpack.c.l.b16 %v1164
    %v2679 = vunpack.c.h.b16 %v1164
    %v2680 = vunpack.c.l.b16 %v1165
    %v2681 = vunpack.c.h.b16 %v1165
    %v2682 = vunpack.c.l.b16 %v1166
    %v2683 = vunpack.c.h.b16 %v1166
    %v2684 = vunpack.c.l.b16 %v1167
    %v2685 = vunpack.c.h.b16 %v1167
    %v2686 = vunpack.c.l.b16 %v1168
    %v2687 = vunpack.c.h.b16 %v1168
    %v2688 = vunpack.c.l.b16 %v1169
    %v2689 = vunpack.c.h.b16 %v1169
    %v2690 = vunpack.c.l.b16 %v1170
    %v2691 = vunpack.c.h.b16 %v1170
    %v2692 = vunpack.c.l.b16 %v1171
    %v2693 = vunpack.c.h.b16 %v1171
    %v2694 = vunpack.c.l.b16 %v1172
    %v2695 = vunpack.c.h.b16 %v1172
    %v2696 = vunpack.c.l.b16 %v1173
    %v2697 = vunpack.c.h.b16 %v1173
    %v2698 = vunpack.c.l.b16 %v1174
    %v2699 = vunpack.c.h.b16 %v1174
    %v2700 = vunpack.c.l.b16 %v1175
    %v2701 = vunpack.c.h.b16 %v1175
    %v2702 = vunpack.c.l.b16 %v1176
    %v2703 = vunpack.c.h.b16 %v1176
    %v2704 = vunpack.c.l.b16 %v1177
    %v2705 = vunpack.c.h.b16 %v1177
    %v2706 = vunpack.c.l.b16 %v1178
    %v2707 = vunpack.c.h.b16 %v1178
    %v2708 = vunpack.c.l.b16 %v1179
    %v2709 = vunpack.c.h.b16 %v1179
    %v2710 = vunpack.c.l.b16 %v1180
    %v2711 = vunpack.c.h.b16 %v1180
    %v2712 = vunpack.c.l.b16 %v1181
    %v2713 = vunpack.c.h.b16 %v1181
    %v2714 = vunpack.c.l.b16 %v1182
    %v2715 = vunpack.c.h.b16 %v1182
    %v2716 = vunpack.c.l.b16 %v1183
    %v2717 = vunpack.c.h.b16 %v1183
    %v2718 = vunpack.c.l.b16 %v1184
    %v2719 = vunpack.c.h.b16 %v1184
    %v2720 = vunpack.c.l.b16 %v1185
    %v2721 = vunpack.c.h.b16 %v1185
    %v2722 = vunpack.c.l.b16 %v1186
    %v2723 = vunpack.c.h.b16 %v1186
    %v2724 = vunpack.c.l.b16 %v1187
    %v2725 = vunpack.c.h.b16 %v1187
    %v2726 = vunpack.c.l.b16 %v1188
    %v2727 = vunpack.c.h.b16 %v1188
    %v2728 = vunpack.c.l.b16 %v1189
    %v2729 = vunpack.c.h.b16 %v1189
    %v2730 = vunpack.c.l.b16 %v1190
    %v2731 = vunpack.c.h.b16 %v1190
    %v2732 = vunpack.c.l.b16 %v1191
    %v2733 = vunpack.c.h.b16 %v1191
    %v2734 = vunpack.c.l.b16 %v1192
    %v2735 = vunpack.c.h.b16 %v1192
    %v2736 = vunpack.c.l.b16 %v1193
    %v2737 = vunpack.c.h.b16 %v1193
    %v2738 = vunpack.c.l.b16 %v1194
    %v2739 = vunpack.c.h.b16 %v1194
    %v2740 = vunpack.c.l.b16 %v1195
    %v2741 = vunpack.c.h.b16 %v1195
    %v2742 = vunpack.c.l.b16 %v1196
    %v2743 = vunpack.c.h.b16 %v1196
    %v2744 = vunpack.c.l.b16 %v1197
    %v2745 = vunpack.c.h.b16 %v1197
    %v2746 = vunpack.c.l.b16 %v1198
    %v2747 = vunpack.c.h.b16 %v1198
    %v2748 = vunpack.c.l.b16 %v1199
    %v2749 = vunpack.c.h.b16 %v1199
    %v2750 = vunpack.c.l.b16 %v1200
    %v2751 = vunpack.c.h.b16 %v1200
    %v2752 = vunpack.c.l.b16 %v1201
    %v2753 = vunpack.c.h.b16 %v1201
    %v2754 = vunpack.c.l.b16 %v1202
    %v2755 = vunpack.c.h.b16 %v1202
    %v2756 = vunpack.c.l.b16 %v1203
    %v2757 = vunpack.c.h.b16 %v1203
    %v2758 = vunpack.c.l.b16 %v1204
    %v2759 = vunpack.c.h.b16 %v1204
    %v2760 = vunpack.c.l.b16 %v1205
    %v2761 = vunpack.c.h.b16 %v1205
    %v2762 = vunpack.c.l.b16 %v1206
    %v2763 = vunpack.c.h.b16 %v1206
    %v2764 = vunpack.c.l.b16 %v1207
    %v2765 = vunpack.c.h.b16 %v1207
    %v2766 = vunpack.c.l.b16 %v1208
    %v2767 = vunpack.c.h.b16 %v1208
    %v2768 = vunpack.c.l.b16 %v1209
    %v2769 = vunpack.c.h.b16 %v1209
    %v2770 = vunpack.c.l.b16 %v1210
    %v2771 = vunpack.c.h.b16 %v1210
    %v2772 = vunpack.c.l.b16 %v1211
    %v2773 = vunpack.c.h.b16 %v1211
    %v2774 = vunpack.c.l.b16 %v1212
    %v2775 = vunpack.c.h.b16 %v1212
    %v2776 = vunpack.c.l.b16 %v1213
    %v2777 = vunpack.c.h.b16 %v1213
    %v2778 = vunpack.c.l.b16 %v1214
    %v2779 = vunpack.c.h.b16 %v1214
    %v2780 = vunpack.c.l.b16 %v1215
    %v2781 = vunpack.c.h.b16 %v1215
    %v2782 = vunpack.c.l.b16 %v1216
    %v2783 = vunpack.c.h.b16 %v1216
    %v2784 = vunpack.c.l.b16 %v1217
    %v2785 = vunpack.c.h.b16 %v1217
    %v2786 = vunpack.c.l.b16 %v1218
    %v2787 = vunpack.c.h.b16 %v1218
    %v2788 = vunpack.c.l.b16 %v1219
    %v2789 = vunpack.c.h.b16 %v1219
    %v2790 = vunpack.c.l.b16 %v1220
    %v2791 = vunpack.c.h.b16 %v1220
    %v2792 = vunpack.c.l.b16 %v1221
    %v2793 = vunpack.c.h.b16 %v1221
    %v2794 = vunpack.c.l.b16 %v1222
    %v2795 = vunpack.c.h.b16 %v1222
    %v2796 = vunpack.c.l.b16 %v1223
    %v2797 = vunpack.c.h.b16 %v1223
    %v2798 = vunpack.c.l.b16 %v1224
    %v2799 = vunpack.c.h.b16 %v1224
    %v2800 = vunpack.c.l.b16 %v1225
    %v2801 = vunpack.c.h.b16 %v1225
    %v2802 = vunpack.c.l.b16 %v1226
    %v2803 = vunpack.c.h.b16 %v1226
    %v2804 = vunpack.c.l.b16 %v1227
    %v2805 = vunpack.c.h.b16 %v1227
    %v2806 = vunpack.c.l.b16 %v1228
    %v2807 = vunpack.c.h.b16 %v1228
    %v2808 = vunpack.c.l.b16 %v1229
    %v2809 = vunpack.c.h.b16 %v1229
    %v2810 = vunpack.c.l.b16 %v1230
    %v2811 = vunpack.c.h.b16 %v1230
    %v2812 = vunpack.c.l.b16 %v1231
    %v2813 = vunpack.c.h.b16 %v1231
    %v2814 = vunpack.c.l.b16 %v1232
    %v2815 = vunpack.c.h.b16 %v1232
    %v2816 = vunpack.c.l.b16 %v1233
    %v2817 = vunpack.c.h.b16 %v1233
    %v2818 = vunpack.c.l.b16 %v1234
    %v2819 = vunpack.c.h.b16 %v1234
    %v2820 = vunpack.c.l.b16 %v1235
    %v2821 = vunpack.c.h.b16 %v1235
    %v2822 = vunpack.c.l.b16 %v1236
    %v2823 = vunpack.c.h.b16 %v1236
    %v2824 = vunpack.c.l.b16 %v1237
    %v2825 = vunpack.c.h.b16 %v1237
    %v2826 = vunpack.c.l.b16 %v1238
    %v2827 = vunpack.c.h.b16 %v1238
    %v2828 = vunpack.c.l.b16 %v1239
    %v2829 = vunpack.c.h.b16 %v1239
    %v2830 = vunpack.c.l.b16 %v1240
    %v2831 = vunpack.c.h.b16 %v1240
    %v2832 = vunpack.c.l.b16 %v1241
    %v2833 = vunpack.c.h.b16 %v1241
    %v2834 = vunpack.c.l.b16 %v1242
    %v2835 = vunpack.c.h.b16 %v1242
    %v2836 = vunpack.c.l.b16 %v1243
    %v2837 = vunpack.c.h.b16 %v1243
    %v2838 = vunpack.c.l.b16 %v1244
    %v2839 = vunpack.c.h.b16 %v1244
    %v2840 = vunpack.c.l.b16 %v1245
    %v2841 = vunpack.c.h.b16 %v1245
    %v2842 = vunpack.c.l.b16 %v1246
    %v2843 = vunpack.c.h.b16 %v1246
    %v2844 = vunpack.c.l.b16 %v1247
    %v2845 = vunpack.c.h.b16 %v1247
    %v2846 = vunpack.c.l.b16 %v1248
    %v2847 = vunpack.c.h.b16 %v1248
    %v2848 = vunpack.c.l.b16 %v1249
    %v2849 = vunpack.c.h.b16 %v1249
    %v2850 = vunpack.c.l.b16 %v1250
    %v2851 = vunpack.c.h.b16 %v1250
    %v2852 = vunpack.c.l.b16 %v1251
    %v2853 = vunpack.c.h.b16 %v1251
    %v2854 = vunpack.c.l.b16 %v1252
    %v2855 = vunpack.c.h.b16 %v1252
    %v2856 = vunpack.c.l.b16 %v1253
    %v2857 = vunpack.c.h.b16 %v1253
    %v2858 = vunpack.c.l.b16 %v1254
    %v2859 = vunpack.c.h.b16 %v1254
    %v2860 = vunpack.c.l.b16 %v1255
    %v2861 = vunpack.c.h.b16 %v1255
    %v2862 = vunpack.c.l.b16 %v1256
    %v2863 = vunpack.c.h.b16 %v1256
    %v2864 = vunpack.c.l.b16 %v1257
    %v2865 = vunpack.c.h.b16 %v1257
    %v2866 = vunpack.c.l.b16 %v1258
    %v2867 = vunpack.c.h.b16 %v1258
    %v2868 = vunpack.c.l.b16 %v1259
    %v2869 = vunpack.c.h.b16 %v1259
    %v2870 = vunpack.c.l.b16 %v1260
    %v2871 = vunpack.c.h.b16 %v1260
    %v2872 = vunpack.c.l.b16 %v1261
    %v2873 = vunpack.c.h.b16 %v1261
    %v2874 = vunpack.c.l.b16 %v1262
    %v2875 = vunpack.c.h.b16 %v1262
    %v2876 = vunpack.c.l.b16 %v1263
    %v2877 = vunpack.c.h.b16 %v1263
    %v2878 = vunpack.c.l.b16 %v1264
    %v2879 = vunpack.c.h.b16 %v1264
    %v2880 = vunpack.c.l.b16 %v1265
    %v2881 = vunpack.c.h.b16 %v1265
    %v2882 = vunpack.c.l.b16 %v1266
    %v2883 = vunpack.c.h.b16 %v1266
    %v2884 = vunpack.c.l.b16 %v1267
    %v2885 = vunpack.c.h.b16 %v1267
    %v2886 = vunpack.c.l.b16 %v1268
    %v2887 = vunpack.c.h.b16 %v1268
    %v2888 = vunpack.c.l.b16 %v1269
    %v2889 = vunpack.c.h.b16 %v1269
    %v2890 = vunpack.c.l.b16 %v1270
    %v2891 = vunpack.c.h.b16 %v1270
    %v2892 = vunpack.c.l.b16 %v1271
    %v2893 = vunpack.c.h.b16 %v1271
    %v2894 = vunpack.c.l.b16 %v1272
    %v2895 = vunpack.c.h.b16 %v1272
    %v2896 = vunpack.c.l.b16 %v1273
    %v2897 = vunpack.c.h.b16 %v1273
    %v2898 = vunpack.c.l.b16 %v1274
    %v2899 = vunpack.c.h.b16 %v1274
    %v2900 = vunpack.c.l.b16 %v1275
    %v2901 = vunpack.c.h.b16 %v1275
    %v2902 = vunpack.c.l.b16 %v1276
    %v2903 = vunpack.c.h.b16 %v1276
    %v2904 = vunpack.c.l.b16 %v1277
    %v2905 = vunpack.c.h.b16 %v1277
    %v2906 = vunpack.c.l.b16 %v1278
    %v2907 = vunpack.c.h.b16 %v1278
    %v2908 = vunpack.c.l.b16 %v1279
    %v2909 = vunpack.c.h.b16 %v1279
    %v2910 = vunpack.c.l.b16 %v1280
    %v2911 = vunpack.c.h.b16 %v1280
    %v2912 = vunpack.c.l.b16 %v1281
    %v2913 = vunpack.c.h.b16 %v1281
    %v2914 = vunpack.c.l.b16 %v1282
    %v2915 = vunpack.c.h.b16 %v1282
    %v2916 = vunpack.c.l.b16 %v1283
    %v2917 = vunpack.c.h.b16 %v1283
    %v2918 = vunpack.c.l.b16 %v1284
    %v2919 = vunpack.c.h.b16 %v1284
    %v2920 = vunpack.c.l.b16 %v1285
    %v2921 = vunpack.c.h.b16 %v1285
    %v2922 = vunpack.c.l.b16 %v1286
    %v2923 = vunpack.c.h.b16 %v1286
    %v2924 = vunpack.c.l.b16 %v1287
    %v2925 = vunpack.c.h.b16 %v1287
    %v2926 = vunpack.c.l.b16 %v1288
    %v2927 = vunpack.c.h.b16 %v1288
    %v2928 = vunpack.c.l.b16 %v1289
    %v2929 = vunpack.c.h.b16 %v1289
    %v2930 = vunpack.c.l.b16 %v1290
    %v2931 = vunpack.c.h.b16 %v1290
    %v2932 = vunpack.c.l.b16 %v1291
    %v2933 = vunpack.c.h.b16 %v1291
    %v2934 = vunpack.c.l.b16 %v1292
    %v2935 = vunpack.c.h.b16 %v1292
    %v2936 = vunpack.c.l.b16 %v1293
    %v2937 = vunpack.c.h.b16 %v1293
    %v2938 = vunpack.c.l.b16 %v1294
    %v2939 = vunpack.c.h.b16 %v1294
    %v2940 = vunpack.c.l.b16 %v1295
    %v2941 = vunpack.c.h.b16 %v1295
    %v2942 = vunpack.c.l.b16 %v1296
    %v2943 = vunpack.c.h.b16 %v1296
    %v2944 = vunpack.c.l.b16 %v1297
    %v2945 = vunpack.c.h.b16 %v1297
    %v2946 = vunpack.c.l.b16 %v1298
    %v2947 = vunpack.c.h.b16 %v1298
    %v2948 = vunpack.c.l.b16 %v1299
    %v2949 = vunpack.c.h.b16 %v1299
    %v2950 = vunpack.c.l.b16 %v1300
    %v2951 = vunpack.c.h.b16 %v1300
    %v2952 = vunpack.c.l.b16 %v1301
    %v2953 = vunpack.c.h.b16 %v1301
    %v2954 = vunpack.c.l.b16 %v1302
    %v2955 = vunpack.c.h.b16 %v1302
    %v2956 = vunpack.c.l.b16 %v1303
    %v2957 = vunpack.c.h.b16 %v1303
    %v2958 = vunpack.c.l.b16 %v1304
    %v2959 = vunpack.c.h.b16 %v1304
    %v2960 = vunpack.c.l.b16 %v1305
    %v2961 = vunpack.c.h.b16 %v1305
    %v2962 = vunpack.c.l.b16 %v1306
    %v2963 = vunpack.c.h.b16 %v1306
    %v2964 = vunpack.c.l.b16 %v1307
    %v2965 = vunpack.c.h.b16 %v1307
    %v2966 = vunpack.c.l.b16 %v1308
    %v2967 = vunpack.c.h.b16 %v1308
    %v2968 = vunpack.c.l.b16 %v1309
    %v2969 = vunpack.c.h.b16 %v1309
    %v2970 = vunpack.c.l.b16 %v1310
    %v2971 = vunpack.c.h.b16 %v1310
    %v2972 = vunpack.c.l.b16 %v1311
    %v2973 = vunpack.c.h.b16 %v1311
    %v2974 = vunpack.c.l.b16 %v1312
    %v2975 = vunpack.c.h.b16 %v1312
    %v2976 = vunpack.c.l.b16 %v1313
    %v2977 = vunpack.c.h.b16 %v1313
    %v2978 = vunpack.c.l.b16 %v1314
    %v2979 = vunpack.c.h.b16 %v1314
    %v2980 = vunpack.c.l.b16 %v1315
    %v2981 = vunpack.c.h.b16 %v1315
    %v2982 = vunpack.c.l.b16 %v1316
    %v2983 = vunpack.c.h.b16 %v1316
    %v2984 = vunpack.c.l.b16 %v1317
    %v2985 = vunpack.c.h.b16 %v1317
    %v2986 = vunpack.c.l.b16 %v1318
    %v2987 = vunpack.c.h.b16 %v1318
    %v2988 = vunpack.c.l.b16 %v1319
    %v2989 = vunpack.c.h.b16 %v1319
    %v2990 = vunpack.c.l.b16 %v1320
    %v2991 = vunpack.c.h.b16 %v1320
    %v2992 = vunpack.c.l.b16 %v1321
    %v2993 = vunpack.c.h.b16 %v1321
    %v2994 = vunpack.c.l.b16 %v1322
    %v2995 = vunpack.c.h.b16 %v1322
    %v2996 = vunpack.c.l.b16 %v1323
    %v2997 = vunpack.c.h.b16 %v1323
    %v2998 = vunpack.c.l.b16 %v1324
    %v2999 = vunpack.c.h.b16 %v1324
    %v3000 = vunpack.c.l.b16 %v1325
    %v3001 = vunpack.c.h.b16 %v1325
    %v3002 = vunpack.c.l.b16 %v1326
    %v3003 = vunpack.c.h.b16 %v1326
    %v3004 = vunpack.c.l.b16 %v1327
    %v3005 = vunpack.c.h.b16 %v1327
    %v3006 = vunpack.c.l.b16 %v1328
    %v3007 = vunpack.c.h.b16 %v1328
    %v3008 = vunpack.c.l.b16 %v1329
    %v3009 = vunpack.c.h.b16 %v1329
    %v3010 = vunpack.c.l.b16 %v1330
    %v3011 = vunpack.c.h.b16 %v1330
    %v3012 = vunpack.c.l.b16 %v1331
    %v3013 = vunpack.c.h.b16 %v1331
    %v3014 = vunpack.c.l.b16 %v1332
    %v3015 = vunpack.c.h.b16 %v1332
    %v3016 = vunpack.c.l.b16 %v1333
    %v3017 = vunpack.c.h.b16 %v1333
    %v3018 = vunpack.c.l.b16 %v1334
    %v3019 = vunpack.c.h.b16 %v1334
    %v3020 = vunpack.c.l.b16 %v1335
    %v3021 = vunpack.c.h.b16 %v1335
    %v3022 = vunpack.c.l.b16 %v1336
    %v3023 = vunpack.c.h.b16 %v1336
    %v3024 = vunpack.c.l.b16 %v1337
    %v3025 = vunpack.c.h.b16 %v1337
    %v3026 = vunpack.c.l.b16 %v1338
    %v3027 = vunpack.c.h.b16 %v1338
    %v3028 = vunpack.c.l.b16 %v1339
    %v3029 = vunpack.c.h.b16 %v1339
    %v3030 = vunpack.c.l.b16 %v1340
    %v3031 = vunpack.c.h.b16 %v1340
    %v3032 = vunpack.c.l.b16 %v1341
    %v3033 = vunpack.c.h.b16 %v1341
    %v3034 = vunpack.c.l.b16 %v1342
    %v3035 = vunpack.c.h.b16 %v1342
    %v3036 = vunpack.c.l.b16 %v1343
    %v3037 = vunpack.c.h.b16 %v1343
    %v3038 = vunpack.c.l.b16 %v1344
    %v3039 = vunpack.c.h.b16 %v1344
    %v3040 = vunpack.c.l.b16 %v1345
    %v3041 = vunpack.c.h.b16 %v1345
    %v3042 = vunpack.c.l.b16 %v1346
    %v3043 = vunpack.c.h.b16 %v1346
    %v3044 = vunpack.c.l.b16 %v1347
    %v3045 = vunpack.c.h.b16 %v1347
    %v3046 = vunpack.c.l.b16 %v1348
    %v3047 = vunpack.c.h.b16 %v1348
    %v3048 = vunpack.c.l.b16 %v1349
    %v3049 = vunpack.c.h.b16 %v1349
    %v3050 = vunpack.c.l.b16 %v1350
    %v3051 = vunpack.c.h.b16 %v1350
    %v3052 = vunpack.c.l.b16 %v1351
    %v3053 = vunpack.c.h.b16 %v1351
    %v3054 = vunpack.c.l.b16 %v1352
    %v3055 = vunpack.c.h.b16 %v1352
    %v3056 = vunpack.c.l.b16 %v1353
    %v3057 = vunpack.c.h.b16 %v1353
    %v3058 = vunpack.c.l.b16 %v1354
    %v3059 = vunpack.c.h.b16 %v1354
    %v3060 = vunpack.c.l.b16 %v1355
    %v3061 = vunpack.c.h.b16 %v1355
    %v3062 = vunpack.c.l.b16 %v1356
    %v3063 = vunpack.c.h.b16 %v1356
    %v3064 = vunpack.c.l.b16 %v1357
    %v3065 = vunpack.c.h.b16 %v1357
    %v3066 = vunpack.c.l.b16 %v1358
    %v3067 = vunpack.c.h.b16 %v1358
    %v3068 = vunpack.c.l.b16 %v1359
    %v3069 = vunpack.c.h.b16 %v1359
    %v3070 = vunpack.c.l.b16 %v1360
    %v3071 = vunpack.c.h.b16 %v1360
    %v3072 = vunpack.c.l.b16 %v1361
    %v3073 = vunpack.c.h.b16 %v1361
    %v3074 = vunpack.c.l.b16 %v1362
    %v3075 = vunpack.c.h.b16 %v1362
    %v3076 = vunpack.c.l.b16 %v1363
    %v3077 = vunpack.c.h.b16 %v1363
    %v3078 = vunpack.c.l.b16 %v1364
    %v3079 = vunpack.c.h.b16 %v1364
    %v3080 = vunpack.c.l.b16 %v1365
    %v3081 = vunpack.c.h.b16 %v1365
    %v3082 = vunpack.c.l.b16 %v1366
    %v3083 = vunpack.c.h.b16 %v1366
    %v3084 = vunpack.c.l.b16 %v1367
    %v3085 = vunpack.c.h.b16 %v1367
    %v3086 = vunpack.c.l.b16 %v1368
    %v3087 = vunpack.c.h.b16 %v1368
    %v3088 = vunpack.c.l.b16 %v1369
    %v3089 = vunpack.c.h.b16 %v1369
    %v3090 = vunpack.c.l.b16 %v1370
    %v3091 = vunpack.c.h.b16 %v1370
    %v3092 = vunpack.c.l.b16 %v1371
    %v3093 = vunpack.c.h.b16 %v1371
    %v3094 = vunpack.c.l.b16 %v1372
    %v3095 = vunpack.c.h.b16 %v1372
    %v3096 = vunpack.c.l.b16 %v1373
    %v3097 = vunpack.c.h.b16 %v1373
    %v3098 = vunpack.c.l.b16 %v1374
    %v3099 = vunpack.c.h.b16 %v1374
    %v3100 = vunpack.c.l.b16 %v1375
    %v3101 = vunpack.c.h.b16 %v1375
    %v3102 = vunpack.c.l.b16 %v1376
    %v3103 = vunpack.c.h.b16 %v1376
    %v3104 = vunpack.c.l.b16 %v1377
    %v3105 = vunpack.c.h.b16 %v1377
    %v3106 = vunpack.c.l.b16 %v1378
    %v3107 = vunpack.c.h.b16 %v1378
    %v3108 = vunpack.c.l.b16 %v1379
    %v3109 = vunpack.c.h.b16 %v1379
    %v3110 = vunpack.c.l.b16 %v1380
    %v3111 = vunpack.c.h.b16 %v1380
    %v3112 = vunpack.c.l.b16 %v1381
    %v3113 = vunpack.c.h.b16 %v1381
    %v3114 = vunpack.c.l.b16 %v1382
    %v3115 = vunpack.c.h.b16 %v1382
    %v3116 = vunpack.c.l.b16 %v1383
    %v3117 = vunpack.c.h.b16 %v1383
    %v3118 = vunpack.c.l.b16 %v1384
    %v3119 = vunpack.c.h.b16 %v1384
    %v3120 = vunpack.c.l.b16 %v1385
    %v3121 = vunpack.c.h.b16 %v1385
    %v3122 = vunpack.c.l.b16 %v1386
    %v3123 = vunpack.c.h.b16 %v1386
    %v3124 = vunpack.c.l.b16 %v1387
    %v3125 = vunpack.c.h.b16 %v1387
    %v3126 = vunpack.c.l.b16 %v1388
    %v3127 = vunpack.c.h.b16 %v1388
    %v3128 = vunpack.c.l.b16 %v1389
    %v3129 = vunpack.c.h.b16 %v1389
    %v3130 = vunpack.c.l.b16 %v1390
    %v3131 = vunpack.c.h.b16 %v1390
    %v3132 = vunpack.c.l.b16 %v1391
    %v3133 = vunpack.c.h.b16 %v1391
    %v3134 = vunpack.c.l.b16 %v1392
    %v3135 = vunpack.c.h.b16 %v1392
    %v3136 = vunpack.c.l.b16 %v1393
    %v3137 = vunpack.c.h.b16 %v1393
    %v3138 = vunpack.c.l.b16 %v1394
    %v3139 = vunpack.c.h.b16 %v1394
    %v3140 = vunpack.c.l.b16 %v1395
    %v3141 = vunpack.c.h.b16 %v1395
    %v3142 = vunpack.c.l.b16 %v1396
    %v3143 = vunpack.c.h.b16 %v1396
    %v3144 = vunpack.c.l.b16 %v1397
    %v3145 = vunpack.c.h.b16 %v1397
    %v3146 = vunpack.c.l.b16 %v1398
    %v3147 = vunpack.c.h.b16 %v1398
    %v3148 = vunpack.c.l.b16 %v1399
    %v3149 = vunpack.c.h.b16 %v1399
    %v3150 = vunpack.c.l.b16 %v1400
    %v3151 = vunpack.c.h.b16 %v1400
    %v3152 = vunpack.c.l.b16 %v1401
    %v3153 = vunpack.c.h.b16 %v1401
    %v3154 = vunpack.c.l.b16 %v1402
    %v3155 = vunpack.c.h.b16 %v1402
    %v3156 = vunpack.c.l.b16 %v1403
    %v3157 = vunpack.c.h.b16 %v1403
    %v3158 = vunpack.c.l.b16 %v1404
    %v3159 = vunpack.c.h.b16 %v1404
    %v3160 = vunpack.c.l.b16 %v1405
    %v3161 = vunpack.c.h.b16 %v1405
    %v3162 = vunpack.c.l.b16 %v1406
    %v3163 = vunpack.c.h.b16 %v1406
    %v3164 = vunpack.c.l.b16 %v1407
    %v3165 = vunpack.c.h.b16 %v1407
    %v3166 = vunpack.c.l.b16 %v1408
    %v3167 = vunpack.c.h.b16 %v1408
    %v3168 = vunpack.c.l.b16 %v1409
    %v3169 = vunpack.c.h.b16 %v1409
    %v3170 = vunpack.c.l.b16 %v1410
    %v3171 = vunpack.c.h.b16 %v1410
    %v3172 = vunpack.c.l.b16 %v1411
    %v3173 = vunpack.c.h.b16 %v1411
    %v3174 = vunpack.c.l.b16 %v1412
    %v3175 = vunpack.c.h.b16 %v1412
    %v3176 = vunpack.c.l.b16 %v1413
    %v3177 = vunpack.c.h.b16 %v1413
    %v3178 = vunpack.c.l.b16 %v1414
    %v3179 = vunpack.c.h.b16 %v1414
    %v3180 = vunpack.c.l.b16 %v1415
    %v3181 = vunpack.c.h.b16 %v1415
    %v3182 = vunpack.c.l.b16 %v1416
    %v3183 = vunpack.c.h.b16 %v1416
    %v3184 = vunpack.c.l.b16 %v1417
    %v3185 = vunpack.c.h.b16 %v1417
    %v3186 = vunpack.c.l.b16 %v1418
    %v3187 = vunpack.c.h.b16 %v1418
    %v3188 = vunpack.c.l.b16 %v1419
    %v3189 = vunpack.c.h.b16 %v1419
    %v3190 = vunpack.c.l.b16 %v1420
    %v3191 = vunpack.c.h.b16 %v1420
    %v3192 = vunpack.c.l.b16 %v1421
    %v3193 = vunpack.c.h.b16 %v1421
    %v3194 = vunpack.c.l.b16 %v1422
    %v3195 = vunpack.c.h.b16 %v1422
    %v3196 = vunpack.c.l.b16 %v1423
    %v3197 = vunpack.c.h.b16 %v1423
    %v3198 = vunpack.c.l.b16 %v1424
    %v3199 = vunpack.c.h.b16 %v1424
    %v3200 = vunpack.c.l.b16 %v1425
    %v3201 = vunpack.c.h.b16 %v1425
    %v3202 = vunpack.c.l.b16 %v1426
    %v3203 = vunpack.c.h.b16 %v1426
    %v3204 = vunpack.c.l.b16 %v1427
    %v3205 = vunpack.c.h.b16 %v1427
    %v3206 = vunpack.c.l.b16 %v1428
    %v3207 = vunpack.c.h.b16 %v1428
    %v3208 = vunpack.c.l.b16 %v1429
    %v3209 = vunpack.c.h.b16 %v1429
    %v3210 = vunpack.c.l.b16 %v1430
    %v3211 = vunpack.c.h.b16 %v1430
    %v3212 = vunpack.c.l.b16 %v1431
    %v3213 = vunpack.c.h.b16 %v1431
    %v3214 = vunpack.c.l.b16 %v1432
    %v3215 = vunpack.c.h.b16 %v1432
    %v3216 = vunpack.c.l.b16 %v1433
    %v3217 = vunpack.c.h.b16 %v1433
    %v3218 = vunpack.c.l.b16 %v1434
    %v3219 = vunpack.c.h.b16 %v1434
    %v3220 = vunpack.c.l.b16 %v1435
    %v3221 = vunpack.c.h.b16 %v1435
    %v3222 = vunpack.c.l.b16 %v1436
    %v3223 = vunpack.c.h.b16 %v1436
    %v3224 = vunpack.c.l.b16 %v1437
    %v3225 = vunpack.c.h.b16 %v1437
    %v3226 = vunpack.c.l.b16 %v1438
    %v3227 = vunpack.c.h.b16 %v1438
    %v3228 = vunpack.c.l.b16 %v1439
    %v3229 = vunpack.c.h.b16 %v1439
    %v3230 = vunpack.c.l.b16 %v1440
    %v3231 = vunpack.c.h.b16 %v1440
    %v3232 = vunpack.c.l.b16 %v1441
    %v3233 = vunpack.c.h.b16 %v1441
    %v3234 = vunpack.c.l.b16 %v1442
    %v3235 = vunpack.c.h.b16 %v1442
    %v3236 = vunpack.c.l.b16 %v1443
    %v3237 = vunpack.c.h.b16 %v1443
    %v3238 = vunpack.c.l.b16 %v1444
    %v3239 = vunpack.c.h.b16 %v1444
    %v3240 = vunpack.c.l.b16 %v1445
    %v3241 = vunpack.c.h.b16 %v1445
    %v3242 = vunpack.c.l.b16 %v1446
    %v3243 = vunpack.c.h.b16 %v1446
    %v3244 = vunpack.c.l.b16 %v1447
    %v3245 = vunpack.c.h.b16 %v1447
    %v3246 = vunpack.c.l.b16 %v1448
    %v3247 = vunpack.c.h.b16 %v1448
    %v3248 = vunpack.c.l.b16 %v1449
    %v3249 = vunpack.c.h.b16 %v1449
    %v3250 = vunpack.c.l.b16 %v1450
    %v3251 = vunpack.c.h.b16 %v1450
    %v3252 = vunpack.c.l.b16 %v1451
    %v3253 = vunpack.c.h.b16 %v1451
    %v3254 = vunpack.c.l.b16 %v1452
    %v3255 = vunpack.c.h.b16 %v1452
    %v3256 = vunpack.c.l.b16 %v1453
    %v3257 = vunpack.c.h.b16 %v1453
    %v3258 = vunpack.c.l.b16 %v1454
    %v3259 = vunpack.c.h.b16 %v1454
    %v3260 = vunpack.c.l.b16 %v1455
    %v3261 = vunpack.c.h.b16 %v1455
    %v3262 = vunpack.c.l.b16 %v1456
    %v3263 = vunpack.c.h.b16 %v1456
    %v3264 = vunpack.c.l.b16 %v1457
    %v3265 = vunpack.c.h.b16 %v1457
    %v3266 = vunpack.c.l.b16 %v1458
    %v3267 = vunpack.c.h.b16 %v1458
    %v3268 = vunpack.c.l.b16 %v1459
    %v3269 = vunpack.c.h.b16 %v1459
    %v3270 = vunpack.c.l.b16 %v1460
    %v3271 = vunpack.c.h.b16 %v1460
    %v3272 = vunpack.c.l.b16 %v1461
    %v3273 = vunpack.c.h.b16 %v1461
    %v3274 = vunpack.c.l.b16 %v1462
    %v3275 = vunpack.c.h.b16 %v1462
    %v3276 = vunpack.c.l.b16 %v1463
    %v3277 = vunpack.c.h.b16 %v1463
    %v3278 = vunpack.c.l.b16 %v1464
    %v3279 = vunpack.c.h.b16 %v1464
    %v3280 = vunpack.c.l.b16 %v1465
    %v3281 = vunpack.c.h.b16 %v1465
    %v3282 = vunpack.c.l.b16 %v1466
    %v3283 = vunpack.c.h.b16 %v1466
    %v3284 = vunpack.c.l.b16 %v1467
    %v3285 = vunpack.c.h.b16 %v1467
    %v3286 = vunpack.c.l.b16 %v1468
    %v3287 = vunpack.c.h.b16 %v1468
    %v3288 = vunpack.c.l.b16 %v1469
    %v3289 = vunpack.c.h.b16 %v1469
    %v3290 = vunpack.c.l.b16 %v1470
    %v3291 = vunpack.c.h.b16 %v1470
    %v3292 = vunpack.c.l.b16 %v1471
    %v3293 = vunpack.c.h.b16 %v1471
    %v3294 = vunpack.c.l.b16 %v1472
    %v3295 = vunpack.c.h.b16 %v1472
    %v3296 = vunpack.c.l.b16 %v1473
    %v3297 = vunpack.c.h.b16 %v1473
    %v3298 = vunpack.c.l.b16 %v1474
    %v3299 = vunpack.c.h.b16 %v1474
    %v3300 = vunpack.c.l.b16 %v1475
    %v3301 = vunpack.c.h.b16 %v1475
    %v3302 = vunpack.c.l.b16 %v1476
    %v3303 = vunpack.c.h.b16 %v1476
    %v3304 = vunpack.c.l.b16 %v1477
    %v3305 = vunpack.c.h.b16 %v1477
    %v3306 = vunpack.c.l.b16 %v1478
    %v3307 = vunpack.c.h.b16 %v1478
    %v3308 = vunpack.c.l.b16 %v1479
    %v3309 = vunpack.c.h.b16 %v1479
    %v3310 = vunpack.c.l.b16 %v1480
    %v3311 = vunpack.c.h.b16 %v1480
    %v3312 = vunpack.c.l.b16 %v1481
    %v3313 = vunpack.c.h.b16 %v1481
    %v3314 = vunpack.c.l.b16 %v1482
    %v3315 = vunpack.c.h.b16 %v1482
    %v3316 = vunpack.c.l.b16 %v1483
    %v3317 = vunpack.c.h.b16 %v1483
    %v3318 = vunpack.c.l.b16 %v1484
    %v3319 = vunpack.c.h.b16 %v1484
    %v3320 = vunpack.c.l.b16 %v1485
    %v3321 = vunpack.c.h.b16 %v1485
    %v3322 = vunpack.c.l.b16 %v1486
    %v3323 = vunpack.c.h.b16 %v1486
    %v3324 = vunpack.c.l.b16 %v1487
    %v3325 = vunpack.c.h.b16 %v1487
    %v3326 = vunpack.c.l.b16 %v1488
    %v3327 = vunpack.c.h.b16 %v1488
    %v3328 = vunpack.c.l.b16 %v1489
    %v3329 = vunpack.c.h.b16 %v1489
    %v3330 = vunpack.c.l.b16 %v1490
    %v3331 = vunpack.c.h.b16 %v1490
    %v3332 = vunpack.c.l.b16 %v1491
    %v3333 = vunpack.c.h.b16 %v1491
    %v3334 = vunpack.c.l.b16 %v1492
    %v3335 = vunpack.c.h.b16 %v1492
    %v3336 = vunpack.c.l.b16 %v1493
    %v3337 = vunpack.c.h.b16 %v1493
    %v3338 = vunpack.c.l.b16 %v1494
    %v3339 = vunpack.c.h.b16 %v1494
    %v3340 = vunpack.c.l.b16 %v1495
    %v3341 = vunpack.c.h.b16 %v1495
    %v3342 = vunpack.c.l.b16 %v1496
    %v3343 = vunpack.c.h.b16 %v1496
    %v3344 = vunpack.c.l.b16 %v1497
    %v3345 = vunpack.c.h.b16 %v1497
    %v3346 = vunpack.c.l.b16 %v1498
    %v3347 = vunpack.c.h.b16 %v1498
    %v3348 = vunpack.c.l.b16 %v1499
    %v3349 = vunpack.c.h.b16 %v1499
    %v3350 = vunpack.c.l.b16 %v1500
    %v3351 = vunpack.c.h.b16 %v1500
    %v3352 = vunpack.c.l.b16 %v1501
    %v3353 = vunpack.c.h.b16 %v1501
    %v3354 = vunpack.c.l.b16 %v1502
    %v3355 = vunpack.c.h.b16 %v1502
    %v3356 = vunpack.c.l.b16 %v1503
    %v3357 = vunpack.c.h.b16 %v1503
    %v3358 = vunpack.c.l.b16 %v1504
    %v3359 = vunpack.c.h.b16 %v1504
    %v3360 = vunpack.c.l.b16 %v1505
    %v3361 = vunpack.c.h.b16 %v1505
    %v3362 = vunpack.c.l.b16 %v1506
    %v3363 = vunpack.c.h.b16 %v1506
    %v3364 = vunpack.c.l.b16 %v1507
    %v3365 = vunpack.c.h.b16 %v1507
    %v3366 = vunpack.c.l.b16 %v1508
    %v3367 = vunpack.c.h.b16 %v1508
    %v3368 = vunpack.c.l.b16 %v1509
    %v3369 = vunpack.c.h.b16 %v1509
    %v3370 = vunpack.c.l.b16 %v1510
    %v3371 = vunpack.c.h.b16 %v1510
    %v3372 = vunpack.c.l.b16 %v1511
    %v3373 = vunpack.c.h.b16 %v1511
    %v3374 = vunpack.c.l.b16 %v1512
    %v3375 = vunpack.c.h.b16 %v1512
    %v3376 = vunpack.c.l.b16 %v1513
    %v3377 = vunpack.c.h.b16 %v1513
    %v3378 = vunpack.c.l.b16 %v1514
    %v3379 = vunpack.c.h.b16 %v1514
    %v3380 = vunpack.c.l.b16 %v1515
    %v3381 = vunpack.c.h.b16 %v1515
    %v3382 = vunpack.c.l.b16 %v1516
    %v3383 = vunpack.c.h.b16 %v1516
    %v3384 = vunpack.c.l.b16 %v1517
    %v3385 = vunpack.c.h.b16 %v1517
    %v3386 = vunpack.c.l.b16 %v1518
    %v3387 = vunpack.c.h.b16 %v1518
    %v3388 = vunpack.c.l.b16 %v1519
    %v3389 = vunpack.c.h.b16 %v1519
    %v3390 = vunpack.c.l.b16 %v1520
    %v3391 = vunpack.c.h.b16 %v1520
    %v3392 = vunpack.c.l.b16 %v1521
    %v3393 = vunpack.c.h.b16 %v1521
    %v3394 = vunpack.c.l.b16 %v1522
    %v3395 = vunpack.c.h.b16 %v1522
    %v3396 = vunpack.c.l.b16 %v1523
    %v3397 = vunpack.c.h.b16 %v1523
    %v3398 = vunpack.c.l.b16 %v1524
    %v3399 = vunpack.c.h.b16 %v1524
    %v3400 = vunpack.c.l.b16 %v1525
    %v3401 = vunpack.c.h.b16 %v1525
    %v3402 = vunpack.c.l.b16 %v1526
    %v3403 = vunpack.c.h.b16 %v1526
    %v3404 = vunpack.c.l.b16 %v1527
    %v3405 = vunpack.c.h.b16 %v1527
    %v3406 = vunpack.c.l.b16 %v1528
    %v3407 = vunpack.c.h.b16 %v1528
    %v3408 = vunpack.c.l.b16 %v1529
    %v3409 = vunpack.c.h.b16 %v1529
    %v3410 = vunpack.c.l.b16 %v1530
    %v3411 = vunpack.c.h.b16 %v1530
    %v3412 = vunpack.c.l.b16 %v1531
    %v3413 = vunpack.c.h.b16 %v1531
    %v3414 = vunpack.c.l.b16 %v1532
    %v3415 = vunpack.c.h.b16 %v1532
    %v3416 = vunpack.c.l.b16 %v1533
    %v3417 = vunpack.c.h.b16 %v1533
    %v3418 = vunpack.c.l.b16 %v1534
    %v3419 = vunpack.c.h.b16 %v1534
    %v3420 = vunpack.c.l.b16 %v1535
    %v3421 = vunpack.c.h.b16 %v1535
    %v3422 = vunpack.c.l.b16 %v1536
    %v3423 = vunpack.c.h.b16 %v1536
    %v3424 = vunpack.c.l.b16 %v1537
    %v3425 = vunpack.c.h.b16 %v1537
    %v3426 = vunpack.c.l.b16 %v1538
    %v3427 = vunpack.c.h.b16 %v1538
    %v3428 = vunpack.c.l.b16 %v1539
    %v3429 = vunpack.c.h.b16 %v1539
    %v3430 = vunpack.c.l.b16 %v1540
    %v3431 = vunpack.c.h.b16 %v1540
    %v3432 = vunpack.c.l.b16 %v1541
    %v3433 = vunpack.c.h.b16 %v1541
    %v3434 = vunpack.c.l.b16 %v1542
    %v3435 = vunpack.c.h.b16 %v1542
    %v3436 = vunpack.c.l.b16 %v1543
    %v3437 = vunpack.c.h.b16 %v1543
    %v3438 = vunpack.c.l.b16 %v1544
    %v3439 = vunpack.c.h.b16 %v1544
    %v3440 = vunpack.c.l.b16 %v1545
    %v3441 = vunpack.c.h.b16 %v1545
    %v3442 = vunpack.c.l.b16 %v1546
    %v3443 = vunpack.c.h.b16 %v1546
    %v3444 = vunpack.c.l.b16 %v1547
    %v3445 = vunpack.c.h.b16 %v1547
    %v3446 = vunpack.c.l.b16 %v1548
    %v3447 = vunpack.c.h.b16 %v1548
    %v3448 = vunpack.c.l.b16 %v1549
    %v3449 = vunpack.c.h.b16 %v1549
    %v3450 = vunpack.c.l.b16 %v1550
    %v3451 = vunpack.c.h.b16 %v1550
    %v3452 = vunpack.c.l.b16 %v1551
    %v3453 = vunpack.c.h.b16 %v1551
    %v3454 = vunpack.c.l.b16 %v1552
    %v3455 = vunpack.c.h.b16 %v1552
    %v3456 = vunpack.c.l.b16 %v1553
    %v3457 = vunpack.c.h.b16 %v1553
    %v3458 = vunpack.c.l.b16 %v1554
    %v3459 = vunpack.c.h.b16 %v1554
    %v3460 = vunpack.c.l.b16 %v1555
    %v3461 = vunpack.c.h.b16 %v1555
    %v3462 = vunpack.c.l.b16 %v1556
    %v3463 = vunpack.c.h.b16 %v1556
    %v3464 = vunpack.c.l.b16 %v1557
    %v3465 = vunpack.c.h.b16 %v1557
    %v3466 = vunpack.c.l.b16 %v1558
    %v3467 = vunpack.c.h.b16 %v1558
    %v3468 = vunpack.c.l.b16 %v1559
    %v3469 = vunpack.c.h.b16 %v1559
    %v3470 = vunpack.c.l.b16 %v1560
    %v3471 = vunpack.c.h.b16 %v1560
    %v3472 = vunpack.c.l.b16 %v1561
    %v3473 = vunpack.c.h.b16 %v1561
    %v3474 = vunpack.c.l.b16 %v1562
    %v3475 = vunpack.c.h.b16 %v1562
    %v3476 = vunpack.c.l.b16 %v1563
    %v3477 = vunpack.c.h.b16 %v1563
    %v3478 = vunpack.c.l.b16 %v1564
    %v3479 = vunpack.c.h.b16 %v1564
    %v3480 = vunpack.c.l.b16 %v1565
    %v3481 = vunpack.c.h.b16 %v1565
    %v3482 = vunpack.c.l.b16 %v1566
    %v3483 = vunpack.c.h.b16 %v1566
    %v3484 = vunpack.c.l.b16 %v1567
    %v3485 = vunpack.c.h.b16 %v1567
    %v3486 = vunpack.c.l.b16 %v1568
    %v3487 = vunpack.c.h.b16 %v1568
    %v3488 = vunpack.c.l.b16 %v1569
    %v3489 = vunpack.c.h.b16 %v1569
    %v3490 = vunpack.c.l.b16 %v1570
    %v3491 = vunpack.c.h.b16 %v1570
    %v3492 = vunpack.c.l.b16 %v1571
    %v3493 = vunpack.c.h.b16 %v1571
    %v3494 = vunpack.c.l.b16 %v1572
    %v3495 = vunpack.c.h.b16 %v1572
    %v3496 = vunpack.c.l.b16 %v1573
    %v3497 = vunpack.c.h.b16 %v1573
    %v3498 = vunpack.c.l.b16 %v1574
    %v3499 = vunpack.c.h.b16 %v1574
    %v3500 = vunpack.c.l.b16 %v1575
    %v3501 = vunpack.c.h.b16 %v1575
    %v3502 = vunpack.c.l.b16 %v1576
    %v3503 = vunpack.c.h.b16 %v1576
    %v3504 = vunpack.c.l.b16 %v1577
    %v3505 = vunpack.c.h.b16 %v1577
    %v3506 = vunpack.c.l.b16 %v1578
    %v3507 = vunpack.c.h.b16 %v1578
    %v3508 = vunpack.c.l.b16 %v1579
    %v3509 = vunpack.c.h.b16 %v1579
    %v3510 = vunpack.c.l.b16 %v1580
    %v3511 = vunpack.c.h.b16 %v1580
    %v3512 = vunpack.c.l.b16 %v1581
    %v3513 = vunpack.c.h.b16 %v1581
    %v3514 = vunpack.c.l.b16 %v1582
    %v3515 = vunpack.c.h.b16 %v1582
    %v3516 = vunpack.c.l.b16 %v1583
    %v3517 = vunpack.c.h.b16 %v1583
    %v3518 = vunpack.c.l.b16 %v1584
    %v3519 = vunpack.c.h.b16 %v1584
    %v3520 = vunpack.c.l.b16 %v1585
    %v3521 = vunpack.c.h.b16 %v1585
    %v3522 = vunpack.c.l.b16 %v1586
    %v3523 = vunpack.c.h.b16 %v1586
    %v3524 = vunpack.c.l.b16 %v1587
    %v3525 = vunpack.c.h.b16 %v1587
    %v3526 = vunpack.c.l.b16 %v1588
    %v3527 = vunpack.c.h.b16 %v1588
    %v3528 = vunpack.c.l.b16 %v1589
    %v3529 = vunpack.c.h.b16 %v1589
    %v3530 = vunpack.c.l.b16 %v1590
    %v3531 = vunpack.c.h.b16 %v1590
    %v3532 = vunpack.c.l.b16 %v1591
    %v3533 = vunpack.c.h.b16 %v1591
    %v3534 = vunpack.c.l.b16 %v1592
    %v3535 = vunpack.c.h.b16 %v1592
    %v3536 = vunpack.c.l.b16 %v1593
    %v3537 = vunpack.c.h.b16 %v1593
    %v3538 = vunpack.c.l.b16 %v1594
    %v3539 = vunpack.c.h.b16 %v1594
    %v3540 = vunpack.c.l.b16 %v1595
    %v3541 = vunpack.c.h.b16 %v1595
    %v3542 = vunpack.c.l.b16 %v1596
    %v3543 = vunpack.c.h.b16 %v1596
    %v3544 = vunpack.c.l.b16 %v1597
    %v3545 = vunpack.c.h.b16 %v1597
    %v3546 = vunpack.c.l.b16 %v1598
    %v3547 = vunpack.c.h.b16 %v1598
    %v3548 = vunpack.c.l.b16 %v1599
    %v3549 = vunpack.c.h.b16 %v1599
    %v3550 = vunpack.c.l.b16 %v1600
    %v3551 = vunpack.c.h.b16 %v1600
    %v3552 = vunpack.c.l.b16 %v1601
    %v3553 = vunpack.c.h.b16 %v1601
    %v3554 = vunpack.c.l.b16 %v1602
    %v3555 = vunpack.c.h.b16 %v1602
    %v3556 = vunpack.c.l.b16 %v1603
    %v3557 = vunpack.c.h.b16 %v1603
    %v3558 = vunpack.c.l.b16 %v1604
    %v3559 = vunpack.c.h.b16 %v1604
    %v3560 = vunpack.c.l.b16 %v1605
    %v3561 = vunpack.c.h.b16 %v1605
    %v3562 = vunpack.c.l.b16 %v1606
    %v3563 = vunpack.c.h.b16 %v1606
    %v3564 = vunpack.c.l.b16 %v1607
    %v3565 = vunpack.c.h.b16 %v1607
    %v3566 = vunpack.c.l.b16 %v1608
    %v3567 = vunpack.c.h.b16 %v1608
    %v3568 = vunpack.c.l.b16 %v1609
    %v3569 = vunpack.c.h.b16 %v1609
    %v3570 = vunpack.c.l.b16 %v1610
    %v3571 = vunpack.c.h.b16 %v1610
    %v3572 = vunpack.c.l.b16 %v1611
    %v3573 = vunpack.c.h.b16 %v1611
    %v3574 = vpack.c.b16 %v2302, %v2294
    %v3575 = vpack.c.b16 %v2303, %v2295
    %v3576 = vpack.c.b16 %v2304, %v2296
    %v3577 = vpack.c.b16 %v2305, %v2297
    %v3578 = vpack.c.b16 %v2306, %v2298
    %v3579 = vpack.c.b16 %v2307, %v2299
    %v3580 = vpack.c.b16 %v2308, %v2300
    %v3581 = vpack.c.b16 %v2309, %v2301
    %v3582 = vpack.c.b16 %v2318, %v2310
    %v3583 = vpack.c.b16 %v2319, %v2311
    %v3584 = vpack.c.b16 %v2320, %v2312
    %v3585 = vpack.c.b16 %v2321, %v2313
    %v3586 = vpack.c.b16 %v2322, %v2314
    %v3587 = vpack.c.b16 %v2323, %v2315
    %v3588 = vpack.c.b16 %v2324, %v2316
    %v3589 = vpack.c.b16 %v2325, %v2317
    %v3590 = vpack.c.b16 %v2334, %v2326
    %v3591 = vpack.c.b16 %v2335, %v2327
    %v3592 = vpack.c.b16 %v2336, %v2328
    %v3593 = vpack.c.b16 %v2337, %v2329
    %v3594 = vpack.c.b16 %v2338, %v2330
    %v3595 = vpack.c.b16 %v2339, %v2331
    %v3596 = vpack.c.b16 %v2340, %v2332
    %v3597 = vpack.c.b16 %v2341, %v2333
    %v3598 = vpack.c.b16 %v2350, %v2342
    %v3599 = vpack.c.b16 %v2351, %v2343
    %v3600 = vpack.c.b16 %v2352, %v2344
    %v3601 = vpack.c.b16 %v2353, %v2345
    %v3602 = vpack.c.b16 %v2354, %v2346
    %v3603 = vpack.c.b16 %v2355, %v2347
    %v3604 = vpack.c.b16 %v2356, %v2348
    %v3605 = vpack.c.b16 %v2357, %v2349
    %v3606 = vpack.c.b16 %v2366, %v2358
    %v3607 = vpack.c.b16 %v2367, %v2359
    %v3608 = vpack.c.b16 %v2368, %v2360
    %v3609 = vpack.c.b16 %v2369, %v2361
    %v3610 = vpack.c.b16 %v2370, %v2362
    %v3611 = vpack.c.b16 %v2371, %v2363
    %v3612 = vpack.c.b16 %v2372, %v2364
    %v3613 = vpack.c.b16 %v2373, %v2365
    %v3614 = vpack.c.b16 %v2382, %v2374
    %v3615 = vpack.c.b16 %v2383, %v2375
    %v3616 = vpack.c.b16 %v2384, %v2376
    %v3617 = vpack.c.b16 %v2385, %v2377
    %v3618 = vpack.c.b16 %v2386, %v2378
    %v3619 = vpack.c.b16 %v2387, %v2379
    %v3620 = vpack.c.b16 %v2388, %v2380
    %v3621 = vpack.c.b16 %v2389, %v2381
    %v3622 = vpack.c.b16 %v2398, %v2390
    %v3623 = vpack.c.b16 %v2399, %v2391
    %v3624 = vpack.c.b16 %v2400, %v2392
    %v3625 = vpack.c.b16 %v2401, %v2393
    %v3626 = vpack.c.b16 %v2402, %v2394
    %v3627 = vpack.c.b16 %v2403, %v2395
    %v3628 = vpack.c.b16 %v2404, %v2396
    %v3629 = vpack.c.b16 %v2405, %v2397
    %v3630 = vpack.c.b16 %v2414, %v2406
    %v3631 = vpack.c.b16 %v2415, %v2407
    %v3632 = vpack.c.b16 %v2416, %v2408
    %v3633 = vpack.c.b16 %v2417, %v2409
    %v3634 = vpack.c.b16 %v2418, %v2410
    %v3635 = vpack.c.b16 %v2419, %v2411
    %v3636 = vpack.c.b16 %v2420, %v2412
    %v3637 = vpack.c.b16 %v2421, %v2413
    %v3638 = vpack.c.b16 %v2430, %v2422
    %v3639 = vpack.c.b16 %v2431, %v2423
    %v3640 = vpack.c.b16 %v2432, %v2424
    %v3641 = vpack.c.b16 %v2433, %v2425
    %v3642 = vpack.c.b16 %v2434, %v2426
    %v3643 = vpack.c.b16 %v2435, %v2427
    %v3644 = vpack.c.b16 %v2436, %v2428
    %v3645 = vpack.c.b16 %v2437, %v2429
    %v3646 = vpack.c.b16 %v2446, %v2438
    %v3647 = vpack.c.b16 %v2447, %v2439
    %v3648 = vpack.c.b16 %v2448, %v2440
    %v3649 = vpack.c.b16 %v2449, %v2441
    %v3650 = vpack.c.b16 %v2450, %v2442
    %v3651 = vpack.c.b16 %v2451, %v2443
    %v3652 = vpack.c.b16 %v2452, %v2444
    %v3653 = vpack.c.b16 %v2453, %v2445
    %v3654 = vpack.c.b16 %v2462, %v2454
    %v3655 = vpack.c.b16 %v2463, %v2455
    %v3656 = vpack.c.b16 %v2464, %v2456
    %v3657 = vpack.c.b16 %v2465, %v2457
    %v3658 = vpack.c.b16 %v2466, %v2458
    %v3659 = vpack.c.b16 %v2467, %v2459
    %v3660 = vpack.c.b16 %v2468, %v2460
    %v3661 = vpack.c.b16 %v2469, %v2461
    %v3662 = vpack.c.b16 %v2478, %v2470
    %v3663 = vpack.c.b16 %v2479, %v2471
    %v3664 = vpack.c.b16 %v2480, %v2472
    %v3665 = vpack.c.b16 %v2481, %v2473
    %v3666 = vpack.c.b16 %v2482, %v2474
    %v3667 = vpack.c.b16 %v2483, %v2475
    %v3668 = vpack.c.b16 %v2484, %v2476
    %v3669 = vpack.c.b16 %v2485, %v2477
    %v3670 = vpack.c.b16 %v2494, %v2486
    %v3671 = vpack.c.b16 %v2495, %v2487
    %v3672 = vpack.c.b16 %v2496, %v2488
    %v3673 = vpack.c.b16 %v2497, %v2489
    %v3674 = vpack.c.b16 %v2498, %v2490
    %v3675 = vpack.c.b16 %v2499, %v2491
    %v3676 = vpack.c.b16 %v2500, %v2492
    %v3677 = vpack.c.b16 %v2501, %v2493
    %v3678 = vpack.c.b16 %v2510, %v2502
    %v3679 = vpack.c.b16 %v2511, %v2503
    %v3680 = vpack.c.b16 %v2512, %v2504
    %v3681 = vpack.c.b16 %v2513, %v2505
    %v3682 = vpack.c.b16 %v2514, %v2506
    %v3683 = vpack.c.b16 %v2515, %v2507
    %v3684 = vpack.c.b16 %v2516, %v2508
    %v3685 = vpack.c.b16 %v2517, %v2509
    %v3686 = vpack.c.b16 %v2526, %v2518
    %v3687 = vpack.c.b16 %v2527, %v2519
    %v3688 = vpack.c.b16 %v2528, %v2520
    %v3689 = vpack.c.b16 %v2529, %v2521
    %v3690 = vpack.c.b16 %v2530, %v2522
    %v3691 = vpack.c.b16 %v2531, %v2523
    %v3692 = vpack.c.b16 %v2532, %v2524
    %v3693 = vpack.c.b16 %v2533, %v2525
    %v3694 = vpack.c.b16 %v2542, %v2534
    %v3695 = vpack.c.b16 %v2543, %v2535
    %v3696 = vpack.c.b16 %v2544, %v2536
    %v3697 = vpack.c.b16 %v2545, %v2537
    %v3698 = vpack.c.b16 %v2546, %v2538
    %v3699 = vpack.c.b16 %v2547, %v2539
    %v3700 = vpack.c.b16 %v2548, %v2540
    %v3701 = vpack.c.b16 %v2549, %v2541
    %v3702 = vpack.c.b16 %v2558, %v2550
    %v3703 = vpack.c.b16 %v2559, %v2551
    %v3704 = vpack.c.b16 %v2560, %v2552
    %v3705 = vpack.c.b16 %v2561, %v2553
    %v3706 = vpack.c.b16 %v2562, %v2554
    %v3707 = vpack.c.b16 %v2563, %v2555
    %v3708 = vpack.c.b16 %v2564, %v2556
    %v3709 = vpack.c.b16 %v2565, %v2557
    %v3710 = vpack.c.b16 %v2574, %v2566
    %v3711 = vpack.c.b16 %v2575, %v2567
    %v3712 = vpack.c.b16 %v2576, %v2568
    %v3713 = vpack.c.b16 %v2577, %v2569
    %v3714 = vpack.c.b16 %v2578, %v2570
    %v3715 = vpack.c.b16 %v2579, %v2571
    %v3716 = vpack.c.b16 %v2580, %v2572
    %v3717 = vpack.c.b16 %v2581, %v2573
    %v3718 = vpack.c.b16 %v2590, %v2582
    %v3719 = vpack.c.b16 %v2591, %v2583
    %v3720 = vpack.c.b16 %v2592, %v2584
    %v3721 = vpack.c.b16 %v2593, %v2585
    %v3722 = vpack.c.b16 %v2594, %v2586
    %v3723 = vpack.c.b16 %v2595, %v2587
    %v3724 = vpack.c.b16 %v2596, %v2588
    %v3725 = vpack.c.b16 %v2597, %v2589
    %v3726 = vpack.c.b16 %v2606, %v2598
    %v3727 = vpack.c.b16 %v2607, %v2599
    %v3728 = vpack.c.b16 %v2608, %v2600
    %v3729 = vpack.c.b16 %v2609, %v2601
    %v3730 = vpack.c.b16 %v2610, %v2602
    %v3731 = vpack.c.b16 %v2611, %v2603
    %v3732 = vpack.c.b16 %v2612, %v2604
    %v3733 = vpack.c.b16 %v2613, %v2605
    %v3734 = vpack.c.b16 %v2622, %v2614
    %v3735 = vpack.c.b16 %v2623, %v2615
    %v3736 = vpack.c.b16 %v2624, %v2616
    %v3737 = vpack.c.b16 %v2625, %v2617
    %v3738 = vpack.c.b16 %v2626, %v2618
    %v3739 = vpack.c.b16 %v2627, %v2619
    %v3740 = vpack.c.b16 %v2628, %v2620
    %v3741 = vpack.c.b16 %v2629, %v2621
    %v3742 = vpack.c.b16 %v2638, %v2630
    %v3743 = vpack.c.b16 %v2639, %v2631
    %v3744 = vpack.c.b16 %v2640, %v2632
    %v3745 = vpack.c.b16 %v2641, %v2633
    %v3746 = vpack.c.b16 %v2642, %v2634
    %v3747 = vpack.c.b16 %v2643, %v2635
    %v3748 = vpack.c.b16 %v2644, %v2636
    %v3749 = vpack.c.b16 %v2645, %v2637
    %v3750 = vpack.c.b16 %v2654, %v2646
    %v3751 = vpack.c.b16 %v2655, %v2647
    %v3752 = vpack.c.b16 %v2656, %v2648
    %v3753 = vpack.c.b16 %v2657, %v2649
    %v3754 = vpack.c.b16 %v2658, %v2650
    %v3755 = vpack.c.b16 %v2659, %v2651
    %v3756 = vpack.c.b16 %v2660, %v2652
    %v3757 = vpack.c.b16 %v2661, %v2653
    %v3758 = vpack.c.b16 %v2670, %v2662
    %v3759 = vpack.c.b16 %v2671, %v2663
    %v3760 = vpack.c.b16 %v2672, %v2664
    %v3761 = vpack.c.b16 %v2673, %v2665
    %v3762 = vpack.c.b16 %v2674, %v2666
    %v3763 = vpack.c.b16 %v2675, %v2667
    %v3764 = vpack.c.b16 %v2676, %v2668
    %v3765 = vpack.c.b16 %v2677, %v2669
    %v3766 = vpack.c.b16 %v2686, %v2678
    %v3767 = vpack.c.b16 %v2687, %v2679
    %v3768 = vpack.c.b16 %v2688, %v2680
    %v3769 = vpack.c.b16 %v2689, %v2681
    %v3770 = vpack.c.b16 %v2690, %v2682
    %v3771 = vpack.c.b16 %v2691, %v2683
    %v3772 = vpack.c.b16 %v2692, %v2684
    %v3773 = vpack.c.b16 %v2693, %v2685
    %v3774 = vpack.c.b16 %v2702, %v2694
    %v3775 = vpack.c.b16 %v2703, %v2695
    %v3776 = vpack.c.b16 %v2704, %v2696
    %v3777 = vpack.c.b16 %v2705, %v2697
    %v3778 = vpack.c.b16 %v2706, %v2698
    %v3779 = vpack.c.b16 %v2707, %v2699
    %v3780 = vpack.c.b16 %v2708, %v2700
    %v3781 = vpack.c.b16 %v2709, %v2701
    %v3782 = vpack.c.b16 %v2718, %v2710
    %v3783 = vpack.c.b16 %v2719, %v2711
    %v3784 = vpack.c.b16 %v2720, %v2712
    %v3785 = vpack.c.b16 %v2721, %v2713
    %v3786 = vpack.c.b16 %v2722, %v2714
    %v3787 = vpack.c.b16 %v2723, %v2715
    %v3788 = vpack.c.b16 %v2724, %v2716
    %v3789 = vpack.c.b16 %v2725, %v2717
    %v3790 = vpack.c.b16 %v2734, %v2726
    %v3791 = vpack.c.b16 %v2735, %v2727
    %v3792 = vpack.c.b16 %v2736, %v2728
    %v3793 = vpack.c.b16 %v2737, %v2729
    %v3794 = vpack.c.b16 %v2738, %v2730
    %v3795 = vpack.c.b16 %v2739, %v2731
    %v3796 = vpack.c.b16 %v2740, %v2732
    %v3797 = vpack.c.b16 %v2741, %v2733
    %v3798 = vpack.c.b16 %v2750, %v2742
    %v3799 = vpack.c.b16 %v2751, %v2743
    %v3800 = vpack.c.b16 %v2752, %v2744
    %v3801 = vpack.c.b16 %v2753, %v2745
    %v3802 = vpack.c.b16 %v2754, %v2746
    %v3803 = vpack.c.b16 %v2755, %v2747
    %v3804 = vpack.c.b16 %v2756, %v2748
    %v3805 = vpack.c.b16 %v2757, %v2749
    %v3806 = vpack.c.b16 %v2766, %v2758
    %v3807 = vpack.c.b16 %v2767, %v2759
    %v3808 = vpack.c.b16 %v2768, %v2760
    %v3809 = vpack.c.b16 %v2769, %v2761
    %v3810 = vpack.c.b16 %v2770, %v2762
    %v3811 = vpack.c.b16 %v2771, %v2763
    %v3812 = vpack.c.b16 %v2772, %v2764
    %v3813 = vpack.c.b16 %v2773, %v2765
    %v3814 = vpack.c.b16 %v2782, %v2774
    %v3815 = vpack.c.b16 %v2783, %v2775
    %v3816 = vpack.c.b16 %v2784, %v2776
    %v3817 = vpack.c.b16 %v2785, %v2777
    %v3818 = vpack.c.b16 %v2786, %v2778
    %v3819 = vpack.c.b16 %v2787, %v2779
    %v3820 = vpack.c.b16 %v2788, %v2780
    %v3821 = vpack.c.b16 %v2789, %v2781
    %v3822 = vpack.c.b16 %v2798, %v2790
    %v3823 = vpack.c.b16 %v2799, %v2791
    %v3824 = vpack.c.b16 %v2800, %v2792
    %v3825 = vpack.c.b16 %v2801, %v2793
    %v3826 = vpack.c.b16 %v2802, %v2794
    %v3827 = vpack.c.b16 %v2803, %v2795
    %v3828 = vpack.c.b16 %v2804, %v2796
    %v3829 = vpack.c.b16 %v2805, %v2797
    %v3830 = vpack.c.b16 %v2814, %v2806
    %v3831 = vpack.c.b16 %v2815, %v2807
    %v3832 = vpack.c.b16 %v2816, %v2808
    %v3833 = vpack.c.b16 %v2817, %v2809
    %v3834 = vpack.c.b16 %v2818, %v2810
    %v3835 = vpack.c.b16 %v2819, %v2811
    %v3836 = vpack.c.b16 %v2820, %v2812
    %v3837 = vpack.c.b16 %v2821, %v2813
    %v3838 = vpack.c.b16 %v2830, %v2822
    %v3839 = vpack.c.b16 %v2831, %v2823
    %v3840 = vpack.c.b16 %v2832, %v2824
    %v3841 = vpack.c.b16 %v2833, %v2825
    %v3842 = vpack.c.b16 %v2834, %v2826
    %v3843 = vpack.c.b16 %v2835, %v2827
    %v3844 = vpack.c.b16 %v2836, %v2828
    %v3845 = vpack.c.b16 %v2837, %v2829
    %v3846 = vpack.c.b16 %v2846, %v2838
    %v3847 = vpack.c.b16 %v2847, %v2839
    %v3848 = vpack.c.b16 %v2848, %v2840
    %v3849 = vpack.c.b16 %v2849, %v2841
    %v3850 = vpack.c.b16 %v2850, %v2842
    %v3851 = vpack.c.b16 %v2851, %v2843
    %v3852 = vpack.c.b16 %v2852, %v2844
    %v3853 = vpack.c.b16 %v2853, %v2845
    %v3854 = vpack.c.b16 %v2862, %v2854
    %v3855 = vpack.c.b16 %v2863, %v2855
    %v3856 = vpack.c.b16 %v2864, %v2856
    %v3857 = vpack.c.b16 %v2865, %v2857
    %v3858 = vpack.c.b16 %v2866, %v2858
    %v3859 = vpack.c.b16 %v2867, %v2859
    %v3860 = vpack.c.b16 %v2868, %v2860
    %v3861 = vpack.c.b16 %v2869, %v2861
    %v3862 = vpack.c.b16 %v2878, %v2870
    %v3863 = vpack.c.b16 %v2879, %v2871
    %v3864 = vpack.c.b16 %v2880, %v2872
    %v3865 = vpack.c.b16 %v2881, %v2873
    %v3866 = vpack.c.b16 %v2882, %v2874
    %v3867 = vpack.c.b16 %v2883, %v2875
    %v3868 = vpack.c.b16 %v2884, %v2876
    %v3869 = vpack.c.b16 %v2885, %v2877
    %v3870 = vpack.c.b16 %v2894, %v2886
    %v3871 = vpack.c.b16 %v2895, %v2887
    %v3872 = vpack.c.b16 %v2896, %v2888
    %v3873 = vpack.c.b16 %v2897, %v2889
    %v3874 = vpack.c.b16 %v2898, %v2890
    %v3875 = vpack.c.b16 %v2899, %v2891
    %v3876 = vpack.c.b16 %v2900, %v2892
    %v3877 = vpack.c.b16 %v2901, %v2893
    %v3878 = vpack.c.b16 %v2910, %v2902
    %v3879 = vpack.c.b16 %v2911, %v2903
    %v3880 = vpack.c.b16 %v2912, %v2904
    %v3881 = vpack.c.b16 %v2913, %v2905
    %v3882 = vpack.c.b16 %v2914, %v2906
    %v3883 = vpack.c.b16 %v2915, %v2907
    %v3884 = vpack.c.b16 %v2916, %v2908
    %v3885 = vpack.c.b16 %v2917, %v2909
    %v3886 = vpack.c.b16 %v2926, %v2918
    %v3887 = vpack.c.b16 %v2927, %v2919
    %v3888 = vpack.c.b16 %v2928, %v2920
    %v3889 = vpack.c.b16 %v2929, %v2921
    %v3890 = vpack.c.b16 %v2930, %v2922
    %v3891 = vpack.c.b16 %v2931, %v2923
    %v3892 = vpack.c.b16 %v2932, %v2924
    %v3893 = vpack.c.b16 %v2933, %v2925
    %v3894 = vpack.c.b16 %v2942, %v2934
    %v3895 = vpack.c.b16 %v2943, %v2935
    %v3896 = vpack.c.b16 %v2944, %v2936
    %v3897 = vpack.c.b16 %v2945, %v2937
    %v3898 = vpack.c.b16 %v2946, %v2938
    %v3899 = vpack.c.b16 %v2947, %v2939
    %v3900 = vpack.c.b16 %v2948, %v2940
    %v3901 = vpack.c.b16 %v2949, %v2941
    %v3902 = vpack.c.b16 %v2958, %v2950
    %v3903 = vpack.c.b16 %v2959, %v2951
    %v3904 = vpack.c.b16 %v2960, %v2952
    %v3905 = vpack.c.b16 %v2961, %v2953
    %v3906 = vpack.c.b16 %v2962, %v2954
    %v3907 = vpack.c.b16 %v2963, %v2955
    %v3908 = vpack.c.b16 %v2964, %v2956
    %v3909 = vpack.c.b16 %v2965, %v2957
    %v3910 = vpack.c.b16 %v2974, %v2966
    %v3911 = vpack.c.b16 %v2975, %v2967
    %v3912 = vpack.c.b16 %v2976, %v2968
    %v3913 = vpack.c.b16 %v2977, %v2969
    %v3914 = vpack.c.b16 %v2978, %v2970
    %v3915 = vpack.c.b16 %v2979, %v2971
    %v3916 = vpack.c.b16 %v2980, %v2972
    %v3917 = vpack.c.b16 %v2981, %v2973
    %v3918 = vpack.c.b16 %v2990, %v2982
    %v3919 = vpack.c.b16 %v2991, %v2983
    %v3920 = vpack.c.b16 %v2992, %v2984
    %v3921 = vpack.c.b16 %v2993, %v2985
    %v3922 = vpack.c.b16 %v2994, %v2986
    %v3923 = vpack.c.b16 %v2995, %v2987
    %v3924 = vpack.c.b16 %v2996, %v2988
    %v3925 = vpack.c.b16 %v2997, %v2989
    %v3926 = vpack.c.b16 %v3006, %v2998
    %v3927 = vpack.c.b16 %v3007, %v2999
    %v3928 = vpack.c.b16 %v3008, %v3000
    %v3929 = vpack.c.b16 %v3009, %v3001
    %v3930 = vpack.c.b16 %v3010, %v3002
    %v3931 = vpack.c.b16 %v3011, %v3003
    %v3932 = vpack.c.b16 %v3012, %v3004
    %v3933 = vpack.c.b16 %v3013, %v3005
    %v3934 = vpack.c.b16 %v3022, %v3014
    %v3935 = vpack.c.b16 %v3023, %v3015
    %v3936 = vpack.c.b16 %v3024, %v3016
    %v3937 = vpack.c.b16 %v3025, %v3017
    %v3938 = vpack.c.b16 %v3026, %v3018
    %v3939 = vpack.c.b16 %v3027, %v3019
    %v3940 = vpack.c.b16 %v3028, %v3020
    %v3941 = vpack.c.b16 %v3029, %v3021
    %v3942 = vpack.c.b16 %v3038, %v3030
    %v3943 = vpack.c.b16 %v3039, %v3031
    %v3944 = vpack.c.b16 %v3040, %v3032
    %v3945 = vpack.c.b16 %v3041, %v3033
    %v3946 = vpack.c.b16 %v3042, %v3034
    %v3947 = vpack.c.b16 %v3043, %v3035
    %v3948 = vpack.c.b16 %v3044, %v3036
    %v3949 = vpack.c.b16 %v3045, %v3037
    %v3950 = vpack.c.b16 %v3054, %v3046
    %v3951 = vpack.c.b16 %v3055, %v3047
    %v3952 = vpack.c.b16 %v3056, %v3048
    %v3953 = vpack.c.b16 %v3057, %v3049
    %v3954 = vpack.c.b16 %v3058, %v3050
    %v3955 = vpack.c.b16 %v3059, %v3051
    %v3956 = vpack.c.b16 %v3060, %v3052
    %v3957 = vpack.c.b16 %v3061, %v3053
    %v3958 = vpack.c.b16 %v3070, %v3062
    %v3959 = vpack.c.b16 %v3071, %v3063
    %v3960 = vpack.c.b16 %v3072, %v3064
    %v3961 = vpack.c.b16 %v3073, %v3065
    %v3962 = vpack.c.b16 %v3074, %v3066
    %v3963 = vpack.c.b16 %v3075, %v3067
    %v3964 = vpack.c.b16 %v3076, %v3068
    %v3965 = vpack.c.b16 %v3077, %v3069
    %v3966 = vpack.c.b16 %v3086, %v3078
    %v3967 = vpack.c.b16 %v3087, %v3079
    %v3968 = vpack.c.b16 %v3088, %v3080
    %v3969 = vpack.c.b16 %v3089, %v3081
    %v3970 = vpack.c.b16 %v3090, %v3082
    %v3971 = vpack.c.b16 %v3091, %v3083
    %v3972 = vpack.c.b16 %v3092, %v3084
    %v3973 = vpack.c.b16 %v3093, %v3085
    %v3974 = vpack.c.b16 %v3102, %v3094
    %v3975 = vpack.c.b16 %v3103, %v3095
    %v3976 = vpack.c.b16 %v3104, %v3096
    %v3977 = vpack.c.b16 %v3105, %v3097
    %v3978 = vpack.c.b16 %v3106, %v3098
    %v3979 = vpack.c.b16 %v3107, %v3099
    %v3980 = vpack.c.b16 %v3108, %v3100
    %v3981 = vpack.c.b16 %v3109, %v3101
    %v3982 = vpack.c.b16 %v3118, %v3110
    %v3983 = vpack.c.b16 %v3119, %v3111
    %v3984 = vpack.c.b16 %v3120, %v3112
    %v3985 = vpack.c.b16 %v3121, %v3113
    %v3986 = vpack.c.b16 %v3122, %v3114
    %v3987 = vpack.c.b16 %v3123, %v3115
    %v3988 = vpack.c.b16 %v3124, %v3116
    %v3989 = vpack.c.b16 %v3125, %v3117
    %v3990 = vpack.c.b16 %v3134, %v3126
    %v3991 = vpack.c.b16 %v3135, %v3127
    %v3992 = vpack.c.b16 %v3136, %v3128
    %v3993 = vpack.c.b16 %v3137, %v3129
    %v3994 = vpack.c.b16 %v3138, %v3130
    %v3995 = vpack.c.b16 %v3139, %v3131
    %v3996 = vpack.c.b16 %v3140, %v3132
    %v3997 = vpack.c.b16 %v3141, %v3133
    %v3998 = vpack.c.b16 %v3150, %v3142
    %v3999 = vpack.c.b16 %v3151, %v3143
    %v4000 = vpack.c.b16 %v3152, %v3144
    %v4001 = vpack.c.b16 %v3153, %v3145
    %v4002 = vpack.c.b16 %v3154, %v3146
    %v4003 = vpack.c.b16 %v3155, %v3147
    %v4004 = vpack.c.b16 %v3156, %v3148
    %v4005 = vpack.c.b16 %v3157, %v3149
    %v4006 = vpack.c.b16 %v3166, %v3158
    %v4007 = vpack.c.b16 %v3167, %v3159
    %v4008 = vpack.c.b16 %v3168, %v3160
    %v4009 = vpack.c.b16 %v3169, %v3161
    %v4010 = vpack.c.b16 %v3170, %v3162
    %v4011 = vpack.c.b16 %v3171, %v3163
    %v4012 = vpack.c.b16 %v3172, %v3164
    %v4013 = vpack.c.b16 %v3173, %v3165
    %v4014 = vpack.c.b16 %v3182, %v3174
    %v4015 = vpack.c.b16 %v3183, %v3175
    %v4016 = vpack.c.b16 %v3184, %v3176
    %v4017 = vpack.c.b16 %v3185, %v3177
    %v4018 = vpack.c.b16 %v3186, %v3178
    %v4019 = vpack.c.b16 %v3187, %v3179
    %v4020 = vpack.c.b16 %v3188, %v3180
    %v4021 = vpack.c.b16 %v3189, %v3181
    %v4022 = vpack.c.b16 %v3198, %v3190
    %v4023 = vpack.c.b16 %v3199, %v3191
    %v4024 = vpack.c.b16 %v3200, %v3192
    %v4025 = vpack.c.b16 %v3201, %v3193
    %v4026 = vpack.c.b16 %v3202, %v3194
    %v4027 = vpack.c.b16 %v3203, %v3195
    %v4028 = vpack.c.b16 %v3204, %v3196
    %v4029 = vpack.c.b16 %v3205, %v3197
    %v4030 = vpack.c.b16 %v3214, %v3206
    %v4031 = vpack.c.b16 %v3215, %v3207
    %v4032 = vpack.c.b16 %v3216, %v3208
    %v4033 = vpack.c.b16 %v3217, %v3209
    %v4034 = vpack.c.b16 %v3218, %v3210
    %v4035 = vpack.c.b16 %v3219, %v3211
    %v4036 = vpack.c.b16 %v3220, %v3212
    %v4037 = vpack.c.b16 %v3221, %v3213
    %v4038 = vpack.c.b16 %v3230, %v3222
    %v4039 = vpack.c.b16 %v3231, %v3223
    %v4040 = vpack.c.b16 %v3232, %v3224
    %v4041 = vpack.c.b16 %v3233, %v3225
    %v4042 = vpack.c.b16 %v3234, %v3226
    %v4043 = vpack.c.b16 %v3235, %v3227
    %v4044 = vpack.c.b16 %v3236, %v3228
    %v4045 = vpack.c.b16 %v3237, %v3229
    %v4046 = vpack.c.b16 %v3246, %v3238
    %v4047 = vpack.c.b16 %v3247, %v3239
    %v4048 = vpack.c.b16 %v3248, %v3240
    %v4049 = vpack.c.b16 %v3249, %v3241
    %v4050 = vpack.c.b16 %v3250, %v3242
    %v4051 = vpack.c.b16 %v3251, %v3243
    %v4052 = vpack.c.b16 %v3252, %v3244
    %v4053 = vpack.c.b16 %v3253, %v3245
    %v4054 = vpack.c.b16 %v3262, %v3254
    %v4055 = vpack.c.b16 %v3263, %v3255
    %v4056 = vpack.c.b16 %v3264, %v3256
    %v4057 = vpack.c.b16 %v3265, %v3257
    %v4058 = vpack.c.b16 %v3266, %v3258
    %v4059 = vpack.c.b16 %v3267, %v3259
    %v4060 = vpack.c.b16 %v3268, %v3260
    %v4061 = vpack.c.b16 %v3269, %v3261
    %v4062 = vpack.c.b16 %v3278, %v3270
    %v4063 = vpack.c.b16 %v3279, %v3271
    %v4064 = vpack.c.b16 %v3280, %v3272
    %v4065 = vpack.c.b16 %v3281, %v3273
    %v4066 = vpack.c.b16 %v3282, %v3274
    %v4067 = vpack.c.b16 %v3283, %v3275
    %v4068 = vpack.c.b16 %v3284, %v3276
    %v4069 = vpack.c.b16 %v3285, %v3277
    %v4070 = vpack.c.b16 %v3294, %v3286
    %v4071 = vpack.c.b16 %v3295, %v3287
    %v4072 = vpack.c.b16 %v3296, %v3288
    %v4073 = vpack.c.b16 %v3297, %v3289
    %v4074 = vpack.c.b16 %v3298, %v3290
    %v4075 = vpack.c.b16 %v3299, %v3291
    %v4076 = vpack.c.b16 %v3300, %v3292
    %v4077 = vpack.c.b16 %v3301, %v3293
    %v4078 = vpack.c.b16 %v3310, %v3302
    %v4079 = vpack.c.b16 %v3311, %v3303
    %v4080 = vpack.c.b16 %v3312, %v3304
    %v4081 = vpack.c.b16 %v3313, %v3305
    %v4082 = vpack.c.b16 %v3314, %v3306
    %v4083 = vpack.c.b16 %v3315, %v3307
    %v4084 = vpack.c.b16 %v3316, %v3308
    %v4085 = vpack.c.b16 %v3317, %v3309
    %v4086 = vpack.c.b16 %v3326, %v3318
    %v4087 = vpack.c.b16 %v3327, %v3319
    %v4088 = vpack.c.b16 %v3328, %v3320
    %v4089 = vpack.c.b16 %v3329, %v3321
    %v4090 = vpack.c.b16 %v3330, %v3322
    %v4091 = vpack.c.b16 %v3331, %v3323
    %v4092 = vpack.c.b16 %v3332, %v3324
    %v4093 = vpack.c.b16 %v3333, %v3325
    %v4094 = vpack.c.b16 %v3342, %v3334
    %v4095 = vpack.c.b16 %v3343, %v3335
    %v4096 = vpack.c.b16 %v3344, %v3336
    %v4097 = vpack.c.b16 %v3345, %v3337
    %v4098 = vpack.c.b16 %v3346, %v3338
    %v4099 = vpack.c.b16 %v3347, %v3339
    %v4100 = vpack.c.b16 %v3348, %v3340
    %v4101 = vpack.c.b16 %v3349, %v3341
    %v4102 = vpack.c.b16 %v3358, %v3350
    %v4103 = vpack.c.b16 %v3359, %v3351
    %v4104 = vpack.c.b16 %v3360, %v3352
    %v4105 = vpack.c.b16 %v3361, %v3353
    %v4106 = vpack.c.b16 %v3362, %v3354
    %v4107 = vpack.c.b16 %v3363, %v3355
    %v4108 = vpack.c.b16 %v3364, %v3356
    %v4109 = vpack.c.b16 %v3365, %v3357
    %v4110 = vpack.c.b16 %v3374, %v3366
    %v4111 = vpack.c.b16 %v3375, %v3367
    %v4112 = vpack.c.b16 %v3376, %v3368
    %v4113 = vpack.c.b16 %v3377, %v3369
    %v4114 = vpack.c.b16 %v3378, %v3370
    %v4115 = vpack.c.b16 %v3379, %v3371
    %v4116 = vpack.c.b16 %v3380, %v3372
    %v4117 = vpack.c.b16 %v3381, %v3373
    %v4118 = vpack.c.b16 %v3390, %v3382
    %v4119 = vpack.c.b16 %v3391, %v3383
    %v4120 = vpack.c.b16 %v3392, %v3384
    %v4121 = vpack.c.b16 %v3393, %v3385
    %v4122 = vpack.c.b16 %v3394, %v3386
    %v4123 = vpack.c.b16 %v3395, %v3387
    %v4124 = vpack.c.b16 %v3396, %v3388
    %v4125 = vpack.c.b16 %v3397, %v3389
    %v4126 = vpack.c.b16 %v3406, %v3398
    %v4127 = vpack.c.b16 %v3407, %v3399
    %v4128 = vpack.c.b16 %v3408, %v3400
    %v4129 = vpack.c.b16 %v3409, %v3401
    %v4130 = vpack.c.b16 %v3410, %v3402
    %v4131 = vpack.c.b16 %v3411, %v3403
    %v4132 = vpack.c.b16 %v3412, %v3404
    %v4133 = vpack.c.b16 %v3413, %v3405
    %v4134 = vpack.c.b16 %v3422, %v3414
    %v4135 = vpack.c.b16 %v3423, %v3415
    %v4136 = vpack.c.b16 %v3424, %v3416
    %v4137 = vpack.c.b16 %v3425, %v3417
    %v4138 = vpack.c.b16 %v3426, %v3418
    %v4139 = vpack.c.b16 %v3427, %v3419
    %v4140 = vpack.c.b16 %v3428, %v3420
    %v4141 = vpack.c.b16 %v3429, %v3421
    %v4142 = vpack.c.b16 %v3438, %v3430
    %v4143 = vpack.c.b16 %v3439, %v3431
    %v4144 = vpack.c.b16 %v3440, %v3432
    %v4145 = vpack.c.b16 %v3441, %v3433
    %v4146 = vpack.c.b16 %v3442, %v3434
    %v4147 = vpack.c.b16 %v3443, %v3435
    %v4148 = vpack.c.b16 %v3444, %v3436
    %v4149 = vpack.c.b16 %v3445, %v3437
    %v4150 = vpack.c.b16 %v3454, %v3446
    %v4151 = vpack.c.b16 %v3455, %v3447
    %v4152 = vpack.c.b16 %v3456, %v3448
    %v4153 = vpack.c.b16 %v3457, %v3449
    %v4154 = vpack.c.b16 %v3458, %v3450
    %v4155 = vpack.c.b16 %v3459, %v3451
    %v4156 = vpack.c.b16 %v3460, %v3452
    %v4157 = vpack.c.b16 %v3461, %v3453
    %v4158 = vpack.c.b16 %v3470, %v3462
    %v4159 = vpack.c.b16 %v3471, %v3463
    %v4160 = vpack.c.b16 %v3472, %v3464
    %v4161 = vpack.c.b16 %v3473, %v3465
    %v4162 = vpack.c.b16 %v3474, %v3466
    %v4163 = vpack.c.b16 %v3475, %v3467
    %v4164 = vpack.c.b16 %v3476, %v3468
    %v4165 = vpack.c.b16 %v3477, %v3469
    %v4166 = vpack.c.b16 %v3486, %v3478
    %v4167 = vpack.c.b16 %v3487, %v3479
    %v4168 = vpack.c.b16 %v3488, %v3480
    %v4169 = vpack.c.b16 %v3489, %v3481
    %v4170 = vpack.c.b16 %v3490, %v3482
    %v4171 = vpack.c.b16 %v3491, %v3483
    %v4172 = vpack.c.b16 %v3492, %v3484
    %v4173 = vpack.c.b16 %v3493, %v3485
    %v4174 = vpack.c.b16 %v3502, %v3494
    %v4175 = vpack.c.b16 %v3503, %v3495
    %v4176 = vpack.c.b16 %v3504, %v3496
    %v4177 = vpack.c.b16 %v3505, %v3497
    %v4178 = vpack.c.b16 %v3506, %v3498
    %v4179 = vpack.c.b16 %v3507, %v3499
    %v4180 = vpack.c.b16 %v3508, %v3500
    %v4181 = vpack.c.b16 %v3509, %v3501
    %v4182 = vpack.c.b16 %v3518, %v3510
    %v4183 = vpack.c.b16 %v3519, %v3511
    %v4184 = vpack.c.b16 %v3520, %v3512
    %v4185 = vpack.c.b16 %v3521, %v3513
    %v4186 = vpack.c.b16 %v3522, %v3514
    %v4187 = vpack.c.b16 %v3523, %v3515
    %v4188 = vpack.c.b16 %v3524, %v3516
    %v4189 = vpack.c.b16 %v3525, %v3517
    %v4190 = vpack.c.b16 %v3534, %v3526
    %v4191 = vpack.c.b16 %v3535, %v3527
    %v4192 = vpack.c.b16 %v3536, %v3528
    %v4193 = vpack.c.b16 %v3537, %v3529
    %v4194 = vpack.c.b16 %v3538, %v3530
    %v4195 = vpack.c.b16 %v3539, %v3531
    %v4196 = vpack.c.b16 %v3540, %v3532
    %v4197 = vpack.c.b16 %v3541, %v3533
    %v4198 = vpack.c.b16 %v3550, %v3542
    %v4199 = vpack.c.b16 %v3551, %v3543
    %v4200 = vpack.c.b16 %v3552, %v3544
    %v4201 = vpack.c.b16 %v3553, %v3545
    %v4202 = vpack.c.b16 %v3554, %v3546
    %v4203 = vpack.c.b16 %v3555, %v3547
    %v4204 = vpack.c.b16 %v3556, %v3548
    %v4205 = vpack.c.b16 %v3557, %v3549
    %v4206 = vpack.c.b16 %v3566, %v3558
    %v4207 = vpack.c.b16 %v3567, %v3559
    %v4208 = vpack.c.b16 %v3568, %v3560
    %v4209 = vpack.c.b16 %v3569, %v3561
    %v4210 = vpack.c.b16 %v3570, %v3562
    %v4211 = vpack.c.b16 %v3571, %v3563
    %v4212 = vpack.c.b16 %v3572, %v3564
    %v4213 = vpack.c.b16 %v3573, %v3565
    %4854 = vmatprep.subr.bf16.mxu0 %v3631
    %4855 = vmatpush1.bf16.msra.mxu0 %v3630
    %4856 = vmatprep.subr.bf16.mxu0 %v3623
    %4857 = vmatpush1.bf16.msra.mxu0 %v3622
    %4858 = vmatprep.subr.bf16.mxu0 %v3615
    %4859 = vmatpush1.bf16.msra.mxu0 %v3614
    %4860 = vmatprep.subr.bf16.mxu0 %v3607
    %4861 = vmatpush1.bf16.msra.mxu0 %v3606
    %4862 = vmatprep.subr.bf16.mxu0 %v3599
    %4863 = vmatpush1.bf16.msra.mxu0 %v3598
    %4864 = vmatprep.subr.bf16.mxu0 %v3591
    %4865 = vmatpush1.bf16.msra.mxu0 %v3590
    %4866 = vmatprep.subr.bf16.mxu0 %v3583
    %4867 = vmatpush1.bf16.msra.mxu0 %v3582
    %4868 = vmatprep.subr.bf16.mxu0 %v3575
    %4869 = vmatpush1.bf16.msra.mxu0 %v3574
    %4870 = vmatprep.subr.bf16.mxu0 %v3695
    %4871 = vmatpush2.bf16.msra.mxu0 %v3694
    %4872 = vmatprep.subr.bf16.mxu0 %v3687
    %4873 = vmatpush2.bf16.msra.mxu0 %v3686
    %4874 = vmatprep.subr.bf16.mxu0 %v3679
    %4875 = vmatpush2.bf16.msra.mxu0 %v3678
    %4876 = vmatprep.subr.bf16.mxu0 %v3671
    %4877 = vmatpush2.bf16.msra.mxu0 %v3670
    %4878 = vmatprep.subr.bf16.mxu0 %v3663
    %4879 = vmatpush2.bf16.msra.mxu0 %v3662
    %4880 = vmatprep.subr.bf16.mxu0 %v3655
    %4881 = vmatpush2.bf16.msra.mxu0 %v3654
    %4882 = vmatprep.subr.bf16.mxu0 %v3647
    %4883 = vmatpush2.bf16.msra.mxu0 %v3646
    %4884 = vmatprep.subr.bf16.mxu0 %v3639
    %4885 = vmatpush2.bf16.msra.mxu0 %v3638
    %4886 = vmatprep.mubr.bf16.mxu0 %v963
    %4887 = vmatmul.mubr.bf16.gmra.mxu0 %v962
    %v4888 = vpop.f32.mrf.mxu0
    %v4889 = vadd.f32 %v1617, %v4888
    %v4890 = vpop.f32.mrf.mxu0
    %v4891 = vadd.f32 %v1621, %v4890
    %v4892 = vpop.f32.mrf.mxu0
    %v4893 = vpop.f32.mrf.mxu0
    %4894 = vdwg.mxu0
    %4895 = vmatprep.subr.bf16.mxu0 %v3759
    %4896 = vmatpush1.bf16.msra.mxu0 %v3758
    %4897 = vmatprep.subr.bf16.mxu0 %v3751
    %4898 = vmatpush1.bf16.msra.mxu0 %v3750
    %4899 = vmatprep.subr.bf16.mxu0 %v3743
    %4900 = vmatpush1.bf16.msra.mxu0 %v3742
    %4901 = vmatprep.subr.bf16.mxu0 %v3735
    %4902 = vmatpush1.bf16.msra.mxu0 %v3734
    %4903 = vmatprep.subr.bf16.mxu0 %v3727
    %4904 = vmatpush1.bf16.msra.mxu0 %v3726
    %4905 = vmatprep.subr.bf16.mxu0 %v3719
    %4906 = vmatpush1.bf16.msra.mxu0 %v3718
    %4907 = vmatprep.subr.bf16.mxu0 %v3711
    %4908 = vmatpush1.bf16.msra.mxu0 %v3710
    %4909 = vmatprep.subr.bf16.mxu0 %v3703
    %4910 = vmatpush1.bf16.msra.mxu0 %v3702
    %4911 = vmatprep.subr.bf16.mxu0 %v3823
    %4912 = vmatpush2.bf16.msra.mxu0 %v3822
    %4913 = vmatprep.subr.bf16.mxu0 %v3815
    %4914 = vmatpush2.bf16.msra.mxu0 %v3814
    %4915 = vmatprep.subr.bf16.mxu0 %v3807
    %4916 = vmatpush2.bf16.msra.mxu0 %v3806
    %4917 = vmatprep.subr.bf16.mxu0 %v3799
    %4918 = vmatpush2.bf16.msra.mxu0 %v3798
    %4919 = vmatprep.subr.bf16.mxu0 %v3791
    %4920 = vmatpush2.bf16.msra.mxu0 %v3790
    %4921 = vmatprep.subr.bf16.mxu0 %v3783
    %4922 = vmatpush2.bf16.msra.mxu0 %v3782
    %4923 = vmatprep.subr.bf16.mxu0 %v3775
    %4924 = vmatpush2.bf16.msra.mxu0 %v3774
    %4925 = vmatprep.subr.bf16.mxu0 %v3767
    %4926 = vmatpush2.bf16.msra.mxu0 %v3766
    %4927 = vmatprep.mubr.bf16.mxu0 %v965
    %4928 = vmatmul.mubr.bf16.gmra.mxu0 %v964
    %v4929 = vpop.f32.mrf.mxu0
    %v4930 = vadd.f32 %v4889, %v4929
    %v4931 = vpop.f32.mrf.mxu0
    %v4932 = vadd.f32 %v4891, %v4931
    %v4933 = vpop.f32.mrf.mxu0
    %v4934 = vpop.f32.mrf.mxu0
    %4935 = vdwg.mxu0
    %4936 = vmatprep.subr.bf16.mxu0 %v3887
    %4937 = vmatpush1.bf16.msra.mxu0 %v3886
    %4938 = vmatprep.subr.bf16.mxu0 %v3879
    %4939 = vmatpush1.bf16.msra.mxu0 %v3878
    %4940 = vmatprep.subr.bf16.mxu0 %v3871
    %4941 = vmatpush1.bf16.msra.mxu0 %v3870
    %4942 = vmatprep.subr.bf16.mxu0 %v3863
    %4943 = vmatpush1.bf16.msra.mxu0 %v3862
    %4944 = vmatprep.subr.bf16.mxu0 %v3855
    %4945 = vmatpush1.bf16.msra.mxu0 %v3854
    %4946 = vmatprep.subr.bf16.mxu0 %v3847
    %4947 = vmatpush1.bf16.msra.mxu0 %v3846
    %4948 = vmatprep.subr.bf16.mxu0 %v3839
    %4949 = vmatpush1.bf16.msra.mxu0 %v3838
    %4950 = vmatprep.subr.bf16.mxu0 %v3831
    %4951 = vmatpush1.bf16.msra.mxu0 %v3830
    %4952 = vmatprep.subr.bf16.mxu0 %v3951
    %4953 = vmatpush2.bf16.msra.mxu0 %v3950
    %4954 = vmatprep.subr.bf16.mxu0 %v3943
    %4955 = vmatpush2.bf16.msra.mxu0 %v3942
    %4956 = vmatprep.subr.bf16.mxu0 %v3935
    %4957 = vmatpush2.bf16.msra.mxu0 %v3934
    %4958 = vmatprep.subr.bf16.mxu0 %v3927
    %4959 = vmatpush2.bf16.msra.mxu0 %v3926
    %4960 = vmatprep.subr.bf16.mxu0 %v3919
    %4961 = vmatpush2.bf16.msra.mxu0 %v3918
    %4962 = vmatprep.subr.bf16.mxu0 %v3911
    %4963 = vmatpush2.bf16.msra.mxu0 %v3910
    %4964 = vmatprep.subr.bf16.mxu0 %v3903
    %4965 = vmatpush2.bf16.msra.mxu0 %v3902
    %4966 = vmatprep.subr.bf16.mxu0 %v3895
    %4967 = vmatpush2.bf16.msra.mxu0 %v3894
    %4968 = vmatprep.mubr.bf16.mxu0 %v967
    %4969 = vmatmul.mubr.bf16.gmra.mxu0 %v966
    %v4970 = vpop.f32.mrf.mxu0
    %v4971 = vadd.f32 %v4930, %v4970
    %v4972 = vpop.f32.mrf.mxu0
    %v4973 = vadd.f32 %v4932, %v4972
    %v4974 = vpop.f32.mrf.mxu0
    %v4975 = vpop.f32.mrf.mxu0
    %4976 = vdwg.mxu0
    %4977 = vmatprep.subr.bf16.mxu0 %v4015
    %4978 = vmatpush1.bf16.msra.mxu0 %v4014
    %4979 = vmatprep.subr.bf16.mxu0 %v4007
    %4980 = vmatpush1.bf16.msra.mxu0 %v4006
    %4981 = vmatprep.subr.bf16.mxu0 %v3999
    %4982 = vmatpush1.bf16.msra.mxu0 %v3998
    %4983 = vmatprep.subr.bf16.mxu0 %v3991
    %4984 = vmatpush1.bf16.msra.mxu0 %v3990
    %4985 = vmatprep.subr.bf16.mxu0 %v3983
    %4986 = vmatpush1.bf16.msra.mxu0 %v3982
    %4987 = vmatprep.subr.bf16.mxu0 %v3975
    %4988 = vmatpush1.bf16.msra.mxu0 %v3974
    %4989 = vmatprep.subr.bf16.mxu0 %v3967
    %4990 = vmatpush1.bf16.msra.mxu0 %v3966
    %4991 = vmatprep.subr.bf16.mxu0 %v3959
    %4992 = vmatpush1.bf16.msra.mxu0 %v3958
    %4993 = vmatprep.subr.bf16.mxu0 %v4079
    %4994 = vmatpush2.bf16.msra.mxu0 %v4078
    %4995 = vmatprep.subr.bf16.mxu0 %v4071
    %4996 = vmatpush2.bf16.msra.mxu0 %v4070
    %4997 = vmatprep.subr.bf16.mxu0 %v4063
    %4998 = vmatpush2.bf16.msra.mxu0 %v4062
    %4999 = vmatprep.subr.bf16.mxu0 %v4055
    %5000 = vmatpush2.bf16.msra.mxu0 %v4054
    %5001 = vmatprep.subr.bf16.mxu0 %v4047
    %5002 = vmatpush2.bf16.msra.mxu0 %v4046
    %5003 = vmatprep.subr.bf16.mxu0 %v4039
    %5004 = vmatpush2.bf16.msra.mxu0 %v4038
    %5005 = vmatprep.subr.bf16.mxu0 %v4031
    %5006 = vmatpush2.bf16.msra.mxu0 %v4030
    %5007 = vmatprep.subr.bf16.mxu0 %v4023
    %5008 = vmatpush2.bf16.msra.mxu0 %v4022
    %5009 = vmatprep.mubr.bf16.mxu0 %v969
    %5010 = vmatmul.mubr.bf16.gmra.mxu0 %v968
    %v5011 = vpop.f32.mrf.mxu0
    %v5012 = vadd.f32 %v4971, %v5011
    %v5013 = vpop.f32.mrf.mxu0
    %v5014 = vadd.f32 %v4973, %v5013
    %v5015 = vpop.f32.mrf.mxu0
    %v5016 = vpop.f32.mrf.mxu0
    %5017 = vdwg.mxu0
    %5018 = vmatprep.subr.bf16.mxu0 %v4143
    %5019 = vmatpush1.bf16.msra.mxu0 %v4142
    %5020 = vmatprep.subr.bf16.mxu0 %v4135
    %5021 = vmatpush1.bf16.msra.mxu0 %v4134
    %5022 = vmatprep.subr.bf16.mxu0 %v4127
    %5023 = vmatpush1.bf16.msra.mxu0 %v4126
    %5024 = vmatprep.subr.bf16.mxu0 %v4119
    %5025 = vmatpush1.bf16.msra.mxu0 %v4118
    %5026 = vmatprep.subr.bf16.mxu0 %v4111
    %5027 = vmatpush1.bf16.msra.mxu0 %v4110
    %5028 = vmatprep.subr.bf16.mxu0 %v4103
    %5029 = vmatpush1.bf16.msra.mxu0 %v4102
    %5030 = vmatprep.subr.bf16.mxu0 %v4095
    %5031 = vmatpush1.bf16.msra.mxu0 %v4094
    %5032 = vmatprep.subr.bf16.mxu0 %v4087
    %5033 = vmatpush1.bf16.msra.mxu0 %v4086
    %5034 = vmatprep.subr.bf16.mxu0 %v4207
    %5035 = vmatpush2.bf16.msra.mxu0 %v4206
    %5036 = vmatprep.subr.bf16.mxu0 %v4199
    %5037 = vmatpush2.bf16.msra.mxu0 %v4198
    %5038 = vmatprep.subr.bf16.mxu0 %v4191
    %5039 = vmatpush2.bf16.msra.mxu0 %v4190
    %5040 = vmatprep.subr.bf16.mxu0 %v4183
    %5041 = vmatpush2.bf16.msra.mxu0 %v4182
    %5042 = vmatprep.subr.bf16.mxu0 %v4175
    %5043 = vmatpush2.bf16.msra.mxu0 %v4174
    %5044 = vmatprep.subr.bf16.mxu0 %v4167
    %5045 = vmatpush2.bf16.msra.mxu0 %v4166
    %5046 = vmatprep.subr.bf16.mxu0 %v4159
    %5047 = vmatpush2.bf16.msra.mxu0 %v4158
    %5048 = vmatprep.subr.bf16.mxu0 %v4151
    %5049 = vmatpush2.bf16.msra.mxu0 %v4150
    %5050 = vmatprep.mubr.bf16.mxu0 %v971
    %5051 = vmatmul.mubr.bf16.gmra.mxu0 %v970
    %v5052 = vpop.f32.mrf.mxu0
    %v5053 = vadd.f32 %v5012, %v5052
    %v5054 = vpop.f32.mrf.mxu0
    %v5055 = vadd.f32 %v5014, %v5054
    %v5056 = vpop.f32.mrf.mxu0
    %v5057 = vpop.f32.mrf.mxu0
    %5058 = vdwg.mxu0
    %5059 = vmatprep.subr.bf16.mxu0 %v3633
    %5060 = vmatpush1.bf16.msra.mxu0 %v3632
    %5061 = vmatprep.subr.bf16.mxu0 %v3625
    %5062 = vmatpush1.bf16.msra.mxu0 %v3624
    %5063 = vmatprep.subr.bf16.mxu0 %v3617
    %5064 = vmatpush1.bf16.msra.mxu0 %v3616
    %5065 = vmatprep.subr.bf16.mxu0 %v3609
    %5066 = vmatpush1.bf16.msra.mxu0 %v3608
    %5067 = vmatprep.subr.bf16.mxu0 %v3601
    %5068 = vmatpush1.bf16.msra.mxu0 %v3600
    %5069 = vmatprep.subr.bf16.mxu0 %v3593
    %5070 = vmatpush1.bf16.msra.mxu0 %v3592
    %5071 = vmatprep.subr.bf16.mxu0 %v3585
    %5072 = vmatpush1.bf16.msra.mxu0 %v3584
    %5073 = vmatprep.subr.bf16.mxu0 %v3577
    %5074 = vmatpush1.bf16.msra.mxu0 %v3576
    %5075 = vmatprep.subr.bf16.mxu0 %v3697
    %5076 = vmatpush2.bf16.msra.mxu0 %v3696
    %5077 = vmatprep.subr.bf16.mxu0 %v3689
    %5078 = vmatpush2.bf16.msra.mxu0 %v3688
    %5079 = vmatprep.subr.bf16.mxu0 %v3681
    %5080 = vmatpush2.bf16.msra.mxu0 %v3680
    %5081 = vmatprep.subr.bf16.mxu0 %v3673
    %5082 = vmatpush2.bf16.msra.mxu0 %v3672
    %5083 = vmatprep.subr.bf16.mxu0 %v3665
    %5084 = vmatpush2.bf16.msra.mxu0 %v3664
    %5085 = vmatprep.subr.bf16.mxu0 %v3657
    %5086 = vmatpush2.bf16.msra.mxu0 %v3656
    %5087 = vmatprep.subr.bf16.mxu0 %v3649
    %5088 = vmatpush2.bf16.msra.mxu0 %v3648
    %5089 = vmatprep.subr.bf16.mxu0 %v3641
    %5090 = vmatpush2.bf16.msra.mxu0 %v3640
    %5091 = vmatprep.mubr.bf16.mxu0 %v963
    %5092 = vmatmul.mubr.bf16.gmra.mxu0 %v962
    %v5093 = vpop.f32.mrf.mxu0
    %v5094 = vadd.f32 %v1625, %v5093
    %v5095 = vpop.f32.mrf.mxu0
    %v5096 = vadd.f32 %v1629, %v5095
    %v5097 = vpop.f32.mrf.mxu0
    %v5098 = vpop.f32.mrf.mxu0
    %5099 = vdwg.mxu0
    %5100 = vmatprep.subr.bf16.mxu0 %v3761
    %5101 = vmatpush1.bf16.msra.mxu0 %v3760
    %5102 = vmatprep.subr.bf16.mxu0 %v3753
    %5103 = vmatpush1.bf16.msra.mxu0 %v3752
    %5104 = vmatprep.subr.bf16.mxu0 %v3745
    %5105 = vmatpush1.bf16.msra.mxu0 %v3744
    %5106 = vmatprep.subr.bf16.mxu0 %v3737
    %5107 = vmatpush1.bf16.msra.mxu0 %v3736
    %5108 = vmatprep.subr.bf16.mxu0 %v3729
    %5109 = vmatpush1.bf16.msra.mxu0 %v3728
    %5110 = vmatprep.subr.bf16.mxu0 %v3721
    %5111 = vmatpush1.bf16.msra.mxu0 %v3720
    %5112 = vmatprep.subr.bf16.mxu0 %v3713
    %5113 = vmatpush1.bf16.msra.mxu0 %v3712
    %5114 = vmatprep.subr.bf16.mxu0 %v3705
    %5115 = vmatpush1.bf16.msra.mxu0 %v3704
    %5116 = vmatprep.subr.bf16.mxu0 %v3825
    %5117 = vmatpush2.bf16.msra.mxu0 %v3824
    %5118 = vmatprep.subr.bf16.mxu0 %v3817
    %5119 = vmatpush2.bf16.msra.mxu0 %v3816
    %5120 = vmatprep.subr.bf16.mxu0 %v3809
    %5121 = vmatpush2.bf16.msra.mxu0 %v3808
    %5122 = vmatprep.subr.bf16.mxu0 %v3801
    %5123 = vmatpush2.bf16.msra.mxu0 %v3800
    %5124 = vmatprep.subr.bf16.mxu0 %v3793
    %5125 = vmatpush2.bf16.msra.mxu0 %v3792
    %5126 = vmatprep.subr.bf16.mxu0 %v3785
    %5127 = vmatpush2.bf16.msra.mxu0 %v3784
    %5128 = vmatprep.subr.bf16.mxu0 %v3777
    %5129 = vmatpush2.bf16.msra.mxu0 %v3776
    %5130 = vmatprep.subr.bf16.mxu0 %v3769
    %5131 = vmatpush2.bf16.msra.mxu0 %v3768
    %5132 = vmatprep.mubr.bf16.mxu0 %v965
    %5133 = vmatmul.mubr.bf16.gmra.mxu0 %v964
    %v5134 = vpop.f32.mrf.mxu0
    %v5135 = vadd.f32 %v5094, %v5134
    %v5136 = vpop.f32.mrf.mxu0
    %v5137 = vadd.f32 %v5096, %v5136
    %v5138 = vpop.f32.mrf.mxu0
    %v5139 = vpop.f32.mrf.mxu0
    %5140 = vdwg.mxu0
    %5141 = vmatprep.subr.bf16.mxu0 %v3889
    %5142 = vmatpush1.bf16.msra.mxu0 %v3888
    %5143 = vmatprep.subr.bf16.mxu0 %v3881
    %5144 = vmatpush1.bf16.msra.mxu0 %v3880
    %5145 = vmatprep.subr.bf16.mxu0 %v3873
    %5146 = vmatpush1.bf16.msra.mxu0 %v3872
    %5147 = vmatprep.subr.bf16.mxu0 %v3865
    %5148 = vmatpush1.bf16.msra.mxu0 %v3864
    %5149 = vmatprep.subr.bf16.mxu0 %v3857
    %5150 = vmatpush1.bf16.msra.mxu0 %v3856
    %5151 = vmatprep.subr.bf16.mxu0 %v3849
    %5152 = vmatpush1.bf16.msra.mxu0 %v3848
    %5153 = vmatprep.subr.bf16.mxu0 %v3841
    %5154 = vmatpush1.bf16.msra.mxu0 %v3840
    %5155 = vmatprep.subr.bf16.mxu0 %v3833
    %5156 = vmatpush1.bf16.msra.mxu0 %v3832
    %5157 = vmatprep.subr.bf16.mxu0 %v3953
    %5158 = vmatpush2.bf16.msra.mxu0 %v3952
    %5159 = vmatprep.subr.bf16.mxu0 %v3945
    %5160 = vmatpush2.bf16.msra.mxu0 %v3944
    %5161 = vmatprep.subr.bf16.mxu0 %v3937
    %5162 = vmatpush2.bf16.msra.mxu0 %v3936
    %5163 = vmatprep.subr.bf16.mxu0 %v3929
    %5164 = vmatpush2.bf16.msra.mxu0 %v3928
    %5165 = vmatprep.subr.bf16.mxu0 %v3921
    %5166 = vmatpush2.bf16.msra.mxu0 %v3920
    %5167 = vmatprep.subr.bf16.mxu0 %v3913
    %5168 = vmatpush2.bf16.msra.mxu0 %v3912
    %5169 = vmatprep.subr.bf16.mxu0 %v3905
    %5170 = vmatpush2.bf16.msra.mxu0 %v3904
    %5171 = vmatprep.subr.bf16.mxu0 %v3897
    %5172 = vmatpush2.bf16.msra.mxu0 %v3896
    %5173 = vmatprep.mubr.bf16.mxu0 %v967
    %5174 = vmatmul.mubr.bf16.gmra.mxu0 %v966
    %v5175 = vpop.f32.mrf.mxu0
    %v5176 = vadd.f32 %v5135, %v5175
    %v5177 = vpop.f32.mrf.mxu0
    %v5178 = vadd.f32 %v5137, %v5177
    %v5179 = vpop.f32.mrf.mxu0
    %v5180 = vpop.f32.mrf.mxu0
    %5181 = vdwg.mxu0
    %5182 = vmatprep.subr.bf16.mxu0 %v4017
    %5183 = vmatpush1.bf16.msra.mxu0 %v4016
    %5184 = vmatprep.subr.bf16.mxu0 %v4009
    %5185 = vmatpush1.bf16.msra.mxu0 %v4008
    %5186 = vmatprep.subr.bf16.mxu0 %v4001
    %5187 = vmatpush1.bf16.msra.mxu0 %v4000
    %5188 = vmatprep.subr.bf16.mxu0 %v3993
    %5189 = vmatpush1.bf16.msra.mxu0 %v3992
    %5190 = vmatprep.subr.bf16.mxu0 %v3985
    %5191 = vmatpush1.bf16.msra.mxu0 %v3984
    %5192 = vmatprep.subr.bf16.mxu0 %v3977
    %5193 = vmatpush1.bf16.msra.mxu0 %v3976
    %5194 = vmatprep.subr.bf16.mxu0 %v3969
    %5195 = vmatpush1.bf16.msra.mxu0 %v3968
    %5196 = vmatprep.subr.bf16.mxu0 %v3961
    %5197 = vmatpush1.bf16.msra.mxu0 %v3960
    %5198 = vmatprep.subr.bf16.mxu0 %v4081
    %5199 = vmatpush2.bf16.msra.mxu0 %v4080
    %5200 = vmatprep.subr.bf16.mxu0 %v4073
    %5201 = vmatpush2.bf16.msra.mxu0 %v4072
    %5202 = vmatprep.subr.bf16.mxu0 %v4065
    %5203 = vmatpush2.bf16.msra.mxu0 %v4064
    %5204 = vmatprep.subr.bf16.mxu0 %v4057
    %5205 = vmatpush2.bf16.msra.mxu0 %v4056
    %5206 = vmatprep.subr.bf16.mxu0 %v4049
    %5207 = vmatpush2.bf16.msra.mxu0 %v4048
    %5208 = vmatprep.subr.bf16.mxu0 %v4041
    %5209 = vmatpush2.bf16.msra.mxu0 %v4040
    %5210 = vmatprep.subr.bf16.mxu0 %v4033
    %5211 = vmatpush2.bf16.msra.mxu0 %v4032
    %5212 = vmatprep.subr.bf16.mxu0 %v4025
    %5213 = vmatpush2.bf16.msra.mxu0 %v4024
    %5214 = vmatprep.mubr.bf16.mxu0 %v969
    %5215 = vmatmul.mubr.bf16.gmra.mxu0 %v968
    %v5216 = vpop.f32.mrf.mxu0
    %v5217 = vadd.f32 %v5176, %v5216
    %v5218 = vpop.f32.mrf.mxu0
    %v5219 = vadd.f32 %v5178, %v5218
    %v5220 = vpop.f32.mrf.mxu0
    %v5221 = vpop.f32.mrf.mxu0
    %5222 = vdwg.mxu0
    %5223 = vmatprep.subr.bf16.mxu0 %v4145
    %5224 = vmatpush1.bf16.msra.mxu0 %v4144
    %5225 = vmatprep.subr.bf16.mxu0 %v4137
    %5226 = vmatpush1.bf16.msra.mxu0 %v4136
    %5227 = vmatprep.subr.bf16.mxu0 %v4129
    %5228 = vmatpush1.bf16.msra.mxu0 %v4128
    %5229 = vmatprep.subr.bf16.mxu0 %v4121
    %5230 = vmatpush1.bf16.msra.mxu0 %v4120
    %5231 = vmatprep.subr.bf16.mxu0 %v4113
    %5232 = vmatpush1.bf16.msra.mxu0 %v4112
    %5233 = vmatprep.subr.bf16.mxu0 %v4105
    %5234 = vmatpush1.bf16.msra.mxu0 %v4104
    %5235 = vmatprep.subr.bf16.mxu0 %v4097
    %5236 = vmatpush1.bf16.msra.mxu0 %v4096
    %5237 = vmatprep.subr.bf16.mxu0 %v4089
    %5238 = vmatpush1.bf16.msra.mxu0 %v4088
    %5239 = vmatprep.subr.bf16.mxu0 %v4209
    %5240 = vmatpush2.bf16.msra.mxu0 %v4208
    %5241 = vmatprep.subr.bf16.mxu0 %v4201
    %5242 = vmatpush2.bf16.msra.mxu0 %v4200
    %5243 = vmatprep.subr.bf16.mxu0 %v4193
    %5244 = vmatpush2.bf16.msra.mxu0 %v4192
    %5245 = vmatprep.subr.bf16.mxu0 %v4185
    %5246 = vmatpush2.bf16.msra.mxu0 %v4184
    %5247 = vmatprep.subr.bf16.mxu0 %v4177
    %5248 = vmatpush2.bf16.msra.mxu0 %v4176
    %5249 = vmatprep.subr.bf16.mxu0 %v4169
    %5250 = vmatpush2.bf16.msra.mxu0 %v4168
    %5251 = vmatprep.subr.bf16.mxu0 %v4161
    %5252 = vmatpush2.bf16.msra.mxu0 %v4160
    %5253 = vmatprep.subr.bf16.mxu0 %v4153
    %5254 = vmatpush2.bf16.msra.mxu0 %v4152
    %5255 = vmatprep.mubr.bf16.mxu0 %v971
    %5256 = vmatmul.mubr.bf16.gmra.mxu0 %v970
    %v5257 = vpop.f32.mrf.mxu0
    %v5258 = vadd.f32 %v5217, %v5257
    %v5259 = vpop.f32.mrf.mxu0
    %v5260 = vadd.f32 %v5219, %v5259
    %v5261 = vpop.f32.mrf.mxu0
    %v5262 = vpop.f32.mrf.mxu0
    %5263 = vdwg.mxu0
    %5264 = vmatprep.subr.bf16.mxu0 %v3635
    %5265 = vmatpush1.bf16.msra.mxu0 %v3634
    %5266 = vmatprep.subr.bf16.mxu0 %v3627
    %5267 = vmatpush1.bf16.msra.mxu0 %v3626
    %5268 = vmatprep.subr.bf16.mxu0 %v3619
    %5269 = vmatpush1.bf16.msra.mxu0 %v3618
    %5270 = vmatprep.subr.bf16.mxu0 %v3611
    %5271 = vmatpush1.bf16.msra.mxu0 %v3610
    %5272 = vmatprep.subr.bf16.mxu0 %v3603
    %5273 = vmatpush1.bf16.msra.mxu0 %v3602
    %5274 = vmatprep.subr.bf16.mxu0 %v3595
    %5275 = vmatpush1.bf16.msra.mxu0 %v3594
    %5276 = vmatprep.subr.bf16.mxu0 %v3587
    %5277 = vmatpush1.bf16.msra.mxu0 %v3586
    %5278 = vmatprep.subr.bf16.mxu0 %v3579
    %5279 = vmatpush1.bf16.msra.mxu0 %v3578
    %5280 = vmatprep.subr.bf16.mxu0 %v3699
    %5281 = vmatpush2.bf16.msra.mxu0 %v3698
    %5282 = vmatprep.subr.bf16.mxu0 %v3691
    %5283 = vmatpush2.bf16.msra.mxu0 %v3690
    %5284 = vmatprep.subr.bf16.mxu0 %v3683
    %5285 = vmatpush2.bf16.msra.mxu0 %v3682
    %5286 = vmatprep.subr.bf16.mxu0 %v3675
    %5287 = vmatpush2.bf16.msra.mxu0 %v3674
    %5288 = vmatprep.subr.bf16.mxu0 %v3667
    %5289 = vmatpush2.bf16.msra.mxu0 %v3666
    %5290 = vmatprep.subr.bf16.mxu0 %v3659
    %5291 = vmatpush2.bf16.msra.mxu0 %v3658
    %5292 = vmatprep.subr.bf16.mxu0 %v3651
    %5293 = vmatpush2.bf16.msra.mxu0 %v3650
    %5294 = vmatprep.subr.bf16.mxu0 %v3643
    %5295 = vmatpush2.bf16.msra.mxu0 %v3642
    %5296 = vmatprep.mubr.bf16.mxu0 %v963
    %5297 = vmatmul.mubr.bf16.gmra.mxu0 %v962
    %v5298 = vpop.f32.mrf.mxu0
    %v5299 = vadd.f32 %v1633, %v5298
    %v5300 = vpop.f32.mrf.mxu0
    %v5301 = vadd.f32 %v1637, %v5300
    %v5302 = vpop.f32.mrf.mxu0
    %v5303 = vpop.f32.mrf.mxu0
    %5304 = vdwg.mxu0
    %5305 = vmatprep.subr.bf16.mxu0 %v3763
    %5306 = vmatpush1.bf16.msra.mxu0 %v3762
    %5307 = vmatprep.subr.bf16.mxu0 %v3755
    %5308 = vmatpush1.bf16.msra.mxu0 %v3754
    %5309 = vmatprep.subr.bf16.mxu0 %v3747
    %5310 = vmatpush1.bf16.msra.mxu0 %v3746
    %5311 = vmatprep.subr.bf16.mxu0 %v3739
    %5312 = vmatpush1.bf16.msra.mxu0 %v3738
    %5313 = vmatprep.subr.bf16.mxu0 %v3731
    %5314 = vmatpush1.bf16.msra.mxu0 %v3730
    %5315 = vmatprep.subr.bf16.mxu0 %v3723
    %5316 = vmatpush1.bf16.msra.mxu0 %v3722
    %5317 = vmatprep.subr.bf16.mxu0 %v3715
    %5318 = vmatpush1.bf16.msra.mxu0 %v3714
    %5319 = vmatprep.subr.bf16.mxu0 %v3707
    %5320 = vmatpush1.bf16.msra.mxu0 %v3706
    %5321 = vmatprep.subr.bf16.mxu0 %v3827
    %5322 = vmatpush2.bf16.msra.mxu0 %v3826
    %5323 = vmatprep.subr.bf16.mxu0 %v3819
    %5324 = vmatpush2.bf16.msra.mxu0 %v3818
    %5325 = vmatprep.subr.bf16.mxu0 %v3811
    %5326 = vmatpush2.bf16.msra.mxu0 %v3810
    %5327 = vmatprep.subr.bf16.mxu0 %v3803
    %5328 = vmatpush2.bf16.msra.mxu0 %v3802
    %5329 = vmatprep.subr.bf16.mxu0 %v3795
    %5330 = vmatpush2.bf16.msra.mxu0 %v3794
    %5331 = vmatprep.subr.bf16.mxu0 %v3787
    %5332 = vmatpush2.bf16.msra.mxu0 %v3786
    %5333 = vmatprep.subr.bf16.mxu0 %v3779
    %5334 = vmatpush2.bf16.msra.mxu0 %v3778
    %5335 = vmatprep.subr.bf16.mxu0 %v3771
    %5336 = vmatpush2.bf16.msra.mxu0 %v3770
    %5337 = vmatprep.mubr.bf16.mxu0 %v965
    %5338 = vmatmul.mubr.bf16.gmra.mxu0 %v964
    %v5339 = vpop.f32.mrf.mxu0
    %v5340 = vadd.f32 %v5299, %v5339
    %v5341 = vpop.f32.mrf.mxu0
    %v5342 = vadd.f32 %v5301, %v5341
    %v5343 = vpop.f32.mrf.mxu0
    %v5344 = vpop.f32.mrf.mxu0
    %5345 = vdwg.mxu0
    %5346 = vmatprep.subr.bf16.mxu0 %v3891
    %5347 = vmatpush1.bf16.msra.mxu0 %v3890
    %5348 = vmatprep.subr.bf16.mxu0 %v3883
    %5349 = vmatpush1.bf16.msra.mxu0 %v3882
    %5350 = vmatprep.subr.bf16.mxu0 %v3875
    %5351 = vmatpush1.bf16.msra.mxu0 %v3874
    %5352 = vmatprep.subr.bf16.mxu0 %v3867
    %5353 = vmatpush1.bf16.msra.mxu0 %v3866
    %5354 = vmatprep.subr.bf16.mxu0 %v3859
    %5355 = vmatpush1.bf16.msra.mxu0 %v3858
    %5356 = vmatprep.subr.bf16.mxu0 %v3851
    %5357 = vmatpush1.bf16.msra.mxu0 %v3850
    %5358 = vmatprep.subr.bf16.mxu0 %v3843
    %5359 = vmatpush1.bf16.msra.mxu0 %v3842
    %5360 = vmatprep.subr.bf16.mxu0 %v3835
    %5361 = vmatpush1.bf16.msra.mxu0 %v3834
    %5362 = vmatprep.subr.bf16.mxu0 %v3955
    %5363 = vmatpush2.bf16.msra.mxu0 %v3954
    %5364 = vmatprep.subr.bf16.mxu0 %v3947
    %5365 = vmatpush2.bf16.msra.mxu0 %v3946
    %5366 = vmatprep.subr.bf16.mxu0 %v3939
    %5367 = vmatpush2.bf16.msra.mxu0 %v3938
    %5368 = vmatprep.subr.bf16.mxu0 %v3931
    %5369 = vmatpush2.bf16.msra.mxu0 %v3930
    %5370 = vmatprep.subr.bf16.mxu0 %v3923
    %5371 = vmatpush2.bf16.msra.mxu0 %v3922
    %5372 = vmatprep.subr.bf16.mxu0 %v3915
    %5373 = vmatpush2.bf16.msra.mxu0 %v3914
    %5374 = vmatprep.subr.bf16.mxu0 %v3907
    %5375 = vmatpush2.bf16.msra.mxu0 %v3906
    %5376 = vmatprep.subr.bf16.mxu0 %v3899
    %5377 = vmatpush2.bf16.msra.mxu0 %v3898
    %5378 = vmatprep.mubr.bf16.mxu0 %v967
    %5379 = vmatmul.mubr.bf16.gmra.mxu0 %v966
    %v5380 = vpop.f32.mrf.mxu0
    %v5381 = vadd.f32 %v5340, %v5380
    %v5382 = vpop.f32.mrf.mxu0
    %v5383 = vadd.f32 %v5342, %v5382
    %v5384 = vpop.f32.mrf.mxu0
    %v5385 = vpop.f32.mrf.mxu0
    %5386 = vdwg.mxu0
    %5387 = vmatprep.subr.bf16.mxu0 %v4019
    %5388 = vmatpush1.bf16.msra.mxu0 %v4018
    %5389 = vmatprep.subr.bf16.mxu0 %v4011
    %5390 = vmatpush1.bf16.msra.mxu0 %v4010
    %5391 = vmatprep.subr.bf16.mxu0 %v4003
    %5392 = vmatpush1.bf16.msra.mxu0 %v4002
    %5393 = vmatprep.subr.bf16.mxu0 %v3995
    %5394 = vmatpush1.bf16.msra.mxu0 %v3994
    %5395 = vmatprep.subr.bf16.mxu0 %v3987
    %5396 = vmatpush1.bf16.msra.mxu0 %v3986
    %5397 = vmatprep.subr.bf16.mxu0 %v3979
    %5398 = vmatpush1.bf16.msra.mxu0 %v3978
    %5399 = vmatprep.subr.bf16.mxu0 %v3971
    %5400 = vmatpush1.bf16.msra.mxu0 %v3970
    %5401 = vmatprep.subr.bf16.mxu0 %v3963
    %5402 = vmatpush1.bf16.msra.mxu0 %v3962
    %5403 = vmatprep.subr.bf16.mxu0 %v4083
    %5404 = vmatpush2.bf16.msra.mxu0 %v4082
    %5405 = vmatprep.subr.bf16.mxu0 %v4075
    %5406 = vmatpush2.bf16.msra.mxu0 %v4074
    %5407 = vmatprep.subr.bf16.mxu0 %v4067
    %5408 = vmatpush2.bf16.msra.mxu0 %v4066
    %5409 = vmatprep.subr.bf16.mxu0 %v4059
    %5410 = vmatpush2.bf16.msra.mxu0 %v4058
    %5411 = vmatprep.subr.bf16.mxu0 %v4051
    %5412 = vmatpush2.bf16.msra.mxu0 %v4050
    %5413 = vmatprep.subr.bf16.mxu0 %v4043
    %5414 = vmatpush2.bf16.msra.mxu0 %v4042
    %5415 = vmatprep.subr.bf16.mxu0 %v4035
    %5416 = vmatpush2.bf16.msra.mxu0 %v4034
    %5417 = vmatprep.subr.bf16.mxu0 %v4027
    %5418 = vmatpush2.bf16.msra.mxu0 %v4026
    %5419 = vmatprep.mubr.bf16.mxu0 %v969
    %5420 = vmatmul.mubr.bf16.gmra.mxu0 %v968
    %v5421 = vpop.f32.mrf.mxu0
    %v5422 = vadd.f32 %v5381, %v5421
    %v5423 = vpop.f32.mrf.mxu0
    %v5424 = vadd.f32 %v5383, %v5423
    %v5425 = vpop.f32.mrf.mxu0
    %v5426 = vpop.f32.mrf.mxu0
    %5427 = vdwg.mxu0
    %5428 = vmatprep.subr.bf16.mxu0 %v4147
    %5429 = vmatpush1.bf16.msra.mxu0 %v4146
    %5430 = vmatprep.subr.bf16.mxu0 %v4139
    %5431 = vmatpush1.bf16.msra.mxu0 %v4138
    %5432 = vmatprep.subr.bf16.mxu0 %v4131
    %5433 = vmatpush1.bf16.msra.mxu0 %v4130
    %5434 = vmatprep.subr.bf16.mxu0 %v4123
    %5435 = vmatpush1.bf16.msra.mxu0 %v4122
    %5436 = vmatprep.subr.bf16.mxu0 %v4115
    %5437 = vmatpush1.bf16.msra.mxu0 %v4114
    %5438 = vmatprep.subr.bf16.mxu0 %v4107
    %5439 = vmatpush1.bf16.msra.mxu0 %v4106
    %5440 = vmatprep.subr.bf16.mxu0 %v4099
    %5441 = vmatpush1.bf16.msra.mxu0 %v4098
    %5442 = vmatprep.subr.bf16.mxu0 %v4091
    %5443 = vmatpush1.bf16.msra.mxu0 %v4090
    %5444 = vmatprep.subr.bf16.mxu0 %v4211
    %5445 = vmatpush2.bf16.msra.mxu0 %v4210
    %5446 = vmatprep.subr.bf16.mxu0 %v4203
    %5447 = vmatpush2.bf16.msra.mxu0 %v4202
    %5448 = vmatprep.subr.bf16.mxu0 %v4195
    %5449 = vmatpush2.bf16.msra.mxu0 %v4194
    %5450 = vmatprep.subr.bf16.mxu0 %v4187
    %5451 = vmatpush2.bf16.msra.mxu0 %v4186
    %5452 = vmatprep.subr.bf16.mxu0 %v4179
    %5453 = vmatpush2.bf16.msra.mxu0 %v4178
    %5454 = vmatprep.subr.bf16.mxu0 %v4171
    %5455 = vmatpush2.bf16.msra.mxu0 %v4170
    %5456 = vmatprep.subr.bf16.mxu0 %v4163
    %5457 = vmatpush2.bf16.msra.mxu0 %v4162
    %5458 = vmatprep.subr.bf16.mxu0 %v4155
    %5459 = vmatpush2.bf16.msra.mxu0 %v4154
    %5460 = vmatprep.mubr.bf16.mxu0 %v971
    %5461 = vmatmul.mubr.bf16.gmra.mxu0 %v970
    %v5462 = vpop.f32.mrf.mxu0
    %v5463 = vadd.f32 %v5422, %v5462
    %v5464 = vpop.f32.mrf.mxu0
    %v5465 = vadd.f32 %v5424, %v5464
    %v5466 = vpop.f32.mrf.mxu0
    %v5467 = vpop.f32.mrf.mxu0
    %5468 = vdwg.mxu0
    %5469 = vmatprep.subr.bf16.mxu0 %v3637
    %5470 = vmatpush1.bf16.msra.mxu0 %v3636
    %5471 = vmatprep.subr.bf16.mxu0 %v3629
    %5472 = vmatpush1.bf16.msra.mxu0 %v3628
    %5473 = vmatprep.subr.bf16.mxu0 %v3621
    %5474 = vmatpush1.bf16.msra.mxu0 %v3620
    %5475 = vmatprep.subr.bf16.mxu0 %v3613
    %5476 = vmatpush1.bf16.msra.mxu0 %v3612
    %5477 = vmatprep.subr.bf16.mxu0 %v3605
    %5478 = vmatpush1.bf16.msra.mxu0 %v3604
    %5479 = vmatprep.subr.bf16.mxu0 %v3597
    %5480 = vmatpush1.bf16.msra.mxu0 %v3596
    %5481 = vmatprep.subr.bf16.mxu0 %v3589
    %5482 = vmatpush1.bf16.msra.mxu0 %v3588
    %5483 = vmatprep.subr.bf16.mxu0 %v3581
    %5484 = vmatpush1.bf16.msra.mxu0 %v3580
    %5485 = vmatprep.subr.bf16.mxu0 %v3701
    %5486 = vmatpush2.bf16.msra.mxu0 %v3700
    %5487 = vmatprep.subr.bf16.mxu0 %v3693
    %5488 = vmatpush2.bf16.msra.mxu0 %v3692
    %5489 = vmatprep.subr.bf16.mxu0 %v3685
    %5490 = vmatpush2.bf16.msra.mxu0 %v3684
    %5491 = vmatprep.subr.bf16.mxu0 %v3677
    %5492 = vmatpush2.bf16.msra.mxu0 %v3676
    %5493 = vmatprep.subr.bf16.mxu0 %v3669
    %5494 = vmatpush2.bf16.msra.mxu0 %v3668
    %5495 = vmatprep.subr.bf16.mxu0 %v3661
    %5496 = vmatpush2.bf16.msra.mxu0 %v3660
    %5497 = vmatprep.subr.bf16.mxu0 %v3653
    %5498 = vmatpush2.bf16.msra.mxu0 %v3652
    %5499 = vmatprep.subr.bf16.mxu0 %v3645
    %5500 = vmatpush2.bf16.msra.mxu0 %v3644
    %5501 = vmatprep.mubr.bf16.mxu0 %v963
    %5502 = vmatmul.mubr.bf16.gmra.mxu0 %v962
    %v5503 = vpop.f32.mrf.mxu0
    %v5504 = vadd.f32 %v1641, %v5503
    %v5505 = vpop.f32.mrf.mxu0
    %v5506 = vadd.f32 %v1645, %v5505
    %v5507 = vpop.f32.mrf.mxu0
    %v5508 = vpop.f32.mrf.mxu0
    %5509 = vdwg.mxu0
    %5510 = vmatprep.subr.bf16.mxu0 %v3765
    %5511 = vmatpush1.bf16.msra.mxu0 %v3764
    %5512 = vmatprep.subr.bf16.mxu0 %v3757
    %5513 = vmatpush1.bf16.msra.mxu0 %v3756
    %5514 = vmatprep.subr.bf16.mxu0 %v3749
    %5515 = vmatpush1.bf16.msra.mxu0 %v3748
    %5516 = vmatprep.subr.bf16.mxu0 %v3741
    %5517 = vmatpush1.bf16.msra.mxu0 %v3740
    %5518 = vmatprep.subr.bf16.mxu0 %v3733
    %5519 = vmatpush1.bf16.msra.mxu0 %v3732
    %5520 = vmatprep.subr.bf16.mxu0 %v3725
    %5521 = vmatpush1.bf16.msra.mxu0 %v3724
    %5522 = vmatprep.subr.bf16.mxu0 %v3717
    %5523 = vmatpush1.bf16.msra.mxu0 %v3716
    %5524 = vmatprep.subr.bf16.mxu0 %v3709
    %5525 = vmatpush1.bf16.msra.mxu0 %v3708
    %5526 = vmatprep.subr.bf16.mxu0 %v3829
    %5527 = vmatpush2.bf16.msra.mxu0 %v3828
    %5528 = vmatprep.subr.bf16.mxu0 %v3821
    %5529 = vmatpush2.bf16.msra.mxu0 %v3820
    %5530 = vmatprep.subr.bf16.mxu0 %v3813
    %5531 = vmatpush2.bf16.msra.mxu0 %v3812
    %5532 = vmatprep.subr.bf16.mxu0 %v3805
    %5533 = vmatpush2.bf16.msra.mxu0 %v3804
    %5534 = vmatprep.subr.bf16.mxu0 %v3797
    %5535 = vmatpush2.bf16.msra.mxu0 %v3796
    %5536 = vmatprep.subr.bf16.mxu0 %v3789
    %5537 = vmatpush2.bf16.msra.mxu0 %v3788
    %5538 = vmatprep.subr.bf16.mxu0 %v3781
    %5539 = vmatpush2.bf16.msra.mxu0 %v3780
    %5540 = vmatprep.subr.bf16.mxu0 %v3773
    %5541 = vmatpush2.bf16.msra.mxu0 %v3772
    %5542 = vmatprep.mubr.bf16.mxu0 %v965
    %5543 = vmatmul.mubr.bf16.gmra.mxu0 %v964
    %v5544 = vpop.f32.mrf.mxu0
    %v5545 = vadd.f32 %v5504, %v5544
    %v5546 = vpop.f32.mrf.mxu0
    %v5547 = vadd.f32 %v5506, %v5546
    %v5548 = vpop.f32.mrf.mxu0
    %v5549 = vpop.f32.mrf.mxu0
    %5550 = vdwg.mxu0
    %5551 = vmatprep.subr.bf16.mxu0 %v3893
    %5552 = vmatpush1.bf16.msra.mxu0 %v3892
    %5553 = vmatprep.subr.bf16.mxu0 %v3885
    %5554 = vmatpush1.bf16.msra.mxu0 %v3884
    %5555 = vmatprep.subr.bf16.mxu0 %v3877
    %5556 = vmatpush1.bf16.msra.mxu0 %v3876
    %5557 = vmatprep.subr.bf16.mxu0 %v3869
    %5558 = vmatpush1.bf16.msra.mxu0 %v3868
    %5559 = vmatprep.subr.bf16.mxu0 %v3861
    %5560 = vmatpush1.bf16.msra.mxu0 %v3860
    %5561 = vmatprep.subr.bf16.mxu0 %v3853
    %5562 = vmatpush1.bf16.msra.mxu0 %v3852
    %5563 = vmatprep.subr.bf16.mxu0 %v3845
    %5564 = vmatpush1.bf16.msra.mxu0 %v3844
    %5565 = vmatprep.subr.bf16.mxu0 %v3837
    %5566 = vmatpush1.bf16.msra.mxu0 %v3836
    %5567 = vmatprep.subr.bf16.mxu0 %v3957
    %5568 = vmatpush2.bf16.msra.mxu0 %v3956
    %5569 = vmatprep.subr.bf16.mxu0 %v3949
    %5570 = vmatpush2.bf16.msra.mxu0 %v3948
    %5571 = vmatprep.subr.bf16.mxu0 %v3941
    %5572 = vmatpush2.bf16.msra.mxu0 %v3940
    %5573 = vmatprep.subr.bf16.mxu0 %v3933
    %5574 = vmatpush2.bf16.msra.mxu0 %v3932
    %5575 = vmatprep.subr.bf16.mxu0 %v3925
    %5576 = vmatpush2.bf16.msra.mxu0 %v3924
    %5577 = vmatprep.subr.bf16.mxu0 %v3917
    %5578 = vmatpush2.bf16.msra.mxu0 %v3916
    %5579 = vmatprep.subr.bf16.mxu0 %v3909
    %5580 = vmatpush2.bf16.msra.mxu0 %v3908
    %5581 = vmatprep.subr.bf16.mxu0 %v3901
    %5582 = vmatpush2.bf16.msra.mxu0 %v3900
    %5583 = vmatprep.mubr.bf16.mxu0 %v967
    %5584 = vmatmul.mubr.bf16.gmra.mxu0 %v966
    %v5585 = vpop.f32.mrf.mxu0
    %v5586 = vadd.f32 %v5545, %v5585
    %v5587 = vpop.f32.mrf.mxu0
    %v5588 = vadd.f32 %v5547, %v5587
    %v5589 = vpop.f32.mrf.mxu0
    %v5590 = vpop.f32.mrf.mxu0
    %5591 = vdwg.mxu0
    %5592 = vmatprep.subr.bf16.mxu0 %v4021
    %5593 = vmatpush1.bf16.msra.mxu0 %v4020
    %5594 = vmatprep.subr.bf16.mxu0 %v4013
    %5595 = vmatpush1.bf16.msra.mxu0 %v4012
    %5596 = vmatprep.subr.bf16.mxu0 %v4005
    %5597 = vmatpush1.bf16.msra.mxu0 %v4004
    %5598 = vmatprep.subr.bf16.mxu0 %v3997
    %5599 = vmatpush1.bf16.msra.mxu0 %v3996
    %5600 = vmatprep.subr.bf16.mxu0 %v3989
    %5601 = vmatpush1.bf16.msra.mxu0 %v3988
    %5602 = vmatprep.subr.bf16.mxu0 %v3981
    %5603 = vmatpush1.bf16.msra.mxu0 %v3980
    %5604 = vmatprep.subr.bf16.mxu0 %v3973
    %5605 = vmatpush1.bf16.msra.mxu0 %v3972
    %5606 = vmatprep.subr.bf16.mxu0 %v3965
    %5607 = vmatpush1.bf16.msra.mxu0 %v3964
    %5608 = vmatprep.subr.bf16.mxu0 %v4085
    %5609 = vmatpush2.bf16.msra.mxu0 %v4084
    %5610 = vmatprep.subr.bf16.mxu0 %v4077
    %5611 = vmatpush2.bf16.msra.mxu0 %v4076
    %5612 = vmatprep.subr.bf16.mxu0 %v4069
    %5613 = vmatpush2.bf16.msra.mxu0 %v4068
    %5614 = vmatprep.subr.bf16.mxu0 %v4061
    %5615 = vmatpush2.bf16.msra.mxu0 %v4060
    %5616 = vmatprep.subr.bf16.mxu0 %v4053
    %5617 = vmatpush2.bf16.msra.mxu0 %v4052
    %5618 = vmatprep.subr.bf16.mxu0 %v4045
    %5619 = vmatpush2.bf16.msra.mxu0 %v4044
    %5620 = vmatprep.subr.bf16.mxu0 %v4037
    %5621 = vmatpush2.bf16.msra.mxu0 %v4036
    %5622 = vmatprep.subr.bf16.mxu0 %v4029
    %5623 = vmatpush2.bf16.msra.mxu0 %v4028
    %5624 = vmatprep.mubr.bf16.mxu0 %v969
    %5625 = vmatmul.mubr.bf16.gmra.mxu0 %v968
    %v5626 = vpop.f32.mrf.mxu0
    %v5627 = vadd.f32 %v5586, %v5626
    %v5628 = vpop.f32.mrf.mxu0
    %v5629 = vadd.f32 %v5588, %v5628
    %v5630 = vpop.f32.mrf.mxu0
    %v5631 = vpop.f32.mrf.mxu0
    %5632 = vdwg.mxu0
    %5633 = vmatprep.subr.bf16.mxu0 %v4149
    %5634 = vmatpush1.bf16.msra.mxu0 %v4148
    %5635 = vmatprep.subr.bf16.mxu0 %v4141
    %5636 = vmatpush1.bf16.msra.mxu0 %v4140
    %5637 = vmatprep.subr.bf16.mxu0 %v4133
    %5638 = vmatpush1.bf16.msra.mxu0 %v4132
    %5639 = vmatprep.subr.bf16.mxu0 %v4125
    %5640 = vmatpush1.bf16.msra.mxu0 %v4124
    %5641 = vmatprep.subr.bf16.mxu0 %v4117
    %5642 = vmatpush1.bf16.msra.mxu0 %v4116
    %5643 = vmatprep.subr.bf16.mxu0 %v4109
    %5644 = vmatpush1.bf16.msra.mxu0 %v4108
    %5645 = vmatprep.subr.bf16.mxu0 %v4101
    %5646 = vmatpush1.bf16.msra.mxu0 %v4100
    %5647 = vmatprep.subr.bf16.mxu0 %v4093
    %5648 = vmatpush1.bf16.msra.mxu0 %v4092
    %5649 = vmatprep.subr.bf16.mxu0 %v4213
    %5650 = vmatpush2.bf16.msra.mxu0 %v4212
    %5651 = vmatprep.subr.bf16.mxu0 %v4205
    %5652 = vmatpush2.bf16.msra.mxu0 %v4204
    %5653 = vmatprep.subr.bf16.mxu0 %v4197
    %5654 = vmatpush2.bf16.msra.mxu0 %v4196
    %5655 = vmatprep.subr.bf16.mxu0 %v4189
    %5656 = vmatpush2.bf16.msra.mxu0 %v4188
    %5657 = vmatprep.subr.bf16.mxu0 %v4181
    %5658 = vmatpush2.bf16.msra.mxu0 %v4180
    %5659 = vmatprep.subr.bf16.mxu0 %v4173
    %5660 = vmatpush2.bf16.msra.mxu0 %v4172
    %5661 = vmatprep.subr.bf16.mxu0 %v4165
    %5662 = vmatpush2.bf16.msra.mxu0 %v4164
    %5663 = vmatprep.subr.bf16.mxu0 %v4157
    %5664 = vmatpush2.bf16.msra.mxu0 %v4156
    %5665 = vmatprep.mubr.bf16.mxu0 %v971
    %5666 = vmatmul.mubr.bf16.gmra.mxu0 %v970
    %v5667 = vpop.f32.mrf.mxu0
    %v5668 = vadd.f32 %v5627, %v5667
    %v5669 = vpop.f32.mrf.mxu0
    %v5670 = vadd.f32 %v5629, %v5669
    %v5671 = vpop.f32.mrf.mxu0
    %v5672 = vpop.f32.mrf.mxu0
    %5673 = vdwg.mxu0
    %v5674 = vmax.f32 %v5053, 0.0
    %v5675 = vmax.f32 %v5055, 0.0
    %v5676 = vmax.f32 %v5258, 0.0
    %v5677 = vmax.f32 %v5260, 0.0
    %v5678 = vmax.f32 %v5463, 0.0
    %v5679 = vmax.f32 %v5465, 0.0
    %v5680 = vmax.f32 %v5668, 0.0
    %v5681 = vmax.f32 %v5670, 0.0
    %v5682 = vpack.c.bf16 %v5674, %v5674
    %v5683 = vpack.c.bf16 %v5675, %v5675
    %v5684 = vpack.c.bf16 %v5676, %v5676
    %v5685 = vpack.c.bf16 %v5677, %v5677
    %v5686 = vpack.c.bf16 %v5678, %v5678
    %v5687 = vpack.c.bf16 %v5679, %v5679
    %v5688 = vpack.c.bf16 %v5680, %v5680
    %v5689 = vpack.c.bf16 %v5681, %v5681
    %v5690 = vld [vmem:[#allocation10] sm:$0xff]
    %v5691 = vld [vmem:[#allocation10 + $0x8] sm:$0xff]
    %v5692 = vld [vmem:[#allocation10 + $0x10] sm:$0xff]
    %v5693 = vld [vmem:[#allocation10 + $0x18] sm:$0xff]
    %v5694 = vld [vmem:[#allocation10 + $0x20] sm:$0xff]
    %v5695 = vld [vmem:[#allocation10 + $0x28] sm:$0xff]
    %v5696 = vld [vmem:[#allocation10 + $0x30] sm:$0xff]
    %v5697 = vld [vmem:[#allocation10 + $0x38] sm:$0xff]
    %v5698 = vld [vmem:[#allocation10 + $0x40] sm:$0xff]
    %v5699 = vld [vmem:[#allocation10 + $0x48] sm:$0xff]
    %v5700 = vld [vmem:[#allocation10 + $0x50] sm:$0xff]
    %v5701 = vld [vmem:[#allocation10 + $0x58] sm:$0xff]
    %v5702 = vld [vmem:[#allocation10 + $0x60] sm:$0xff]
    %v5703 = vld [vmem:[#allocation10 + $0x68] sm:$0xff]
    %v5704 = vld [vmem:[#allocation10 + $0x70] sm:$0xff]
    %v5705 = vld [vmem:[#allocation10 + $0x78] sm:$0xff]
    %v5706 = vld [vmem:[#allocation10 + $0x80] sm:$0xff]
    %v5707 = vld [vmem:[#allocation10 + $0x88] sm:$0xff]
    %v5708 = vld [vmem:[#allocation10 + $0x90] sm:$0xff]
    %v5709 = vld [vmem:[#allocation10 + $0x98] sm:$0xff]
    %v5710 = vld [vmem:[#allocation10 + $0xa0] sm:$0xff]
    %v5711 = vld [vmem:[#allocation10 + $0xa8] sm:$0xff]
    %v5712 = vld [vmem:[#allocation10 + $0xb0] sm:$0xff]
    %v5713 = vld [vmem:[#allocation10 + $0xb8] sm:$0xff]
    %v5714 = vld [vmem:[#allocation10 + $0xc0] sm:$0xff]
    %v5715 = vld [vmem:[#allocation10 + $0xc8] sm:$0xff]
    %v5716 = vld [vmem:[#allocation10 + $0xd0] sm:$0xff]
    %v5717 = vld [vmem:[#allocation10 + $0xd8] sm:$0xff]
    %v5718 = vld [vmem:[#allocation10 + $0xe0] sm:$0xff]
    %v5719 = vld [vmem:[#allocation10 + $0xe8] sm:$0xff]
    %v5720 = vld [vmem:[#allocation10 + $0xf0] sm:$0xff]
    %v5721 = vld [vmem:[#allocation10 + $0xf8] sm:$0xff]
    %v5722 = vld [vmem:[#allocation10 + $0x100] sm:$0xff]
    %v5723 = vld [vmem:[#allocation10 + $0x108] sm:$0xff]
    %v5724 = vld [vmem:[#allocation10 + $0x110] sm:$0xff]
    %v5725 = vld [vmem:[#allocation10 + $0x118] sm:$0xff]
    %v5726 = vld [vmem:[#allocation10 + $0x120] sm:$0xff]
    %v5727 = vld [vmem:[#allocation10 + $0x128] sm:$0xff]
    %v5728 = vld [vmem:[#allocation10 + $0x130] sm:$0xff]
    %v5729 = vld [vmem:[#allocation10 + $0x138] sm:$0xff]
    %v5730 = vld [vmem:[#allocation10 + $0x140] sm:$0xff]
    %v5731 = vld [vmem:[#allocation10 + $0x148] sm:$0xff]
    %v5732 = vld [vmem:[#allocation10 + $0x150] sm:$0xff]
    %v5733 = vld [vmem:[#allocation10 + $0x158] sm:$0xff]
    %v5734 = vld [vmem:[#allocation10 + $0x160] sm:$0xff]
    %v5735 = vld [vmem:[#allocation10 + $0x168] sm:$0xff]
    %v5736 = vld [vmem:[#allocation10 + $0x170] sm:$0xff]
    %v5737 = vld [vmem:[#allocation10 + $0x178] sm:$0xff]
    %v5738 = vld [vmem:[#allocation10 + $0x180] sm:$0xff]
    %v5739 = vld [vmem:[#allocation10 + $0x188] sm:$0xff]
    %v5740 = vld [vmem:[#allocation10 + $0x190] sm:$0xff]
    %v5741 = vld [vmem:[#allocation10 + $0x198] sm:$0xff]
    %v5742 = vld [vmem:[#allocation10 + $0x1a0] sm:$0xff]
    %v5743 = vld [vmem:[#allocation10 + $0x1a8] sm:$0xff]
    %v5744 = vld [vmem:[#allocation10 + $0x1b0] sm:$0xff]
    %v5745 = vld [vmem:[#allocation10 + $0x1b8] sm:$0xff]
    %v5746 = vld [vmem:[#allocation10 + $0x1c0] sm:$0xff]
    %v5747 = vld [vmem:[#allocation10 + $0x1c8] sm:$0xff]
    %v5748 = vld [vmem:[#allocation10 + $0x1d0] sm:$0xff]
    %v5749 = vld [vmem:[#allocation10 + $0x1d8] sm:$0xff]
    %v5750 = vld [vmem:[#allocation10 + $0x1e0] sm:$0xff]
    %v5751 = vld [vmem:[#allocation10 + $0x1e8] sm:$0xff]
    %v5752 = vld [vmem:[#allocation10 + $0x1f0] sm:$0xff]
    %v5753 = vld [vmem:[#allocation10 + $0x1f8] sm:$0xff]
    %v5754 = vld [vmem:[#allocation10 + $0x200] sm:$0xff]
    %v5755 = vld [vmem:[#allocation10 + $0x208] sm:$0xff]
    %v5756 = vld [vmem:[#allocation10 + $0x210] sm:$0xff]
    %v5757 = vld [vmem:[#allocation10 + $0x218] sm:$0xff]
    %v5758 = vld [vmem:[#allocation10 + $0x220] sm:$0xff]
    %v5759 = vld [vmem:[#allocation10 + $0x228] sm:$0xff]
    %v5760 = vld [vmem:[#allocation10 + $0x230] sm:$0xff]
    %v5761 = vld [vmem:[#allocation10 + $0x238] sm:$0xff]
    %v5762 = vld [vmem:[#allocation10 + $0x240] sm:$0xff]
    %v5763 = vld [vmem:[#allocation10 + $0x248] sm:$0xff]
    %v5764 = vld [vmem:[#allocation10 + $0x250] sm:$0xff]
    %v5765 = vld [vmem:[#allocation10 + $0x258] sm:$0xff]
    %v5766 = vld [vmem:[#allocation10 + $0x260] sm:$0xff]
    %v5767 = vld [vmem:[#allocation10 + $0x268] sm:$0xff]
    %v5768 = vld [vmem:[#allocation10 + $0x270] sm:$0xff]
    %v5769 = vld [vmem:[#allocation10 + $0x278] sm:$0xff]
    %v5770 = vld [vmem:[#allocation10 + $0x280] sm:$0xff]
    %v5771 = vld [vmem:[#allocation10 + $0x288] sm:$0xff]
    %v5772 = vld [vmem:[#allocation10 + $0x290] sm:$0xff]
    %v5773 = vld [vmem:[#allocation10 + $0x298] sm:$0xff]
    %v5774 = vld [vmem:[#allocation10 + $0x2a0] sm:$0xff]
    %v5775 = vld [vmem:[#allocation10 + $0x2a8] sm:$0xff]
    %v5776 = vld [vmem:[#allocation10 + $0x2b0] sm:$0xff]
    %v5777 = vld [vmem:[#allocation10 + $0x2b8] sm:$0xff]
    %v5778 = vld [vmem:[#allocation10 + $0x2c0] sm:$0xff]
    %v5779 = vld [vmem:[#allocation10 + $0x2c8] sm:$0xff]
    %v5780 = vld [vmem:[#allocation10 + $0x2d0] sm:$0xff]
    %v5781 = vld [vmem:[#allocation10 + $0x2d8] sm:$0xff]
    %v5782 = vld [vmem:[#allocation10 + $0x2e0] sm:$0xff]
    %v5783 = vld [vmem:[#allocation10 + $0x2e8] sm:$0xff]
    %v5784 = vld [vmem:[#allocation10 + $0x2f0] sm:$0xff]
    %v5785 = vld [vmem:[#allocation10 + $0x2f8] sm:$0xff]
    %v5786 = vld [vmem:[#allocation10 + $0x300] sm:$0xff]
    %v5787 = vld [vmem:[#allocation10 + $0x308] sm:$0xff]
    %v5788 = vld [vmem:[#allocation10 + $0x310] sm:$0xff]
    %v5789 = vld [vmem:[#allocation10 + $0x318] sm:$0xff]
    %v5790 = vld [vmem:[#allocation10 + $0x320] sm:$0xff]
    %v5791 = vld [vmem:[#allocation10 + $0x328] sm:$0xff]
    %v5792 = vld [vmem:[#allocation10 + $0x330] sm:$0xff]
    %v5793 = vld [vmem:[#allocation10 + $0x338] sm:$0xff]
    %v5794 = vld [vmem:[#allocation10 + $0x340] sm:$0xff]
    %v5795 = vld [vmem:[#allocation10 + $0x348] sm:$0xff]
    %v5796 = vld [vmem:[#allocation10 + $0x350] sm:$0xff]
    %v5797 = vld [vmem:[#allocation10 + $0x358] sm:$0xff]
    %v5798 = vld [vmem:[#allocation10 + $0x360] sm:$0xff]
    %v5799 = vld [vmem:[#allocation10 + $0x368] sm:$0xff]
    %v5800 = vld [vmem:[#allocation10 + $0x370] sm:$0xff]
    %v5801 = vld [vmem:[#allocation10 + $0x378] sm:$0xff]
    %v5802 = vld [vmem:[#allocation10 + $0x380] sm:$0xff]
    %v5803 = vld [vmem:[#allocation10 + $0x388] sm:$0xff]
    %v5804 = vld [vmem:[#allocation10 + $0x390] sm:$0xff]
    %v5805 = vld [vmem:[#allocation10 + $0x398] sm:$0xff]
    %v5806 = vld [vmem:[#allocation10 + $0x3a0] sm:$0xff]
    %v5807 = vld [vmem:[#allocation10 + $0x3a8] sm:$0xff]
    %v5808 = vld [vmem:[#allocation10 + $0x3b0] sm:$0xff]
    %v5809 = vld [vmem:[#allocation10 + $0x3b8] sm:$0xff]
    %v5810 = vld [vmem:[#allocation10 + $0x3c0] sm:$0xff]
    %v5811 = vld [vmem:[#allocation10 + $0x3c8] sm:$0xff]
    %v5812 = vld [vmem:[#allocation10 + $0x3d0] sm:$0xff]
    %v5813 = vld [vmem:[#allocation10 + $0x3d8] sm:$0xff]
    %v5814 = vld [vmem:[#allocation10 + $0x3e0] sm:$0xff]
    %v5815 = vld [vmem:[#allocation10 + $0x3e8] sm:$0xff]
    %v5816 = vld [vmem:[#allocation10 + $0x3f0] sm:$0xff]
    %v5817 = vld [vmem:[#allocation10 + $0x3f8] sm:$0xff]
    %v5818 = vld [vmem:[#allocation10 + $0x400] sm:$0xff]
    %v5819 = vld [vmem:[#allocation10 + $0x408] sm:$0xff]
    %v5820 = vld [vmem:[#allocation10 + $0x410] sm:$0xff]
    %v5821 = vld [vmem:[#allocation10 + $0x418] sm:$0xff]
    %v5822 = vld [vmem:[#allocation10 + $0x420] sm:$0xff]
    %v5823 = vld [vmem:[#allocation10 + $0x428] sm:$0xff]
    %v5824 = vld [vmem:[#allocation10 + $0x430] sm:$0xff]
    %v5825 = vld [vmem:[#allocation10 + $0x438] sm:$0xff]
    %v5826 = vld [vmem:[#allocation10 + $0x440] sm:$0xff]
    %v5827 = vld [vmem:[#allocation10 + $0x448] sm:$0xff]
    %v5828 = vld [vmem:[#allocation10 + $0x450] sm:$0xff]
    %v5829 = vld [vmem:[#allocation10 + $0x458] sm:$0xff]
    %v5830 = vld [vmem:[#allocation10 + $0x460] sm:$0xff]
    %v5831 = vld [vmem:[#allocation10 + $0x468] sm:$0xff]
    %v5832 = vld [vmem:[#allocation10 + $0x470] sm:$0xff]
    %v5833 = vld [vmem:[#allocation10 + $0x478] sm:$0xff]
    %v5834 = vld [vmem:[#allocation10 + $0x480] sm:$0xff]
    %v5835 = vld [vmem:[#allocation10 + $0x488] sm:$0xff]
    %v5836 = vld [vmem:[#allocation10 + $0x490] sm:$0xff]
    %v5837 = vld [vmem:[#allocation10 + $0x498] sm:$0xff]
    %v5838 = vld [vmem:[#allocation10 + $0x4a0] sm:$0xff]
    %v5839 = vld [vmem:[#allocation10 + $0x4a8] sm:$0xff]
    %v5840 = vld [vmem:[#allocation10 + $0x4b0] sm:$0xff]
    %v5841 = vld [vmem:[#allocation10 + $0x4b8] sm:$0xff]
    %v5842 = vld [vmem:[#allocation10 + $0x4c0] sm:$0xff]
    %v5843 = vld [vmem:[#allocation10 + $0x4c8] sm:$0xff]
    %v5844 = vld [vmem:[#allocation10 + $0x4d0] sm:$0xff]
    %v5845 = vld [vmem:[#allocation10 + $0x4d8] sm:$0xff]
    %v5846 = vld [vmem:[#allocation10 + $0x4e0] sm:$0xff]
    %v5847 = vld [vmem:[#allocation10 + $0x4e8] sm:$0xff]
    %v5848 = vld [vmem:[#allocation10 + $0x4f0] sm:$0xff]
    %v5849 = vld [vmem:[#allocation10 + $0x4f8] sm:$0xff]
    %v5850 = vld [vmem:[#allocation10 + $0x500] sm:$0xff]
    %v5851 = vld [vmem:[#allocation10 + $0x508] sm:$0xff]
    %v5852 = vld [vmem:[#allocation10 + $0x510] sm:$0xff]
    %v5853 = vld [vmem:[#allocation10 + $0x518] sm:$0xff]
    %v5854 = vld [vmem:[#allocation10 + $0x520] sm:$0xff]
    %v5855 = vld [vmem:[#allocation10 + $0x528] sm:$0xff]
    %v5856 = vld [vmem:[#allocation10 + $0x530] sm:$0xff]
    %v5857 = vld [vmem:[#allocation10 + $0x538] sm:$0xff]
    %v5858 = vld [vmem:[#allocation10 + $0x540] sm:$0xff]
    %v5859 = vld [vmem:[#allocation10 + $0x548] sm:$0xff]
    %v5860 = vld [vmem:[#allocation10 + $0x550] sm:$0xff]
    %v5861 = vld [vmem:[#allocation10 + $0x558] sm:$0xff]
    %v5862 = vld [vmem:[#allocation10 + $0x560] sm:$0xff]
    %v5863 = vld [vmem:[#allocation10 + $0x568] sm:$0xff]
    %v5864 = vld [vmem:[#allocation10 + $0x570] sm:$0xff]
    %v5865 = vld [vmem:[#allocation10 + $0x578] sm:$0xff]
    %v5866 = vld [vmem:[#allocation10 + $0x580] sm:$0xff]
    %v5867 = vld [vmem:[#allocation10 + $0x588] sm:$0xff]
    %v5868 = vld [vmem:[#allocation10 + $0x590] sm:$0xff]
    %v5869 = vld [vmem:[#allocation10 + $0x598] sm:$0xff]
    %v5870 = vld [vmem:[#allocation10 + $0x5a0] sm:$0xff]
    %v5871 = vld [vmem:[#allocation10 + $0x5a8] sm:$0xff]
    %v5872 = vld [vmem:[#allocation10 + $0x5b0] sm:$0xff]
    %v5873 = vld [vmem:[#allocation10 + $0x5b8] sm:$0xff]
    %v5874 = vld [vmem:[#allocation10 + $0x5c0] sm:$0xff]
    %v5875 = vld [vmem:[#allocation10 + $0x5c8] sm:$0xff]
    %v5876 = vld [vmem:[#allocation10 + $0x5d0] sm:$0xff]
    %v5877 = vld [vmem:[#allocation10 + $0x5d8] sm:$0xff]
    %v5878 = vld [vmem:[#allocation10 + $0x5e0] sm:$0xff]
    %v5879 = vld [vmem:[#allocation10 + $0x5e8] sm:$0xff]
    %v5880 = vld [vmem:[#allocation10 + $0x5f0] sm:$0xff]
    %v5881 = vld [vmem:[#allocation10 + $0x5f8] sm:$0xff]
    %v5882 = vld [vmem:[#allocation10 + $0x600] sm:$0xff]
    %v5883 = vld [vmem:[#allocation10 + $0x608] sm:$0xff]
    %v5884 = vld [vmem:[#allocation10 + $0x610] sm:$0xff]
    %v5885 = vld [vmem:[#allocation10 + $0x618] sm:$0xff]
    %v5886 = vld [vmem:[#allocation10 + $0x620] sm:$0xff]
    %v5887 = vld [vmem:[#allocation10 + $0x628] sm:$0xff]
    %v5888 = vld [vmem:[#allocation10 + $0x630] sm:$0xff]
    %v5889 = vld [vmem:[#allocation10 + $0x638] sm:$0xff]
    %v5890 = vld [vmem:[#allocation10 + $0x640] sm:$0xff]
    %v5891 = vld [vmem:[#allocation10 + $0x648] sm:$0xff]
    %v5892 = vld [vmem:[#allocation10 + $0x650] sm:$0xff]
    %v5893 = vld [vmem:[#allocation10 + $0x658] sm:$0xff]
    %v5894 = vld [vmem:[#allocation10 + $0x660] sm:$0xff]
    %v5895 = vld [vmem:[#allocation10 + $0x668] sm:$0xff]
    %v5896 = vld [vmem:[#allocation10 + $0x670] sm:$0xff]
    %v5897 = vld [vmem:[#allocation10 + $0x678] sm:$0xff]
    %v5898 = vld [vmem:[#allocation10 + $0x680] sm:$0xff]
    %v5899 = vld [vmem:[#allocation10 + $0x688] sm:$0xff]
    %v5900 = vld [vmem:[#allocation10 + $0x690] sm:$0xff]
    %v5901 = vld [vmem:[#allocation10 + $0x698] sm:$0xff]
    %v5902 = vld [vmem:[#allocation10 + $0x6a0] sm:$0xff]
    %v5903 = vld [vmem:[#allocation10 + $0x6a8] sm:$0xff]
    %v5904 = vld [vmem:[#allocation10 + $0x6b0] sm:$0xff]
    %v5905 = vld [vmem:[#allocation10 + $0x6b8] sm:$0xff]
    %v5906 = vld [vmem:[#allocation10 + $0x6c0] sm:$0xff]
    %v5907 = vld [vmem:[#allocation10 + $0x6c8] sm:$0xff]
    %v5908 = vld [vmem:[#allocation10 + $0x6d0] sm:$0xff]
    %v5909 = vld [vmem:[#allocation10 + $0x6d8] sm:$0xff]
    %v5910 = vld [vmem:[#allocation10 + $0x6e0] sm:$0xff]
    %v5911 = vld [vmem:[#allocation10 + $0x6e8] sm:$0xff]
    %v5912 = vld [vmem:[#allocation10 + $0x6f0] sm:$0xff]
    %v5913 = vld [vmem:[#allocation10 + $0x6f8] sm:$0xff]
    %v5914 = vld [vmem:[#allocation10 + $0x700] sm:$0xff]
    %v5915 = vld [vmem:[#allocation10 + $0x708] sm:$0xff]
    %v5916 = vld [vmem:[#allocation10 + $0x710] sm:$0xff]
    %v5917 = vld [vmem:[#allocation10 + $0x718] sm:$0xff]
    %v5918 = vld [vmem:[#allocation10 + $0x720] sm:$0xff]
    %v5919 = vld [vmem:[#allocation10 + $0x728] sm:$0xff]
    %v5920 = vld [vmem:[#allocation10 + $0x730] sm:$0xff]
    %v5921 = vld [vmem:[#allocation10 + $0x738] sm:$0xff]
    %v5922 = vld [vmem:[#allocation10 + $0x740] sm:$0xff]
    %v5923 = vld [vmem:[#allocation10 + $0x748] sm:$0xff]
    %v5924 = vld [vmem:[#allocation10 + $0x750] sm:$0xff]
    %v5925 = vld [vmem:[#allocation10 + $0x758] sm:$0xff]
    %v5926 = vld [vmem:[#allocation10 + $0x760] sm:$0xff]
    %v5927 = vld [vmem:[#allocation10 + $0x768] sm:$0xff]
    %v5928 = vld [vmem:[#allocation10 + $0x770] sm:$0xff]
    %v5929 = vld [vmem:[#allocation10 + $0x778] sm:$0xff]
    %v5930 = vld [vmem:[#allocation10 + $0x780] sm:$0xff]
    %v5931 = vld [vmem:[#allocation10 + $0x788] sm:$0xff]
    %v5932 = vld [vmem:[#allocation10 + $0x790] sm:$0xff]
    %v5933 = vld [vmem:[#allocation10 + $0x798] sm:$0xff]
    %v5934 = vld [vmem:[#allocation10 + $0x7a0] sm:$0xff]
    %v5935 = vld [vmem:[#allocation10 + $0x7a8] sm:$0xff]
    %v5936 = vld [vmem:[#allocation10 + $0x7b0] sm:$0xff]
    %v5937 = vld [vmem:[#allocation10 + $0x7b8] sm:$0xff]
    %v5938 = vld [vmem:[#allocation10 + $0x7c0] sm:$0xff]
    %v5939 = vld [vmem:[#allocation10 + $0x7c8] sm:$0xff]
    %v5940 = vld [vmem:[#allocation10 + $0x7d0] sm:$0xff]
    %v5941 = vld [vmem:[#allocation10 + $0x7d8] sm:$0xff]
    %v5942 = vld [vmem:[#allocation10 + $0x7e0] sm:$0xff]
    %v5943 = vld [vmem:[#allocation10 + $0x7e8] sm:$0xff]
    %v5944 = vld [vmem:[#allocation10 + $0x7f0] sm:$0xff]
    %v5945 = vld [vmem:[#allocation10 + $0x7f8] sm:$0xff]
    %v5946 = vld [vmem:[#allocation11] sm:$0xf]
    %v5948 = vlaneseq
    %v5949 = vshrl.u32 %v5948, 7
    %v5950 = vsub.s32 0, %v5949
    %v5951 = vrot.slane %v5946, %v5950
    %v5952 = vlaneseq
    %v5953 = vshrl.u32 %v5952, 7
    %v5954 = vsub.s32 1, %v5953
    %v5955 = vrot.slane %v5946, %v5954
    %v5956 = vlaneseq
    %v5957 = vshrl.u32 %v5956, 7
    %v5958 = vsub.s32 2, %v5957
    %v5959 = vrot.slane %v5946, %v5958
    %v5960 = vlaneseq
    %v5961 = vshrl.u32 %v5960, 7
    %v5962 = vsub.s32 3, %v5961
    %v5963 = vrot.slane %v5946, %v5962
    %v6224 = vunpack.c.l.b16 %v5690
    %v6225 = vunpack.c.h.b16 %v5690
    %v6226 = vunpack.c.l.b16 %v5691
    %v6227 = vunpack.c.h.b16 %v5691
    %v6228 = vunpack.c.l.b16 %v5692
    %v6229 = vunpack.c.h.b16 %v5692
    %v6230 = vunpack.c.l.b16 %v5693
    %v6231 = vunpack.c.h.b16 %v5693
    %v6232 = vunpack.c.l.b16 %v5694
    %v6233 = vunpack.c.h.b16 %v5694
    %v6234 = vunpack.c.l.b16 %v5695
    %v6235 = vunpack.c.h.b16 %v5695
    %v6236 = vunpack.c.l.b16 %v5696
    %v6237 = vunpack.c.h.b16 %v5696
    %v6238 = vunpack.c.l.b16 %v5697
    %v6239 = vunpack.c.h.b16 %v5697
    %v6240 = vunpack.c.l.b16 %v5698
    %v6241 = vunpack.c.h.b16 %v5698
    %v6242 = vunpack.c.l.b16 %v5699
    %v6243 = vunpack.c.h.b16 %v5699
    %v6244 = vunpack.c.l.b16 %v5700
    %v6245 = vunpack.c.h.b16 %v5700
    %v6246 = vunpack.c.l.b16 %v5701
    %v6247 = vunpack.c.h.b16 %v5701
    %v6248 = vunpack.c.l.b16 %v5702
    %v6249 = vunpack.c.h.b16 %v5702
    %v6250 = vunpack.c.l.b16 %v5703
    %v6251 = vunpack.c.h.b16 %v5703
    %v6252 = vunpack.c.l.b16 %v5704
    %v6253 = vunpack.c.h.b16 %v5704
    %v6254 = vunpack.c.l.b16 %v5705
    %v6255 = vunpack.c.h.b16 %v5705
    %v6256 = vunpack.c.l.b16 %v5706
    %v6257 = vunpack.c.h.b16 %v5706
    %v6258 = vunpack.c.l.b16 %v5707
    %v6259 = vunpack.c.h.b16 %v5707
    %v6260 = vunpack.c.l.b16 %v5708
    %v6261 = vunpack.c.h.b16 %v5708
    %v6262 = vunpack.c.l.b16 %v5709
    %v6263 = vunpack.c.h.b16 %v5709
    %v6264 = vunpack.c.l.b16 %v5710
    %v6265 = vunpack.c.h.b16 %v5710
    %v6266 = vunpack.c.l.b16 %v5711
    %v6267 = vunpack.c.h.b16 %v5711
    %v6268 = vunpack.c.l.b16 %v5712
    %v6269 = vunpack.c.h.b16 %v5712
    %v6270 = vunpack.c.l.b16 %v5713
    %v6271 = vunpack.c.h.b16 %v5713
    %v6272 = vunpack.c.l.b16 %v5714
    %v6273 = vunpack.c.h.b16 %v5714
    %v6274 = vunpack.c.l.b16 %v5715
    %v6275 = vunpack.c.h.b16 %v5715
    %v6276 = vunpack.c.l.b16 %v5716
    %v6277 = vunpack.c.h.b16 %v5716
    %v6278 = vunpack.c.l.b16 %v5717
    %v6279 = vunpack.c.h.b16 %v5717
    %v6280 = vunpack.c.l.b16 %v5718
    %v6281 = vunpack.c.h.b16 %v5718
    %v6282 = vunpack.c.l.b16 %v5719
    %v6283 = vunpack.c.h.b16 %v5719
    %v6284 = vunpack.c.l.b16 %v5720
    %v6285 = vunpack.c.h.b16 %v5720
    %v6286 = vunpack.c.l.b16 %v5721
    %v6287 = vunpack.c.h.b16 %v5721
    %v6288 = vunpack.c.l.b16 %v5722
    %v6289 = vunpack.c.h.b16 %v5722
    %v6290 = vunpack.c.l.b16 %v5723
    %v6291 = vunpack.c.h.b16 %v5723
    %v6292 = vunpack.c.l.b16 %v5724
    %v6293 = vunpack.c.h.b16 %v5724
    %v6294 = vunpack.c.l.b16 %v5725
    %v6295 = vunpack.c.h.b16 %v5725
    %v6296 = vunpack.c.l.b16 %v5726
    %v6297 = vunpack.c.h.b16 %v5726
    %v6298 = vunpack.c.l.b16 %v5727
    %v6299 = vunpack.c.h.b16 %v5727
    %v6300 = vunpack.c.l.b16 %v5728
    %v6301 = vunpack.c.h.b16 %v5728
    %v6302 = vunpack.c.l.b16 %v5729
    %v6303 = vunpack.c.h.b16 %v5729
    %v6304 = vunpack.c.l.b16 %v5730
    %v6305 = vunpack.c.h.b16 %v5730
    %v6306 = vunpack.c.l.b16 %v5731
    %v6307 = vunpack.c.h.b16 %v5731
    %v6308 = vunpack.c.l.b16 %v5732
    %v6309 = vunpack.c.h.b16 %v5732
    %v6310 = vunpack.c.l.b16 %v5733
    %v6311 = vunpack.c.h.b16 %v5733
    %v6312 = vunpack.c.l.b16 %v5734
    %v6313 = vunpack.c.h.b16 %v5734
    %v6314 = vunpack.c.l.b16 %v5735
    %v6315 = vunpack.c.h.b16 %v5735
    %v6316 = vunpack.c.l.b16 %v5736
    %v6317 = vunpack.c.h.b16 %v5736
    %v6318 = vunpack.c.l.b16 %v5737
    %v6319 = vunpack.c.h.b16 %v5737
    %v6320 = vunpack.c.l.b16 %v5738
    %v6321 = vunpack.c.h.b16 %v5738
    %v6322 = vunpack.c.l.b16 %v5739
    %v6323 = vunpack.c.h.b16 %v5739
    %v6324 = vunpack.c.l.b16 %v5740
    %v6325 = vunpack.c.h.b16 %v5740
    %v6326 = vunpack.c.l.b16 %v5741
    %v6327 = vunpack.c.h.b16 %v5741
    %v6328 = vunpack.c.l.b16 %v5742
    %v6329 = vunpack.c.h.b16 %v5742
    %v6330 = vunpack.c.l.b16 %v5743
    %v6331 = vunpack.c.h.b16 %v5743
    %v6332 = vunpack.c.l.b16 %v5744
    %v6333 = vunpack.c.h.b16 %v5744
    %v6334 = vunpack.c.l.b16 %v5745
    %v6335 = vunpack.c.h.b16 %v5745
    %v6336 = vunpack.c.l.b16 %v5746
    %v6337 = vunpack.c.h.b16 %v5746
    %v6338 = vunpack.c.l.b16 %v5747
    %v6339 = vunpack.c.h.b16 %v5747
    %v6340 = vunpack.c.l.b16 %v5748
    %v6341 = vunpack.c.h.b16 %v5748
    %v6342 = vunpack.c.l.b16 %v5749
    %v6343 = vunpack.c.h.b16 %v5749
    %v6344 = vunpack.c.l.b16 %v5750
    %v6345 = vunpack.c.h.b16 %v5750
    %v6346 = vunpack.c.l.b16 %v5751
    %v6347 = vunpack.c.h.b16 %v5751
    %v6348 = vunpack.c.l.b16 %v5752
    %v6349 = vunpack.c.h.b16 %v5752
    %v6350 = vunpack.c.l.b16 %v5753
    %v6351 = vunpack.c.h.b16 %v5753
    %v6352 = vunpack.c.l.b16 %v5754
    %v6353 = vunpack.c.h.b16 %v5754
    %v6354 = vunpack.c.l.b16 %v5755
    %v6355 = vunpack.c.h.b16 %v5755
    %v6356 = vunpack.c.l.b16 %v5756
    %v6357 = vunpack.c.h.b16 %v5756
    %v6358 = vunpack.c.l.b16 %v5757
    %v6359 = vunpack.c.h.b16 %v5757
    %v6360 = vunpack.c.l.b16 %v5758
    %v6361 = vunpack.c.h.b16 %v5758
    %v6362 = vunpack.c.l.b16 %v5759
    %v6363 = vunpack.c.h.b16 %v5759
    %v6364 = vunpack.c.l.b16 %v5760
    %v6365 = vunpack.c.h.b16 %v5760
    %v6366 = vunpack.c.l.b16 %v5761
    %v6367 = vunpack.c.h.b16 %v5761
    %v6368 = vunpack.c.l.b16 %v5762
    %v6369 = vunpack.c.h.b16 %v5762
    %v6370 = vunpack.c.l.b16 %v5763
    %v6371 = vunpack.c.h.b16 %v5763
    %v6372 = vunpack.c.l.b16 %v5764
    %v6373 = vunpack.c.h.b16 %v5764
    %v6374 = vunpack.c.l.b16 %v5765
    %v6375 = vunpack.c.h.b16 %v5765
    %v6376 = vunpack.c.l.b16 %v5766
    %v6377 = vunpack.c.h.b16 %v5766
    %v6378 = vunpack.c.l.b16 %v5767
    %v6379 = vunpack.c.h.b16 %v5767
    %v6380 = vunpack.c.l.b16 %v5768
    %v6381 = vunpack.c.h.b16 %v5768
    %v6382 = vunpack.c.l.b16 %v5769
    %v6383 = vunpack.c.h.b16 %v5769
    %v6384 = vunpack.c.l.b16 %v5770
    %v6385 = vunpack.c.h.b16 %v5770
    %v6386 = vunpack.c.l.b16 %v5771
    %v6387 = vunpack.c.h.b16 %v5771
    %v6388 = vunpack.c.l.b16 %v5772
    %v6389 = vunpack.c.h.b16 %v5772
    %v6390 = vunpack.c.l.b16 %v5773
    %v6391 = vunpack.c.h.b16 %v5773
    %v6392 = vunpack.c.l.b16 %v5774
    %v6393 = vunpack.c.h.b16 %v5774
    %v6394 = vunpack.c.l.b16 %v5775
    %v6395 = vunpack.c.h.b16 %v5775
    %v6396 = vunpack.c.l.b16 %v5776
    %v6397 = vunpack.c.h.b16 %v5776
    %v6398 = vunpack.c.l.b16 %v5777
    %v6399 = vunpack.c.h.b16 %v5777
    %v6400 = vunpack.c.l.b16 %v5778
    %v6401 = vunpack.c.h.b16 %v5778
    %v6402 = vunpack.c.l.b16 %v5779
    %v6403 = vunpack.c.h.b16 %v5779
    %v6404 = vunpack.c.l.b16 %v5780
    %v6405 = vunpack.c.h.b16 %v5780
    %v6406 = vunpack.c.l.b16 %v5781
    %v6407 = vunpack.c.h.b16 %v5781
    %v6408 = vunpack.c.l.b16 %v5782
    %v6409 = vunpack.c.h.b16 %v5782
    %v6410 = vunpack.c.l.b16 %v5783
    %v6411 = vunpack.c.h.b16 %v5783
    %v6412 = vunpack.c.l.b16 %v5784
    %v6413 = vunpack.c.h.b16 %v5784
    %v6414 = vunpack.c.l.b16 %v5785
    %v6415 = vunpack.c.h.b16 %v5785
    %v6416 = vunpack.c.l.b16 %v5786
    %v6417 = vunpack.c.h.b16 %v5786
    %v6418 = vunpack.c.l.b16 %v5787
    %v6419 = vunpack.c.h.b16 %v5787
    %v6420 = vunpack.c.l.b16 %v5788
    %v6421 = vunpack.c.h.b16 %v5788
    %v6422 = vunpack.c.l.b16 %v5789
    %v6423 = vunpack.c.h.b16 %v5789
    %v6424 = vunpack.c.l.b16 %v5790
    %v6425 = vunpack.c.h.b16 %v5790
    %v6426 = vunpack.c.l.b16 %v5791
    %v6427 = vunpack.c.h.b16 %v5791
    %v6428 = vunpack.c.l.b16 %v5792
    %v6429 = vunpack.c.h.b16 %v5792
    %v6430 = vunpack.c.l.b16 %v5793
    %v6431 = vunpack.c.h.b16 %v5793
    %v6432 = vunpack.c.l.b16 %v5794
    %v6433 = vunpack.c.h.b16 %v5794
    %v6434 = vunpack.c.l.b16 %v5795
    %v6435 = vunpack.c.h.b16 %v5795
    %v6436 = vunpack.c.l.b16 %v5796
    %v6437 = vunpack.c.h.b16 %v5796
    %v6438 = vunpack.c.l.b16 %v5797
    %v6439 = vunpack.c.h.b16 %v5797
    %v6440 = vunpack.c.l.b16 %v5798
    %v6441 = vunpack.c.h.b16 %v5798
    %v6442 = vunpack.c.l.b16 %v5799
    %v6443 = vunpack.c.h.b16 %v5799
    %v6444 = vunpack.c.l.b16 %v5800
    %v6445 = vunpack.c.h.b16 %v5800
    %v6446 = vunpack.c.l.b16 %v5801
    %v6447 = vunpack.c.h.b16 %v5801
    %v6448 = vunpack.c.l.b16 %v5802
    %v6449 = vunpack.c.h.b16 %v5802
    %v6450 = vunpack.c.l.b16 %v5803
    %v6451 = vunpack.c.h.b16 %v5803
    %v6452 = vunpack.c.l.b16 %v5804
    %v6453 = vunpack.c.h.b16 %v5804
    %v6454 = vunpack.c.l.b16 %v5805
    %v6455 = vunpack.c.h.b16 %v5805
    %v6456 = vunpack.c.l.b16 %v5806
    %v6457 = vunpack.c.h.b16 %v5806
    %v6458 = vunpack.c.l.b16 %v5807
    %v6459 = vunpack.c.h.b16 %v5807
    %v6460 = vunpack.c.l.b16 %v5808
    %v6461 = vunpack.c.h.b16 %v5808
    %v6462 = vunpack.c.l.b16 %v5809
    %v6463 = vunpack.c.h.b16 %v5809
    %v6464 = vunpack.c.l.b16 %v5810
    %v6465 = vunpack.c.h.b16 %v5810
    %v6466 = vunpack.c.l.b16 %v5811
    %v6467 = vunpack.c.h.b16 %v5811
    %v6468 = vunpack.c.l.b16 %v5812
    %v6469 = vunpack.c.h.b16 %v5812
    %v6470 = vunpack.c.l.b16 %v5813
    %v6471 = vunpack.c.h.b16 %v5813
    %v6472 = vunpack.c.l.b16 %v5814
    %v6473 = vunpack.c.h.b16 %v5814
    %v6474 = vunpack.c.l.b16 %v5815
    %v6475 = vunpack.c.h.b16 %v5815
    %v6476 = vunpack.c.l.b16 %v5816
    %v6477 = vunpack.c.h.b16 %v5816
    %v6478 = vunpack.c.l.b16 %v5817
    %v6479 = vunpack.c.h.b16 %v5817
    %v6480 = vunpack.c.l.b16 %v5818
    %v6481 = vunpack.c.h.b16 %v5818
    %v6482 = vunpack.c.l.b16 %v5819
    %v6483 = vunpack.c.h.b16 %v5819
    %v6484 = vunpack.c.l.b16 %v5820
    %v6485 = vunpack.c.h.b16 %v5820
    %v6486 = vunpack.c.l.b16 %v5821
    %v6487 = vunpack.c.h.b16 %v5821
    %v6488 = vunpack.c.l.b16 %v5822
    %v6489 = vunpack.c.h.b16 %v5822
    %v6490 = vunpack.c.l.b16 %v5823
    %v6491 = vunpack.c.h.b16 %v5823
    %v6492 = vunpack.c.l.b16 %v5824
    %v6493 = vunpack.c.h.b16 %v5824
    %v6494 = vunpack.c.l.b16 %v5825
    %v6495 = vunpack.c.h.b16 %v5825
    %v6496 = vunpack.c.l.b16 %v5826
    %v6497 = vunpack.c.h.b16 %v5826
    %v6498 = vunpack.c.l.b16 %v5827
    %v6499 = vunpack.c.h.b16 %v5827
    %v6500 = vunpack.c.l.b16 %v5828
    %v6501 = vunpack.c.h.b16 %v5828
    %v6502 = vunpack.c.l.b16 %v5829
    %v6503 = vunpack.c.h.b16 %v5829
    %v6504 = vunpack.c.l.b16 %v5830
    %v6505 = vunpack.c.h.b16 %v5830
    %v6506 = vunpack.c.l.b16 %v5831
    %v6507 = vunpack.c.h.b16 %v5831
    %v6508 = vunpack.c.l.b16 %v5832
    %v6509 = vunpack.c.h.b16 %v5832
    %v6510 = vunpack.c.l.b16 %v5833
    %v6511 = vunpack.c.h.b16 %v5833
    %v6512 = vunpack.c.l.b16 %v5834
    %v6513 = vunpack.c.h.b16 %v5834
    %v6514 = vunpack.c.l.b16 %v5835
    %v6515 = vunpack.c.h.b16 %v5835
    %v6516 = vunpack.c.l.b16 %v5836
    %v6517 = vunpack.c.h.b16 %v5836
    %v6518 = vunpack.c.l.b16 %v5837
    %v6519 = vunpack.c.h.b16 %v5837
    %v6520 = vunpack.c.l.b16 %v5838
    %v6521 = vunpack.c.h.b16 %v5838
    %v6522 = vunpack.c.l.b16 %v5839
    %v6523 = vunpack.c.h.b16 %v5839
    %v6524 = vunpack.c.l.b16 %v5840
    %v6525 = vunpack.c.h.b16 %v5840
    %v6526 = vunpack.c.l.b16 %v5841
    %v6527 = vunpack.c.h.b16 %v5841
    %v6528 = vunpack.c.l.b16 %v5842
    %v6529 = vunpack.c.h.b16 %v5842
    %v6530 = vunpack.c.l.b16 %v5843
    %v6531 = vunpack.c.h.b16 %v5843
    %v6532 = vunpack.c.l.b16 %v5844
    %v6533 = vunpack.c.h.b16 %v5844
    %v6534 = vunpack.c.l.b16 %v5845
    %v6535 = vunpack.c.h.b16 %v5845
    %v6536 = vunpack.c.l.b16 %v5846
    %v6537 = vunpack.c.h.b16 %v5846
    %v6538 = vunpack.c.l.b16 %v5847
    %v6539 = vunpack.c.h.b16 %v5847
    %v6540 = vunpack.c.l.b16 %v5848
    %v6541 = vunpack.c.h.b16 %v5848
    %v6542 = vunpack.c.l.b16 %v5849
    %v6543 = vunpack.c.h.b16 %v5849
    %v6544 = vunpack.c.l.b16 %v5850
    %v6545 = vunpack.c.h.b16 %v5850
    %v6546 = vunpack.c.l.b16 %v5851
    %v6547 = vunpack.c.h.b16 %v5851
    %v6548 = vunpack.c.l.b16 %v5852
    %v6549 = vunpack.c.h.b16 %v5852
    %v6550 = vunpack.c.l.b16 %v5853
    %v6551 = vunpack.c.h.b16 %v5853
    %v6552 = vunpack.c.l.b16 %v5854
    %v6553 = vunpack.c.h.b16 %v5854
    %v6554 = vunpack.c.l.b16 %v5855
    %v6555 = vunpack.c.h.b16 %v5855
    %v6556 = vunpack.c.l.b16 %v5856
    %v6557 = vunpack.c.h.b16 %v5856
    %v6558 = vunpack.c.l.b16 %v5857
    %v6559 = vunpack.c.h.b16 %v5857
    %v6560 = vunpack.c.l.b16 %v5858
    %v6561 = vunpack.c.h.b16 %v5858
    %v6562 = vunpack.c.l.b16 %v5859
    %v6563 = vunpack.c.h.b16 %v5859
    %v6564 = vunpack.c.l.b16 %v5860
    %v6565 = vunpack.c.h.b16 %v5860
    %v6566 = vunpack.c.l.b16 %v5861
    %v6567 = vunpack.c.h.b16 %v5861
    %v6568 = vunpack.c.l.b16 %v5862
    %v6569 = vunpack.c.h.b16 %v5862
    %v6570 = vunpack.c.l.b16 %v5863
    %v6571 = vunpack.c.h.b16 %v5863
    %v6572 = vunpack.c.l.b16 %v5864
    %v6573 = vunpack.c.h.b16 %v5864
    %v6574 = vunpack.c.l.b16 %v5865
    %v6575 = vunpack.c.h.b16 %v5865
    %v6576 = vunpack.c.l.b16 %v5866
    %v6577 = vunpack.c.h.b16 %v5866
    %v6578 = vunpack.c.l.b16 %v5867
    %v6579 = vunpack.c.h.b16 %v5867
    %v6580 = vunpack.c.l.b16 %v5868
    %v6581 = vunpack.c.h.b16 %v5868
    %v6582 = vunpack.c.l.b16 %v5869
    %v6583 = vunpack.c.h.b16 %v5869
    %v6584 = vunpack.c.l.b16 %v5870
    %v6585 = vunpack.c.h.b16 %v5870
    %v6586 = vunpack.c.l.b16 %v5871
    %v6587 = vunpack.c.h.b16 %v5871
    %v6588 = vunpack.c.l.b16 %v5872
    %v6589 = vunpack.c.h.b16 %v5872
    %v6590 = vunpack.c.l.b16 %v5873
    %v6591 = vunpack.c.h.b16 %v5873
    %v6592 = vunpack.c.l.b16 %v5874
    %v6593 = vunpack.c.h.b16 %v5874
    %v6594 = vunpack.c.l.b16 %v5875
    %v6595 = vunpack.c.h.b16 %v5875
    %v6596 = vunpack.c.l.b16 %v5876
    %v6597 = vunpack.c.h.b16 %v5876
    %v6598 = vunpack.c.l.b16 %v5877
    %v6599 = vunpack.c.h.b16 %v5877
    %v6600 = vunpack.c.l.b16 %v5878
    %v6601 = vunpack.c.h.b16 %v5878
    %v6602 = vunpack.c.l.b16 %v5879
    %v6603 = vunpack.c.h.b16 %v5879
    %v6604 = vunpack.c.l.b16 %v5880
    %v6605 = vunpack.c.h.b16 %v5880
    %v6606 = vunpack.c.l.b16 %v5881
    %v6607 = vunpack.c.h.b16 %v5881
    %v6608 = vunpack.c.l.b16 %v5882
    %v6609 = vunpack.c.h.b16 %v5882
    %v6610 = vunpack.c.l.b16 %v5883
    %v6611 = vunpack.c.h.b16 %v5883
    %v6612 = vunpack.c.l.b16 %v5884
    %v6613 = vunpack.c.h.b16 %v5884
    %v6614 = vunpack.c.l.b16 %v5885
    %v6615 = vunpack.c.h.b16 %v5885
    %v6616 = vunpack.c.l.b16 %v5886
    %v6617 = vunpack.c.h.b16 %v5886
    %v6618 = vunpack.c.l.b16 %v5887
    %v6619 = vunpack.c.h.b16 %v5887
    %v6620 = vunpack.c.l.b16 %v5888
    %v6621 = vunpack.c.h.b16 %v5888
    %v6622 = vunpack.c.l.b16 %v5889
    %v6623 = vunpack.c.h.b16 %v5889
    %v6624 = vunpack.c.l.b16 %v5890
    %v6625 = vunpack.c.h.b16 %v5890
    %v6626 = vunpack.c.l.b16 %v5891
    %v6627 = vunpack.c.h.b16 %v5891
    %v6628 = vunpack.c.l.b16 %v5892
    %v6629 = vunpack.c.h.b16 %v5892
    %v6630 = vunpack.c.l.b16 %v5893
    %v6631 = vunpack.c.h.b16 %v5893
    %v6632 = vunpack.c.l.b16 %v5894
    %v6633 = vunpack.c.h.b16 %v5894
    %v6634 = vunpack.c.l.b16 %v5895
    %v6635 = vunpack.c.h.b16 %v5895
    %v6636 = vunpack.c.l.b16 %v5896
    %v6637 = vunpack.c.h.b16 %v5896
    %v6638 = vunpack.c.l.b16 %v5897
    %v6639 = vunpack.c.h.b16 %v5897
    %v6640 = vunpack.c.l.b16 %v5898
    %v6641 = vunpack.c.h.b16 %v5898
    %v6642 = vunpack.c.l.b16 %v5899
    %v6643 = vunpack.c.h.b16 %v5899
    %v6644 = vunpack.c.l.b16 %v5900
    %v6645 = vunpack.c.h.b16 %v5900
    %v6646 = vunpack.c.l.b16 %v5901
    %v6647 = vunpack.c.h.b16 %v5901
    %v6648 = vunpack.c.l.b16 %v5902
    %v6649 = vunpack.c.h.b16 %v5902
    %v6650 = vunpack.c.l.b16 %v5903
    %v6651 = vunpack.c.h.b16 %v5903
    %v6652 = vunpack.c.l.b16 %v5904
    %v6653 = vunpack.c.h.b16 %v5904
    %v6654 = vunpack.c.l.b16 %v5905
    %v6655 = vunpack.c.h.b16 %v5905
    %v6656 = vunpack.c.l.b16 %v5906
    %v6657 = vunpack.c.h.b16 %v5906
    %v6658 = vunpack.c.l.b16 %v5907
    %v6659 = vunpack.c.h.b16 %v5907
    %v6660 = vunpack.c.l.b16 %v5908
    %v6661 = vunpack.c.h.b16 %v5908
    %v6662 = vunpack.c.l.b16 %v5909
    %v6663 = vunpack.c.h.b16 %v5909
    %v6664 = vunpack.c.l.b16 %v5910
    %v6665 = vunpack.c.h.b16 %v5910
    %v6666 = vunpack.c.l.b16 %v5911
    %v6667 = vunpack.c.h.b16 %v5911
    %v6668 = vunpack.c.l.b16 %v5912
    %v6669 = vunpack.c.h.b16 %v5912
    %v6670 = vunpack.c.l.b16 %v5913
    %v6671 = vunpack.c.h.b16 %v5913
    %v6672 = vunpack.c.l.b16 %v5914
    %v6673 = vunpack.c.h.b16 %v5914
    %v6674 = vunpack.c.l.b16 %v5915
    %v6675 = vunpack.c.h.b16 %v5915
    %v6676 = vunpack.c.l.b16 %v5916
    %v6677 = vunpack.c.h.b16 %v5916
    %v6678 = vunpack.c.l.b16 %v5917
    %v6679 = vunpack.c.h.b16 %v5917
    %v6680 = vunpack.c.l.b16 %v5918
    %v6681 = vunpack.c.h.b16 %v5918
    %v6682 = vunpack.c.l.b16 %v5919
    %v6683 = vunpack.c.h.b16 %v5919
    %v6684 = vunpack.c.l.b16 %v5920
    %v6685 = vunpack.c.h.b16 %v5920
    %v6686 = vunpack.c.l.b16 %v5921
    %v6687 = vunpack.c.h.b16 %v5921
    %v6688 = vunpack.c.l.b16 %v5922
    %v6689 = vunpack.c.h.b16 %v5922
    %v6690 = vunpack.c.l.b16 %v5923
    %v6691 = vunpack.c.h.b16 %v5923
    %v6692 = vunpack.c.l.b16 %v5924
    %v6693 = vunpack.c.h.b16 %v5924
    %v6694 = vunpack.c.l.b16 %v5925
    %v6695 = vunpack.c.h.b16 %v5925
    %v6696 = vunpack.c.l.b16 %v5926
    %v6697 = vunpack.c.h.b16 %v5926
    %v6698 = vunpack.c.l.b16 %v5927
    %v6699 = vunpack.c.h.b16 %v5927
    %v6700 = vunpack.c.l.b16 %v5928
    %v6701 = vunpack.c.h.b16 %v5928
    %v6702 = vunpack.c.l.b16 %v5929
    %v6703 = vunpack.c.h.b16 %v5929
    %v6704 = vunpack.c.l.b16 %v5930
    %v6705 = vunpack.c.h.b16 %v5930
    %v6706 = vunpack.c.l.b16 %v5931
    %v6707 = vunpack.c.h.b16 %v5931
    %v6708 = vunpack.c.l.b16 %v5932
    %v6709 = vunpack.c.h.b16 %v5932
    %v6710 = vunpack.c.l.b16 %v5933
    %v6711 = vunpack.c.h.b16 %v5933
    %v6712 = vunpack.c.l.b16 %v5934
    %v6713 = vunpack.c.h.b16 %v5934
    %v6714 = vunpack.c.l.b16 %v5935
    %v6715 = vunpack.c.h.b16 %v5935
    %v6716 = vunpack.c.l.b16 %v5936
    %v6717 = vunpack.c.h.b16 %v5936
    %v6718 = vunpack.c.l.b16 %v5937
    %v6719 = vunpack.c.h.b16 %v5937
    %v6720 = vunpack.c.l.b16 %v5938
    %v6721 = vunpack.c.h.b16 %v5938
    %v6722 = vunpack.c.l.b16 %v5939
    %v6723 = vunpack.c.h.b16 %v5939
    %v6724 = vunpack.c.l.b16 %v5940
    %v6725 = vunpack.c.h.b16 %v5940
    %v6726 = vunpack.c.l.b16 %v5941
    %v6727 = vunpack.c.h.b16 %v5941
    %v6728 = vunpack.c.l.b16 %v5942
    %v6729 = vunpack.c.h.b16 %v5942
    %v6730 = vunpack.c.l.b16 %v5943
    %v6731 = vunpack.c.h.b16 %v5943
    %v6732 = vunpack.c.l.b16 %v5944
    %v6733 = vunpack.c.h.b16 %v5944
    %v6734 = vunpack.c.l.b16 %v5945
    %v6735 = vunpack.c.h.b16 %v5945
    %v6736 = vpack.c.b16 %v6228, %v6224
    %v6737 = vpack.c.b16 %v6229, %v6225
    %v6738 = vpack.c.b16 %v6230, %v6226
    %v6739 = vpack.c.b16 %v6231, %v6227
    %v6740 = vpack.c.b16 %v6236, %v6232
    %v6741 = vpack.c.b16 %v6237, %v6233
    %v6742 = vpack.c.b16 %v6238, %v6234
    %v6743 = vpack.c.b16 %v6239, %v6235
    %v6744 = vpack.c.b16 %v6244, %v6240
    %v6745 = vpack.c.b16 %v6245, %v6241
    %v6746 = vpack.c.b16 %v6246, %v6242
    %v6747 = vpack.c.b16 %v6247, %v6243
    %v6748 = vpack.c.b16 %v6252, %v6248
    %v6749 = vpack.c.b16 %v6253, %v6249
    %v6750 = vpack.c.b16 %v6254, %v6250
    %v6751 = vpack.c.b16 %v6255, %v6251
    %v6752 = vpack.c.b16 %v6260, %v6256
    %v6753 = vpack.c.b16 %v6261, %v6257
    %v6754 = vpack.c.b16 %v6262, %v6258
    %v6755 = vpack.c.b16 %v6263, %v6259
    %v6756 = vpack.c.b16 %v6268, %v6264
    %v6757 = vpack.c.b16 %v6269, %v6265
    %v6758 = vpack.c.b16 %v6270, %v6266
    %v6759 = vpack.c.b16 %v6271, %v6267
    %v6760 = vpack.c.b16 %v6276, %v6272
    %v6761 = vpack.c.b16 %v6277, %v6273
    %v6762 = vpack.c.b16 %v6278, %v6274
    %v6763 = vpack.c.b16 %v6279, %v6275
    %v6764 = vpack.c.b16 %v6284, %v6280
    %v6765 = vpack.c.b16 %v6285, %v6281
    %v6766 = vpack.c.b16 %v6286, %v6282
    %v6767 = vpack.c.b16 %v6287, %v6283
    %v6768 = vpack.c.b16 %v6292, %v6288
    %v6769 = vpack.c.b16 %v6293, %v6289
    %v6770 = vpack.c.b16 %v6294, %v6290
    %v6771 = vpack.c.b16 %v6295, %v6291
    %v6772 = vpack.c.b16 %v6300, %v6296
    %v6773 = vpack.c.b16 %v6301, %v6297
    %v6774 = vpack.c.b16 %v6302, %v6298
    %v6775 = vpack.c.b16 %v6303, %v6299
    %v6776 = vpack.c.b16 %v6308, %v6304
    %v6777 = vpack.c.b16 %v6309, %v6305
    %v6778 = vpack.c.b16 %v6310, %v6306
    %v6779 = vpack.c.b16 %v6311, %v6307
    %v6780 = vpack.c.b16 %v6316, %v6312
    %v6781 = vpack.c.b16 %v6317, %v6313
    %v6782 = vpack.c.b16 %v6318, %v6314
    %v6783 = vpack.c.b16 %v6319, %v6315
    %v6784 = vpack.c.b16 %v6324, %v6320
    %v6785 = vpack.c.b16 %v6325, %v6321
    %v6786 = vpack.c.b16 %v6326, %v6322
    %v6787 = vpack.c.b16 %v6327, %v6323
    %v6788 = vpack.c.b16 %v6332, %v6328
    %v6789 = vpack.c.b16 %v6333, %v6329
    %v6790 = vpack.c.b16 %v6334, %v6330
    %v6791 = vpack.c.b16 %v6335, %v6331
    %v6792 = vpack.c.b16 %v6340, %v6336
    %v6793 = vpack.c.b16 %v6341, %v6337
    %v6794 = vpack.c.b16 %v6342, %v6338
    %v6795 = vpack.c.b16 %v6343, %v6339
    %v6796 = vpack.c.b16 %v6348, %v6344
    %v6797 = vpack.c.b16 %v6349, %v6345
    %v6798 = vpack.c.b16 %v6350, %v6346
    %v6799 = vpack.c.b16 %v6351, %v6347
    %v6800 = vpack.c.b16 %v6356, %v6352
    %v6801 = vpack.c.b16 %v6357, %v6353
    %v6802 = vpack.c.b16 %v6358, %v6354
    %v6803 = vpack.c.b16 %v6359, %v6355
    %v6804 = vpack.c.b16 %v6364, %v6360
    %v6805 = vpack.c.b16 %v6365, %v6361
    %v6806 = vpack.c.b16 %v6366, %v6362
    %v6807 = vpack.c.b16 %v6367, %v6363
    %v6808 = vpack.c.b16 %v6372, %v6368
    %v6809 = vpack.c.b16 %v6373, %v6369
    %v6810 = vpack.c.b16 %v6374, %v6370
    %v6811 = vpack.c.b16 %v6375, %v6371
    %v6812 = vpack.c.b16 %v6380, %v6376
    %v6813 = vpack.c.b16 %v6381, %v6377
    %v6814 = vpack.c.b16 %v6382, %v6378
    %v6815 = vpack.c.b16 %v6383, %v6379
    %v6816 = vpack.c.b16 %v6388, %v6384
    %v6817 = vpack.c.b16 %v6389, %v6385
    %v6818 = vpack.c.b16 %v6390, %v6386
    %v6819 = vpack.c.b16 %v6391, %v6387
    %v6820 = vpack.c.b16 %v6396, %v6392
    %v6821 = vpack.c.b16 %v6397, %v6393
    %v6822 = vpack.c.b16 %v6398, %v6394
    %v6823 = vpack.c.b16 %v6399, %v6395
    %v6824 = vpack.c.b16 %v6404, %v6400
    %v6825 = vpack.c.b16 %v6405, %v6401
    %v6826 = vpack.c.b16 %v6406, %v6402
    %v6827 = vpack.c.b16 %v6407, %v6403
    %v6828 = vpack.c.b16 %v6412, %v6408
    %v6829 = vpack.c.b16 %v6413, %v6409
    %v6830 = vpack.c.b16 %v6414, %v6410
    %v6831 = vpack.c.b16 %v6415, %v6411
    %v6832 = vpack.c.b16 %v6420, %v6416
    %v6833 = vpack.c.b16 %v6421, %v6417
    %v6834 = vpack.c.b16 %v6422, %v6418
    %v6835 = vpack.c.b16 %v6423, %v6419
    %v6836 = vpack.c.b16 %v6428, %v6424
    %v6837 = vpack.c.b16 %v6429, %v6425
    %v6838 = vpack.c.b16 %v6430, %v6426
    %v6839 = vpack.c.b16 %v6431, %v6427
    %v6840 = vpack.c.b16 %v6436, %v6432
    %v6841 = vpack.c.b16 %v6437, %v6433
    %v6842 = vpack.c.b16 %v6438, %v6434
    %v6843 = vpack.c.b16 %v6439, %v6435
    %v6844 = vpack.c.b16 %v6444, %v6440
    %v6845 = vpack.c.b16 %v6445, %v6441
    %v6846 = vpack.c.b16 %v6446, %v6442
    %v6847 = vpack.c.b16 %v6447, %v6443
    %v6848 = vpack.c.b16 %v6452, %v6448
    %v6849 = vpack.c.b16 %v6453, %v6449
    %v6850 = vpack.c.b16 %v6454, %v6450
    %v6851 = vpack.c.b16 %v6455, %v6451
    %v6852 = vpack.c.b16 %v6460, %v6456
    %v6853 = vpack.c.b16 %v6461, %v6457
    %v6854 = vpack.c.b16 %v6462, %v6458
    %v6855 = vpack.c.b16 %v6463, %v6459
    %v6856 = vpack.c.b16 %v6468, %v6464
    %v6857 = vpack.c.b16 %v6469, %v6465
    %v6858 = vpack.c.b16 %v6470, %v6466
    %v6859 = vpack.c.b16 %v6471, %v6467
    %v6860 = vpack.c.b16 %v6476, %v6472
    %v6861 = vpack.c.b16 %v6477, %v6473
    %v6862 = vpack.c.b16 %v6478, %v6474
    %v6863 = vpack.c.b16 %v6479, %v6475
    %v6864 = vpack.c.b16 %v6484, %v6480
    %v6865 = vpack.c.b16 %v6485, %v6481
    %v6866 = vpack.c.b16 %v6486, %v6482
    %v6867 = vpack.c.b16 %v6487, %v6483
    %v6868 = vpack.c.b16 %v6492, %v6488
    %v6869 = vpack.c.b16 %v6493, %v6489
    %v6870 = vpack.c.b16 %v6494, %v6490
    %v6871 = vpack.c.b16 %v6495, %v6491
    %v6872 = vpack.c.b16 %v6500, %v6496
    %v6873 = vpack.c.b16 %v6501, %v6497
    %v6874 = vpack.c.b16 %v6502, %v6498
    %v6875 = vpack.c.b16 %v6503, %v6499
    %v6876 = vpack.c.b16 %v6508, %v6504
    %v6877 = vpack.c.b16 %v6509, %v6505
    %v6878 = vpack.c.b16 %v6510, %v6506
    %v6879 = vpack.c.b16 %v6511, %v6507
    %v6880 = vpack.c.b16 %v6516, %v6512
    %v6881 = vpack.c.b16 %v6517, %v6513
    %v6882 = vpack.c.b16 %v6518, %v6514
    %v6883 = vpack.c.b16 %v6519, %v6515
    %v6884 = vpack.c.b16 %v6524, %v6520
    %v6885 = vpack.c.b16 %v6525, %v6521
    %v6886 = vpack.c.b16 %v6526, %v6522
    %v6887 = vpack.c.b16 %v6527, %v6523
    %v6888 = vpack.c.b16 %v6532, %v6528
    %v6889 = vpack.c.b16 %v6533, %v6529
    %v6890 = vpack.c.b16 %v6534, %v6530
    %v6891 = vpack.c.b16 %v6535, %v6531
    %v6892 = vpack.c.b16 %v6540, %v6536
    %v6893 = vpack.c.b16 %v6541, %v6537
    %v6894 = vpack.c.b16 %v6542, %v6538
    %v6895 = vpack.c.b16 %v6543, %v6539
    %v6896 = vpack.c.b16 %v6548, %v6544
    %v6897 = vpack.c.b16 %v6549, %v6545
    %v6898 = vpack.c.b16 %v6550, %v6546
    %v6899 = vpack.c.b16 %v6551, %v6547
    %v6900 = vpack.c.b16 %v6556, %v6552
    %v6901 = vpack.c.b16 %v6557, %v6553
    %v6902 = vpack.c.b16 %v6558, %v6554
    %v6903 = vpack.c.b16 %v6559, %v6555
    %v6904 = vpack.c.b16 %v6564, %v6560
    %v6905 = vpack.c.b16 %v6565, %v6561
    %v6906 = vpack.c.b16 %v6566, %v6562
    %v6907 = vpack.c.b16 %v6567, %v6563
    %v6908 = vpack.c.b16 %v6572, %v6568
    %v6909 = vpack.c.b16 %v6573, %v6569
    %v6910 = vpack.c.b16 %v6574, %v6570
    %v6911 = vpack.c.b16 %v6575, %v6571
    %v6912 = vpack.c.b16 %v6580, %v6576
    %v6913 = vpack.c.b16 %v6581, %v6577
    %v6914 = vpack.c.b16 %v6582, %v6578
    %v6915 = vpack.c.b16 %v6583, %v6579
    %v6916 = vpack.c.b16 %v6588, %v6584
    %v6917 = vpack.c.b16 %v6589, %v6585
    %v6918 = vpack.c.b16 %v6590, %v6586
    %v6919 = vpack.c.b16 %v6591, %v6587
    %v6920 = vpack.c.b16 %v6596, %v6592
    %v6921 = vpack.c.b16 %v6597, %v6593
    %v6922 = vpack.c.b16 %v6598, %v6594
    %v6923 = vpack.c.b16 %v6599, %v6595
    %v6924 = vpack.c.b16 %v6604, %v6600
    %v6925 = vpack.c.b16 %v6605, %v6601
    %v6926 = vpack.c.b16 %v6606, %v6602
    %v6927 = vpack.c.b16 %v6607, %v6603
    %v6928 = vpack.c.b16 %v6612, %v6608
    %v6929 = vpack.c.b16 %v6613, %v6609
    %v6930 = vpack.c.b16 %v6614, %v6610
    %v6931 = vpack.c.b16 %v6615, %v6611
    %v6932 = vpack.c.b16 %v6620, %v6616
    %v6933 = vpack.c.b16 %v6621, %v6617
    %v6934 = vpack.c.b16 %v6622, %v6618
    %v6935 = vpack.c.b16 %v6623, %v6619
    %v6936 = vpack.c.b16 %v6628, %v6624
    %v6937 = vpack.c.b16 %v6629, %v6625
    %v6938 = vpack.c.b16 %v6630, %v6626
    %v6939 = vpack.c.b16 %v6631, %v6627
    %v6940 = vpack.c.b16 %v6636, %v6632
    %v6941 = vpack.c.b16 %v6637, %v6633
    %v6942 = vpack.c.b16 %v6638, %v6634
    %v6943 = vpack.c.b16 %v6639, %v6635
    %v6944 = vpack.c.b16 %v6644, %v6640
    %v6945 = vpack.c.b16 %v6645, %v6641
    %v6946 = vpack.c.b16 %v6646, %v6642
    %v6947 = vpack.c.b16 %v6647, %v6643
    %v6948 = vpack.c.b16 %v6652, %v6648
    %v6949 = vpack.c.b16 %v6653, %v6649
    %v6950 = vpack.c.b16 %v6654, %v6650
    %v6951 = vpack.c.b16 %v6655, %v6651
    %v6952 = vpack.c.b16 %v6660, %v6656
    %v6953 = vpack.c.b16 %v6661, %v6657
    %v6954 = vpack.c.b16 %v6662, %v6658
    %v6955 = vpack.c.b16 %v6663, %v6659
    %v6956 = vpack.c.b16 %v6668, %v6664
    %v6957 = vpack.c.b16 %v6669, %v6665
    %v6958 = vpack.c.b16 %v6670, %v6666
    %v6959 = vpack.c.b16 %v6671, %v6667
    %v6960 = vpack.c.b16 %v6676, %v6672
    %v6961 = vpack.c.b16 %v6677, %v6673
    %v6962 = vpack.c.b16 %v6678, %v6674
    %v6963 = vpack.c.b16 %v6679, %v6675
    %v6964 = vpack.c.b16 %v6684, %v6680
    %v6965 = vpack.c.b16 %v6685, %v6681
    %v6966 = vpack.c.b16 %v6686, %v6682
    %v6967 = vpack.c.b16 %v6687, %v6683
    %v6968 = vpack.c.b16 %v6692, %v6688
    %v6969 = vpack.c.b16 %v6693, %v6689
    %v6970 = vpack.c.b16 %v6694, %v6690
    %v6971 = vpack.c.b16 %v6695, %v6691
    %v6972 = vpack.c.b16 %v6700, %v6696
    %v6973 = vpack.c.b16 %v6701, %v6697
    %v6974 = vpack.c.b16 %v6702, %v6698
    %v6975 = vpack.c.b16 %v6703, %v6699
    %v6976 = vpack.c.b16 %v6708, %v6704
    %v6977 = vpack.c.b16 %v6709, %v6705
    %v6978 = vpack.c.b16 %v6710, %v6706
    %v6979 = vpack.c.b16 %v6711, %v6707
    %v6980 = vpack.c.b16 %v6716, %v6712
    %v6981 = vpack.c.b16 %v6717, %v6713
    %v6982 = vpack.c.b16 %v6718, %v6714
    %v6983 = vpack.c.b16 %v6719, %v6715
    %v6984 = vpack.c.b16 %v6724, %v6720
    %v6985 = vpack.c.b16 %v6725, %v6721
    %v6986 = vpack.c.b16 %v6726, %v6722
    %v6987 = vpack.c.b16 %v6727, %v6723
    %v6988 = vpack.c.b16 %v6732, %v6728
    %v6989 = vpack.c.b16 %v6733, %v6729
    %v6990 = vpack.c.b16 %v6734, %v6730
    %v6991 = vpack.c.b16 %v6735, %v6731
    %7248 = vmatprep.subr.bf16.mxu0 %v6765
    %7249 = vmatpush1.bf16.msra.mxu0 %v6764
    %7250 = vmatprep.subr.bf16.mxu0 %v6761
    %7251 = vmatpush1.bf16.msra.mxu0 %v6760
    %7252 = vmatprep.subr.bf16.mxu0 %v6757
    %7253 = vmatpush1.bf16.msra.mxu0 %v6756
    %7254 = vmatprep.subr.bf16.mxu0 %v6753
    %7255 = vmatpush1.bf16.msra.mxu0 %v6752
    %7256 = vmatprep.subr.bf16.mxu0 %v6749
    %7257 = vmatpush1.bf16.msra.mxu0 %v6748
    %7258 = vmatprep.subr.bf16.mxu0 %v6745
    %7259 = vmatpush1.bf16.msra.mxu0 %v6744
    %7260 = vmatprep.subr.bf16.mxu0 %v6741
    %7261 = vmatpush1.bf16.msra.mxu0 %v6740
    %7262 = vmatprep.subr.bf16.mxu0 %v6737
    %7263 = vmatpush1.bf16.msra.mxu0 %v6736
    %7264 = vmatprep.subr.bf16.mxu0 %v6797
    %7265 = vmatpush2.bf16.msra.mxu0 %v6796
    %7266 = vmatprep.subr.bf16.mxu0 %v6793
    %7267 = vmatpush2.bf16.msra.mxu0 %v6792
    %7268 = vmatprep.subr.bf16.mxu0 %v6789
    %7269 = vmatpush2.bf16.msra.mxu0 %v6788
    %7270 = vmatprep.subr.bf16.mxu0 %v6785
    %7271 = vmatpush2.bf16.msra.mxu0 %v6784
    %7272 = vmatprep.subr.bf16.mxu0 %v6781
    %7273 = vmatpush2.bf16.msra.mxu0 %v6780
    %7274 = vmatprep.subr.bf16.mxu0 %v6777
    %7275 = vmatpush2.bf16.msra.mxu0 %v6776
    %7276 = vmatprep.subr.bf16.mxu0 %v6773
    %7277 = vmatpush2.bf16.msra.mxu0 %v6772
    %7278 = vmatprep.subr.bf16.mxu0 %v6769
    %7279 = vmatpush2.bf16.msra.mxu0 %v6768
    %7280 = vmatprep.mubr.bf16.mxu0 %v5683
    %7281 = vmatmul.mubr.bf16.gmra.mxu0 %v5682
    %v7282 = vpop.f32.mrf.mxu0
    %v7283 = vadd.f32 %v5951, %v7282
    %v7284 = vpop.f32.mrf.mxu0
    %v7285 = vadd.f32 %v5955, %v7284
    %v7286 = vpop.f32.mrf.mxu0
    %v7287 = vpop.f32.mrf.mxu0
    %7288 = vdwg.mxu0
    %7289 = vmatprep.subr.bf16.mxu0 %v6829
    %7290 = vmatpush1.bf16.msra.mxu0 %v6828
    %7291 = vmatprep.subr.bf16.mxu0 %v6825
    %7292 = vmatpush1.bf16.msra.mxu0 %v6824
    %7293 = vmatprep.subr.bf16.mxu0 %v6821
    %7294 = vmatpush1.bf16.msra.mxu0 %v6820
    %7295 = vmatprep.subr.bf16.mxu0 %v6817
    %7296 = vmatpush1.bf16.msra.mxu0 %v6816
    %7297 = vmatprep.subr.bf16.mxu0 %v6813
    %7298 = vmatpush1.bf16.msra.mxu0 %v6812
    %7299 = vmatprep.subr.bf16.mxu0 %v6809
    %7300 = vmatpush1.bf16.msra.mxu0 %v6808
    %7301 = vmatprep.subr.bf16.mxu0 %v6805
    %7302 = vmatpush1.bf16.msra.mxu0 %v6804
    %7303 = vmatprep.subr.bf16.mxu0 %v6801
    %7304 = vmatpush1.bf16.msra.mxu0 %v6800
    %7305 = vmatprep.subr.bf16.mxu0 %v6861
    %7306 = vmatpush2.bf16.msra.mxu0 %v6860
    %7307 = vmatprep.subr.bf16.mxu0 %v6857
    %7308 = vmatpush2.bf16.msra.mxu0 %v6856
    %7309 = vmatprep.subr.bf16.mxu0 %v6853
    %7310 = vmatpush2.bf16.msra.mxu0 %v6852
    %7311 = vmatprep.subr.bf16.mxu0 %v6849
    %7312 = vmatpush2.bf16.msra.mxu0 %v6848
    %7313 = vmatprep.subr.bf16.mxu0 %v6845
    %7314 = vmatpush2.bf16.msra.mxu0 %v6844
    %7315 = vmatprep.subr.bf16.mxu0 %v6841
    %7316 = vmatpush2.bf16.msra.mxu0 %v6840
    %7317 = vmatprep.subr.bf16.mxu0 %v6837
    %7318 = vmatpush2.bf16.msra.mxu0 %v6836
    %7319 = vmatprep.subr.bf16.mxu0 %v6833
    %7320 = vmatpush2.bf16.msra.mxu0 %v6832
    %7321 = vmatprep.mubr.bf16.mxu0 %v5685
    %7322 = vmatmul.mubr.bf16.gmra.mxu0 %v5684
    %v7323 = vpop.f32.mrf.mxu0
    %v7324 = vadd.f32 %v7283, %v7323
    %v7325 = vpop.f32.mrf.mxu0
    %v7326 = vadd.f32 %v7285, %v7325
    %v7327 = vpop.f32.mrf.mxu0
    %v7328 = vpop.f32.mrf.mxu0
    %7329 = vdwg.mxu0
    %7330 = vmatprep.subr.bf16.mxu0 %v6893
    %7331 = vmatpush1.bf16.msra.mxu0 %v6892
    %7332 = vmatprep.subr.bf16.mxu0 %v6889
    %7333 = vmatpush1.bf16.msra.mxu0 %v6888
    %7334 = vmatprep.subr.bf16.mxu0 %v6885
    %7335 = vmatpush1.bf16.msra.mxu0 %v6884
    %7336 = vmatprep.subr.bf16.mxu0 %v6881
    %7337 = vmatpush1.bf16.msra.mxu0 %v6880
    %7338 = vmatprep.subr.bf16.mxu0 %v6877
    %7339 = vmatpush1.bf16.msra.mxu0 %v6876
    %7340 = vmatprep.subr.bf16.mxu0 %v6873
    %7341 = vmatpush1.bf16.msra.mxu0 %v6872
    %7342 = vmatprep.subr.bf16.mxu0 %v6869
    %7343 = vmatpush1.bf16.msra.mxu0 %v6868
    %7344 = vmatprep.subr.bf16.mxu0 %v6865
    %7345 = vmatpush1.bf16.msra.mxu0 %v6864
    %7346 = vmatprep.subr.bf16.mxu0 %v6925
    %7347 = vmatpush2.bf16.msra.mxu0 %v6924
    %7348 = vmatprep.subr.bf16.mxu0 %v6921
    %7349 = vmatpush2.bf16.msra.mxu0 %v6920
    %7350 = vmatprep.subr.bf16.mxu0 %v6917
    %7351 = vmatpush2.bf16.msra.mxu0 %v6916
    %7352 = vmatprep.subr.bf16.mxu0 %v6913
    %7353 = vmatpush2.bf16.msra.mxu0 %v6912
    %7354 = vmatprep.subr.bf16.mxu0 %v6909
    %7355 = vmatpush2.bf16.msra.mxu0 %v6908
    %7356 = vmatprep.subr.bf16.mxu0 %v6905
    %7357 = vmatpush2.bf16.msra.mxu0 %v6904
    %7358 = vmatprep.subr.bf16.mxu0 %v6901
    %7359 = vmatpush2.bf16.msra.mxu0 %v6900
    %7360 = vmatprep.subr.bf16.mxu0 %v6897
    %7361 = vmatpush2.bf16.msra.mxu0 %v6896
    %7362 = vmatprep.mubr.bf16.mxu0 %v5687
    %7363 = vmatmul.mubr.bf16.gmra.mxu0 %v5686
    %v7364 = vpop.f32.mrf.mxu0
    %v7365 = vadd.f32 %v7324, %v7364
    %v7366 = vpop.f32.mrf.mxu0
    %v7367 = vadd.f32 %v7326, %v7366
    %v7368 = vpop.f32.mrf.mxu0
    %v7369 = vpop.f32.mrf.mxu0
    %7370 = vdwg.mxu0
    %7371 = vmatprep.subr.bf16.mxu0 %v6957
    %7372 = vmatpush1.bf16.msra.mxu0 %v6956
    %7373 = vmatprep.subr.bf16.mxu0 %v6953
    %7374 = vmatpush1.bf16.msra.mxu0 %v6952
    %7375 = vmatprep.subr.bf16.mxu0 %v6949
    %7376 = vmatpush1.bf16.msra.mxu0 %v6948
    %7377 = vmatprep.subr.bf16.mxu0 %v6945
    %7378 = vmatpush1.bf16.msra.mxu0 %v6944
    %7379 = vmatprep.subr.bf16.mxu0 %v6941
    %7380 = vmatpush1.bf16.msra.mxu0 %v6940
    %7381 = vmatprep.subr.bf16.mxu0 %v6937
    %7382 = vmatpush1.bf16.msra.mxu0 %v6936
    %7383 = vmatprep.subr.bf16.mxu0 %v6933
    %7384 = vmatpush1.bf16.msra.mxu0 %v6932
    %7385 = vmatprep.subr.bf16.mxu0 %v6929
    %7386 = vmatpush1.bf16.msra.mxu0 %v6928
    %7387 = vmatprep.subr.bf16.mxu0 %v6989
    %7388 = vmatpush2.bf16.msra.mxu0 %v6988
    %7389 = vmatprep.subr.bf16.mxu0 %v6985
    %7390 = vmatpush2.bf16.msra.mxu0 %v6984
    %7391 = vmatprep.subr.bf16.mxu0 %v6981
    %7392 = vmatpush2.bf16.msra.mxu0 %v6980
    %7393 = vmatprep.subr.bf16.mxu0 %v6977
    %7394 = vmatpush2.bf16.msra.mxu0 %v6976
    %7395 = vmatprep.subr.bf16.mxu0 %v6973
    %7396 = vmatpush2.bf16.msra.mxu0 %v6972
    %7397 = vmatprep.subr.bf16.mxu0 %v6969
    %7398 = vmatpush2.bf16.msra.mxu0 %v6968
    %7399 = vmatprep.subr.bf16.mxu0 %v6965
    %7400 = vmatpush2.bf16.msra.mxu0 %v6964
    %7401 = vmatprep.subr.bf16.mxu0 %v6961
    %7402 = vmatpush2.bf16.msra.mxu0 %v6960
    %7403 = vmatprep.mubr.bf16.mxu0 %v5689
    %7404 = vmatmul.mubr.bf16.gmra.mxu0 %v5688
    %v7405 = vpop.f32.mrf.mxu0
    %v7406 = vadd.f32 %v7365, %v7405
    %v7407 = vpop.f32.mrf.mxu0
    %v7408 = vadd.f32 %v7367, %v7407
    %v7409 = vpop.f32.mrf.mxu0
    %v7410 = vpop.f32.mrf.mxu0
    %7411 = vdwg.mxu0
    %7412 = vmatprep.subr.bf16.mxu0 %v6767
    %7413 = vmatpush1.bf16.msra.mxu0 %v6766
    %7414 = vmatprep.subr.bf16.mxu0 %v6763
    %7415 = vmatpush1.bf16.msra.mxu0 %v6762
    %7416 = vmatprep.subr.bf16.mxu0 %v6759
    %7417 = vmatpush1.bf16.msra.mxu0 %v6758
    %7418 = vmatprep.subr.bf16.mxu0 %v6755
    %7419 = vmatpush1.bf16.msra.mxu0 %v6754
    %7420 = vmatprep.subr.bf16.mxu0 %v6751
    %7421 = vmatpush1.bf16.msra.mxu0 %v6750
    %7422 = vmatprep.subr.bf16.mxu0 %v6747
    %7423 = vmatpush1.bf16.msra.mxu0 %v6746
    %7424 = vmatprep.subr.bf16.mxu0 %v6743
    %7425 = vmatpush1.bf16.msra.mxu0 %v6742
    %7426 = vmatprep.subr.bf16.mxu0 %v6739
    %7427 = vmatpush1.bf16.msra.mxu0 %v6738
    %7428 = vmatprep.subr.bf16.mxu0 %v6799
    %7429 = vmatpush2.bf16.msra.mxu0 %v6798
    %7430 = vmatprep.subr.bf16.mxu0 %v6795
    %7431 = vmatpush2.bf16.msra.mxu0 %v6794
    %7432 = vmatprep.subr.bf16.mxu0 %v6791
    %7433 = vmatpush2.bf16.msra.mxu0 %v6790
    %7434 = vmatprep.subr.bf16.mxu0 %v6787
    %7435 = vmatpush2.bf16.msra.mxu0 %v6786
    %7436 = vmatprep.subr.bf16.mxu0 %v6783
    %7437 = vmatpush2.bf16.msra.mxu0 %v6782
    %7438 = vmatprep.subr.bf16.mxu0 %v6779
    %7439 = vmatpush2.bf16.msra.mxu0 %v6778
    %7440 = vmatprep.subr.bf16.mxu0 %v6775
    %7441 = vmatpush2.bf16.msra.mxu0 %v6774
    %7442 = vmatprep.subr.bf16.mxu0 %v6771
    %7443 = vmatpush2.bf16.msra.mxu0 %v6770
    %7444 = vmatprep.mubr.bf16.mxu0 %v5683
    %7445 = vmatmul.mubr.bf16.gmra.mxu0 %v5682
    %v7446 = vpop.f32.mrf.mxu0
    %v7447 = vadd.f32 %v5959, %v7446
    %v7448 = vpop.f32.mrf.mxu0
    %v7449 = vadd.f32 %v5963, %v7448
    %v7450 = vpop.f32.mrf.mxu0
    %v7451 = vpop.f32.mrf.mxu0
    %7452 = vdwg.mxu0
    %7453 = vmatprep.subr.bf16.mxu0 %v6831
    %7454 = vmatpush1.bf16.msra.mxu0 %v6830
    %7455 = vmatprep.subr.bf16.mxu0 %v6827
    %7456 = vmatpush1.bf16.msra.mxu0 %v6826
    %7457 = vmatprep.subr.bf16.mxu0 %v6823
    %7458 = vmatpush1.bf16.msra.mxu0 %v6822
    %7459 = vmatprep.subr.bf16.mxu0 %v6819
    %7460 = vmatpush1.bf16.msra.mxu0 %v6818
    %7461 = vmatprep.subr.bf16.mxu0 %v6815
    %7462 = vmatpush1.bf16.msra.mxu0 %v6814
    %7463 = vmatprep.subr.bf16.mxu0 %v6811
    %7464 = vmatpush1.bf16.msra.mxu0 %v6810
    %7465 = vmatprep.subr.bf16.mxu0 %v6807
    %7466 = vmatpush1.bf16.msra.mxu0 %v6806
    %7467 = vmatprep.subr.bf16.mxu0 %v6803
    %7468 = vmatpush1.bf16.msra.mxu0 %v6802
    %7469 = vmatprep.subr.bf16.mxu0 %v6863
    %7470 = vmatpush2.bf16.msra.mxu0 %v6862
    %7471 = vmatprep.subr.bf16.mxu0 %v6859
    %7472 = vmatpush2.bf16.msra.mxu0 %v6858
    %7473 = vmatprep.subr.bf16.mxu0 %v6855
    %7474 = vmatpush2.bf16.msra.mxu0 %v6854
    %7475 = vmatprep.subr.bf16.mxu0 %v6851
    %7476 = vmatpush2.bf16.msra.mxu0 %v6850
    %7477 = vmatprep.subr.bf16.mxu0 %v6847
    %7478 = vmatpush2.bf16.msra.mxu0 %v6846
    %7479 = vmatprep.subr.bf16.mxu0 %v6843
    %7480 = vmatpush2.bf16.msra.mxu0 %v6842
    %7481 = vmatprep.subr.bf16.mxu0 %v6839
    %7482 = vmatpush2.bf16.msra.mxu0 %v6838
    %7483 = vmatprep.subr.bf16.mxu0 %v6835
    %7484 = vmatpush2.bf16.msra.mxu0 %v6834
    %7485 = vmatprep.mubr.bf16.mxu0 %v5685
    %7486 = vmatmul.mubr.bf16.gmra.mxu0 %v5684
    %v7487 = vpop.f32.mrf.mxu0
    %v7488 = vadd.f32 %v7447, %v7487
    %v7489 = vpop.f32.mrf.mxu0
    %v7490 = vadd.f32 %v7449, %v7489
    %v7491 = vpop.f32.mrf.mxu0
    %v7492 = vpop.f32.mrf.mxu0
    %7493 = vdwg.mxu0
    %7494 = vmatprep.subr.bf16.mxu0 %v6895
    %7495 = vmatpush1.bf16.msra.mxu0 %v6894
    %7496 = vmatprep.subr.bf16.mxu0 %v6891
    %7497 = vmatpush1.bf16.msra.mxu0 %v6890
    %7498 = vmatprep.subr.bf16.mxu0 %v6887
    %7499 = vmatpush1.bf16.msra.mxu0 %v6886
    %7500 = vmatprep.subr.bf16.mxu0 %v6883
    %7501 = vmatpush1.bf16.msra.mxu0 %v6882
    %7502 = vmatprep.subr.bf16.mxu0 %v6879
    %7503 = vmatpush1.bf16.msra.mxu0 %v6878
    %7504 = vmatprep.subr.bf16.mxu0 %v6875
    %7505 = vmatpush1.bf16.msra.mxu0 %v6874
    %7506 = vmatprep.subr.bf16.mxu0 %v6871
    %7507 = vmatpush1.bf16.msra.mxu0 %v6870
    %7508 = vmatprep.subr.bf16.mxu0 %v6867
    %7509 = vmatpush1.bf16.msra.mxu0 %v6866
    %7510 = vmatprep.subr.bf16.mxu0 %v6927
    %7511 = vmatpush2.bf16.msra.mxu0 %v6926
    %7512 = vmatprep.subr.bf16.mxu0 %v6923
    %7513 = vmatpush2.bf16.msra.mxu0 %v6922
    %7514 = vmatprep.subr.bf16.mxu0 %v6919
    %7515 = vmatpush2.bf16.msra.mxu0 %v6918
    %7516 = vmatprep.subr.bf16.mxu0 %v6915
    %7517 = vmatpush2.bf16.msra.mxu0 %v6914
    %7518 = vmatprep.subr.bf16.mxu0 %v6911
    %7519 = vmatpush2.bf16.msra.mxu0 %v6910
    %7520 = vmatprep.subr.bf16.mxu0 %v6907
    %7521 = vmatpush2.bf16.msra.mxu0 %v6906
    %7522 = vmatprep.subr.bf16.mxu0 %v6903
    %7523 = vmatpush2.bf16.msra.mxu0 %v6902
    %7524 = vmatprep.subr.bf16.mxu0 %v6899
    %7525 = vmatpush2.bf16.msra.mxu0 %v6898
    %7526 = vmatprep.mubr.bf16.mxu0 %v5687
    %7527 = vmatmul.mubr.bf16.gmra.mxu0 %v5686
    %v7528 = vpop.f32.mrf.mxu0
    %v7529 = vadd.f32 %v7488, %v7528
    %v7530 = vpop.f32.mrf.mxu0
    %v7531 = vadd.f32 %v7490, %v7530
    %v7532 = vpop.f32.mrf.mxu0
    %v7533 = vpop.f32.mrf.mxu0
    %7534 = vdwg.mxu0
    %7535 = vmatprep.subr.bf16.mxu0 %v6959
    %7536 = vmatpush1.bf16.msra.mxu0 %v6958
    %7537 = vmatprep.subr.bf16.mxu0 %v6955
    %7538 = vmatpush1.bf16.msra.mxu0 %v6954
    %7539 = vmatprep.subr.bf16.mxu0 %v6951
    %7540 = vmatpush1.bf16.msra.mxu0 %v6950
    %7541 = vmatprep.subr.bf16.mxu0 %v6947
    %7542 = vmatpush1.bf16.msra.mxu0 %v6946
    %7543 = vmatprep.subr.bf16.mxu0 %v6943
    %7544 = vmatpush1.bf16.msra.mxu0 %v6942
    %7545 = vmatprep.subr.bf16.mxu0 %v6939
    %7546 = vmatpush1.bf16.msra.mxu0 %v6938
    %7547 = vmatprep.subr.bf16.mxu0 %v6935
    %7548 = vmatpush1.bf16.msra.mxu0 %v6934
    %7549 = vmatprep.subr.bf16.mxu0 %v6931
    %7550 = vmatpush1.bf16.msra.mxu0 %v6930
    %7551 = vmatprep.subr.bf16.mxu0 %v6991
    %7552 = vmatpush2.bf16.msra.mxu0 %v6990
    %7553 = vmatprep.subr.bf16.mxu0 %v6987
    %7554 = vmatpush2.bf16.msra.mxu0 %v6986
    %7555 = vmatprep.subr.bf16.mxu0 %v6983
    %7556 = vmatpush2.bf16.msra.mxu0 %v6982
    %7557 = vmatprep.subr.bf16.mxu0 %v6979
    %7558 = vmatpush2.bf16.msra.mxu0 %v6978
    %7559 = vmatprep.subr.bf16.mxu0 %v6975
    %7560 = vmatpush2.bf16.msra.mxu0 %v6974
    %7561 = vmatprep.subr.bf16.mxu0 %v6971
    %7562 = vmatpush2.bf16.msra.mxu0 %v6970
    %7563 = vmatprep.subr.bf16.mxu0 %v6967
    %7564 = vmatpush2.bf16.msra.mxu0 %v6966
    %7565 = vmatprep.subr.bf16.mxu0 %v6963
    %7566 = vmatpush2.bf16.msra.mxu0 %v6962
    %7567 = vmatprep.mubr.bf16.mxu0 %v5689
    %7568 = vmatmul.mubr.bf16.gmra.mxu0 %v5688
    %v7569 = vpop.f32.mrf.mxu0
    %v7570 = vadd.f32 %v7529, %v7569
    %v7571 = vpop.f32.mrf.mxu0
    %v7572 = vadd.f32 %v7531, %v7571
    %v7573 = vpop.f32.mrf.mxu0
    %v7574 = vpop.f32.mrf.mxu0
    %7575 = vdwg.mxu0
    %v7576 = vmax.f32 %v7406, 0.0
    %v7577 = vmax.f32 %v7408, 0.0
    %v7578 = vmax.f32 %v7570, 0.0
    %v7579 = vmax.f32 %v7572, 0.0
    %v7580 = vpack.c.bf16 %v7576, %v7576
    %v7581 = vpack.c.bf16 %v7577, %v7577
    %v7582 = vpack.c.bf16 %v7578, %v7578
    %v7583 = vpack.c.bf16 %v7579, %v7579
    %v7584 = vld [vmem:[#allocation13] sm:$0xf]
    %v7585 = vld [vmem:[#allocation13 + $0x4] sm:$0xf]
    %v7586 = vld [vmem:[#allocation13 + $0x8] sm:$0xf]
    %v7587 = vld [vmem:[#allocation13 + $0xc] sm:$0xf]
    %v7588 = vld [vmem:[#allocation13 + $0x10] sm:$0xf]
    %v7589 = vld [vmem:[#allocation13 + $0x14] sm:$0xf]
    %v7590 = vld [vmem:[#allocation13 + $0x18] sm:$0xf]
    %v7591 = vld [vmem:[#allocation13 + $0x1c] sm:$0xf]
    %v7592 = vld [vmem:[#allocation13 + $0x20] sm:$0xf]
    %v7593 = vld [vmem:[#allocation13 + $0x24] sm:$0xf]
    %v7594 = vld [vmem:[#allocation13 + $0x28] sm:$0xf]
    %v7595 = vld [vmem:[#allocation13 + $0x2c] sm:$0xf]
    %v7596 = vld [vmem:[#allocation13 + $0x30] sm:$0xf]
    %v7597 = vld [vmem:[#allocation13 + $0x34] sm:$0xf]
    %v7598 = vld [vmem:[#allocation13 + $0x38] sm:$0xf]
    %v7599 = vld [vmem:[#allocation13 + $0x3c] sm:$0xf]
    %v7600 = vld [vmem:[#allocation13 + $0x40] sm:$0xf]
    %v7601 = vld [vmem:[#allocation13 + $0x44] sm:$0xf]
    %v7602 = vld [vmem:[#allocation13 + $0x48] sm:$0xf]
    %v7603 = vld [vmem:[#allocation13 + $0x4c] sm:$0xf]
    %v7604 = vld [vmem:[#allocation13 + $0x50] sm:$0xf]
    %v7605 = vld [vmem:[#allocation13 + $0x54] sm:$0xf]
    %v7606 = vld [vmem:[#allocation13 + $0x58] sm:$0xf]
    %v7607 = vld [vmem:[#allocation13 + $0x5c] sm:$0xf]
    %v7608 = vld [vmem:[#allocation13 + $0x60] sm:$0xf]
    %v7609 = vld [vmem:[#allocation13 + $0x64] sm:$0xf]
    %v7610 = vld [vmem:[#allocation13 + $0x68] sm:$0xf]
    %v7611 = vld [vmem:[#allocation13 + $0x6c] sm:$0xf]
    %v7612 = vld [vmem:[#allocation13 + $0x70] sm:$0xf]
    %v7613 = vld [vmem:[#allocation13 + $0x74] sm:$0xf]
    %v7614 = vld [vmem:[#allocation13 + $0x78] sm:$0xf]
    %v7615 = vld [vmem:[#allocation13 + $0x7c] sm:$0xf]
    %v7616 = vld [vmem:[#allocation13 + $0x80] sm:$0xf]
    %v7617 = vld [vmem:[#allocation13 + $0x84] sm:$0xf]
    %v7618 = vld [vmem:[#allocation13 + $0x88] sm:$0xf]
    %v7619 = vld [vmem:[#allocation13 + $0x8c] sm:$0xf]
    %v7620 = vld [vmem:[#allocation13 + $0x90] sm:$0xf]
    %v7621 = vld [vmem:[#allocation13 + $0x94] sm:$0xf]
    %v7622 = vld [vmem:[#allocation13 + $0x98] sm:$0xf]
    %v7623 = vld [vmem:[#allocation13 + $0x9c] sm:$0xf]
    %v7624 = vld [vmem:[#allocation13 + $0xa0] sm:$0xf]
    %v7625 = vld [vmem:[#allocation13 + $0xa4] sm:$0xf]
    %v7626 = vld [vmem:[#allocation13 + $0xa8] sm:$0xf]
    %v7627 = vld [vmem:[#allocation13 + $0xac] sm:$0xf]
    %v7628 = vld [vmem:[#allocation13 + $0xb0] sm:$0xf]
    %v7629 = vld [vmem:[#allocation13 + $0xb4] sm:$0xf]
    %v7630 = vld [vmem:[#allocation13 + $0xb8] sm:$0xf]
    %v7631 = vld [vmem:[#allocation13 + $0xbc] sm:$0xf]
    %v7632 = vld [vmem:[#allocation13 + $0xc0] sm:$0xf]
    %v7633 = vld [vmem:[#allocation13 + $0xc4] sm:$0xf]
    %v7634 = vld [vmem:[#allocation13 + $0xc8] sm:$0xf]
    %v7635 = vld [vmem:[#allocation13 + $0xcc] sm:$0xf]
    %v7636 = vld [vmem:[#allocation13 + $0xd0] sm:$0xf]
    %v7637 = vld [vmem:[#allocation13 + $0xd4] sm:$0xf]
    %v7638 = vld [vmem:[#allocation13 + $0xd8] sm:$0xf]
    %v7639 = vld [vmem:[#allocation13 + $0xdc] sm:$0xf]
    %v7640 = vld [vmem:[#allocation13 + $0xe0] sm:$0xf]
    %v7641 = vld [vmem:[#allocation13 + $0xe4] sm:$0xf]
    %v7642 = vld [vmem:[#allocation13 + $0xe8] sm:$0xf]
    %v7643 = vld [vmem:[#allocation13 + $0xec] sm:$0xf]
    %v7644 = vld [vmem:[#allocation13 + $0xf0] sm:$0xf]
    %v7645 = vld [vmem:[#allocation13 + $0xf4] sm:$0xf]
    %v7646 = vld [vmem:[#allocation13 + $0xf8] sm:$0xf]
    %v7647 = vld [vmem:[#allocation13 + $0xfc] sm:$0xf]
    %v7648 = vld [vmem:[#allocation14] sm:$0x1]
    %v7650 = vlaneseq
    %v7651 = vshrl.u32 %v7650, 7
    %v7652 = vsub.s32 0, %v7651
    %v7653 = vrot.slane %v7648, %v7652
    %v7719 = vunpack.c.l.b16 %v7584
    %v7720 = vunpack.c.l.b16 %v7585
    %v7721 = vunpack.c.l.b16 %v7586
    %v7722 = vunpack.c.l.b16 %v7587
    %v7723 = vunpack.c.l.b16 %v7588
    %v7724 = vunpack.c.l.b16 %v7589
    %v7725 = vunpack.c.l.b16 %v7590
    %v7726 = vunpack.c.l.b16 %v7591
    %v7727 = vunpack.c.l.b16 %v7592
    %v7728 = vunpack.c.l.b16 %v7593
    %v7729 = vunpack.c.l.b16 %v7594
    %v7730 = vunpack.c.l.b16 %v7595
    %v7731 = vunpack.c.l.b16 %v7596
    %v7732 = vunpack.c.l.b16 %v7597
    %v7733 = vunpack.c.l.b16 %v7598
    %v7734 = vunpack.c.l.b16 %v7599
    %v7735 = vunpack.c.l.b16 %v7600
    %v7736 = vunpack.c.l.b16 %v7601
    %v7737 = vunpack.c.l.b16 %v7602
    %v7738 = vunpack.c.l.b16 %v7603
    %v7739 = vunpack.c.l.b16 %v7604
    %v7740 = vunpack.c.l.b16 %v7605
    %v7741 = vunpack.c.l.b16 %v7606
    %v7742 = vunpack.c.l.b16 %v7607
    %v7743 = vunpack.c.l.b16 %v7608
    %v7744 = vunpack.c.l.b16 %v7609
    %v7745 = vunpack.c.l.b16 %v7610
    %v7746 = vunpack.c.l.b16 %v7611
    %v7747 = vunpack.c.l.b16 %v7612
    %v7748 = vunpack.c.l.b16 %v7613
    %v7749 = vunpack.c.l.b16 %v7614
    %v7750 = vunpack.c.l.b16 %v7615
    %v7751 = vunpack.c.l.b16 %v7616
    %v7752 = vunpack.c.l.b16 %v7617
    %v7753 = vunpack.c.l.b16 %v7618
    %v7754 = vunpack.c.l.b16 %v7619
    %v7755 = vunpack.c.l.b16 %v7620
    %v7756 = vunpack.c.l.b16 %v7621
    %v7757 = vunpack.c.l.b16 %v7622
    %v7758 = vunpack.c.l.b16 %v7623
    %v7759 = vunpack.c.l.b16 %v7624
    %v7760 = vunpack.c.l.b16 %v7625
    %v7761 = vunpack.c.l.b16 %v7626
    %v7762 = vunpack.c.l.b16 %v7627
    %v7763 = vunpack.c.l.b16 %v7628
    %v7764 = vunpack.c.l.b16 %v7629
    %v7765 = vunpack.c.l.b16 %v7630
    %v7766 = vunpack.c.l.b16 %v7631
    %v7767 = vunpack.c.l.b16 %v7632
    %v7768 = vunpack.c.l.b16 %v7633
    %v7769 = vunpack.c.l.b16 %v7634
    %v7770 = vunpack.c.l.b16 %v7635
    %v7771 = vunpack.c.l.b16 %v7636
    %v7772 = vunpack.c.l.b16 %v7637
    %v7773 = vunpack.c.l.b16 %v7638
    %v7774 = vunpack.c.l.b16 %v7639
    %v7775 = vunpack.c.l.b16 %v7640
    %v7776 = vunpack.c.l.b16 %v7641
    %v7777 = vunpack.c.l.b16 %v7642
    %v7778 = vunpack.c.l.b16 %v7643
    %v7779 = vunpack.c.l.b16 %v7644
    %v7780 = vunpack.c.l.b16 %v7645
    %v7781 = vunpack.c.l.b16 %v7646
    %v7782 = vunpack.c.l.b16 %v7647
    %v7783 = vpack.c.b16 %v7720, %v7719
    %v7784 = vpack.c.b16 %v7722, %v7721
    %v7785 = vpack.c.b16 %v7724, %v7723
    %v7786 = vpack.c.b16 %v7726, %v7725
    %v7787 = vpack.c.b16 %v7728, %v7727
    %v7788 = vpack.c.b16 %v7730, %v7729
    %v7789 = vpack.c.b16 %v7732, %v7731
    %v7790 = vpack.c.b16 %v7734, %v7733
    %v7791 = vpack.c.b16 %v7736, %v7735
    %v7792 = vpack.c.b16 %v7738, %v7737
    %v7793 = vpack.c.b16 %v7740, %v7739
    %v7794 = vpack.c.b16 %v7742, %v7741
    %v7795 = vpack.c.b16 %v7744, %v7743
    %v7796 = vpack.c.b16 %v7746, %v7745
    %v7797 = vpack.c.b16 %v7748, %v7747
    %v7798 = vpack.c.b16 %v7750, %v7749
    %v7799 = vpack.c.b16 %v7752, %v7751
    %v7800 = vpack.c.b16 %v7754, %v7753
    %v7801 = vpack.c.b16 %v7756, %v7755
    %v7802 = vpack.c.b16 %v7758, %v7757
    %v7803 = vpack.c.b16 %v7760, %v7759
    %v7804 = vpack.c.b16 %v7762, %v7761
    %v7805 = vpack.c.b16 %v7764, %v7763
    %v7806 = vpack.c.b16 %v7766, %v7765
    %v7807 = vpack.c.b16 %v7768, %v7767
    %v7808 = vpack.c.b16 %v7770, %v7769
    %v7809 = vpack.c.b16 %v7772, %v7771
    %v7810 = vpack.c.b16 %v7774, %v7773
    %v7811 = vpack.c.b16 %v7776, %v7775
    %v7812 = vpack.c.b16 %v7778, %v7777
    %v7813 = vpack.c.b16 %v7780, %v7779
    %v7814 = vpack.c.b16 %v7782, %v7781
    %7847 = vmatprep.subr.bf16.mxu0 0
    %7848 = vmatpush1.bf16.msra.mxu0 %v7790
    %7849 = vmatprep.subr.bf16.mxu0 0
    %7850 = vmatpush1.bf16.msra.mxu0 %v7789
    %7851 = vmatprep.subr.bf16.mxu0 0
    %7852 = vmatpush1.bf16.msra.mxu0 %v7788
    %7853 = vmatprep.subr.bf16.mxu0 0
    %7854 = vmatpush1.bf16.msra.mxu0 %v7787
    %7855 = vmatprep.subr.bf16.mxu0 0
    %7856 = vmatpush1.bf16.msra.mxu0 %v7786
    %7857 = vmatprep.subr.bf16.mxu0 0
    %7858 = vmatpush1.bf16.msra.mxu0 %v7785
    %7859 = vmatprep.subr.bf16.mxu0 0
    %7860 = vmatpush1.bf16.msra.mxu0 %v7784
    %7861 = vmatprep.subr.bf16.mxu0 0
    %7862 = vmatpush1.bf16.msra.mxu0 %v7783
    %7863 = vmatprep.subr.bf16.mxu0 0
    %7864 = vmatpush2.bf16.msra.mxu0 %v7798
    %7865 = vmatprep.subr.bf16.mxu0 0
    %7866 = vmatpush2.bf16.msra.mxu0 %v7797
    %7867 = vmatprep.subr.bf16.mxu0 0
    %7868 = vmatpush2.bf16.msra.mxu0 %v7796
    %7869 = vmatprep.subr.bf16.mxu0 0
    %7870 = vmatpush2.bf16.msra.mxu0 %v7795
    %7871 = vmatprep.subr.bf16.mxu0 0
    %7872 = vmatpush2.bf16.msra.mxu0 %v7794
    %7873 = vmatprep.subr.bf16.mxu0 0
    %7874 = vmatpush2.bf16.msra.mxu0 %v7793
    %7875 = vmatprep.subr.bf16.mxu0 0
    %7876 = vmatpush2.bf16.msra.mxu0 %v7792
    %7877 = vmatprep.subr.bf16.mxu0 0
    %7878 = vmatpush2.bf16.msra.mxu0 %v7791
    %7879 = vmatprep.mubr.bf16.mxu0 %v7581
    %7880 = vmatmul.mubr.bf16.gmra.mxu0 %v7580
    %v7881 = vpop.f32.mrf.mxu0
    %v7882 = vadd.f32 %v7653, %v7881
    %v7883 = vpop.f32.mrf.mxu0
    %v7884 = vpop.f32.mrf.mxu0
    %v7885 = vpop.f32.mrf.mxu0
    %7886 = vdwg.mxu0
    %7887 = vmatprep.subr.bf16.mxu0 0
    %7888 = vmatpush1.bf16.msra.mxu0 %v7806
    %7889 = vmatprep.subr.bf16.mxu0 0
    %7890 = vmatpush1.bf16.msra.mxu0 %v7805
    %7891 = vmatprep.subr.bf16.mxu0 0
    %7892 = vmatpush1.bf16.msra.mxu0 %v7804
    %7893 = vmatprep.subr.bf16.mxu0 0
    %7894 = vmatpush1.bf16.msra.mxu0 %v7803
    %7895 = vmatprep.subr.bf16.mxu0 0
    %7896 = vmatpush1.bf16.msra.mxu0 %v7802
    %7897 = vmatprep.subr.bf16.mxu0 0
    %7898 = vmatpush1.bf16.msra.mxu0 %v7801
    %7899 = vmatprep.subr.bf16.mxu0 0
    %7900 = vmatpush1.bf16.msra.mxu0 %v7800
    %7901 = vmatprep.subr.bf16.mxu0 0
    %7902 = vmatpush1.bf16.msra.mxu0 %v7799
    %7903 = vmatprep.subr.bf16.mxu0 0
    %7904 = vmatpush2.bf16.msra.mxu0 %v7814
    %7905 = vmatprep.subr.bf16.mxu0 0
    %7906 = vmatpush2.bf16.msra.mxu0 %v7813
    %7907 = vmatprep.subr.bf16.mxu0 0
    %7908 = vmatpush2.bf16.msra.mxu0 %v7812
    %7909 = vmatprep.subr.bf16.mxu0 0
    %7910 = vmatpush2.bf16.msra.mxu0 %v7811
    %7911 = vmatprep.subr.bf16.mxu0 0
    %7912 = vmatpush2.bf16.msra.mxu0 %v7810
    %7913 = vmatprep.subr.bf16.mxu0 0
    %7914 = vmatpush2.bf16.msra.mxu0 %v7809
    %7915 = vmatprep.subr.bf16.mxu0 0
    %7916 = vmatpush2.bf16.msra.mxu0 %v7808
    %7917 = vmatprep.subr.bf16.mxu0 0
    %7918 = vmatpush2.bf16.msra.mxu0 %v7807
    %7919 = vmatprep.mubr.bf16.mxu0 %v7583
    %7920 = vmatmul.mubr.bf16.gmra.mxu0 %v7582
    %v7921 = vpop.f32.mrf.mxu0
    %v7922 = vadd.f32 %v7882, %v7921
    %v7923 = vpop.f32.mrf.mxu0
    %v7924 = vpop.f32.mrf.mxu0
    %v7925 = vpop.f32.mrf.mxu0
    %7926 = vdwg.mxu0
    %7927 = vst [vmem:[#allocation16] sm:$0x3] %v7922
    // Predicated region
    $region70: #{cnn_forward.1} parent=1 // pred_check
      _
    $region71: #{cnn_forward.1} parent=1 // pred_check_branch
      %7929 = sbr.rel (0) target = $region73
    $region72: #{cnn_forward.1} parent=1 // pred_region
      %s7931 = ssub.s32 32, 32
      %7932 = vsyncadd [#allocation4], %s7931
      %s7934 = sshll.u32 [#allocation16], 4
      %s7935 = int_to_ptr.vmem [resolvable:$true] %s7934
      %7937 = dma.vmem_to_hbm [thread:$0]  %s7935, 32, %s9, [#allocation4]
    $region73: #{cnn_forward.1} parent=1 // pred_fallthru
      _
    // Predicated region
    $region74: #{cnn_forward.1} parent=1 // pred_check
      _
    $region75: #{cnn_forward.1} parent=1 // pred_check_branch
      %7939 = sbr.rel (0) target = $region77
    $region76: #{cnn_forward.1} parent=1 // pred_region
      %7940 = dma.done [#allocation4], 32
    $region77: #{cnn_forward.1} parent=1 // pred_fallthru
      _
    %7941 = vsyncpa [#allocation3], 1
    %7942 = vsyncpa [#allocation6], 1
    %7943 = vsyncpa [#allocation9], 1
    %7944 = vsyncpa [#allocation12], 1
    %7945 = vsyncpa [#allocation15], 1
    %7946 = vsyncpa [#allocation4], 1

</llo_original>
